<compile_context>
chip_gen: v7x
topology: tpu7x:2x2x1
jax: 0.10.0
libtpu: 0.0.40
codegen_flags: <defaults>
</compile_context>

<pallas_src>
import math

import jax
import jax.numpy as jnp
from jax import lax
from jax.experimental import pallas as pl

# ----------------------------- model config ---------------------------------
B        = 2      # batch
L_X      = 8      # decoder (target) sequence length
L_CROSS  = 16     # encoder (memory) sequence length
D_MODEL  = 32
N_HEADS  = 4
D_HEAD   = D_MODEL // N_HEADS
D_FF     = 64
N_LAYERS = 2
EPS      = 1e-5
_SCALE   = 1.0 / math.sqrt(D_HEAD)
_f32     = jnp.float32

# Row indices inside the packed bias/LN slab (per layer, shape (17, D_MODEL)).
(_BQ_S, _BK_S, _BV_S, _BO_S,
 _BQ_C, _BK_C, _BV_C, _BO_C,
 _B_FF2,
 _LN1_G, _LN1_B, _LN2_G, _LN2_B, _LN3_G, _LN3_B,
 _NORM_G, _NORM_B) = range(17)
_N_VEC_ROWS = 17


# ----------------------------- in-kernel helpers -----------------------------
def _layer_norm(z, g, b):
    # PyTorch LayerNorm semantics: biased variance, eps=1e-5; g/b are (1, D).
    mu = jnp.mean(z, axis=-1, keepdims=True)
    d = z - mu
    var = jnp.mean(d * d, axis=-1, keepdims=True)
    return d * lax.rsqrt(var + EPS) * g + b


def _softmax_rows(s):
    s = s - jnp.max(s, axis=-1, keepdims=True)
    p = jnp.exp(s)
    return p * pl.reciprocal(jnp.sum(p, axis=-1, keepdims=True), approx=False)


def _dot_nt(a, bt):
    # a @ bt.T without materializing the transpose.
    return lax.dot_general(a, bt, (((1,), (1,)), ((), ())),
                           preferred_element_type=jnp.float32)


def _mha_slab(q, k, v, wo, bo, lk):
    """Multi-head attention on batch-flattened slabs.

    q: (B*L_X, D); k, v: (B*lk, D); wo: (D, D); bo: (1, D).
    Scores of all (batch, head) pairs are stacked along sublanes so the
    softmax runs once per attention call; all head contexts are reassembled
    into one (B*L_X, D) slab so the output projection is a single matmul.
    """
    q = q * _SCALE                    # fold 1/sqrt(Dh) into q once
    blocks = []
    for b in range(B):
        qb = q[b * L_X:(b + 1) * L_X, :]
        kb = k[b * lk:(b + 1) * lk, :]
        for h in range(N_HEADS):
            sl = slice(h * D_HEAD, (h + 1) * D_HEAD)
            blocks.append(_dot_nt(qb[:, sl], kb[:, sl]))        # (L_X, lk)
    p = _softmax_rows(jnp.concatenate(blocks, axis=0))          # (B*H*L_X, lk)

    rows = []
    for b in range(B):
        vb = v[b * lk:(b + 1) * lk, :]
        ctx = []
        for h in range(N_HEADS):
            sl = slice(h * D_HEAD, (h + 1) * D_HEAD)
            r0 = (b * N_HEADS + h) * L_X
            ctx.append(jnp.dot(p[r0:r0 + L_X, :], vb[:, sl],
                               preferred_element_type=jnp.float32))
        rows.append(jnp.concatenate(ctx, axis=1))               # (L_X, D)
    o_full = jnp.concatenate(rows, axis=0)                      # (B*L_X, D)
    return jnp.dot(o_full, wo, preferred_element_type=jnp.float32) + bo


# ----------------------------- fused decoder kernel --------------------------
def _decoder_kernel(x_ref, cross_ref, w_att_ref, ff1_ref, w_ff2_ref, vec_ref,
                    o_ref):
    # Single grid step; both batch elements are in the sublane dim.
    x = x_ref[...]          # (B*L_X,     D)
    cross = cross_ref[...]  # (B*L_CROSS, D)

    D = D_MODEL
    vv = None
    # TODO(synk): x_mask / cross_mask are None in this instantiation; masked
    # (e.g. causal) attention is not implemented.
    for li in range(N_LAYERS):
        vv = vec_ref[li]                                      # (17, D)

        def w(idx, _li=li):                                   # (D, D) weight
            return w_att_ref[_li, idx * D:(idx + 1) * D, :]

        def bias(r, _vv=vv):                                  # (1, D) row
            return _vv[r:r + 1, :]

        # ---- self-attention (batch-flattened slabs) + add & norm1 ----
        q = jnp.dot(x, w(0), preferred_element_type=jnp.float32) + bias(_BQ_S)
        k = jnp.dot(x, w(1), preferred_element_type=jnp.float32) + bias(_BK_S)
        v = jnp.dot(x, w(2), preferred_element_type=jnp.float32) + bias(_BV_S)
        sa = _mha_slab(q, k, v, w(3), bias(_BO_S), L_X)
        x = _layer_norm(x + sa, bias(_LN1_G), bias(_LN1_B))

        # ---- cross-attention + add & norm2 ----
        q = jnp.dot(x, w(4), preferred_element_type=jnp.float32) + bias(_BQ_C)
        k = jnp.dot(cross, w(5), preferred_element_type=jnp.float32) + bias(_BK_C)
        v = jnp.dot(cross, w(6), preferred_element_type=jnp.float32) + bias(_BV_C)
        ca = _mha_slab(q, k, v, w(7), bias(_BO_C), L_CROSS)
        x = _layer_norm(x + ca, bias(_LN2_G), bias(_LN2_B))

        # ---- 1x1-conv feed-forward (relu), f32 throughout, + add & norm3 ----
        w1 = ff1_ref[li, 0:D, :]                              # (D, D_FF)
        b1 = ff1_ref[li, D:D + 1, :]                          # (1, D_FF)
        w2 = w_ff2_ref[li]                                    # (D_FF, D)
        h = jnp.maximum(
            jnp.dot(x, w1, preferred_element_type=jnp.float32) + b1, 0.0)
        y = jnp.dot(h, w2, preferred_element_type=jnp.float32) + bias(_B_FF2)
        x = _layer_norm(x + y, bias(_LN3_G), bias(_LN3_B))

    # ---- final LayerNorm epilogue (norm rows replicated into each layer) ----
    x = _layer_norm(x, vv[_NORM_G:_NORM_G + 1, :], vv[_NORM_B:_NORM_B + 1, :])
    o_ref[...] = x.astype(o_ref.dtype)


# ----------------------------- parameter packing -----------------------------
def _pack_params(params):
    """Consolidate all weights into 4 packed f32 slabs (fewer DMA inputs)."""
    att, ff1, ff2, vecs = [], [], [], []
    for p in params["layers"]:
        sa, ca = p["self_attn"], p["cross_attn"]
        att.append(jnp.concatenate(
            [sa["wq"], sa["wk"], sa["wv"], sa["wo"],
             ca["wq"], ca["wk"], ca["wv"], ca["wo"]], axis=0))          # (8D, D)
        ff1.append(jnp.concatenate(
            [p["w_ff1"], p["b_ff1"][None, :]], axis=0))                 # (D+1, D_FF)
        ff2.append(p["w_ff2"])                                          # (D_FF, D)
        vecs.append(jnp.stack(
            [sa["bq"], sa["bk"], sa["bv"], sa["bo"],
             ca["bq"], ca["bk"], ca["bv"], ca["bo"],
             p["b_ff2"],
             p["ln1_g"], p["ln1_b"], p["ln2_g"], p["ln2_b"],
             p["ln3_g"], p["ln3_b"],
             params["norm_g"], params["norm_b"]], axis=0))              # (17, D)
    return (jnp.stack(att), jnp.stack(ff1), jnp.stack(ff2), jnp.stack(vecs))


# ----------------------------- decoder forward -------------------------------
@jax.jit
def decoder_forward(x, cross, params):
    # x: (B, L_X, D)   cross: (B, L_CROSS, D)   (x_mask = cross_mask = None)
    Bn, Lq, D = x.shape
    Lk = cross.shape[1]
    w_att, ff1, ff2, vecs = _pack_params(params)

    # Single-step pallas_call: no grid, whole arrays VMEM-resident, one
    # prologue/epilogue.  Batch is flattened into the sublane dim.
    out2d = pl.pallas_call(
        _decoder_kernel,
        out_shape=jax.ShapeDtypeStruct((Bn * Lq, D), x.dtype),
    )(x.reshape(Bn * Lq, D), cross.reshape(Bn * Lk, D), w_att, ff1, ff2, vecs)
    return out2d.reshape(Bn, Lq, D)


# ----------------------------- pure-JAX reference ----------------------------
def _ref_ln(z, g, b):
    mu = jnp.mean(z, axis=-1, keepdims=True)
    var = jnp.mean((z - mu) ** 2, axis=-1, keepdims=True)
    return (z - mu) * lax.rsqrt(var + EPS) * g + b


def _ref_attn(q_in, kv_in, p):
    Bn, Lq, D = q_in.shape
    Lk = kv_in.shape[1]
    q = (q_in @ p["wq"] + p["bq"]).reshape(Bn, Lq, N_HEADS, D_HEAD).transpose(0, 2, 1, 3)
    k = (kv_in @ p["wk"] + p["bk"]).reshape(Bn, Lk, N_HEADS, D_HEAD).transpose(0, 2, 1, 3)
    v = (kv_in @ p["wv"] + p["bv"]).reshape(Bn, Lk, N_HEADS, D_HEAD).transpose(0, 2, 1, 3)
    s = jnp.einsum("bhqd,bhkd->bhqk", q, k) / math.sqrt(D_HEAD)
    a = jax.nn.softmax(s, axis=-1)
    o = jnp.einsum("bhqk,bhkd->bhqd", a, v).transpose(0, 2, 1, 3).reshape(Bn, Lq, D)
    return o @ p["wo"] + p["bo"]


def decoder_reference(x, cross, params):
    for p in params["layers"]:
        x = _ref_ln(x + _ref_attn(x, x, p["self_attn"]), p["ln1_g"], p["ln1_b"])
        x = _ref_ln(x + _ref_attn(x, cross, p["cross_attn"]), p["ln2_g"], p["ln2_b"])
        y = jnp.maximum(x @ p["w_ff1"] + p["b_ff1"], 0.0) @ p["w_ff2"] + p["b_ff2"]
        x = _ref_ln(x + y, p["ln3_g"], p["ln3_b"])
    return _ref_ln(x, params["norm_g"], params["norm_b"])


# ----------------------------- params ---------------------------------------
def _init_attn_params(key):
    ks = jax.random.split(key, 4)
    mk = lambda k: (jax.random.normal(k, (D_MODEL, D_MODEL), _f32) * 0.05)
    return {
        "wq": mk(ks[0]), "bq": jnp.zeros((D_MODEL,), _f32),
        "wk": mk(ks[1]), "bk": jnp.zeros((D_MODEL,), _f32),
        "wv": mk(ks[2]), "bv": jnp.zeros((D_MODEL,), _f32),
        "wo": mk(ks[3]), "bo": jnp.zeros((D_MODEL,), _f32),
    }


def init_params(key):
    layers = []
    for i in range(N_LAYERS):
        k = jax.random.fold_in(key, i)
        k1, k2, k3, k4 = jax.random.split(k, 4)
        layers.append({
            "self_attn": _init_attn_params(k1),
            "cross_attn": _init_attn_params(k2),
            "w_ff1": jax.random.normal(k3, (D_MODEL, D_FF), _f32) * 0.05,
            "b_ff1": jnp.zeros((D_FF,), _f32),
            "w_ff2": jax.random.normal(k4, (D_FF, D_MODEL), _f32) * 0.05,
            "b_ff2": jnp.zeros((D_MODEL,), _f32),
            "ln1_g": jnp.ones((D_MODEL,), _f32), "ln1_b": jnp.zeros((D_MODEL,), _f32),
            "ln2_g": jnp.ones((D_MODEL,), _f32), "ln2_b": jnp.zeros((D_MODEL,), _f32),
            "ln3_g": jnp.ones((D_MODEL,), _f32), "ln3_b": jnp.zeros((D_MODEL,), _f32),
        })
    return {
        "layers": layers,
        "norm_g": jnp.ones((D_MODEL,), _f32),
        "norm_b": jnp.zeros((D_MODEL,), _f32),
    }


# ----------------------------- main ------------------------------------------
if __name__ == "__main__":
    key = jax.random.PRNGKey(0)
    kx, kc, kp = jax.random.split(key, 3)
    x = jax.random.normal(kx, (B, L_X, D_MODEL), _f32)
    cross = jax.random.normal(kc, (B, L_CROSS, D_MODEL), _f32)
    params = init_params(kp)

    out = decoder_forward(x, cross, params)
    out = jax.block_until_ready(out)

    ref = decoder_reference(x, cross, params)
    assert out.shape == (B, L_X, D_MODEL)
    assert jnp.allclose(out, ref, atol=1e-4, rtol=1e-4), \
        f"max abs err {jnp.max(jnp.abs(out - ref))}"

    print("KERNEL_OK")
</pallas_src>

<mosaic_0001>
module attributes {stable_mosaic.version = 11 : i64} {
  func.func @_decoder_kernel(%arg0: memref<16x32xf32, #tpu.memory_space<vmem>>, %arg1: memref<32x32xf32, #tpu.memory_space<vmem>>, %arg2: memref<2x256x32xf32, #tpu.memory_space<vmem>>, %arg3: memref<2x33x64xf32, #tpu.memory_space<vmem>>, %arg4: memref<2x64x32xf32, #tpu.memory_space<vmem>>, %arg5: memref<2x17x32xf32, #tpu.memory_space<vmem>>, %arg6: memref<16x32xf32, #tpu.memory_space<vmem>>) attributes {dimension_semantics = [], scalar_prefetch = 0 : i64, scratch_operands = 0 : i64, tpu.core_type = #tpu.core_type<tc>} {
    %c0 = arith.constant 0 : index
    %c0_0 = arith.constant 0 : index
    %0 = vector.load %arg0[%c0, %c0_0] : memref<16x32xf32, #tpu.memory_space<vmem>>, vector<16x32xf32>
    %c0_1 = arith.constant 0 : index
    %c0_2 = arith.constant 0 : index
    %1 = vector.load %arg1[%c0_1, %c0_2] : memref<32x32xf32, #tpu.memory_space<vmem>>, vector<32x32xf32>
    %c0_3 = arith.constant 0 : index
    %c0_4 = arith.constant 0 : index
    %c0_5 = arith.constant 0 : index
    %2 = vector.load %arg5[%c0_3, %c0_4, %c0_5] : memref<2x17x32xf32, #tpu.memory_space<vmem>>, vector<1x17x32xf32>
    %3 = vector.shape_cast %2 : vector<1x17x32xf32> to vector<17x32xf32>
    %c0_6 = arith.constant 0 : index
    %c0_7 = arith.constant 0 : index
    %c0_8 = arith.constant 0 : index
    %4 = vector.load %arg2[%c0_6, %c0_7, %c0_8] : memref<2x256x32xf32, #tpu.memory_space<vmem>>, vector<1x32x32xf32>
    %5 = vector.shape_cast %4 : vector<1x32x32xf32> to vector<32x32xf32>
    %cst = arith.constant dense<0.000000e+00> : vector<16x32xf32>
    %6 = tpu.matmul %0, %5, %cst {dimension_numbers = #tpu.dot_dimension_numbers<[1], [0], [0], [1], [0, 0, 1, 1], [], []>} : vector<16x32xf32>, vector<32x32xf32>, vector<16x32xf32> -> vector<16x32xf32>
    %7 = vector.extract_strided_slice %3 {offsets = [0, 0], sizes = [1, 32], strides = [1, 1]} : vector<17x32xf32> to vector<1x32xf32>
    %8 = vector.broadcast %7 : vector<1x32xf32> to vector<16x32xf32>
    %9 = arith.addf %6, %8 : vector<16x32xf32>
    %c0_9 = arith.constant 0 : index
    %c32 = arith.constant 32 : index
    %c0_10 = arith.constant 0 : index
    %10 = vector.load %arg2[%c0_9, %c32, %c0_10] : memref<2x256x32xf32, #tpu.memory_space<vmem>>, vector<1x32x32xf32>
    %11 = vector.shape_cast %10 : vector<1x32x32xf32> to vector<32x32xf32>
    %cst_11 = arith.constant dense<0.000000e+00> : vector<16x32xf32>
    %12 = tpu.matmul %0, %11, %cst_11 {dimension_numbers = #tpu.dot_dimension_numbers<[1], [0], [0], [1], [0, 0, 1, 1], [], []>} : vector<16x32xf32>, vector<32x32xf32>, vector<16x32xf32> -> vector<16x32xf32>
    %13 = vector.extract_strided_slice %3 {offsets = [1, 0], sizes = [1, 32], strides = [1, 1]} : vector<17x32xf32> to vector<1x32xf32>
    %14 = vector.broadcast %13 : vector<1x32xf32> to vector<16x32xf32>
    %15 = arith.addf %12, %14 : vector<16x32xf32>
    %c0_12 = arith.constant 0 : index
    %c64 = arith.constant 64 : index
    %c0_13 = arith.constant 0 : index
    %16 = vector.load %arg2[%c0_12, %c64, %c0_13] : memref<2x256x32xf32, #tpu.memory_space<vmem>>, vector<1x32x32xf32>
    %17 = vector.shape_cast %16 : vector<1x32x32xf32> to vector<32x32xf32>
    %cst_14 = arith.constant dense<0.000000e+00> : vector<16x32xf32>
    %18 = tpu.matmul %0, %17, %cst_14 {dimension_numbers = #tpu.dot_dimension_numbers<[1], [0], [0], [1], [0, 0, 1, 1], [], []>} : vector<16x32xf32>, vector<32x32xf32>, vector<16x32xf32> -> vector<16x32xf32>
    %19 = vector.extract_strided_slice %3 {offsets = [2, 0], sizes = [1, 32], strides = [1, 1]} : vector<17x32xf32> to vector<1x32xf32>
    %20 = vector.broadcast %19 : vector<1x32xf32> to vector<16x32xf32>
    %21 = arith.addf %18, %20 : vector<16x32xf32>
    %c0_15 = arith.constant 0 : index
    %c96 = arith.constant 96 : index
    %c0_16 = arith.constant 0 : index
    %22 = vector.load %arg2[%c0_15, %c96, %c0_16] : memref<2x256x32xf32, #tpu.memory_space<vmem>>, vector<1x32x32xf32>
    %23 = vector.shape_cast %22 : vector<1x32x32xf32> to vector<32x32xf32>
    %24 = vector.extract_strided_slice %3 {offsets = [3, 0], sizes = [1, 32], strides = [1, 1]} : vector<17x32xf32> to vector<1x32xf32>
    %cst_17 = arith.constant 0.353553385 : f32
    %25 = vector.broadcast %cst_17 : f32 to vector<16x32xf32>
    %26 = arith.mulf %9, %25 : vector<16x32xf32>
    %27 = vector.extract_strided_slice %26 {offsets = [0, 0], sizes = [8, 32], strides = [1, 1]} : vector<16x32xf32> to vector<8x32xf32>
    %28 = vector.extract_strided_slice %15 {offsets = [0, 0], sizes = [8, 32], strides = [1, 1]} : vector<16x32xf32> to vector<8x32xf32>
    %29 = vector.extract_strided_slice %27 {offsets = [0, 0], sizes = [8, 8], strides = [1, 1]} : vector<8x32xf32> to vector<8x8xf32>
    %30 = vector.extract_strided_slice %28 {offsets = [0, 0], sizes = [8, 8], strides = [1, 1]} : vector<8x32xf32> to vector<8x8xf32>
    %cst_18 = arith.constant dense<0.000000e+00> : vector<8x8xf32>
    %31 = tpu.matmul %29, %30, %cst_18 {dimension_numbers = #tpu.dot_dimension_numbers<[1], [1], [0], [0], [0, 0, 1, 0], [], []>} : vector<8x8xf32>, vector<8x8xf32>, vector<8x8xf32> -> vector<8x8xf32>
    %32 = vector.extract_strided_slice %27 {offsets = [0, 8], sizes = [8, 8], strides = [1, 1]} : vector<8x32xf32> to vector<8x8xf32>
    %33 = vector.extract_strided_slice %28 {offsets = [0, 8], sizes = [8, 8], strides = [1, 1]} : vector<8x32xf32> to vector<8x8xf32>
    %cst_19 = arith.constant dense<0.000000e+00> : vector<8x8xf32>
    %34 = tpu.matmul %32, %33, %cst_19 {dimension_numbers = #tpu.dot_dimension_numbers<[1], [1], [0], [0], [0, 0, 1, 0], [], []>} : vector<8x8xf32>, vector<8x8xf32>, vector<8x8xf32> -> vector<8x8xf32>
    %35 = vector.extract_strided_slice %27 {offsets = [0, 16], sizes = [8, 8], strides = [1, 1]} : vector<8x32xf32> to vector<8x8xf32>
    %36 = vector.extract_strided_slice %28 {offsets = [0, 16], sizes = [8, 8], strides = [1, 1]} : vector<8x32xf32> to vector<8x8xf32>
    %cst_20 = arith.constant dense<0.000000e+00> : vector<8x8xf32>
    %37 = tpu.matmul %35, %36, %cst_20 {dimension_numbers = #tpu.dot_dimension_numbers<[1], [1], [0], [0], [0, 0, 1, 0], [], []>} : vector<8x8xf32>, vector<8x8xf32>, vector<8x8xf32> -> vector<8x8xf32>
    %38 = vector.extract_strided_slice %27 {offsets = [0, 24], sizes = [8, 8], strides = [1, 1]} : vector<8x32xf32> to vector<8x8xf32>
    %39 = vector.extract_strided_slice %28 {offsets = [0, 24], sizes = [8, 8], strides = [1, 1]} : vector<8x32xf32> to vector<8x8xf32>
    %cst_21 = arith.constant dense<0.000000e+00> : vector<8x8xf32>
    %40 = tpu.matmul %38, %39, %cst_21 {dimension_numbers = #tpu.dot_dimension_numbers<[1], [1], [0], [0], [0, 0, 1, 0], [], []>} : vector<8x8xf32>, vector<8x8xf32>, vector<8x8xf32> -> vector<8x8xf32>
    %41 = vector.extract_strided_slice %26 {offsets = [8, 0], sizes = [8, 32], strides = [1, 1]} : vector<16x32xf32> to vector<8x32xf32>
    %42 = vector.extract_strided_slice %15 {offsets = [8, 0], sizes = [8, 32], strides = [1, 1]} : vector<16x32xf32> to vector<8x32xf32>
    %43 = vector.extract_strided_slice %41 {offsets = [0, 0], sizes = [8, 8], strides = [1, 1]} : vector<8x32xf32> to vector<8x8xf32>
    %44 = vector.extract_strided_slice %42 {offsets = [0, 0], sizes = [8, 8], strides = [1, 1]} : vector<8x32xf32> to vector<8x8xf32>
    %cst_22 = arith.constant dense<0.000000e+00> : vector<8x8xf32>
    %45 = tpu.matmul %43, %44, %cst_22 {dimension_numbers = #tpu.dot_dimension_numbers<[1], [1], [0], [0], [0, 0, 1, 0], [], []>} : vector<8x8xf32>, vector<8x8xf32>, vector<8x8xf32> -> vector<8x8xf32>
    %46 = vector.extract_strided_slice %41 {offsets = [0, 8], sizes = [8, 8], strides = [1, 1]} : vector<8x32xf32> to vector<8x8xf32>
    %47 = vector.extract_strided_slice %42 {offsets = [0, 8], sizes = [8, 8], strides = [1, 1]} : vector<8x32xf32> to vector<8x8xf32>
    %cst_23 = arith.constant dense<0.000000e+00> : vector<8x8xf32>
    %48 = tpu.matmul %46, %47, %cst_23 {dimension_numbers = #tpu.dot_dimension_numbers<[1], [1], [0], [0], [0, 0, 1, 0], [], []>} : vector<8x8xf32>, vector<8x8xf32>, vector<8x8xf32> -> vector<8x8xf32>
    %49 = vector.extract_strided_slice %41 {offsets = [0, 16], sizes = [8, 8], strides = [1, 1]} : vector<8x32xf32> to vector<8x8xf32>
    %50 = vector.extract_strided_slice %42 {offsets = [0, 16], sizes = [8, 8], strides = [1, 1]} : vector<8x32xf32> to vector<8x8xf32>
    %cst_24 = arith.constant dense<0.000000e+00> : vector<8x8xf32>
    %51 = tpu.matmul %49, %50, %cst_24 {dimension_numbers = #tpu.dot_dimension_numbers<[1], [1], [0], [0], [0, 0, 1, 0], [], []>} : vector<8x8xf32>, vector<8x8xf32>, vector<8x8xf32> -> vector<8x8xf32>
    %52 = vector.extract_strided_slice %41 {offsets = [0, 24], sizes = [8, 8], strides = [1, 1]} : vector<8x32xf32> to vector<8x8xf32>
    %53 = vector.extract_strided_slice %42 {offsets = [0, 24], sizes = [8, 8], strides = [1, 1]} : vector<8x32xf32> to vector<8x8xf32>
    %cst_25 = arith.constant dense<0.000000e+00> : vector<8x8xf32>
    %54 = tpu.matmul %52, %53, %cst_25 {dimension_numbers = #tpu.dot_dimension_numbers<[1], [1], [0], [0], [0, 0, 1, 0], [], []>} : vector<8x8xf32>, vector<8x8xf32>, vector<8x8xf32> -> vector<8x8xf32>
    %55 = tpu.concatenate %31, %34, %37, %40, %45, %48, %51, %54 in 0 : vector<8x8xf32>, vector<8x8xf32>, vector<8x8xf32>, vector<8x8xf32>, vector<8x8xf32>, vector<8x8xf32>, vector<8x8xf32>, vector<8x8xf32> -> vector<64x8xf32>
    %cst_26 = arith.constant dense<0xFF800000> : vector<64xf32>
    %56 = vector.multi_reduction <maximumf>, %55, %cst_26 [1] : vector<64x8xf32> to vector<64xf32>
    %57 = vector.shape_cast %56 : vector<64xf32> to vector<64x1xf32>
    %58 = vector.broadcast %57 : vector<64x1xf32> to vector<64x8xf32>
    %59 = arith.subf %55, %58 : vector<64x8xf32>
    %60 = math.exp %59 : vector<64x8xf32>
    %cst_27 = arith.constant dense<0.000000e+00> : vector<64xf32>
    %61 = vector.multi_reduction <add>, %60, %cst_27 [1] : vector<64x8xf32> to vector<64xf32>
    %62 = vector.shape_cast %61 : vector<64xf32> to vector<64x1xf32>
    %63 = tpu.reciprocal %62 : vector<64x1xf32> -> vector<64x1xf32>
    %64 = vector.broadcast %63 : vector<64x1xf32> to vector<64x8xf32>
    %65 = arith.mulf %60, %64 : vector<64x8xf32>
    %66 = vector.extract_strided_slice %21 {offsets = [0, 0], sizes = [8, 32], strides = [1, 1]} : vector<16x32xf32> to vector<8x32xf32>
    %67 = vector.extract_strided_slice %65 {offsets = [0, 0], sizes = [8, 8], strides = [1, 1]} : vector<64x8xf32> to vector<8x8xf32>
    %68 = vector.extract_strided_slice %66 {offsets = [0, 0], sizes = [8, 8], strides = [1, 1]} : vector<8x32xf32> to vector<8x8xf32>
    %cst_28 = arith.constant dense<0.000000e+00> : vector<8x8xf32>
    %69 = tpu.matmul %67, %68, %cst_28 {dimension_numbers = #tpu.dot_dimension_numbers<[1], [0], [0], [1], [0, 0, 1, 1], [], []>} : vector<8x8xf32>, vector<8x8xf32>, vector<8x8xf32> -> vector<8x8xf32>
    %70 = vector.extract_strided_slice %65 {offsets = [8, 0], sizes = [8, 8], strides = [1, 1]} : vector<64x8xf32> to vector<8x8xf32>
    %71 = vector.extract_strided_slice %66 {offsets = [0, 8], sizes = [8, 8], strides = [1, 1]} : vector<8x32xf32> to vector<8x8xf32>
    %cst_29 = arith.constant dense<0.000000e+00> : vector<8x8xf32>
    %72 = tpu.matmul %70, %71, %cst_29 {dimension_numbers = #tpu.dot_dimension_numbers<[1], [0], [0], [1], [0, 0, 1, 1], [], []>} : vector<8x8xf32>, vector<8x8xf32>, vector<8x8xf32> -> vector<8x8xf32>
    %73 = vector.extract_strided_slice %65 {offsets = [16, 0], sizes = [8, 8], strides = [1, 1]} : vector<64x8xf32> to vector<8x8xf32>
    %74 = vector.extract_strided_slice %66 {offsets = [0, 16], sizes = [8, 8], strides = [1, 1]} : vector<8x32xf32> to vector<8x8xf32>
    %cst_30 = arith.constant dense<0.000000e+00> : vector<8x8xf32>
    %75 = tpu.matmul %73, %74, %cst_30 {dimension_numbers = #tpu.dot_dimension_numbers<[1], [0], [0], [1], [0, 0, 1, 1], [], []>} : vector<8x8xf32>, vector<8x8xf32>, vector<8x8xf32> -> vector<8x8xf32>
    %76 = vector.extract_strided_slice %65 {offsets = [24, 0], sizes = [8, 8], strides = [1, 1]} : vector<64x8xf32> to vector<8x8xf32>
    %77 = vector.extract_strided_slice %66 {offsets = [0, 24], sizes = [8, 8], strides = [1, 1]} : vector<8x32xf32> to vector<8x8xf32>
    %cst_31 = arith.constant dense<0.000000e+00> : vector<8x8xf32>
    %78 = tpu.matmul %76, %77, %cst_31 {dimension_numbers = #tpu.dot_dimension_numbers<[1], [0], [0], [1], [0, 0, 1, 1], [], []>} : vector<8x8xf32>, vector<8x8xf32>, vector<8x8xf32> -> vector<8x8xf32>
    %79 = tpu.concatenate %69, %72, %75, %78 in 1 : vector<8x8xf32>, vector<8x8xf32>, vector<8x8xf32>, vector<8x8xf32> -> vector<8x32xf32>
    %80 = vector.extract_strided_slice %21 {offsets = [8, 0], sizes = [8, 32], strides = [1, 1]} : vector<16x32xf32> to vector<8x32xf32>
    %81 = vector.extract_strided_slice %65 {offsets = [32, 0], sizes = [8, 8], strides = [1, 1]} : vector<64x8xf32> to vector<8x8xf32>
    %82 = vector.extract_strided_slice %80 {offsets = [0, 0], sizes = [8, 8], strides = [1, 1]} : vector<8x32xf32> to vector<8x8xf32>
    %cst_32 = arith.constant dense<0.000000e+00> : vector<8x8xf32>
    %83 = tpu.matmul %81, %82, %cst_32 {dimension_numbers = #tpu.dot_dimension_numbers<[1], [0], [0], [1], [0, 0, 1, 1], [], []>} : vector<8x8xf32>, vector<8x8xf32>, vector<8x8xf32> -> vector<8x8xf32>
    %84 = vector.extract_strided_slice %65 {offsets = [40, 0], sizes = [8, 8], strides = [1, 1]} : vector<64x8xf32> to vector<8x8xf32>
    %85 = vector.extract_strided_slice %80 {offsets = [0, 8], sizes = [8, 8], strides = [1, 1]} : vector<8x32xf32> to vector<8x8xf32>
    %cst_33 = arith.constant dense<0.000000e+00> : vector<8x8xf32>
    %86 = tpu.matmul %84, %85, %cst_33 {dimension_numbers = #tpu.dot_dimension_numbers<[1], [0], [0], [1], [0, 0, 1, 1], [], []>} : vector<8x8xf32>, vector<8x8xf32>, vector<8x8xf32> -> vector<8x8xf32>
    %87 = vector.extract_strided_slice %65 {offsets = [48, 0], sizes = [8, 8], strides = [1, 1]} : vector<64x8xf32> to vector<8x8xf32>
    %88 = vector.extract_strided_slice %80 {offsets = [0, 16], sizes = [8, 8], strides = [1, 1]} : vector<8x32xf32> to vector<8x8xf32>
    %cst_34 = arith.constant dense<0.000000e+00> : vector<8x8xf32>
    %89 = tpu.matmul %87, %88, %cst_34 {dimension_numbers = #tpu.dot_dimension_numbers<[1], [0], [0], [1], [0, 0, 1, 1], [], []>} : vector<8x8xf32>, vector<8x8xf32>, vector<8x8xf32> -> vector<8x8xf32>
    %90 = vector.extract_strided_slice %65 {offsets = [56, 0], sizes = [8, 8], strides = [1, 1]} : vector<64x8xf32> to vector<8x8xf32>
    %91 = vector.extract_strided_slice %80 {offsets = [0, 24], sizes = [8, 8], strides = [1, 1]} : vector<8x32xf32> to vector<8x8xf32>
    %cst_35 = arith.constant dense<0.000000e+00> : vector<8x8xf32>
    %92 = tpu.matmul %90, %91, %cst_35 {dimension_numbers = #tpu.dot_dimension_numbers<[1], [0], [0], [1], [0, 0, 1, 1], [], []>} : vector<8x8xf32>, vector<8x8xf32>, vector<8x8xf32> -> vector<8x8xf32>
    %93 = tpu.concatenate %83, %86, %89, %92 in 1 : vector<8x8xf32>, vector<8x8xf32>, vector<8x8xf32>, vector<8x8xf32> -> vector<8x32xf32>
    %94 = tpu.concatenate %79, %93 in 0 : vector<8x32xf32>, vector<8x32xf32> -> vector<16x32xf32>
    %cst_36 = arith.constant dense<0.000000e+00> : vector<16x32xf32>
    %95 = tpu.matmul %94, %23, %cst_36 {dimension_numbers = #tpu.dot_dimension_numbers<[1], [0], [0], [1], [0, 0, 1, 1], [], []>} : vector<16x32xf32>, vector<32x32xf32>, vector<16x32xf32> -> vector<16x32xf32>
    %96 = vector.broadcast %24 : vector<1x32xf32> to vector<16x32xf32>
    %97 = arith.addf %95, %96 : vector<16x32xf32>
    %98 = arith.addf %0, %97 : vector<16x32xf32>
    %99 = vector.extract_strided_slice %3 {offsets = [9, 0], sizes = [1, 32], strides = [1, 1]} : vector<17x32xf32> to vector<1x32xf32>
    %100 = vector.extract_strided_slice %3 {offsets = [10, 0], sizes = [1, 32], strides = [1, 1]} : vector<17x32xf32> to vector<1x32xf32>
    %cst_37 = arith.constant dense<0.000000e+00> : vector<16xf32>
    %101 = vector.multi_reduction <add>, %98, %cst_37 [1] : vector<16x32xf32> to vector<16xf32>
    %102 = vector.shape_cast %101 : vector<16xf32> to vector<16x1xf32>
    %cst_38 = arith.constant 3.200000e+01 : f32
    %103 = vector.broadcast %cst_38 : f32 to vector<16x1xf32>
    %104 = arith.divf %102, %103 : vector<16x1xf32>
    %105 = vector.broadcast %104 : vector<16x1xf32> to vector<16x32xf32>
    %106 = arith.subf %98, %105 : vector<16x32xf32>
    %107 = arith.mulf %106, %106 : vector<16x32xf32>
    %cst_39 = arith.constant dense<0.000000e+00> : vector<16xf32>
    %108 = vector.multi_reduction <add>, %107, %cst_39 [1] : vector<16x32xf32> to vector<16xf32>
    %109 = vector.shape_cast %108 : vector<16xf32> to vector<16x1xf32>
    %cst_40 = arith.constant 3.200000e+01 : f32
    %110 = vector.broadcast %cst_40 : f32 to vector<16x1xf32>
    %111 = arith.divf %109, %110 : vector<16x1xf32>
    %cst_41 = arith.constant 9.99999974E-6 : f32
    %112 = vector.broadcast %cst_41 : f32 to vector<16x1xf32>
    %113 = arith.addf %111, %112 : vector<16x1xf32>
    %114 = math.rsqrt %113 : vector<16x1xf32>
    %115 = vector.broadcast %114 : vector<16x1xf32> to vector<16x32xf32>
    %116 = arith.mulf %106, %115 : vector<16x32xf32>
    %117 = vector.broadcast %99 : vector<1x32xf32> to vector<16x32xf32>
    %118 = arith.mulf %116, %117 : vector<16x32xf32>
    %119 = vector.broadcast %100 : vector<1x32xf32> to vector<16x32xf32>
    %120 = arith.addf %118, %119 : vector<16x32xf32>
    %c0_42 = arith.constant 0 : index
    %c128 = arith.constant 128 : index
    %c0_43 = arith.constant 0 : index
    %121 = vector.load %arg2[%c0_42, %c128, %c0_43] : memref<2x256x32xf32, #tpu.memory_space<vmem>>, vector<1x32x32xf32>
    %122 = vector.shape_cast %121 : vector<1x32x32xf32> to vector<32x32xf32>
    %cst_44 = arith.constant dense<0.000000e+00> : vector<16x32xf32>
    %123 = tpu.matmul %120, %122, %cst_44 {dimension_numbers = #tpu.dot_dimension_numbers<[1], [0], [0], [1], [0, 0, 1, 1], [], []>} : vector<16x32xf32>, vector<32x32xf32>, vector<16x32xf32> -> vector<16x32xf32>
    %124 = vector.extract_strided_slice %3 {offsets = [4, 0], sizes = [1, 32], strides = [1, 1]} : vector<17x32xf32> to vector<1x32xf32>
    %125 = vector.broadcast %124 : vector<1x32xf32> to vector<16x32xf32>
    %126 = arith.addf %123, %125 : vector<16x32xf32>
    %c0_45 = arith.constant 0 : index
    %c160 = arith.constant 160 : index
    %c0_46 = arith.constant 0 : index
    %127 = vector.load %arg2[%c0_45, %c160, %c0_46] : memref<2x256x32xf32, #tpu.memory_space<vmem>>, vector<1x32x32xf32>
    %128 = vector.shape_cast %127 : vector<1x32x32xf32> to vector<32x32xf32>
    %cst_47 = arith.constant dense<0.000000e+00> : vector<32x32xf32>
    %129 = tpu.matmul %1, %128, %cst_47 {dimension_numbers = #tpu.dot_dimension_numbers<[1], [0], [0], [1], [0, 0, 1, 1], [], []>} : vector<32x32xf32>, vector<32x32xf32>, vector<32x32xf32> -> vector<32x32xf32>
    %130 = vector.extract_strided_slice %3 {offsets = [5, 0], sizes = [1, 32], strides = [1, 1]} : vector<17x32xf32> to vector<1x32xf32>
    %131 = vector.broadcast %130 : vector<1x32xf32> to vector<32x32xf32>
    %132 = arith.addf %129, %131 : vector<32x32xf32>
    %c0_48 = arith.constant 0 : index
    %c192 = arith.constant 192 : index
    %c0_49 = arith.constant 0 : index
    %133 = vector.load %arg2[%c0_48, %c192, %c0_49] : memref<2x256x32xf32, #tpu.memory_space<vmem>>, vector<1x32x32xf32>
    %134 = vector.shape_cast %133 : vector<1x32x32xf32> to vector<32x32xf32>
    %cst_50 = arith.constant dense<0.000000e+00> : vector<32x32xf32>
    %135 = tpu.matmul %1, %134, %cst_50 {dimension_numbers = #tpu.dot_dimension_numbers<[1], [0], [0], [1], [0, 0, 1, 1], [], []>} : vector<32x32xf32>, vector<32x32xf32>, vector<32x32xf32> -> vector<32x32xf32>
    %136 = vector.extract_strided_slice %3 {offsets = [6, 0], sizes = [1, 32], strides = [1, 1]} : vector<17x32xf32> to vector<1x32xf32>
    %137 = vector.broadcast %136 : vector<1x32xf32> to vector<32x32xf32>
    %138 = arith.addf %135, %137 : vector<32x32xf32>
    %c0_51 = arith.constant 0 : index
    %c224 = arith.constant 224 : index
    %c0_52 = arith.constant 0 : index
    %139 = vector.load %arg2[%c0_51, %c224, %c0_52] : memref<2x256x32xf32, #tpu.memory_space<vmem>>, vector<1x32x32xf32>
    %140 = vector.shape_cast %139 : vector<1x32x32xf32> to vector<32x32xf32>
    %141 = vector.extract_strided_slice %3 {offsets = [7, 0], sizes = [1, 32], strides = [1, 1]} : vector<17x32xf32> to vector<1x32xf32>
    %cst_53 = arith.constant 0.353553385 : f32
    %142 = vector.broadcast %cst_53 : f32 to vector<16x32xf32>
    %143 = arith.mulf %126, %142 : vector<16x32xf32>
    %144 = vector.extract_strided_slice %143 {offsets = [0, 0], sizes = [8, 32], strides = [1, 1]} : vector<16x32xf32> to vector<8x32xf32>
    %145 = vector.extract_strided_slice %132 {offsets = [0, 0], sizes = [16, 32], strides = [1, 1]} : vector<32x32xf32> to vector<16x32xf32>
    %146 = vector.extract_strided_slice %144 {offsets = [0, 0], sizes = [8, 8], strides = [1, 1]} : vector<8x32xf32> to vector<8x8xf32>
    %147 = vector.extract_strided_slice %145 {offsets = [0, 0], sizes = [16, 8], strides = [1, 1]} : vector<16x32xf32> to vector<16x8xf32>
    %cst_54 = arith.constant dense<0.000000e+00> : vector<8x16xf32>
    %148 = tpu.matmul %146, %147, %cst_54 {dimension_numbers = #tpu.dot_dimension_numbers<[1], [1], [0], [0], [0, 0, 1, 0], [], []>} : vector<8x8xf32>, vector<16x8xf32>, vector<8x16xf32> -> vector<8x16xf32>
    %149 = vector.extract_strided_slice %144 {offsets = [0, 8], sizes = [8, 8], strides = [1, 1]} : vector<8x32xf32> to vector<8x8xf32>
    %150 = vector.extract_strided_slice %145 {offsets = [0, 8], sizes = [16, 8], strides = [1, 1]} : vector<16x32xf32> to vector<16x8xf32>
    %cst_55 = arith.constant dense<0.000000e+00> : vector<8x16xf32>
    %151 = tpu.matmul %149, %150, %cst_55 {dimension_numbers = #tpu.dot_dimension_numbers<[1], [1], [0], [0], [0, 0, 1, 0], [], []>} : vector<8x8xf32>, vector<16x8xf32>, vector<8x16xf32> -> vector<8x16xf32>
    %152 = vector.extract_strided_slice %144 {offsets = [0, 16], sizes = [8, 8], strides = [1, 1]} : vector<8x32xf32> to vector<8x8xf32>
    %153 = vector.extract_strided_slice %145 {offsets = [0, 16], sizes = [16, 8], strides = [1, 1]} : vector<16x32xf32> to vector<16x8xf32>
    %cst_56 = arith.constant dense<0.000000e+00> : vector<8x16xf32>
    %154 = tpu.matmul %152, %153, %cst_56 {dimension_numbers = #tpu.dot_dimension_numbers<[1], [1], [0], [0], [0, 0, 1, 0], [], []>} : vector<8x8xf32>, vector<16x8xf32>, vector<8x16xf32> -> vector<8x16xf32>
    %155 = vector.extract_strided_slice %144 {offsets = [0, 24], sizes = [8, 8], strides = [1, 1]} : vector<8x32xf32> to vector<8x8xf32>
    %156 = vector.extract_strided_slice %145 {offsets = [0, 24], sizes = [16, 8], strides = [1, 1]} : vector<16x32xf32> to vector<16x8xf32>
    %cst_57 = arith.constant dense<0.000000e+00> : vector<8x16xf32>
    %157 = tpu.matmul %155, %156, %cst_57 {dimension_numbers = #tpu.dot_dimension_numbers<[1], [1], [0], [0], [0, 0, 1, 0], [], []>} : vector<8x8xf32>, vector<16x8xf32>, vector<8x16xf32> -> vector<8x16xf32>
    %158 = vector.extract_strided_slice %143 {offsets = [8, 0], sizes = [8, 32], strides = [1, 1]} : vector<16x32xf32> to vector<8x32xf32>
    %159 = vector.extract_strided_slice %132 {offsets = [16, 0], sizes = [16, 32], strides = [1, 1]} : vector<32x32xf32> to vector<16x32xf32>
    %160 = vector.extract_strided_slice %158 {offsets = [0, 0], sizes = [8, 8], strides = [1, 1]} : vector<8x32xf32> to vector<8x8xf32>
    %161 = vector.extract_strided_slice %159 {offsets = [0, 0], sizes = [16, 8], strides = [1, 1]} : vector<16x32xf32> to vector<16x8xf32>
    %cst_58 = arith.constant dense<0.000000e+00> : vector<8x16xf32>
    %162 = tpu.matmul %160, %161, %cst_58 {dimension_numbers = #tpu.dot_dimension_numbers<[1], [1], [0], [0], [0, 0, 1, 0], [], []>} : vector<8x8xf32>, vector<16x8xf32>, vector<8x16xf32> -> vector<8x16xf32>
    %163 = vector.extract_strided_slice %158 {offsets = [0, 8], sizes = [8, 8], strides = [1, 1]} : vector<8x32xf32> to vector<8x8xf32>
    %164 = vector.extract_strided_slice %159 {offsets = [0, 8], sizes = [16, 8], strides = [1, 1]} : vector<16x32xf32> to vector<16x8xf32>
    %cst_59 = arith.constant dense<0.000000e+00> : vector<8x16xf32>
    %165 = tpu.matmul %163, %164, %cst_59 {dimension_numbers = #tpu.dot_dimension_numbers<[1], [1], [0], [0], [0, 0, 1, 0], [], []>} : vector<8x8xf32>, vector<16x8xf32>, vector<8x16xf32> -> vector<8x16xf32>
    %166 = vector.extract_strided_slice %158 {offsets = [0, 16], sizes = [8, 8], strides = [1, 1]} : vector<8x32xf32> to vector<8x8xf32>
    %167 = vector.extract_strided_slice %159 {offsets = [0, 16], sizes = [16, 8], strides = [1, 1]} : vector<16x32xf32> to vector<16x8xf32>
    %cst_60 = arith.constant dense<0.000000e+00> : vector<8x16xf32>
    %168 = tpu.matmul %166, %167, %cst_60 {dimension_numbers = #tpu.dot_dimension_numbers<[1], [1], [0], [0], [0, 0, 1, 0], [], []>} : vector<8x8xf32>, vector<16x8xf32>, vector<8x16xf32> -> vector<8x16xf32>
    %169 = vector.extract_strided_slice %158 {offsets = [0, 24], sizes = [8, 8], strides = [1, 1]} : vector<8x32xf32> to vector<8x8xf32>
    %170 = vector.extract_strided_slice %159 {offsets = [0, 24], sizes = [16, 8], strides = [1, 1]} : vector<16x32xf32> to vector<16x8xf32>
    %cst_61 = arith.constant dense<0.000000e+00> : vector<8x16xf32>
    %171 = tpu.matmul %169, %170, %cst_61 {dimension_numbers = #tpu.dot_dimension_numbers<[1], [1], [0], [0], [0, 0, 1, 0], [], []>} : vector<8x8xf32>, vector<16x8xf32>, vector<8x16xf32> -> vector<8x16xf32>
    %172 = tpu.concatenate %148, %151, %154, %157, %162, %165, %168, %171 in 0 : vector<8x16xf32>, vector<8x16xf32>, vector<8x16xf32>, vector<8x16xf32>, vector<8x16xf32>, vector<8x16xf32>, vector<8x16xf32>, vector<8x16xf32> -> vector<64x16xf32>
    %cst_62 = arith.constant dense<0xFF800000> : vector<64xf32>
    %173 = vector.multi_reduction <maximumf>, %172, %cst_62 [1] : vector<64x16xf32> to vector<64xf32>
    %174 = vector.shape_cast %173 : vector<64xf32> to vector<64x1xf32>
    %175 = vector.broadcast %174 : vector<64x1xf32> to vector<64x16xf32>
    %176 = arith.subf %172, %175 : vector<64x16xf32>
    %177 = math.exp %176 : vector<64x16xf32>
    %cst_63 = arith.constant dense<0.000000e+00> : vector<64xf32>
    %178 = vector.multi_reduction <add>, %177, %cst_63 [1] : vector<64x16xf32> to vector<64xf32>
    %179 = vector.shape_cast %178 : vector<64xf32> to vector<64x1xf32>
    %180 = tpu.reciprocal %179 : vector<64x1xf32> -> vector<64x1xf32>
    %181 = vector.broadcast %180 : vector<64x1xf32> to vector<64x16xf32>
    %182 = arith.mulf %177, %181 : vector<64x16xf32>
    %183 = vector.extract_strided_slice %138 {offsets = [0, 0], sizes = [16, 32], strides = [1, 1]} : vector<32x32xf32> to vector<16x32xf32>
    %184 = vector.extract_strided_slice %182 {offsets = [0, 0], sizes = [8, 16], strides = [1, 1]} : vector<64x16xf32> to vector<8x16xf32>
    %185 = vector.extract_strided_slice %183 {offsets = [0, 0], sizes = [16, 8], strides = [1, 1]} : vector<16x32xf32> to vector<16x8xf32>
    %cst_64 = arith.constant dense<0.000000e+00> : vector<8x8xf32>
    %186 = tpu.matmul %184, %185, %cst_64 {dimension_numbers = #tpu.dot_dimension_numbers<[1], [0], [0], [1], [0, 0, 1, 1], [], []>} : vector<8x16xf32>, vector<16x8xf32>, vector<8x8xf32> -> vector<8x8xf32>
    %187 = vector.extract_strided_slice %182 {offsets = [8, 0], sizes = [8, 16], strides = [1, 1]} : vector<64x16xf32> to vector<8x16xf32>
    %188 = vector.extract_strided_slice %183 {offsets = [0, 8], sizes = [16, 8], strides = [1, 1]} : vector<16x32xf32> to vector<16x8xf32>
    %cst_65 = arith.constant dense<0.000000e+00> : vector<8x8xf32>
    %189 = tpu.matmul %187, %188, %cst_65 {dimension_numbers = #tpu.dot_dimension_numbers<[1], [0], [0], [1], [0, 0, 1, 1], [], []>} : vector<8x16xf32>, vector<16x8xf32>, vector<8x8xf32> -> vector<8x8xf32>
    %190 = vector.extract_strided_slice %182 {offsets = [16, 0], sizes = [8, 16], strides = [1, 1]} : vector<64x16xf32> to vector<8x16xf32>
    %191 = vector.extract_strided_slice %183 {offsets = [0, 16], sizes = [16, 8], strides = [1, 1]} : vector<16x32xf32> to vector<16x8xf32>
    %cst_66 = arith.constant dense<0.000000e+00> : vector<8x8xf32>
    %192 = tpu.matmul %190, %191, %cst_66 {dimension_numbers = #tpu.dot_dimension_numbers<[1], [0], [0], [1], [0, 0, 1, 1], [], []>} : vector<8x16xf32>, vector<16x8xf32>, vector<8x8xf32> -> vector<8x8xf32>
    %193 = vector.extract_strided_slice %182 {offsets = [24, 0], sizes = [8, 16], strides = [1, 1]} : vector<64x16xf32> to vector<8x16xf32>
    %194 = vector.extract_strided_slice %183 {offsets = [0, 24], sizes = [16, 8], strides = [1, 1]} : vector<16x32xf32> to vector<16x8xf32>
    %cst_67 = arith.constant dense<0.000000e+00> : vector<8x8xf32>
    %195 = tpu.matmul %193, %194, %cst_67 {dimension_numbers = #tpu.dot_dimension_numbers<[1], [0], [0], [1], [0, 0, 1, 1], [], []>} : vector<8x16xf32>, vector<16x8xf32>, vector<8x8xf32> -> vector<8x8xf32>
    %196 = tpu.concatenate %186, %189, %192, %195 in 1 : vector<8x8xf32>, vector<8x8xf32>, vector<8x8xf32>, vector<8x8xf32> -> vector<8x32xf32>
    %197 = vector.extract_strided_slice %138 {offsets = [16, 0], sizes = [16, 32], strides = [1, 1]} : vector<32x32xf32> to vector<16x32xf32>
    %198 = vector.extract_strided_slice %182 {offsets = [32, 0], sizes = [8, 16], strides = [1, 1]} : vector<64x16xf32> to vector<8x16xf32>
    %199 = vector.extract_strided_slice %197 {offsets = [0, 0], sizes = [16, 8], strides = [1, 1]} : vector<16x32xf32> to vector<16x8xf32>
    %cst_68 = arith.constant dense<0.000000e+00> : vector<8x8xf32>
    %200 = tpu.matmul %198, %199, %cst_68 {dimension_numbers = #tpu.dot_dimension_numbers<[1], [0], [0], [1], [0, 0, 1, 1], [], []>} : vector<8x16xf32>, vector<16x8xf32>, vector<8x8xf32> -> vector<8x8xf32>
    %201 = vector.extract_strided_slice %182 {offsets = [40, 0], sizes = [8, 16], strides = [1, 1]} : vector<64x16xf32> to vector<8x16xf32>
    %202 = vector.extract_strided_slice %197 {offsets = [0, 8], sizes = [16, 8], strides = [1, 1]} : vector<16x32xf32> to vector<16x8xf32>
    %cst_69 = arith.constant dense<0.000000e+00> : vector<8x8xf32>
    %203 = tpu.matmul %201, %202, %cst_69 {dimension_numbers = #tpu.dot_dimension_numbers<[1], [0], [0], [1], [0, 0, 1, 1], [], []>} : vector<8x16xf32>, vector<16x8xf32>, vector<8x8xf32> -> vector<8x8xf32>
    %204 = vector.extract_strided_slice %182 {offsets = [48, 0], sizes = [8, 16], strides = [1, 1]} : vector<64x16xf32> to vector<8x16xf32>
    %205 = vector.extract_strided_slice %197 {offsets = [0, 16], sizes = [16, 8], strides = [1, 1]} : vector<16x32xf32> to vector<16x8xf32>
    %cst_70 = arith.constant dense<0.000000e+00> : vector<8x8xf32>
    %206 = tpu.matmul %204, %205, %cst_70 {dimension_numbers = #tpu.dot_dimension_numbers<[1], [0], [0], [1], [0, 0, 1, 1], [], []>} : vector<8x16xf32>, vector<16x8xf32>, vector<8x8xf32> -> vector<8x8xf32>
    %207 = vector.extract_strided_slice %182 {offsets = [56, 0], sizes = [8, 16], strides = [1, 1]} : vector<64x16xf32> to vector<8x16xf32>
    %208 = vector.extract_strided_slice %197 {offsets = [0, 24], sizes = [16, 8], strides = [1, 1]} : vector<16x32xf32> to vector<16x8xf32>
    %cst_71 = arith.constant dense<0.000000e+00> : vector<8x8xf32>
    %209 = tpu.matmul %207, %208, %cst_71 {dimension_numbers = #tpu.dot_dimension_numbers<[1], [0], [0], [1], [0, 0, 1, 1], [], []>} : vector<8x16xf32>, vector<16x8xf32>, vector<8x8xf32> -> vector<8x8xf32>
    %210 = tpu.concatenate %200, %203, %206, %209 in 1 : vector<8x8xf32>, vector<8x8xf32>, vector<8x8xf32>, vector<8x8xf32> -> vector<8x32xf32>
    %211 = tpu.concatenate %196, %210 in 0 : vector<8x32xf32>, vector<8x32xf32> -> vector<16x32xf32>
    %cst_72 = arith.constant dense<0.000000e+00> : vector<16x32xf32>
    %212 = tpu.matmul %211, %140, %cst_72 {dimension_numbers = #tpu.dot_dimension_numbers<[1], [0], [0], [1], [0, 0, 1, 1], [], []>} : vector<16x32xf32>, vector<32x32xf32>, vector<16x32xf32> -> vector<16x32xf32>
    %213 = vector.broadcast %141 : vector<1x32xf32> to vector<16x32xf32>
    %214 = arith.addf %212, %213 : vector<16x32xf32>
    %215 = arith.addf %120, %214 : vector<16x32xf32>
    %216 = vector.extract_strided_slice %3 {offsets = [11, 0], sizes = [1, 32], strides = [1, 1]} : vector<17x32xf32> to vector<1x32xf32>
    %217 = vector.extract_strided_slice %3 {offsets = [12, 0], sizes = [1, 32], strides = [1, 1]} : vector<17x32xf32> to vector<1x32xf32>
    %cst_73 = arith.constant dense<0.000000e+00> : vector<16xf32>
    %218 = vector.multi_reduction <add>, %215, %cst_73 [1] : vector<16x32xf32> to vector<16xf32>
    %219 = vector.shape_cast %218 : vector<16xf32> to vector<16x1xf32>
    %cst_74 = arith.constant 3.200000e+01 : f32
    %220 = vector.broadcast %cst_74 : f32 to vector<16x1xf32>
    %221 = arith.divf %219, %220 : vector<16x1xf32>
    %222 = vector.broadcast %221 : vector<16x1xf32> to vector<16x32xf32>
    %223 = arith.subf %215, %222 : vector<16x32xf32>
    %224 = arith.mulf %223, %223 : vector<16x32xf32>
    %cst_75 = arith.constant dense<0.000000e+00> : vector<16xf32>
    %225 = vector.multi_reduction <add>, %224, %cst_75 [1] : vector<16x32xf32> to vector<16xf32>
    %226 = vector.shape_cast %225 : vector<16xf32> to vector<16x1xf32>
    %cst_76 = arith.constant 3.200000e+01 : f32
    %227 = vector.broadcast %cst_76 : f32 to vector<16x1xf32>
    %228 = arith.divf %226, %227 : vector<16x1xf32>
    %cst_77 = arith.constant 9.99999974E-6 : f32
    %229 = vector.broadcast %cst_77 : f32 to vector<16x1xf32>
    %230 = arith.addf %228, %229 : vector<16x1xf32>
    %231 = math.rsqrt %230 : vector<16x1xf32>
    %232 = vector.broadcast %231 : vector<16x1xf32> to vector<16x32xf32>
    %233 = arith.mulf %223, %232 : vector<16x32xf32>
    %234 = vector.broadcast %216 : vector<1x32xf32> to vector<16x32xf32>
    %235 = arith.mulf %233, %234 : vector<16x32xf32>
    %236 = vector.broadcast %217 : vector<1x32xf32> to vector<16x32xf32>
    %237 = arith.addf %235, %236 : vector<16x32xf32>
    %c0_78 = arith.constant 0 : index
    %c0_79 = arith.constant 0 : index
    %c0_80 = arith.constant 0 : index
    %238 = vector.load %arg3[%c0_78, %c0_79, %c0_80] : memref<2x33x64xf32, #tpu.memory_space<vmem>>, vector<1x32x64xf32>
    %239 = vector.shape_cast %238 : vector<1x32x64xf32> to vector<32x64xf32>
    %c0_81 = arith.constant 0 : index
    %c32_82 = arith.constant 32 : index
    %c0_83 = arith.constant 0 : index
    %240 = vector.load %arg3[%c0_81, %c32_82, %c0_83] : memref<2x33x64xf32, #tpu.memory_space<vmem>>, vector<1x1x64xf32>
    %241 = vector.shape_cast %240 : vector<1x1x64xf32> to vector<1x64xf32>
    %c0_84 = arith.constant 0 : index
    %c0_85 = arith.constant 0 : index
    %c0_86 = arith.constant 0 : index
    %242 = vector.load %arg4[%c0_84, %c0_85, %c0_86] : memref<2x64x32xf32, #tpu.memory_space<vmem>>, vector<1x64x32xf32>
    %243 = vector.shape_cast %242 : vector<1x64x32xf32> to vector<64x32xf32>
    %cst_87 = arith.constant dense<0.000000e+00> : vector<16x64xf32>
    %244 = tpu.matmul %237, %239, %cst_87 {dimension_numbers = #tpu.dot_dimension_numbers<[1], [0], [0], [1], [0, 0, 1, 1], [], []>} : vector<16x32xf32>, vector<32x64xf32>, vector<16x64xf32> -> vector<16x64xf32>
    %245 = vector.broadcast %241 : vector<1x64xf32> to vector<16x64xf32>
    %246 = arith.addf %244, %245 : vector<16x64xf32>
    %cst_88 = arith.constant 0.000000e+00 : f32
    %247 = vector.broadcast %cst_88 : f32 to vector<16x64xf32>
    %248 = arith.maximumf %246, %247 : vector<16x64xf32>
    %cst_89 = arith.constant dense<0.000000e+00> : vector<16x32xf32>
    %249 = tpu.matmul %248, %243, %cst_89 {dimension_numbers = #tpu.dot_dimension_numbers<[1], [0], [0], [1], [0, 0, 1, 1], [], []>} : vector<16x64xf32>, vector<64x32xf32>, vector<16x32xf32> -> vector<16x32xf32>
    %250 = vector.extract_strided_slice %3 {offsets = [8, 0], sizes = [1, 32], strides = [1, 1]} : vector<17x32xf32> to vector<1x32xf32>
    %251 = vector.broadcast %250 : vector<1x32xf32> to vector<16x32xf32>
    %252 = arith.addf %249, %251 : vector<16x32xf32>
    %253 = arith.addf %237, %252 : vector<16x32xf32>
    %254 = vector.extract_strided_slice %3 {offsets = [13, 0], sizes = [1, 32], strides = [1, 1]} : vector<17x32xf32> to vector<1x32xf32>
    %255 = vector.extract_strided_slice %3 {offsets = [14, 0], sizes = [1, 32], strides = [1, 1]} : vector<17x32xf32> to vector<1x32xf32>
    %cst_90 = arith.constant dense<0.000000e+00> : vector<16xf32>
    %256 = vector.multi_reduction <add>, %253, %cst_90 [1] : vector<16x32xf32> to vector<16xf32>
    %257 = vector.shape_cast %256 : vector<16xf32> to vector<16x1xf32>
    %cst_91 = arith.constant 3.200000e+01 : f32
    %258 = vector.broadcast %cst_91 : f32 to vector<16x1xf32>
    %259 = arith.divf %257, %258 : vector<16x1xf32>
    %260 = vector.broadcast %259 : vector<16x1xf32> to vector<16x32xf32>
    %261 = arith.subf %253, %260 : vector<16x32xf32>
    %262 = arith.mulf %261, %261 : vector<16x32xf32>
    %cst_92 = arith.constant dense<0.000000e+00> : vector<16xf32>
    %263 = vector.multi_reduction <add>, %262, %cst_92 [1] : vector<16x32xf32> to vector<16xf32>
    %264 = vector.shape_cast %263 : vector<16xf32> to vector<16x1xf32>
    %cst_93 = arith.constant 3.200000e+01 : f32
    %265 = vector.broadcast %cst_93 : f32 to vector<16x1xf32>
    %266 = arith.divf %264, %265 : vector<16x1xf32>
    %cst_94 = arith.constant 9.99999974E-6 : f32
    %267 = vector.broadcast %cst_94 : f32 to vector<16x1xf32>
    %268 = arith.addf %266, %267 : vector<16x1xf32>
    %269 = math.rsqrt %268 : vector<16x1xf32>
    %270 = vector.broadcast %269 : vector<16x1xf32> to vector<16x32xf32>
    %271 = arith.mulf %261, %270 : vector<16x32xf32>
    %272 = vector.broadcast %254 : vector<1x32xf32> to vector<16x32xf32>
    %273 = arith.mulf %271, %272 : vector<16x32xf32>
    %274 = vector.broadcast %255 : vector<1x32xf32> to vector<16x32xf32>
    %275 = arith.addf %273, %274 : vector<16x32xf32>
    %c1 = arith.constant 1 : index
    %c0_95 = arith.constant 0 : index
    %c0_96 = arith.constant 0 : index
    %276 = vector.load %arg5[%c1, %c0_95, %c0_96] : memref<2x17x32xf32, #tpu.memory_space<vmem>>, vector<1x17x32xf32>
    %277 = vector.shape_cast %276 : vector<1x17x32xf32> to vector<17x32xf32>
    %c1_97 = arith.constant 1 : index
    %c0_98 = arith.constant 0 : index
    %c0_99 = arith.constant 0 : index
    %278 = vector.load %arg2[%c1_97, %c0_98, %c0_99] : memref<2x256x32xf32, #tpu.memory_space<vmem>>, vector<1x32x32xf32>
    %279 = vector.shape_cast %278 : vector<1x32x32xf32> to vector<32x32xf32>
    %cst_100 = arith.constant dense<0.000000e+00> : vector<16x32xf32>
    %280 = tpu.matmul %275, %279, %cst_100 {dimension_numbers = #tpu.dot_dimension_numbers<[1], [0], [0], [1], [0, 0, 1, 1], [], []>} : vector<16x32xf32>, vector<32x32xf32>, vector<16x32xf32> -> vector<16x32xf32>
    %281 = vector.extract_strided_slice %277 {offsets = [0, 0], sizes = [1, 32], strides = [1, 1]} : vector<17x32xf32> to vector<1x32xf32>
    %282 = vector.broadcast %281 : vector<1x32xf32> to vector<16x32xf32>
    %283 = arith.addf %280, %282 : vector<16x32xf32>
    %c1_101 = arith.constant 1 : index
    %c32_102 = arith.constant 32 : index
    %c0_103 = arith.constant 0 : index
    %284 = vector.load %arg2[%c1_101, %c32_102, %c0_103] : memref<2x256x32xf32, #tpu.memory_space<vmem>>, vector<1x32x32xf32>
    %285 = vector.shape_cast %284 : vector<1x32x32xf32> to vector<32x32xf32>
    %cst_104 = arith.constant dense<0.000000e+00> : vector<16x32xf32>
    %286 = tpu.matmul %275, %285, %cst_104 {dimension_numbers = #tpu.dot_dimension_numbers<[1], [0], [0], [1], [0, 0, 1, 1], [], []>} : vector<16x32xf32>, vector<32x32xf32>, vector<16x32xf32> -> vector<16x32xf32>
    %287 = vector.extract_strided_slice %277 {offsets = [1, 0], sizes = [1, 32], strides = [1, 1]} : vector<17x32xf32> to vector<1x32xf32>
    %288 = vector.broadcast %287 : vector<1x32xf32> to vector<16x32xf32>
    %289 = arith.addf %286, %288 : vector<16x32xf32>
    %c1_105 = arith.constant 1 : index
    %c64_106 = arith.constant 64 : index
    %c0_107 = arith.constant 0 : index
    %290 = vector.load %arg2[%c1_105, %c64_106, %c0_107] : memref<2x256x32xf32, #tpu.memory_space<vmem>>, vector<1x32x32xf32>
    %291 = vector.shape_cast %290 : vector<1x32x32xf32> to vector<32x32xf32>
    %cst_108 = arith.constant dense<0.000000e+00> : vector<16x32xf32>
    %292 = tpu.matmul %275, %291, %cst_108 {dimension_numbers = #tpu.dot_dimension_numbers<[1], [0], [0], [1], [0, 0, 1, 1], [], []>} : vector<16x32xf32>, vector<32x32xf32>, vector<16x32xf32> -> vector<16x32xf32>
    %293 = vector.extract_strided_slice %277 {offsets = [2, 0], sizes = [1, 32], strides = [1, 1]} : vector<17x32xf32> to vector<1x32xf32>
    %294 = vector.broadcast %293 : vector<1x32xf32> to vector<16x32xf32>
    %295 = arith.addf %292, %294 : vector<16x32xf32>
    %c1_109 = arith.constant 1 : index
    %c96_110 = arith.constant 96 : index
    %c0_111 = arith.constant 0 : index
    %296 = vector.load %arg2[%c1_109, %c96_110, %c0_111] : memref<2x256x32xf32, #tpu.memory_space<vmem>>, vector<1x32x32xf32>
    %297 = vector.shape_cast %296 : vector<1x32x32xf32> to vector<32x32xf32>
    %298 = vector.extract_strided_slice %277 {offsets = [3, 0], sizes = [1, 32], strides = [1, 1]} : vector<17x32xf32> to vector<1x32xf32>
    %cst_112 = arith.constant 0.353553385 : f32
    %299 = vector.broadcast %cst_112 : f32 to vector<16x32xf32>
    %300 = arith.mulf %283, %299 : vector<16x32xf32>
    %301 = vector.extract_strided_slice %300 {offsets = [0, 0], sizes = [8, 32], strides = [1, 1]} : vector<16x32xf32> to vector<8x32xf32>
    %302 = vector.extract_strided_slice %289 {offsets = [0, 0], sizes = [8, 32], strides = [1, 1]} : vector<16x32xf32> to vector<8x32xf32>
    %303 = vector.extract_strided_slice %301 {offsets = [0, 0], sizes = [8, 8], strides = [1, 1]} : vector<8x32xf32> to vector<8x8xf32>
    %304 = vector.extract_strided_slice %302 {offsets = [0, 0], sizes = [8, 8], strides = [1, 1]} : vector<8x32xf32> to vector<8x8xf32>
    %cst_113 = arith.constant dense<0.000000e+00> : vector<8x8xf32>
    %305 = tpu.matmul %303, %304, %cst_113 {dimension_numbers = #tpu.dot_dimension_numbers<[1], [1], [0], [0], [0, 0, 1, 0], [], []>} : vector<8x8xf32>, vector<8x8xf32>, vector<8x8xf32> -> vector<8x8xf32>
    %306 = vector.extract_strided_slice %301 {offsets = [0, 8], sizes = [8, 8], strides = [1, 1]} : vector<8x32xf32> to vector<8x8xf32>
    %307 = vector.extract_strided_slice %302 {offsets = [0, 8], sizes = [8, 8], strides = [1, 1]} : vector<8x32xf32> to vector<8x8xf32>
    %cst_114 = arith.constant dense<0.000000e+00> : vector<8x8xf32>
    %308 = tpu.matmul %306, %307, %cst_114 {dimension_numbers = #tpu.dot_dimension_numbers<[1], [1], [0], [0], [0, 0, 1, 0], [], []>} : vector<8x8xf32>, vector<8x8xf32>, vector<8x8xf32> -> vector<8x8xf32>
    %309 = vector.extract_strided_slice %301 {offsets = [0, 16], sizes = [8, 8], strides = [1, 1]} : vector<8x32xf32> to vector<8x8xf32>
    %310 = vector.extract_strided_slice %302 {offsets = [0, 16], sizes = [8, 8], strides = [1, 1]} : vector<8x32xf32> to vector<8x8xf32>
    %cst_115 = arith.constant dense<0.000000e+00> : vector<8x8xf32>
    %311 = tpu.matmul %309, %310, %cst_115 {dimension_numbers = #tpu.dot_dimension_numbers<[1], [1], [0], [0], [0, 0, 1, 0], [], []>} : vector<8x8xf32>, vector<8x8xf32>, vector<8x8xf32> -> vector<8x8xf32>
    %312 = vector.extract_strided_slice %301 {offsets = [0, 24], sizes = [8, 8], strides = [1, 1]} : vector<8x32xf32> to vector<8x8xf32>
    %313 = vector.extract_strided_slice %302 {offsets = [0, 24], sizes = [8, 8], strides = [1, 1]} : vector<8x32xf32> to vector<8x8xf32>
    %cst_116 = arith.constant dense<0.000000e+00> : vector<8x8xf32>
    %314 = tpu.matmul %312, %313, %cst_116 {dimension_numbers = #tpu.dot_dimension_numbers<[1], [1], [0], [0], [0, 0, 1, 0], [], []>} : vector<8x8xf32>, vector<8x8xf32>, vector<8x8xf32> -> vector<8x8xf32>
    %315 = vector.extract_strided_slice %300 {offsets = [8, 0], sizes = [8, 32], strides = [1, 1]} : vector<16x32xf32> to vector<8x32xf32>
    %316 = vector.extract_strided_slice %289 {offsets = [8, 0], sizes = [8, 32], strides = [1, 1]} : vector<16x32xf32> to vector<8x32xf32>
    %317 = vector.extract_strided_slice %315 {offsets = [0, 0], sizes = [8, 8], strides = [1, 1]} : vector<8x32xf32> to vector<8x8xf32>
    %318 = vector.extract_strided_slice %316 {offsets = [0, 0], sizes = [8, 8], strides = [1, 1]} : vector<8x32xf32> to vector<8x8xf32>
    %cst_117 = arith.constant dense<0.000000e+00> : vector<8x8xf32>
    %319 = tpu.matmul %317, %318, %cst_117 {dimension_numbers = #tpu.dot_dimension_numbers<[1], [1], [0], [0], [0, 0, 1, 0], [], []>} : vector<8x8xf32>, vector<8x8xf32>, vector<8x8xf32> -> vector<8x8xf32>
    %320 = vector.extract_strided_slice %315 {offsets = [0, 8], sizes = [8, 8], strides = [1, 1]} : vector<8x32xf32> to vector<8x8xf32>
    %321 = vector.extract_strided_slice %316 {offsets = [0, 8], sizes = [8, 8], strides = [1, 1]} : vector<8x32xf32> to vector<8x8xf32>
    %cst_118 = arith.constant dense<0.000000e+00> : vector<8x8xf32>
    %322 = tpu.matmul %320, %321, %cst_118 {dimension_numbers = #tpu.dot_dimension_numbers<[1], [1], [0], [0], [0, 0, 1, 0], [], []>} : vector<8x8xf32>, vector<8x8xf32>, vector<8x8xf32> -> vector<8x8xf32>
    %323 = vector.extract_strided_slice %315 {offsets = [0, 16], sizes = [8, 8], strides = [1, 1]} : vector<8x32xf32> to vector<8x8xf32>
    %324 = vector.extract_strided_slice %316 {offsets = [0, 16], sizes = [8, 8], strides = [1, 1]} : vector<8x32xf32> to vector<8x8xf32>
    %cst_119 = arith.constant dense<0.000000e+00> : vector<8x8xf32>
    %325 = tpu.matmul %323, %324, %cst_119 {dimension_numbers = #tpu.dot_dimension_numbers<[1], [1], [0], [0], [0, 0, 1, 0], [], []>} : vector<8x8xf32>, vector<8x8xf32>, vector<8x8xf32> -> vector<8x8xf32>
    %326 = vector.extract_strided_slice %315 {offsets = [0, 24], sizes = [8, 8], strides = [1, 1]} : vector<8x32xf32> to vector<8x8xf32>
    %327 = vector.extract_strided_slice %316 {offsets = [0, 24], sizes = [8, 8], strides = [1, 1]} : vector<8x32xf32> to vector<8x8xf32>
    %cst_120 = arith.constant dense<0.000000e+00> : vector<8x8xf32>
    %328 = tpu.matmul %326, %327, %cst_120 {dimension_numbers = #tpu.dot_dimension_numbers<[1], [1], [0], [0], [0, 0, 1, 0], [], []>} : vector<8x8xf32>, vector<8x8xf32>, vector<8x8xf32> -> vector<8x8xf32>
    %329 = tpu.concatenate %305, %308, %311, %314, %319, %322, %325, %328 in 0 : vector<8x8xf32>, vector<8x8xf32>, vector<8x8xf32>, vector<8x8xf32>, vector<8x8xf32>, vector<8x8xf32>, vector<8x8xf32>, vector<8x8xf32> -> vector<64x8xf32>
    %cst_121 = arith.constant dense<0xFF800000> : vector<64xf32>
    %330 = vector.multi_reduction <maximumf>, %329, %cst_121 [1] : vector<64x8xf32> to vector<64xf32>
    %331 = vector.shape_cast %330 : vector<64xf32> to vector<64x1xf32>
    %332 = vector.broadcast %331 : vector<64x1xf32> to vector<64x8xf32>
    %333 = arith.subf %329, %332 : vector<64x8xf32>
    %334 = math.exp %333 : vector<64x8xf32>
    %cst_122 = arith.constant dense<0.000000e+00> : vector<64xf32>
    %335 = vector.multi_reduction <add>, %334, %cst_122 [1] : vector<64x8xf32> to vector<64xf32>
    %336 = vector.shape_cast %335 : vector<64xf32> to vector<64x1xf32>
    %337 = tpu.reciprocal %336 : vector<64x1xf32> -> vector<64x1xf32>
    %338 = vector.broadcast %337 : vector<64x1xf32> to vector<64x8xf32>
    %339 = arith.mulf %334, %338 : vector<64x8xf32>
    %340 = vector.extract_strided_slice %295 {offsets = [0, 0], sizes = [8, 32], strides = [1, 1]} : vector<16x32xf32> to vector<8x32xf32>
    %341 = vector.extract_strided_slice %339 {offsets = [0, 0], sizes = [8, 8], strides = [1, 1]} : vector<64x8xf32> to vector<8x8xf32>
    %342 = vector.extract_strided_slice %340 {offsets = [0, 0], sizes = [8, 8], strides = [1, 1]} : vector<8x32xf32> to vector<8x8xf32>
    %cst_123 = arith.constant dense<0.000000e+00> : vector<8x8xf32>
    %343 = tpu.matmul %341, %342, %cst_123 {dimension_numbers = #tpu.dot_dimension_numbers<[1], [0], [0], [1], [0, 0, 1, 1], [], []>} : vector<8x8xf32>, vector<8x8xf32>, vector<8x8xf32> -> vector<8x8xf32>
    %344 = vector.extract_strided_slice %339 {offsets = [8, 0], sizes = [8, 8], strides = [1, 1]} : vector<64x8xf32> to vector<8x8xf32>
    %345 = vector.extract_strided_slice %340 {offsets = [0, 8], sizes = [8, 8], strides = [1, 1]} : vector<8x32xf32> to vector<8x8xf32>
    %cst_124 = arith.constant dense<0.000000e+00> : vector<8x8xf32>
    %346 = tpu.matmul %344, %345, %cst_124 {dimension_numbers = #tpu.dot_dimension_numbers<[1], [0], [0], [1], [0, 0, 1, 1], [], []>} : vector<8x8xf32>, vector<8x8xf32>, vector<8x8xf32> -> vector<8x8xf32>
    %347 = vector.extract_strided_slice %339 {offsets = [16, 0], sizes = [8, 8], strides = [1, 1]} : vector<64x8xf32> to vector<8x8xf32>
    %348 = vector.extract_strided_slice %340 {offsets = [0, 16], sizes = [8, 8], strides = [1, 1]} : vector<8x32xf32> to vector<8x8xf32>
    %cst_125 = arith.constant dense<0.000000e+00> : vector<8x8xf32>
    %349 = tpu.matmul %347, %348, %cst_125 {dimension_numbers = #tpu.dot_dimension_numbers<[1], [0], [0], [1], [0, 0, 1, 1], [], []>} : vector<8x8xf32>, vector<8x8xf32>, vector<8x8xf32> -> vector<8x8xf32>
    %350 = vector.extract_strided_slice %339 {offsets = [24, 0], sizes = [8, 8], strides = [1, 1]} : vector<64x8xf32> to vector<8x8xf32>
    %351 = vector.extract_strided_slice %340 {offsets = [0, 24], sizes = [8, 8], strides = [1, 1]} : vector<8x32xf32> to vector<8x8xf32>
    %cst_126 = arith.constant dense<0.000000e+00> : vector<8x8xf32>
    %352 = tpu.matmul %350, %351, %cst_126 {dimension_numbers = #tpu.dot_dimension_numbers<[1], [0], [0], [1], [0, 0, 1, 1], [], []>} : vector<8x8xf32>, vector<8x8xf32>, vector<8x8xf32> -> vector<8x8xf32>
    %353 = tpu.concatenate %343, %346, %349, %352 in 1 : vector<8x8xf32>, vector<8x8xf32>, vector<8x8xf32>, vector<8x8xf32> -> vector<8x32xf32>
    %354 = vector.extract_strided_slice %295 {offsets = [8, 0], sizes = [8, 32], strides = [1, 1]} : vector<16x32xf32> to vector<8x32xf32>
    %355 = vector.extract_strided_slice %339 {offsets = [32, 0], sizes = [8, 8], strides = [1, 1]} : vector<64x8xf32> to vector<8x8xf32>
    %356 = vector.extract_strided_slice %354 {offsets = [0, 0], sizes = [8, 8], strides = [1, 1]} : vector<8x32xf32> to vector<8x8xf32>
    %cst_127 = arith.constant dense<0.000000e+00> : vector<8x8xf32>
    %357 = tpu.matmul %355, %356, %cst_127 {dimension_numbers = #tpu.dot_dimension_numbers<[1], [0], [0], [1], [0, 0, 1, 1], [], []>} : vector<8x8xf32>, vector<8x8xf32>, vector<8x8xf32> -> vector<8x8xf32>
    %358 = vector.extract_strided_slice %339 {offsets = [40, 0], sizes = [8, 8], strides = [1, 1]} : vector<64x8xf32> to vector<8x8xf32>
    %359 = vector.extract_strided_slice %354 {offsets = [0, 8], sizes = [8, 8], strides = [1, 1]} : vector<8x32xf32> to vector<8x8xf32>
    %cst_128 = arith.constant dense<0.000000e+00> : vector<8x8xf32>
    %360 = tpu.matmul %358, %359, %cst_128 {dimension_numbers = #tpu.dot_dimension_numbers<[1], [0], [0], [1], [0, 0, 1, 1], [], []>} : vector<8x8xf32>, vector<8x8xf32>, vector<8x8xf32> -> vector<8x8xf32>
    %361 = vector.extract_strided_slice %339 {offsets = [48, 0], sizes = [8, 8], strides = [1, 1]} : vector<64x8xf32> to vector<8x8xf32>
    %362 = vector.extract_strided_slice %354 {offsets = [0, 16], sizes = [8, 8], strides = [1, 1]} : vector<8x32xf32> to vector<8x8xf32>
    %cst_129 = arith.constant dense<0.000000e+00> : vector<8x8xf32>
    %363 = tpu.matmul %361, %362, %cst_129 {dimension_numbers = #tpu.dot_dimension_numbers<[1], [0], [0], [1], [0, 0, 1, 1], [], []>} : vector<8x8xf32>, vector<8x8xf32>, vector<8x8xf32> -> vector<8x8xf32>
    %364 = vector.extract_strided_slice %339 {offsets = [56, 0], sizes = [8, 8], strides = [1, 1]} : vector<64x8xf32> to vector<8x8xf32>
    %365 = vector.extract_strided_slice %354 {offsets = [0, 24], sizes = [8, 8], strides = [1, 1]} : vector<8x32xf32> to vector<8x8xf32>
    %cst_130 = arith.constant dense<0.000000e+00> : vector<8x8xf32>
    %366 = tpu.matmul %364, %365, %cst_130 {dimension_numbers = #tpu.dot_dimension_numbers<[1], [0], [0], [1], [0, 0, 1, 1], [], []>} : vector<8x8xf32>, vector<8x8xf32>, vector<8x8xf32> -> vector<8x8xf32>
    %367 = tpu.concatenate %357, %360, %363, %366 in 1 : vector<8x8xf32>, vector<8x8xf32>, vector<8x8xf32>, vector<8x8xf32> -> vector<8x32xf32>
    %368 = tpu.concatenate %353, %367 in 0 : vector<8x32xf32>, vector<8x32xf32> -> vector<16x32xf32>
    %cst_131 = arith.constant dense<0.000000e+00> : vector<16x32xf32>
    %369 = tpu.matmul %368, %297, %cst_131 {dimension_numbers = #tpu.dot_dimension_numbers<[1], [0], [0], [1], [0, 0, 1, 1], [], []>} : vector<16x32xf32>, vector<32x32xf32>, vector<16x32xf32> -> vector<16x32xf32>
    %370 = vector.broadcast %298 : vector<1x32xf32> to vector<16x32xf32>
    %371 = arith.addf %369, %370 : vector<16x32xf32>
    %372 = arith.addf %275, %371 : vector<16x32xf32>
    %373 = vector.extract_strided_slice %277 {offsets = [9, 0], sizes = [1, 32], strides = [1, 1]} : vector<17x32xf32> to vector<1x32xf32>
    %374 = vector.extract_strided_slice %277 {offsets = [10, 0], sizes = [1, 32], strides = [1, 1]} : vector<17x32xf32> to vector<1x32xf32>
    %cst_132 = arith.constant dense<0.000000e+00> : vector<16xf32>
    %375 = vector.multi_reduction <add>, %372, %cst_132 [1] : vector<16x32xf32> to vector<16xf32>
    %376 = vector.shape_cast %375 : vector<16xf32> to vector<16x1xf32>
    %cst_133 = arith.constant 3.200000e+01 : f32
    %377 = vector.broadcast %cst_133 : f32 to vector<16x1xf32>
    %378 = arith.divf %376, %377 : vector<16x1xf32>
    %379 = vector.broadcast %378 : vector<16x1xf32> to vector<16x32xf32>
    %380 = arith.subf %372, %379 : vector<16x32xf32>
    %381 = arith.mulf %380, %380 : vector<16x32xf32>
    %cst_134 = arith.constant dense<0.000000e+00> : vector<16xf32>
    %382 = vector.multi_reduction <add>, %381, %cst_134 [1] : vector<16x32xf32> to vector<16xf32>
    %383 = vector.shape_cast %382 : vector<16xf32> to vector<16x1xf32>
    %cst_135 = arith.constant 3.200000e+01 : f32
    %384 = vector.broadcast %cst_135 : f32 to vector<16x1xf32>
    %385 = arith.divf %383, %384 : vector<16x1xf32>
    %cst_136 = arith.constant 9.99999974E-6 : f32
    %386 = vector.broadcast %cst_136 : f32 to vector<16x1xf32>
    %387 = arith.addf %385, %386 : vector<16x1xf32>
    %388 = math.rsqrt %387 : vector<16x1xf32>
    %389 = vector.broadcast %388 : vector<16x1xf32> to vector<16x32xf32>
    %390 = arith.mulf %380, %389 : vector<16x32xf32>
    %391 = vector.broadcast %373 : vector<1x32xf32> to vector<16x32xf32>
    %392 = arith.mulf %390, %391 : vector<16x32xf32>
    %393 = vector.broadcast %374 : vector<1x32xf32> to vector<16x32xf32>
    %394 = arith.addf %392, %393 : vector<16x32xf32>
    %c1_137 = arith.constant 1 : index
    %c128_138 = arith.constant 128 : index
    %c0_139 = arith.constant 0 : index
    %395 = vector.load %arg2[%c1_137, %c128_138, %c0_139] : memref<2x256x32xf32, #tpu.memory_space<vmem>>, vector<1x32x32xf32>
    %396 = vector.shape_cast %395 : vector<1x32x32xf32> to vector<32x32xf32>
    %cst_140 = arith.constant dense<0.000000e+00> : vector<16x32xf32>
    %397 = tpu.matmul %394, %396, %cst_140 {dimension_numbers = #tpu.dot_dimension_numbers<[1], [0], [0], [1], [0, 0, 1, 1], [], []>} : vector<16x32xf32>, vector<32x32xf32>, vector<16x32xf32> -> vector<16x32xf32>
    %398 = vector.extract_strided_slice %277 {offsets = [4, 0], sizes = [1, 32], strides = [1, 1]} : vector<17x32xf32> to vector<1x32xf32>
    %399 = vector.broadcast %398 : vector<1x32xf32> to vector<16x32xf32>
    %400 = arith.addf %397, %399 : vector<16x32xf32>
    %c1_141 = arith.constant 1 : index
    %c160_142 = arith.constant 160 : index
    %c0_143 = arith.constant 0 : index
    %401 = vector.load %arg2[%c1_141, %c160_142, %c0_143] : memref<2x256x32xf32, #tpu.memory_space<vmem>>, vector<1x32x32xf32>
    %402 = vector.shape_cast %401 : vector<1x32x32xf32> to vector<32x32xf32>
    %cst_144 = arith.constant dense<0.000000e+00> : vector<32x32xf32>
    %403 = tpu.matmul %1, %402, %cst_144 {dimension_numbers = #tpu.dot_dimension_numbers<[1], [0], [0], [1], [0, 0, 1, 1], [], []>} : vector<32x32xf32>, vector<32x32xf32>, vector<32x32xf32> -> vector<32x32xf32>
    %404 = vector.extract_strided_slice %277 {offsets = [5, 0], sizes = [1, 32], strides = [1, 1]} : vector<17x32xf32> to vector<1x32xf32>
    %405 = vector.broadcast %404 : vector<1x32xf32> to vector<32x32xf32>
    %406 = arith.addf %403, %405 : vector<32x32xf32>
    %c1_145 = arith.constant 1 : index
    %c192_146 = arith.constant 192 : index
    %c0_147 = arith.constant 0 : index
    %407 = vector.load %arg2[%c1_145, %c192_146, %c0_147] : memref<2x256x32xf32, #tpu.memory_space<vmem>>, vector<1x32x32xf32>
    %408 = vector.shape_cast %407 : vector<1x32x32xf32> to vector<32x32xf32>
    %cst_148 = arith.constant dense<0.000000e+00> : vector<32x32xf32>
    %409 = tpu.matmul %1, %408, %cst_148 {dimension_numbers = #tpu.dot_dimension_numbers<[1], [0], [0], [1], [0, 0, 1, 1], [], []>} : vector<32x32xf32>, vector<32x32xf32>, vector<32x32xf32> -> vector<32x32xf32>
    %410 = vector.extract_strided_slice %277 {offsets = [6, 0], sizes = [1, 32], strides = [1, 1]} : vector<17x32xf32> to vector<1x32xf32>
    %411 = vector.broadcast %410 : vector<1x32xf32> to vector<32x32xf32>
    %412 = arith.addf %409, %411 : vector<32x32xf32>
    %c1_149 = arith.constant 1 : index
    %c224_150 = arith.constant 224 : index
    %c0_151 = arith.constant 0 : index
    %413 = vector.load %arg2[%c1_149, %c224_150, %c0_151] : memref<2x256x32xf32, #tpu.memory_space<vmem>>, vector<1x32x32xf32>
    %414 = vector.shape_cast %413 : vector<1x32x32xf32> to vector<32x32xf32>
    %415 = vector.extract_strided_slice %277 {offsets = [7, 0], sizes = [1, 32], strides = [1, 1]} : vector<17x32xf32> to vector<1x32xf32>
    %cst_152 = arith.constant 0.353553385 : f32
    %416 = vector.broadcast %cst_152 : f32 to vector<16x32xf32>
    %417 = arith.mulf %400, %416 : vector<16x32xf32>
    %418 = vector.extract_strided_slice %417 {offsets = [0, 0], sizes = [8, 32], strides = [1, 1]} : vector<16x32xf32> to vector<8x32xf32>
    %419 = vector.extract_strided_slice %406 {offsets = [0, 0], sizes = [16, 32], strides = [1, 1]} : vector<32x32xf32> to vector<16x32xf32>
    %420 = vector.extract_strided_slice %418 {offsets = [0, 0], sizes = [8, 8], strides = [1, 1]} : vector<8x32xf32> to vector<8x8xf32>
    %421 = vector.extract_strided_slice %419 {offsets = [0, 0], sizes = [16, 8], strides = [1, 1]} : vector<16x32xf32> to vector<16x8xf32>
    %cst_153 = arith.constant dense<0.000000e+00> : vector<8x16xf32>
    %422 = tpu.matmul %420, %421, %cst_153 {dimension_numbers = #tpu.dot_dimension_numbers<[1], [1], [0], [0], [0, 0, 1, 0], [], []>} : vector<8x8xf32>, vector<16x8xf32>, vector<8x16xf32> -> vector<8x16xf32>
    %423 = vector.extract_strided_slice %418 {offsets = [0, 8], sizes = [8, 8], strides = [1, 1]} : vector<8x32xf32> to vector<8x8xf32>
    %424 = vector.extract_strided_slice %419 {offsets = [0, 8], sizes = [16, 8], strides = [1, 1]} : vector<16x32xf32> to vector<16x8xf32>
    %cst_154 = arith.constant dense<0.000000e+00> : vector<8x16xf32>
    %425 = tpu.matmul %423, %424, %cst_154 {dimension_numbers = #tpu.dot_dimension_numbers<[1], [1], [0], [0], [0, 0, 1, 0], [], []>} : vector<8x8xf32>, vector<16x8xf32>, vector<8x16xf32> -> vector<8x16xf32>
    %426 = vector.extract_strided_slice %418 {offsets = [0, 16], sizes = [8, 8], strides = [1, 1]} : vector<8x32xf32> to vector<8x8xf32>
    %427 = vector.extract_strided_slice %419 {offsets = [0, 16], sizes = [16, 8], strides = [1, 1]} : vector<16x32xf32> to vector<16x8xf32>
    %cst_155 = arith.constant dense<0.000000e+00> : vector<8x16xf32>
    %428 = tpu.matmul %426, %427, %cst_155 {dimension_numbers = #tpu.dot_dimension_numbers<[1], [1], [0], [0], [0, 0, 1, 0], [], []>} : vector<8x8xf32>, vector<16x8xf32>, vector<8x16xf32> -> vector<8x16xf32>
    %429 = vector.extract_strided_slice %418 {offsets = [0, 24], sizes = [8, 8], strides = [1, 1]} : vector<8x32xf32> to vector<8x8xf32>
    %430 = vector.extract_strided_slice %419 {offsets = [0, 24], sizes = [16, 8], strides = [1, 1]} : vector<16x32xf32> to vector<16x8xf32>
    %cst_156 = arith.constant dense<0.000000e+00> : vector<8x16xf32>
    %431 = tpu.matmul %429, %430, %cst_156 {dimension_numbers = #tpu.dot_dimension_numbers<[1], [1], [0], [0], [0, 0, 1, 0], [], []>} : vector<8x8xf32>, vector<16x8xf32>, vector<8x16xf32> -> vector<8x16xf32>
    %432 = vector.extract_strided_slice %417 {offsets = [8, 0], sizes = [8, 32], strides = [1, 1]} : vector<16x32xf32> to vector<8x32xf32>
    %433 = vector.extract_strided_slice %406 {offsets = [16, 0], sizes = [16, 32], strides = [1, 1]} : vector<32x32xf32> to vector<16x32xf32>
    %434 = vector.extract_strided_slice %432 {offsets = [0, 0], sizes = [8, 8], strides = [1, 1]} : vector<8x32xf32> to vector<8x8xf32>
    %435 = vector.extract_strided_slice %433 {offsets = [0, 0], sizes = [16, 8], strides = [1, 1]} : vector<16x32xf32> to vector<16x8xf32>
    %cst_157 = arith.constant dense<0.000000e+00> : vector<8x16xf32>
    %436 = tpu.matmul %434, %435, %cst_157 {dimension_numbers = #tpu.dot_dimension_numbers<[1], [1], [0], [0], [0, 0, 1, 0], [], []>} : vector<8x8xf32>, vector<16x8xf32>, vector<8x16xf32> -> vector<8x16xf32>
    %437 = vector.extract_strided_slice %432 {offsets = [0, 8], sizes = [8, 8], strides = [1, 1]} : vector<8x32xf32> to vector<8x8xf32>
    %438 = vector.extract_strided_slice %433 {offsets = [0, 8], sizes = [16, 8], strides = [1, 1]} : vector<16x32xf32> to vector<16x8xf32>
    %cst_158 = arith.constant dense<0.000000e+00> : vector<8x16xf32>
    %439 = tpu.matmul %437, %438, %cst_158 {dimension_numbers = #tpu.dot_dimension_numbers<[1], [1], [0], [0], [0, 0, 1, 0], [], []>} : vector<8x8xf32>, vector<16x8xf32>, vector<8x16xf32> -> vector<8x16xf32>
    %440 = vector.extract_strided_slice %432 {offsets = [0, 16], sizes = [8, 8], strides = [1, 1]} : vector<8x32xf32> to vector<8x8xf32>
    %441 = vector.extract_strided_slice %433 {offsets = [0, 16], sizes = [16, 8], strides = [1, 1]} : vector<16x32xf32> to vector<16x8xf32>
    %cst_159 = arith.constant dense<0.000000e+00> : vector<8x16xf32>
    %442 = tpu.matmul %440, %441, %cst_159 {dimension_numbers = #tpu.dot_dimension_numbers<[1], [1], [0], [0], [0, 0, 1, 0], [], []>} : vector<8x8xf32>, vector<16x8xf32>, vector<8x16xf32> -> vector<8x16xf32>
    %443 = vector.extract_strided_slice %432 {offsets = [0, 24], sizes = [8, 8], strides = [1, 1]} : vector<8x32xf32> to vector<8x8xf32>
    %444 = vector.extract_strided_slice %433 {offsets = [0, 24], sizes = [16, 8], strides = [1, 1]} : vector<16x32xf32> to vector<16x8xf32>
    %cst_160 = arith.constant dense<0.000000e+00> : vector<8x16xf32>
    %445 = tpu.matmul %443, %444, %cst_160 {dimension_numbers = #tpu.dot_dimension_numbers<[1], [1], [0], [0], [0, 0, 1, 0], [], []>} : vector<8x8xf32>, vector<16x8xf32>, vector<8x16xf32> -> vector<8x16xf32>
    %446 = tpu.concatenate %422, %425, %428, %431, %436, %439, %442, %445 in 0 : vector<8x16xf32>, vector<8x16xf32>, vector<8x16xf32>, vector<8x16xf32>, vector<8x16xf32>, vector<8x16xf32>, vector<8x16xf32>, vector<8x16xf32> -> vector<64x16xf32>
    %cst_161 = arith.constant dense<0xFF800000> : vector<64xf32>
    %447 = vector.multi_reduction <maximumf>, %446, %cst_161 [1] : vector<64x16xf32> to vector<64xf32>
    %448 = vector.shape_cast %447 : vector<64xf32> to vector<64x1xf32>
    %449 = vector.broadcast %448 : vector<64x1xf32> to vector<64x16xf32>
    %450 = arith.subf %446, %449 : vector<64x16xf32>
    %451 = math.exp %450 : vector<64x16xf32>
    %cst_162 = arith.constant dense<0.000000e+00> : vector<64xf32>
    %452 = vector.multi_reduction <add>, %451, %cst_162 [1] : vector<64x16xf32> to vector<64xf32>
    %453 = vector.shape_cast %452 : vector<64xf32> to vector<64x1xf32>
    %454 = tpu.reciprocal %453 : vector<64x1xf32> -> vector<64x1xf32>
    %455 = vector.broadcast %454 : vector<64x1xf32> to vector<64x16xf32>
    %456 = arith.mulf %451, %455 : vector<64x16xf32>
    %457 = vector.extract_strided_slice %412 {offsets = [0, 0], sizes = [16, 32], strides = [1, 1]} : vector<32x32xf32> to vector<16x32xf32>
    %458 = vector.extract_strided_slice %456 {offsets = [0, 0], sizes = [8, 16], strides = [1, 1]} : vector<64x16xf32> to vector<8x16xf32>
    %459 = vector.extract_strided_slice %457 {offsets = [0, 0], sizes = [16, 8], strides = [1, 1]} : vector<16x32xf32> to vector<16x8xf32>
    %cst_163 = arith.constant dense<0.000000e+00> : vector<8x8xf32>
    %460 = tpu.matmul %458, %459, %cst_163 {dimension_numbers = #tpu.dot_dimension_numbers<[1], [0], [0], [1], [0, 0, 1, 1], [], []>} : vector<8x16xf32>, vector<16x8xf32>, vector<8x8xf32> -> vector<8x8xf32>
    %461 = vector.extract_strided_slice %456 {offsets = [8, 0], sizes = [8, 16], strides = [1, 1]} : vector<64x16xf32> to vector<8x16xf32>
    %462 = vector.extract_strided_slice %457 {offsets = [0, 8], sizes = [16, 8], strides = [1, 1]} : vector<16x32xf32> to vector<16x8xf32>
    %cst_164 = arith.constant dense<0.000000e+00> : vector<8x8xf32>
    %463 = tpu.matmul %461, %462, %cst_164 {dimension_numbers = #tpu.dot_dimension_numbers<[1], [0], [0], [1], [0, 0, 1, 1], [], []>} : vector<8x16xf32>, vector<16x8xf32>, vector<8x8xf32> -> vector<8x8xf32>
    %464 = vector.extract_strided_slice %456 {offsets = [16, 0], sizes = [8, 16], strides = [1, 1]} : vector<64x16xf32> to vector<8x16xf32>
    %465 = vector.extract_strided_slice %457 {offsets = [0, 16], sizes = [16, 8], strides = [1, 1]} : vector<16x32xf32> to vector<16x8xf32>
    %cst_165 = arith.constant dense<0.000000e+00> : vector<8x8xf32>
    %466 = tpu.matmul %464, %465, %cst_165 {dimension_numbers = #tpu.dot_dimension_numbers<[1], [0], [0], [1], [0, 0, 1, 1], [], []>} : vector<8x16xf32>, vector<16x8xf32>, vector<8x8xf32> -> vector<8x8xf32>
    %467 = vector.extract_strided_slice %456 {offsets = [24, 0], sizes = [8, 16], strides = [1, 1]} : vector<64x16xf32> to vector<8x16xf32>
    %468 = vector.extract_strided_slice %457 {offsets = [0, 24], sizes = [16, 8], strides = [1, 1]} : vector<16x32xf32> to vector<16x8xf32>
    %cst_166 = arith.constant dense<0.000000e+00> : vector<8x8xf32>
    %469 = tpu.matmul %467, %468, %cst_166 {dimension_numbers = #tpu.dot_dimension_numbers<[1], [0], [0], [1], [0, 0, 1, 1], [], []>} : vector<8x16xf32>, vector<16x8xf32>, vector<8x8xf32> -> vector<8x8xf32>
    %470 = tpu.concatenate %460, %463, %466, %469 in 1 : vector<8x8xf32>, vector<8x8xf32>, vector<8x8xf32>, vector<8x8xf32> -> vector<8x32xf32>
    %471 = vector.extract_strided_slice %412 {offsets = [16, 0], sizes = [16, 32], strides = [1, 1]} : vector<32x32xf32> to vector<16x32xf32>
    %472 = vector.extract_strided_slice %456 {offsets = [32, 0], sizes = [8, 16], strides = [1, 1]} : vector<64x16xf32> to vector<8x16xf32>
    %473 = vector.extract_strided_slice %471 {offsets = [0, 0], sizes = [16, 8], strides = [1, 1]} : vector<16x32xf32> to vector<16x8xf32>
    %cst_167 = arith.constant dense<0.000000e+00> : vector<8x8xf32>
    %474 = tpu.matmul %472, %473, %cst_167 {dimension_numbers = #tpu.dot_dimension_numbers<[1], [0], [0], [1], [0, 0, 1, 1], [], []>} : vector<8x16xf32>, vector<16x8xf32>, vector<8x8xf32> -> vector<8x8xf32>
    %475 = vector.extract_strided_slice %456 {offsets = [40, 0], sizes = [8, 16], strides = [1, 1]} : vector<64x16xf32> to vector<8x16xf32>
    %476 = vector.extract_strided_slice %471 {offsets = [0, 8], sizes = [16, 8], strides = [1, 1]} : vector<16x32xf32> to vector<16x8xf32>
    %cst_168 = arith.constant dense<0.000000e+00> : vector<8x8xf32>
    %477 = tpu.matmul %475, %476, %cst_168 {dimension_numbers = #tpu.dot_dimension_numbers<[1], [0], [0], [1], [0, 0, 1, 1], [], []>} : vector<8x16xf32>, vector<16x8xf32>, vector<8x8xf32> -> vector<8x8xf32>
    %478 = vector.extract_strided_slice %456 {offsets = [48, 0], sizes = [8, 16], strides = [1, 1]} : vector<64x16xf32> to vector<8x16xf32>
    %479 = vector.extract_strided_slice %471 {offsets = [0, 16], sizes = [16, 8], strides = [1, 1]} : vector<16x32xf32> to vector<16x8xf32>
    %cst_169 = arith.constant dense<0.000000e+00> : vector<8x8xf32>
    %480 = tpu.matmul %478, %479, %cst_169 {dimension_numbers = #tpu.dot_dimension_numbers<[1], [0], [0], [1], [0, 0, 1, 1], [], []>} : vector<8x16xf32>, vector<16x8xf32>, vector<8x8xf32> -> vector<8x8xf32>
    %481 = vector.extract_strided_slice %456 {offsets = [56, 0], sizes = [8, 16], strides = [1, 1]} : vector<64x16xf32> to vector<8x16xf32>
    %482 = vector.extract_strided_slice %471 {offsets = [0, 24], sizes = [16, 8], strides = [1, 1]} : vector<16x32xf32> to vector<16x8xf32>
    %cst_170 = arith.constant dense<0.000000e+00> : vector<8x8xf32>
    %483 = tpu.matmul %481, %482, %cst_170 {dimension_numbers = #tpu.dot_dimension_numbers<[1], [0], [0], [1], [0, 0, 1, 1], [], []>} : vector<8x16xf32>, vector<16x8xf32>, vector<8x8xf32> -> vector<8x8xf32>
    %484 = tpu.concatenate %474, %477, %480, %483 in 1 : vector<8x8xf32>, vector<8x8xf32>, vector<8x8xf32>, vector<8x8xf32> -> vector<8x32xf32>
    %485 = tpu.concatenate %470, %484 in 0 : vector<8x32xf32>, vector<8x32xf32> -> vector<16x32xf32>
    %cst_171 = arith.constant dense<0.000000e+00> : vector<16x32xf32>
    %486 = tpu.matmul %485, %414, %cst_171 {dimension_numbers = #tpu.dot_dimension_numbers<[1], [0], [0], [1], [0, 0, 1, 1], [], []>} : vector<16x32xf32>, vector<32x32xf32>, vector<16x32xf32> -> vector<16x32xf32>
    %487 = vector.broadcast %415 : vector<1x32xf32> to vector<16x32xf32>
    %488 = arith.addf %486, %487 : vector<16x32xf32>
    %489 = arith.addf %394, %488 : vector<16x32xf32>
    %490 = vector.extract_strided_slice %277 {offsets = [11, 0], sizes = [1, 32], strides = [1, 1]} : vector<17x32xf32> to vector<1x32xf32>
    %491 = vector.extract_strided_slice %277 {offsets = [12, 0], sizes = [1, 32], strides = [1, 1]} : vector<17x32xf32> to vector<1x32xf32>
    %cst_172 = arith.constant dense<0.000000e+00> : vector<16xf32>
    %492 = vector.multi_reduction <add>, %489, %cst_172 [1] : vector<16x32xf32> to vector<16xf32>
    %493 = vector.shape_cast %492 : vector<16xf32> to vector<16x1xf32>
    %cst_173 = arith.constant 3.200000e+01 : f32
    %494 = vector.broadcast %cst_173 : f32 to vector<16x1xf32>
    %495 = arith.divf %493, %494 : vector<16x1xf32>
    %496 = vector.broadcast %495 : vector<16x1xf32> to vector<16x32xf32>
    %497 = arith.subf %489, %496 : vector<16x32xf32>
    %498 = arith.mulf %497, %497 : vector<16x32xf32>
    %cst_174 = arith.constant dense<0.000000e+00> : vector<16xf32>
    %499 = vector.multi_reduction <add>, %498, %cst_174 [1] : vector<16x32xf32> to vector<16xf32>
    %500 = vector.shape_cast %499 : vector<16xf32> to vector<16x1xf32>
    %cst_175 = arith.constant 3.200000e+01 : f32
    %501 = vector.broadcast %cst_175 : f32 to vector<16x1xf32>
    %502 = arith.divf %500, %501 : vector<16x1xf32>
    %cst_176 = arith.constant 9.99999974E-6 : f32
    %503 = vector.broadcast %cst_176 : f32 to vector<16x1xf32>
    %504 = arith.addf %502, %503 : vector<16x1xf32>
    %505 = math.rsqrt %504 : vector<16x1xf32>
    %506 = vector.broadcast %505 : vector<16x1xf32> to vector<16x32xf32>
    %507 = arith.mulf %497, %506 : vector<16x32xf32>
    %508 = vector.broadcast %490 : vector<1x32xf32> to vector<16x32xf32>
    %509 = arith.mulf %507, %508 : vector<16x32xf32>
    %510 = vector.broadcast %491 : vector<1x32xf32> to vector<16x32xf32>
    %511 = arith.addf %509, %510 : vector<16x32xf32>
    %c1_177 = arith.constant 1 : index
    %c0_178 = arith.constant 0 : index
    %c0_179 = arith.constant 0 : index
    %512 = vector.load %arg3[%c1_177, %c0_178, %c0_179] : memref<2x33x64xf32, #tpu.memory_space<vmem>>, vector<1x32x64xf32>
    %513 = vector.shape_cast %512 : vector<1x32x64xf32> to vector<32x64xf32>
    %c1_180 = arith.constant 1 : index
    %c32_181 = arith.constant 32 : index
    %c0_182 = arith.constant 0 : index
    %514 = vector.load %arg3[%c1_180, %c32_181, %c0_182] : memref<2x33x64xf32, #tpu.memory_space<vmem>>, vector<1x1x64xf32>
    %515 = vector.shape_cast %514 : vector<1x1x64xf32> to vector<1x64xf32>
    %c1_183 = arith.constant 1 : index
    %c0_184 = arith.constant 0 : index
    %c0_185 = arith.constant 0 : index
    %516 = vector.load %arg4[%c1_183, %c0_184, %c0_185] : memref<2x64x32xf32, #tpu.memory_space<vmem>>, vector<1x64x32xf32>
    %517 = vector.shape_cast %516 : vector<1x64x32xf32> to vector<64x32xf32>
    %cst_186 = arith.constant dense<0.000000e+00> : vector<16x64xf32>
    %518 = tpu.matmul %511, %513, %cst_186 {dimension_numbers = #tpu.dot_dimension_numbers<[1], [0], [0], [1], [0, 0, 1, 1], [], []>} : vector<16x32xf32>, vector<32x64xf32>, vector<16x64xf32> -> vector<16x64xf32>
    %519 = vector.broadcast %515 : vector<1x64xf32> to vector<16x64xf32>
    %520 = arith.addf %518, %519 : vector<16x64xf32>
    %cst_187 = arith.constant 0.000000e+00 : f32
    %521 = vector.broadcast %cst_187 : f32 to vector<16x64xf32>
    %522 = arith.maximumf %520, %521 : vector<16x64xf32>
    %cst_188 = arith.constant dense<0.000000e+00> : vector<16x32xf32>
    %523 = tpu.matmul %522, %517, %cst_188 {dimension_numbers = #tpu.dot_dimension_numbers<[1], [0], [0], [1], [0, 0, 1, 1], [], []>} : vector<16x64xf32>, vector<64x32xf32>, vector<16x32xf32> -> vector<16x32xf32>
    %524 = vector.extract_strided_slice %277 {offsets = [8, 0], sizes = [1, 32], strides = [1, 1]} : vector<17x32xf32> to vector<1x32xf32>
    %525 = vector.broadcast %524 : vector<1x32xf32> to vector<16x32xf32>
    %526 = arith.addf %523, %525 : vector<16x32xf32>
    %527 = arith.addf %511, %526 : vector<16x32xf32>
    %528 = vector.extract_strided_slice %277 {offsets = [13, 0], sizes = [1, 32], strides = [1, 1]} : vector<17x32xf32> to vector<1x32xf32>
    %529 = vector.extract_strided_slice %277 {offsets = [14, 0], sizes = [1, 32], strides = [1, 1]} : vector<17x32xf32> to vector<1x32xf32>
    %cst_189 = arith.constant dense<0.000000e+00> : vector<16xf32>
    %530 = vector.multi_reduction <add>, %527, %cst_189 [1] : vector<16x32xf32> to vector<16xf32>
    %531 = vector.shape_cast %530 : vector<16xf32> to vector<16x1xf32>
    %cst_190 = arith.constant 3.200000e+01 : f32
    %532 = vector.broadcast %cst_190 : f32 to vector<16x1xf32>
    %533 = arith.divf %531, %532 : vector<16x1xf32>
    %534 = vector.broadcast %533 : vector<16x1xf32> to vector<16x32xf32>
    %535 = arith.subf %527, %534 : vector<16x32xf32>
    %536 = arith.mulf %535, %535 : vector<16x32xf32>
    %cst_191 = arith.constant dense<0.000000e+00> : vector<16xf32>
    %537 = vector.multi_reduction <add>, %536, %cst_191 [1] : vector<16x32xf32> to vector<16xf32>
    %538 = vector.shape_cast %537 : vector<16xf32> to vector<16x1xf32>
    %cst_192 = arith.constant 3.200000e+01 : f32
    %539 = vector.broadcast %cst_192 : f32 to vector<16x1xf32>
    %540 = arith.divf %538, %539 : vector<16x1xf32>
    %cst_193 = arith.constant 9.99999974E-6 : f32
    %541 = vector.broadcast %cst_193 : f32 to vector<16x1xf32>
    %542 = arith.addf %540, %541 : vector<16x1xf32>
    %543 = math.rsqrt %542 : vector<16x1xf32>
    %544 = vector.broadcast %543 : vector<16x1xf32> to vector<16x32xf32>
    %545 = arith.mulf %535, %544 : vector<16x32xf32>
    %546 = vector.broadcast %528 : vector<1x32xf32> to vector<16x32xf32>
    %547 = arith.mulf %545, %546 : vector<16x32xf32>
    %548 = vector.broadcast %529 : vector<1x32xf32> to vector<16x32xf32>
    %549 = arith.addf %547, %548 : vector<16x32xf32>
    %550 = vector.extract_strided_slice %277 {offsets = [15, 0], sizes = [1, 32], strides = [1, 1]} : vector<17x32xf32> to vector<1x32xf32>
    %551 = vector.extract_strided_slice %277 {offsets = [16, 0], sizes = [1, 32], strides = [1, 1]} : vector<17x32xf32> to vector<1x32xf32>
    %cst_194 = arith.constant dense<0.000000e+00> : vector<16xf32>
    %552 = vector.multi_reduction <add>, %549, %cst_194 [1] : vector<16x32xf32> to vector<16xf32>
    %553 = vector.shape_cast %552 : vector<16xf32> to vector<16x1xf32>
    %cst_195 = arith.constant 3.200000e+01 : f32
    %554 = vector.broadcast %cst_195 : f32 to vector<16x1xf32>
    %555 = arith.divf %553, %554 : vector<16x1xf32>
    %556 = vector.broadcast %555 : vector<16x1xf32> to vector<16x32xf32>
    %557 = arith.subf %549, %556 : vector<16x32xf32>
    %558 = arith.mulf %557, %557 : vector<16x32xf32>
    %cst_196 = arith.constant dense<0.000000e+00> : vector<16xf32>
    %559 = vector.multi_reduction <add>, %558, %cst_196 [1] : vector<16x32xf32> to vector<16xf32>
    %560 = vector.shape_cast %559 : vector<16xf32> to vector<16x1xf32>
    %cst_197 = arith.constant 3.200000e+01 : f32
    %561 = vector.broadcast %cst_197 : f32 to vector<16x1xf32>
    %562 = arith.divf %560, %561 : vector<16x1xf32>
    %cst_198 = arith.constant 9.99999974E-6 : f32
    %563 = vector.broadcast %cst_198 : f32 to vector<16x1xf32>
    %564 = arith.addf %562, %563 : vector<16x1xf32>
    %565 = math.rsqrt %564 : vector<16x1xf32>
    %566 = vector.broadcast %565 : vector<16x1xf32> to vector<16x32xf32>
    %567 = arith.mulf %557, %566 : vector<16x32xf32>
    %568 = vector.broadcast %550 : vector<1x32xf32> to vector<16x32xf32>
    %569 = arith.mulf %567, %568 : vector<16x32xf32>
    %570 = vector.broadcast %551 : vector<1x32xf32> to vector<16x32xf32>
    %571 = arith.addf %569, %570 : vector<16x32xf32>
    %c0_199 = arith.constant 0 : index
    %c0_200 = arith.constant 0 : index
    %572 = vector.load %arg6[%c0_199, %c0_200] : memref<16x32xf32, #tpu.memory_space<vmem>>, vector<16x32xf32>
    tpu.vector_store %arg6[%c0_199, %c0_200], %571 {strides = array<i32>} : memref<16x32xf32, #tpu.memory_space<vmem>>, vector<16x32xf32>,
    return
  }
}

</mosaic_0001>

<llo_original>
// kernel: decoder_forward.1
$region0: #{decoder_forward.1}
  #allocation0 [shape = 'u32[]', space=smem, size = 0x4, offset = 0x4, fixed_abs, tag = 'smem constant byte address 0x4 - core index']
  #allocation1 [shape = 'u32[144,128]{1,0:T(1,128)}', space=vmem, size = 0x12000, scoped, tag = 'internal scratch']
  %s0 = inlined_call_operand.vmem [shape: f32[16,32], index: 0, kind: input, shape index: {}]
  %s1 = inlined_call_operand.vmem [shape: f32[32,32], index: 1, kind: input, shape index: {}]
  %s2 = inlined_call_operand.vmem [shape: f32[2,256,32], index: 2, kind: input, shape index: {}]
  %s3 = inlined_call_operand.vmem [shape: f32[2,33,64], index: 3, kind: input, shape index: {}]
  %s4 = inlined_call_operand.vmem [shape: f32[2,64,32], index: 4, kind: input, shape index: {}]
  %s5 = inlined_call_operand.vmem [shape: f32[2,17,32], index: 5, kind: input, shape index: {}]
  %s6 = inlined_call_operand.hbm [shape: f32[16,32], index: 6, kind: output, shape index: {}]
  %s7 = sld [smem:[#allocation0]]
  $region34: #{decoder_forward.1} parent=0
    _
  %s9 = ssub.s32 1, %s7
  %s10 = scalar_select 0, %s9, %s7
  $region1: #{decoder_forward.1} parent=0
    #allocation2 [shape = 'u8[8192]{0}', space=vmem, size = 0x2000, scoped, tag = 'output window, operand 0, single buffered']
    #allocation3 [shape = 's32[1]{0}', space=sflag, size = 0x4, scoped, tag = 'scoped memory for decoder_forward.1']
    %11 = vsyncpa [#allocation3], 0
    // Predicated region
    $region2: #{decoder_forward.1} parent=1 // pred_check
      _
    $region3: #{decoder_forward.1} parent=1 // pred_check_branch
      %13 = sbr.rel (0) target = $region5
    $region4: #{decoder_forward.1} parent=1 // pred_region
      _
    $region5: #{decoder_forward.1} parent=1 // pred_fallthru
      _
    // Predicated region
    $region6: #{decoder_forward.1} parent=1 // pred_check
      _
    $region7: #{decoder_forward.1} parent=1 // pred_check_branch
      %15 = sbr.rel (0) target = $region9
    $region8: #{decoder_forward.1} parent=1 // pred_region
      _
    $region9: #{decoder_forward.1} parent=1 // pred_fallthru
      _
    // Predicated region
    $region10: #{decoder_forward.1} parent=1 // pred_check
      _
    $region11: #{decoder_forward.1} parent=1 // pred_check_branch
      %17 = sbr.rel (0) target = $region13
    $region12: #{decoder_forward.1} parent=1 // pred_region
      _
    $region13: #{decoder_forward.1} parent=1 // pred_fallthru
      _
    // Predicated region
    $region14: #{decoder_forward.1} parent=1 // pred_check
      _
    $region15: #{decoder_forward.1} parent=1 // pred_check_branch
      %19 = sbr.rel (0) target = $region17
    $region16: #{decoder_forward.1} parent=1 // pred_region
      _
    $region17: #{decoder_forward.1} parent=1 // pred_fallthru
      _
    // Predicated region
    $region18: #{decoder_forward.1} parent=1 // pred_check
      _
    $region19: #{decoder_forward.1} parent=1 // pred_check_branch
      %21 = sbr.rel (0) target = $region21
    $region20: #{decoder_forward.1} parent=1 // pred_region
      _
    $region21: #{decoder_forward.1} parent=1 // pred_fallthru
      _
    // Predicated region
    $region22: #{decoder_forward.1} parent=1 // pred_check
      _
    $region23: #{decoder_forward.1} parent=1 // pred_check_branch
      %23 = sbr.rel (0) target = $region25
    $region24: #{decoder_forward.1} parent=1 // pred_region
      _
    $region25: #{decoder_forward.1} parent=1 // pred_fallthru
      _
    %v24 = vld [vmem:[%s0] sm:$0xff]
    %v25 = vld [vmem:[%s0 + $0x8] sm:$0xff]
    %v26 = vld [vmem:[%s1] sm:$0xff]
    %v27 = vld [vmem:[%s1 + $0x8] sm:$0xff]
    %v28 = vld [vmem:[%s1 + $0x10] sm:$0xff]
    %v29 = vld [vmem:[%s1 + $0x18] sm:$0xff]
    %v30 = vld [vmem:[%s5] sm:$0xff]
    %v31 = vld [vmem:[%s5 + $0x8] sm:$0xff]
    %v32 = vld [vmem:[%s2] sm:$0xff]
    %v33 = vld [vmem:[%s2 + $0x8] sm:$0xff]
    %v34 = vld [vmem:[%s2 + $0x10] sm:$0xff]
    %v35 = vld [vmem:[%s2 + $0x18] sm:$0xff]
    %v36 = vlaneseq
    %v37 = vshrl.u32 %v36, 7
    %v38 = vsub.s32 0, %v37
    %v39 = vrot.slane %v30, %v38
    %vm40 = vcmask 261120
    %v42 = vsel %vm40, %v24, 0
    %v45 = vsel %vm40, %v25, 0
    %47 = vmatprep.subr.mxu0 0.0
    %48 = vmatpush1.msra.mxu0 %v32
    %49 = vmatprep.subr.mxu0 0.0
    %50 = vmatpush1.msra.mxu0 %v33
    %51 = vmatprep.subr.mxu0 0.0
    %52 = vmatpush1.msra.mxu0 %v34
    %53 = vmatprep.subr.mxu0 0.0
    %54 = vmatpush1.msra.mxu0 %v35
    %55 = vmatprep.subr.mxu0 0.0
    %56 = vmatpush1.msra.mxu0 0.0
    %57 = vmatprep.subr.mxu0 0.0
    %58 = vmatpush1.msra.mxu0 0.0
    %59 = vmatprep.subr.mxu0 0.0
    %60 = vmatpush1.msra.mxu0 0.0
    %61 = vmatprep.subr.mxu0 0.0
    %62 = vmatpush1.msra.mxu0 0.0
    %63 = vmatprep.subr.mxu0 0.0
    %64 = vmatpush1.msra.mxu0 0.0
    %65 = vmatprep.subr.mxu0 0.0
    %66 = vmatpush1.msra.mxu0 0.0
    %67 = vmatprep.subr.mxu0 0.0
    %68 = vmatpush1.msra.mxu0 0.0
    %69 = vmatprep.subr.mxu0 0.0
    %70 = vmatpush1.msra.mxu0 0.0
    %71 = vmatprep.subr.mxu0 0.0
    %72 = vmatpush1.msra.mxu0 0.0
    %73 = vmatprep.subr.mxu0 0.0
    %74 = vmatpush1.msra.mxu0 0.0
    %75 = vmatprep.subr.mxu0 0.0
    %76 = vmatpush1.msra.mxu0 0.0
    %77 = vmatprep.subr.mxu0 0.0
    %78 = vmatpush1.msra.mxu0 0.0
    %79 = vmatprep.subr.mxu0 0.0
    %80 = vmatpush1.msra.mxu0 0.0
    %81 = vmatprep.subr.mxu0 0.0
    %82 = vmatpush1.msra.mxu0 0.0
    %83 = vmatprep.subr.mxu0 0.0
    %84 = vmatpush1.msra.mxu0 0.0
    %85 = vmatprep.subr.mxu0 0.0
    %86 = vmatpush1.msra.mxu0 0.0
    %87 = vmatprep.subr.mxu0 0.0
    %88 = vmatpush1.msra.mxu0 0.0
    %89 = vmatprep.subr.mxu0 0.0
    %90 = vmatpush1.msra.mxu0 0.0
    %91 = vmatprep.subr.mxu0 0.0
    %92 = vmatpush1.msra.mxu0 0.0
    %93 = vmatprep.subr.mxu0 0.0
    %94 = vmatpush1.msra.mxu0 0.0
    %95 = vmatprep.subr.mxu0 0.0
    %96 = vmatpush1.msra.mxu0 0.0
    %97 = vmatprep.subr.mxu0 0.0
    %98 = vmatpush1.msra.mxu0 0.0
    %99 = vmatprep.subr.mxu0 0.0
    %100 = vmatpush1.msra.mxu0 0.0
    %101 = vmatprep.subr.mxu0 0.0
    %102 = vmatpush1.msra.mxu0 0.0
    %103 = vmatprep.subr.mxu0 0.0
    %104 = vmatpush1.msra.mxu0 0.0
    %105 = vmatprep.subr.mxu0 0.0
    %106 = vmatpush1.msra.mxu0 0.0
    %107 = vmatprep.subr.mxu0 0.0
    %108 = vmatpush1.msra.mxu0 0.0
    %109 = vmatprep.subr.mxu0 0.0
    %110 = vmatpush1.msra.mxu0 0.0
    %111 = vmatprep.mubr.f32.mxu0 0.0
    %112 = vmatmul.mubr.f32.gmra.mrb[0].mxu0 %v42
    %v113 = vpop.f32.mrb[0].mxu0
    %v114 = vadd.f32 %v39, %v113
    %v115 = vpop.f32.mrb[0].mxu0
    %116 = vmatprep.mubr.f32.mxu0 0.0
    %117 = vmatmul.mubr.f32.gmra.mrb[0].mxu0 %v45
    %v118 = vpop.f32.mrb[0].mxu0
    %v119 = vadd.f32 %v39, %v118
    %v120 = vpop.f32.mrb[0].mxu0
    %121 = vdwg.mxu0
    %v122 = vld [vmem:[%s2 + $0x20] sm:$0xff]
    %v123 = vld [vmem:[%s2 + $0x28] sm:$0xff]
    %v124 = vld [vmem:[%s2 + $0x30] sm:$0xff]
    %v125 = vld [vmem:[%s2 + $0x38] sm:$0xff]
    %v126 = vlaneseq
    %v127 = vshrl.u32 %v126, 7
    %v128 = vsub.s32 1, %v127
    %v129 = vrot.slane %v30, %v128
    %130 = vmatprep.subr.mxu0 0.0
    %131 = vmatpush1.msra.mxu0 %v122
    %132 = vmatprep.subr.mxu0 0.0
    %133 = vmatpush1.msra.mxu0 %v123
    %134 = vmatprep.subr.mxu0 0.0
    %135 = vmatpush1.msra.mxu0 %v124
    %136 = vmatprep.subr.mxu0 0.0
    %137 = vmatpush1.msra.mxu0 %v125
    %138 = vmatprep.subr.mxu0 0.0
    %139 = vmatpush1.msra.mxu0 0.0
    %140 = vmatprep.subr.mxu0 0.0
    %141 = vmatpush1.msra.mxu0 0.0
    %142 = vmatprep.subr.mxu0 0.0
    %143 = vmatpush1.msra.mxu0 0.0
    %144 = vmatprep.subr.mxu0 0.0
    %145 = vmatpush1.msra.mxu0 0.0
    %146 = vmatprep.subr.mxu0 0.0
    %147 = vmatpush1.msra.mxu0 0.0
    %148 = vmatprep.subr.mxu0 0.0
    %149 = vmatpush1.msra.mxu0 0.0
    %150 = vmatprep.subr.mxu0 0.0
    %151 = vmatpush1.msra.mxu0 0.0
    %152 = vmatprep.subr.mxu0 0.0
    %153 = vmatpush1.msra.mxu0 0.0
    %154 = vmatprep.subr.mxu0 0.0
    %155 = vmatpush1.msra.mxu0 0.0
    %156 = vmatprep.subr.mxu0 0.0
    %157 = vmatpush1.msra.mxu0 0.0
    %158 = vmatprep.subr.mxu0 0.0
    %159 = vmatpush1.msra.mxu0 0.0
    %160 = vmatprep.subr.mxu0 0.0
    %161 = vmatpush1.msra.mxu0 0.0
    %162 = vmatprep.subr.mxu0 0.0
    %163 = vmatpush1.msra.mxu0 0.0
    %164 = vmatprep.subr.mxu0 0.0
    %165 = vmatpush1.msra.mxu0 0.0
    %166 = vmatprep.subr.mxu0 0.0
    %167 = vmatpush1.msra.mxu0 0.0
    %168 = vmatprep.subr.mxu0 0.0
    %169 = vmatpush1.msra.mxu0 0.0
    %170 = vmatprep.subr.mxu0 0.0
    %171 = vmatpush1.msra.mxu0 0.0
    %172 = vmatprep.subr.mxu0 0.0
    %173 = vmatpush1.msra.mxu0 0.0
    %174 = vmatprep.subr.mxu0 0.0
    %175 = vmatpush1.msra.mxu0 0.0
    %176 = vmatprep.subr.mxu0 0.0
    %177 = vmatpush1.msra.mxu0 0.0
    %178 = vmatprep.subr.mxu0 0.0
    %179 = vmatpush1.msra.mxu0 0.0
    %180 = vmatprep.subr.mxu0 0.0
    %181 = vmatpush1.msra.mxu0 0.0
    %182 = vmatprep.subr.mxu0 0.0
    %183 = vmatpush1.msra.mxu0 0.0
    %184 = vmatprep.subr.mxu0 0.0
    %185 = vmatpush1.msra.mxu0 0.0
    %186 = vmatprep.subr.mxu0 0.0
    %187 = vmatpush1.msra.mxu0 0.0
    %188 = vmatprep.subr.mxu0 0.0
    %189 = vmatpush1.msra.mxu0 0.0
    %190 = vmatprep.subr.mxu0 0.0
    %191 = vmatpush1.msra.mxu0 0.0
    %192 = vmatprep.subr.mxu0 0.0
    %193 = vmatpush1.msra.mxu0 0.0
    %194 = vmatprep.mubr.f32.mxu0 0.0
    %195 = vmatmul.mubr.f32.gmra.mrb[0].mxu0 %v42
    %v196 = vpop.f32.mrb[0].mxu0
    %v197 = vadd.f32 %v129, %v196
    %v198 = vpop.f32.mrb[0].mxu0
    %199 = vmatprep.mubr.f32.mxu0 0.0
    %200 = vmatmul.mubr.f32.gmra.mrb[0].mxu0 %v45
    %v201 = vpop.f32.mrb[0].mxu0
    %v202 = vadd.f32 %v129, %v201
    %v203 = vpop.f32.mrb[0].mxu0
    %204 = vdwg.mxu0
    %v205 = vld [vmem:[%s2 + $0x40] sm:$0xff]
    %v206 = vld [vmem:[%s2 + $0x48] sm:$0xff]
    %v207 = vld [vmem:[%s2 + $0x50] sm:$0xff]
    %v208 = vld [vmem:[%s2 + $0x58] sm:$0xff]
    %v209 = vlaneseq
    %v210 = vshrl.u32 %v209, 7
    %v211 = vsub.s32 2, %v210
    %v212 = vrot.slane %v30, %v211
    %213 = vmatprep.subr.mxu0 0.0
    %214 = vmatpush1.msra.mxu0 %v205
    %215 = vmatprep.subr.mxu0 0.0
    %216 = vmatpush1.msra.mxu0 %v206
    %217 = vmatprep.subr.mxu0 0.0
    %218 = vmatpush1.msra.mxu0 %v207
    %219 = vmatprep.subr.mxu0 0.0
    %220 = vmatpush1.msra.mxu0 %v208
    %221 = vmatprep.subr.mxu0 0.0
    %222 = vmatpush1.msra.mxu0 0.0
    %223 = vmatprep.subr.mxu0 0.0
    %224 = vmatpush1.msra.mxu0 0.0
    %225 = vmatprep.subr.mxu0 0.0
    %226 = vmatpush1.msra.mxu0 0.0
    %227 = vmatprep.subr.mxu0 0.0
    %228 = vmatpush1.msra.mxu0 0.0
    %229 = vmatprep.subr.mxu0 0.0
    %230 = vmatpush1.msra.mxu0 0.0
    %231 = vmatprep.subr.mxu0 0.0
    %232 = vmatpush1.msra.mxu0 0.0
    %233 = vmatprep.subr.mxu0 0.0
    %234 = vmatpush1.msra.mxu0 0.0
    %235 = vmatprep.subr.mxu0 0.0
    %236 = vmatpush1.msra.mxu0 0.0
    %237 = vmatprep.subr.mxu0 0.0
    %238 = vmatpush1.msra.mxu0 0.0
    %239 = vmatprep.subr.mxu0 0.0
    %240 = vmatpush1.msra.mxu0 0.0
    %241 = vmatprep.subr.mxu0 0.0
    %242 = vmatpush1.msra.mxu0 0.0
    %243 = vmatprep.subr.mxu0 0.0
    %244 = vmatpush1.msra.mxu0 0.0
    %245 = vmatprep.subr.mxu0 0.0
    %246 = vmatpush1.msra.mxu0 0.0
    %247 = vmatprep.subr.mxu0 0.0
    %248 = vmatpush1.msra.mxu0 0.0
    %249 = vmatprep.subr.mxu0 0.0
    %250 = vmatpush1.msra.mxu0 0.0
    %251 = vmatprep.subr.mxu0 0.0
    %252 = vmatpush1.msra.mxu0 0.0
    %253 = vmatprep.subr.mxu0 0.0
    %254 = vmatpush1.msra.mxu0 0.0
    %255 = vmatprep.subr.mxu0 0.0
    %256 = vmatpush1.msra.mxu0 0.0
    %257 = vmatprep.subr.mxu0 0.0
    %258 = vmatpush1.msra.mxu0 0.0
    %259 = vmatprep.subr.mxu0 0.0
    %260 = vmatpush1.msra.mxu0 0.0
    %261 = vmatprep.subr.mxu0 0.0
    %262 = vmatpush1.msra.mxu0 0.0
    %263 = vmatprep.subr.mxu0 0.0
    %264 = vmatpush1.msra.mxu0 0.0
    %265 = vmatprep.subr.mxu0 0.0
    %266 = vmatpush1.msra.mxu0 0.0
    %267 = vmatprep.subr.mxu0 0.0
    %268 = vmatpush1.msra.mxu0 0.0
    %269 = vmatprep.subr.mxu0 0.0
    %270 = vmatpush1.msra.mxu0 0.0
    %271 = vmatprep.subr.mxu0 0.0
    %272 = vmatpush1.msra.mxu0 0.0
    %273 = vmatprep.subr.mxu0 0.0
    %274 = vmatpush1.msra.mxu0 0.0
    %275 = vmatprep.subr.mxu0 0.0
    %276 = vmatpush1.msra.mxu0 0.0
    %277 = vmatprep.mubr.f32.mxu0 0.0
    %278 = vmatmul.mubr.f32.gmra.mrb[0].mxu0 %v42
    %v279 = vpop.f32.mrb[0].mxu0
    %v280 = vadd.f32 %v212, %v279
    %v281 = vpop.f32.mrb[0].mxu0
    %282 = vmatprep.mubr.f32.mxu0 0.0
    %283 = vmatmul.mubr.f32.gmra.mrb[0].mxu0 %v45
    %v284 = vpop.f32.mrb[0].mxu0
    %v285 = vadd.f32 %v212, %v284
    %v286 = vpop.f32.mrb[0].mxu0
    %287 = vdwg.mxu0
    %v288 = vld [vmem:[%s2 + $0x60] sm:$0xff]
    %v289 = vld [vmem:[%s2 + $0x68] sm:$0xff]
    %v290 = vld [vmem:[%s2 + $0x70] sm:$0xff]
    %v291 = vld [vmem:[%s2 + $0x78] sm:$0xff]
    %v292 = vmul.f32 %v114, 0.35355338
    %v293 = vmul.f32 %v119, 0.35355338
    %vm294 = vcmask 64512
    %v296 = vsel %vm294, %v292, 0
    %v299 = vsel %vm294, %v197, 0
    %301 = vmatprep.subr.mxu0 0.0
    %302 = vmatpush1.xpose.msra.mxu0 %v299
    %303 = vmatprep.subr.mxu0 0.0
    %304 = vmatpush1.xpose.msra.mxu0 0.0
    %305 = vmatprep.subr.mxu0 0.0
    %306 = vmatpush1.xpose.msra.mxu0 0.0
    %307 = vmatprep.subr.mxu0 0.0
    %308 = vmatpush1.xpose.msra.mxu0 0.0
    %309 = vmatprep.subr.mxu0 0.0
    %310 = vmatpush1.xpose.msra.mxu0 0.0
    %311 = vmatprep.subr.mxu0 0.0
    %312 = vmatpush1.xpose.msra.mxu0 0.0
    %313 = vmatprep.subr.mxu0 0.0
    %314 = vmatpush1.xpose.msra.mxu0 0.0
    %315 = vmatprep.subr.mxu0 0.0
    %316 = vmatpush1.xpose.msra.mxu0 0.0
    %317 = vmatprep.subr.mxu0 0.0
    %318 = vmatpush1.xpose.msra.mxu0 0.0
    %319 = vmatprep.subr.mxu0 0.0
    %320 = vmatpush1.xpose.msra.mxu0 0.0
    %321 = vmatprep.subr.mxu0 0.0
    %322 = vmatpush1.xpose.msra.mxu0 0.0
    %323 = vmatprep.subr.mxu0 0.0
    %324 = vmatpush1.xpose.msra.mxu0 0.0
    %325 = vmatprep.subr.mxu0 0.0
    %326 = vmatpush1.xpose.msra.mxu0 0.0
    %327 = vmatprep.subr.mxu0 0.0
    %328 = vmatpush1.xpose.msra.mxu0 0.0
    %329 = vmatprep.subr.mxu0 0.0
    %330 = vmatpush1.xpose.msra.mxu0 0.0
    %331 = vmatprep.subr.mxu0 0.0
    %332 = vmatpush1.xpose.msra.mxu0 0.0
    %333 = vmatprep.subr.mxu0 0.0
    %334 = vmatpush1.xpose.msra.mxu0 0.0
    %335 = vmatprep.subr.mxu0 0.0
    %336 = vmatpush1.xpose.msra.mxu0 0.0
    %337 = vmatprep.subr.mxu0 0.0
    %338 = vmatpush1.xpose.msra.mxu0 0.0
    %339 = vmatprep.subr.mxu0 0.0
    %340 = vmatpush1.xpose.msra.mxu0 0.0
    %341 = vmatprep.subr.mxu0 0.0
    %342 = vmatpush1.xpose.msra.mxu0 0.0
    %343 = vmatprep.subr.mxu0 0.0
    %344 = vmatpush1.xpose.msra.mxu0 0.0
    %345 = vmatprep.subr.mxu0 0.0
    %346 = vmatpush1.xpose.msra.mxu0 0.0
    %347 = vmatprep.subr.mxu0 0.0
    %348 = vmatpush1.xpose.msra.mxu0 0.0
    %349 = vmatprep.subr.mxu0 0.0
    %350 = vmatpush1.xpose.msra.mxu0 0.0
    %351 = vmatprep.subr.mxu0 0.0
    %352 = vmatpush1.xpose.msra.mxu0 0.0
    %353 = vmatprep.subr.mxu0 0.0
    %354 = vmatpush1.xpose.msra.mxu0 0.0
    %355 = vmatprep.subr.mxu0 0.0
    %356 = vmatpush1.xpose.msra.mxu0 0.0
    %357 = vmatprep.subr.mxu0 0.0
    %358 = vmatpush1.xpose.msra.mxu0 0.0
    %359 = vmatprep.subr.mxu0 0.0
    %360 = vmatpush1.xpose.msra.mxu0 0.0
    %361 = vmatprep.subr.mxu0 0.0
    %362 = vmatpush1.xpose.msra.mxu0 0.0
    %363 = vmatprep.subr.mxu0 0.0
    %364 = vmatpush1.xpose.msra.mxu0 0.0
    %365 = vmatprep.mubr.f32.mxu0 0.0
    %366 = vmatmul.mubr.f32.gmra.mrb[0].mxu0 %v296
    %v367 = vpop.f32.mrb[0].mxu0
    %v368 = vadd.f32 0.0, %v367
    %v369 = vpop.f32.mrb[0].mxu0
    %370 = vdwg.mxu0
    %371 = vrot.lane.b32.xlu0 %v292, 120
    %v372 = vpop.permute.xlu0 %371
    %373 = vrot.lane.b32.xlu0 %v197, 120
    %v374 = vpop.permute.xlu0 %373
    %v375 = vsel %vm294, %v372, 0
    %v377 = vsel %vm294, %v374, 0
    %379 = vmatprep.subr.mxu0 0.0
    %380 = vmatpush1.xpose.msra.mxu0 %v377
    %381 = vmatprep.subr.mxu0 0.0
    %382 = vmatpush1.xpose.msra.mxu0 0.0
    %383 = vmatprep.subr.mxu0 0.0
    %384 = vmatpush1.xpose.msra.mxu0 0.0
    %385 = vmatprep.subr.mxu0 0.0
    %386 = vmatpush1.xpose.msra.mxu0 0.0
    %387 = vmatprep.subr.mxu0 0.0
    %388 = vmatpush1.xpose.msra.mxu0 0.0
    %389 = vmatprep.subr.mxu0 0.0
    %390 = vmatpush1.xpose.msra.mxu0 0.0
    %391 = vmatprep.subr.mxu0 0.0
    %392 = vmatpush1.xpose.msra.mxu0 0.0
    %393 = vmatprep.subr.mxu0 0.0
    %394 = vmatpush1.xpose.msra.mxu0 0.0
    %395 = vmatprep.subr.mxu0 0.0
    %396 = vmatpush1.xpose.msra.mxu0 0.0
    %397 = vmatprep.subr.mxu0 0.0
    %398 = vmatpush1.xpose.msra.mxu0 0.0
    %399 = vmatprep.subr.mxu0 0.0
    %400 = vmatpush1.xpose.msra.mxu0 0.0
    %401 = vmatprep.subr.mxu0 0.0
    %402 = vmatpush1.xpose.msra.mxu0 0.0
    %403 = vmatprep.subr.mxu0 0.0
    %404 = vmatpush1.xpose.msra.mxu0 0.0
    %405 = vmatprep.subr.mxu0 0.0
    %406 = vmatpush1.xpose.msra.mxu0 0.0
    %407 = vmatprep.subr.mxu0 0.0
    %408 = vmatpush1.xpose.msra.mxu0 0.0
    %409 = vmatprep.subr.mxu0 0.0
    %410 = vmatpush1.xpose.msra.mxu0 0.0
    %411 = vmatprep.subr.mxu0 0.0
    %412 = vmatpush1.xpose.msra.mxu0 0.0
    %413 = vmatprep.subr.mxu0 0.0
    %414 = vmatpush1.xpose.msra.mxu0 0.0
    %415 = vmatprep.subr.mxu0 0.0
    %416 = vmatpush1.xpose.msra.mxu0 0.0
    %417 = vmatprep.subr.mxu0 0.0
    %418 = vmatpush1.xpose.msra.mxu0 0.0
    %419 = vmatprep.subr.mxu0 0.0
    %420 = vmatpush1.xpose.msra.mxu0 0.0
    %421 = vmatprep.subr.mxu0 0.0
    %422 = vmatpush1.xpose.msra.mxu0 0.0
    %423 = vmatprep.subr.mxu0 0.0
    %424 = vmatpush1.xpose.msra.mxu0 0.0
    %425 = vmatprep.subr.mxu0 0.0
    %426 = vmatpush1.xpose.msra.mxu0 0.0
    %427 = vmatprep.subr.mxu0 0.0
    %428 = vmatpush1.xpose.msra.mxu0 0.0
    %429 = vmatprep.subr.mxu0 0.0
    %430 = vmatpush1.xpose.msra.mxu0 0.0
    %431 = vmatprep.subr.mxu0 0.0
    %432 = vmatpush1.xpose.msra.mxu0 0.0
    %433 = vmatprep.subr.mxu0 0.0
    %434 = vmatpush1.xpose.msra.mxu0 0.0
    %435 = vmatprep.subr.mxu0 0.0
    %436 = vmatpush1.xpose.msra.mxu0 0.0
    %437 = vmatprep.subr.mxu0 0.0
    %438 = vmatpush1.xpose.msra.mxu0 0.0
    %439 = vmatprep.subr.mxu0 0.0
    %440 = vmatpush1.xpose.msra.mxu0 0.0
    %441 = vmatprep.subr.mxu0 0.0
    %442 = vmatpush1.xpose.msra.mxu0 0.0
    %443 = vmatprep.mubr.f32.mxu0 0.0
    %444 = vmatmul.mubr.f32.gmra.mrb[0].mxu0 %v375
    %v445 = vpop.f32.mrb[0].mxu0
    %v446 = vadd.f32 0.0, %v445
    %v447 = vpop.f32.mrb[0].mxu0
    %448 = vdwg.mxu0
    %449 = vrot.lane.b32.xlu0 %v292, 112
    %v450 = vpop.permute.xlu0 %449
    %451 = vrot.lane.b32.xlu0 %v197, 112
    %v452 = vpop.permute.xlu0 %451
    %v453 = vsel %vm294, %v450, 0
    %v455 = vsel %vm294, %v452, 0
    %457 = vmatprep.subr.mxu0 0.0
    %458 = vmatpush1.xpose.msra.mxu0 %v455
    %459 = vmatprep.subr.mxu0 0.0
    %460 = vmatpush1.xpose.msra.mxu0 0.0
    %461 = vmatprep.subr.mxu0 0.0
    %462 = vmatpush1.xpose.msra.mxu0 0.0
    %463 = vmatprep.subr.mxu0 0.0
    %464 = vmatpush1.xpose.msra.mxu0 0.0
    %465 = vmatprep.subr.mxu0 0.0
    %466 = vmatpush1.xpose.msra.mxu0 0.0
    %467 = vmatprep.subr.mxu0 0.0
    %468 = vmatpush1.xpose.msra.mxu0 0.0
    %469 = vmatprep.subr.mxu0 0.0
    %470 = vmatpush1.xpose.msra.mxu0 0.0
    %471 = vmatprep.subr.mxu0 0.0
    %472 = vmatpush1.xpose.msra.mxu0 0.0
    %473 = vmatprep.subr.mxu0 0.0
    %474 = vmatpush1.xpose.msra.mxu0 0.0
    %475 = vmatprep.subr.mxu0 0.0
    %476 = vmatpush1.xpose.msra.mxu0 0.0
    %477 = vmatprep.subr.mxu0 0.0
    %478 = vmatpush1.xpose.msra.mxu0 0.0
    %479 = vmatprep.subr.mxu0 0.0
    %480 = vmatpush1.xpose.msra.mxu0 0.0
    %481 = vmatprep.subr.mxu0 0.0
    %482 = vmatpush1.xpose.msra.mxu0 0.0
    %483 = vmatprep.subr.mxu0 0.0
    %484 = vmatpush1.xpose.msra.mxu0 0.0
    %485 = vmatprep.subr.mxu0 0.0
    %486 = vmatpush1.xpose.msra.mxu0 0.0
    %487 = vmatprep.subr.mxu0 0.0
    %488 = vmatpush1.xpose.msra.mxu0 0.0
    %489 = vmatprep.subr.mxu0 0.0
    %490 = vmatpush1.xpose.msra.mxu0 0.0
    %491 = vmatprep.subr.mxu0 0.0
    %492 = vmatpush1.xpose.msra.mxu0 0.0
    %493 = vmatprep.subr.mxu0 0.0
    %494 = vmatpush1.xpose.msra.mxu0 0.0
    %495 = vmatprep.subr.mxu0 0.0
    %496 = vmatpush1.xpose.msra.mxu0 0.0
    %497 = vmatprep.subr.mxu0 0.0
    %498 = vmatpush1.xpose.msra.mxu0 0.0
    %499 = vmatprep.subr.mxu0 0.0
    %500 = vmatpush1.xpose.msra.mxu0 0.0
    %501 = vmatprep.subr.mxu0 0.0
    %502 = vmatpush1.xpose.msra.mxu0 0.0
    %503 = vmatprep.subr.mxu0 0.0
    %504 = vmatpush1.xpose.msra.mxu0 0.0
    %505 = vmatprep.subr.mxu0 0.0
    %506 = vmatpush1.xpose.msra.mxu0 0.0
    %507 = vmatprep.subr.mxu0 0.0
    %508 = vmatpush1.xpose.msra.mxu0 0.0
    %509 = vmatprep.subr.mxu0 0.0
    %510 = vmatpush1.xpose.msra.mxu0 0.0
    %511 = vmatprep.subr.mxu0 0.0
    %512 = vmatpush1.xpose.msra.mxu0 0.0
    %513 = vmatprep.subr.mxu0 0.0
    %514 = vmatpush1.xpose.msra.mxu0 0.0
    %515 = vmatprep.subr.mxu0 0.0
    %516 = vmatpush1.xpose.msra.mxu0 0.0
    %517 = vmatprep.subr.mxu0 0.0
    %518 = vmatpush1.xpose.msra.mxu0 0.0
    %519 = vmatprep.subr.mxu0 0.0
    %520 = vmatpush1.xpose.msra.mxu0 0.0
    %521 = vmatprep.mubr.f32.mxu0 0.0
    %522 = vmatmul.mubr.f32.gmra.mrb[0].mxu0 %v453
    %v523 = vpop.f32.mrb[0].mxu0
    %v524 = vadd.f32 0.0, %v523
    %v525 = vpop.f32.mrb[0].mxu0
    %526 = vdwg.mxu0
    %527 = vrot.lane.b32.xlu0 %v292, 104
    %v528 = vpop.permute.xlu0 %527
    %529 = vrot.lane.b32.xlu0 %v197, 104
    %v530 = vpop.permute.xlu0 %529
    %v531 = vsel %vm294, %v528, 0
    %v533 = vsel %vm294, %v530, 0
    %535 = vmatprep.subr.mxu0 0.0
    %536 = vmatpush1.xpose.msra.mxu0 %v533
    %537 = vmatprep.subr.mxu0 0.0
    %538 = vmatpush1.xpose.msra.mxu0 0.0
    %539 = vmatprep.subr.mxu0 0.0
    %540 = vmatpush1.xpose.msra.mxu0 0.0
    %541 = vmatprep.subr.mxu0 0.0
    %542 = vmatpush1.xpose.msra.mxu0 0.0
    %543 = vmatprep.subr.mxu0 0.0
    %544 = vmatpush1.xpose.msra.mxu0 0.0
    %545 = vmatprep.subr.mxu0 0.0
    %546 = vmatpush1.xpose.msra.mxu0 0.0
    %547 = vmatprep.subr.mxu0 0.0
    %548 = vmatpush1.xpose.msra.mxu0 0.0
    %549 = vmatprep.subr.mxu0 0.0
    %550 = vmatpush1.xpose.msra.mxu0 0.0
    %551 = vmatprep.subr.mxu0 0.0
    %552 = vmatpush1.xpose.msra.mxu0 0.0
    %553 = vmatprep.subr.mxu0 0.0
    %554 = vmatpush1.xpose.msra.mxu0 0.0
    %555 = vmatprep.subr.mxu0 0.0
    %556 = vmatpush1.xpose.msra.mxu0 0.0
    %557 = vmatprep.subr.mxu0 0.0
    %558 = vmatpush1.xpose.msra.mxu0 0.0
    %559 = vmatprep.subr.mxu0 0.0
    %560 = vmatpush1.xpose.msra.mxu0 0.0
    %561 = vmatprep.subr.mxu0 0.0
    %562 = vmatpush1.xpose.msra.mxu0 0.0
    %563 = vmatprep.subr.mxu0 0.0
    %564 = vmatpush1.xpose.msra.mxu0 0.0
    %565 = vmatprep.subr.mxu0 0.0
    %566 = vmatpush1.xpose.msra.mxu0 0.0
    %567 = vmatprep.subr.mxu0 0.0
    %568 = vmatpush1.xpose.msra.mxu0 0.0
    %569 = vmatprep.subr.mxu0 0.0
    %570 = vmatpush1.xpose.msra.mxu0 0.0
    %571 = vmatprep.subr.mxu0 0.0
    %572 = vmatpush1.xpose.msra.mxu0 0.0
    %573 = vmatprep.subr.mxu0 0.0
    %574 = vmatpush1.xpose.msra.mxu0 0.0
    %575 = vmatprep.subr.mxu0 0.0
    %576 = vmatpush1.xpose.msra.mxu0 0.0
    %577 = vmatprep.subr.mxu0 0.0
    %578 = vmatpush1.xpose.msra.mxu0 0.0
    %579 = vmatprep.subr.mxu0 0.0
    %580 = vmatpush1.xpose.msra.mxu0 0.0
    %581 = vmatprep.subr.mxu0 0.0
    %582 = vmatpush1.xpose.msra.mxu0 0.0
    %583 = vmatprep.subr.mxu0 0.0
    %584 = vmatpush1.xpose.msra.mxu0 0.0
    %585 = vmatprep.subr.mxu0 0.0
    %586 = vmatpush1.xpose.msra.mxu0 0.0
    %587 = vmatprep.subr.mxu0 0.0
    %588 = vmatpush1.xpose.msra.mxu0 0.0
    %589 = vmatprep.subr.mxu0 0.0
    %590 = vmatpush1.xpose.msra.mxu0 0.0
    %591 = vmatprep.subr.mxu0 0.0
    %592 = vmatpush1.xpose.msra.mxu0 0.0
    %593 = vmatprep.subr.mxu0 0.0
    %594 = vmatpush1.xpose.msra.mxu0 0.0
    %595 = vmatprep.subr.mxu0 0.0
    %596 = vmatpush1.xpose.msra.mxu0 0.0
    %597 = vmatprep.subr.mxu0 0.0
    %598 = vmatpush1.xpose.msra.mxu0 0.0
    %599 = vmatprep.mubr.f32.mxu0 0.0
    %600 = vmatmul.mubr.f32.gmra.mrb[0].mxu0 %v531
    %v601 = vpop.f32.mrb[0].mxu0
    %v602 = vadd.f32 0.0, %v601
    %v603 = vpop.f32.mrb[0].mxu0
    %604 = vdwg.mxu0
    %v606 = vsel %vm294, %v293, 0
    %v609 = vsel %vm294, %v202, 0
    %611 = vmatprep.subr.mxu0 0.0
    %612 = vmatpush1.xpose.msra.mxu0 %v609
    %613 = vmatprep.subr.mxu0 0.0
    %614 = vmatpush1.xpose.msra.mxu0 0.0
    %615 = vmatprep.subr.mxu0 0.0
    %616 = vmatpush1.xpose.msra.mxu0 0.0
    %617 = vmatprep.subr.mxu0 0.0
    %618 = vmatpush1.xpose.msra.mxu0 0.0
    %619 = vmatprep.subr.mxu0 0.0
    %620 = vmatpush1.xpose.msra.mxu0 0.0
    %621 = vmatprep.subr.mxu0 0.0
    %622 = vmatpush1.xpose.msra.mxu0 0.0
    %623 = vmatprep.subr.mxu0 0.0
    %624 = vmatpush1.xpose.msra.mxu0 0.0
    %625 = vmatprep.subr.mxu0 0.0
    %626 = vmatpush1.xpose.msra.mxu0 0.0
    %627 = vmatprep.subr.mxu0 0.0
    %628 = vmatpush1.xpose.msra.mxu0 0.0
    %629 = vmatprep.subr.mxu0 0.0
    %630 = vmatpush1.xpose.msra.mxu0 0.0
    %631 = vmatprep.subr.mxu0 0.0
    %632 = vmatpush1.xpose.msra.mxu0 0.0
    %633 = vmatprep.subr.mxu0 0.0
    %634 = vmatpush1.xpose.msra.mxu0 0.0
    %635 = vmatprep.subr.mxu0 0.0
    %636 = vmatpush1.xpose.msra.mxu0 0.0
    %637 = vmatprep.subr.mxu0 0.0
    %638 = vmatpush1.xpose.msra.mxu0 0.0
    %639 = vmatprep.subr.mxu0 0.0
    %640 = vmatpush1.xpose.msra.mxu0 0.0
    %641 = vmatprep.subr.mxu0 0.0
    %642 = vmatpush1.xpose.msra.mxu0 0.0
    %643 = vmatprep.subr.mxu0 0.0
    %644 = vmatpush1.xpose.msra.mxu0 0.0
    %645 = vmatprep.subr.mxu0 0.0
    %646 = vmatpush1.xpose.msra.mxu0 0.0
    %647 = vmatprep.subr.mxu0 0.0
    %648 = vmatpush1.xpose.msra.mxu0 0.0
    %649 = vmatprep.subr.mxu0 0.0
    %650 = vmatpush1.xpose.msra.mxu0 0.0
    %651 = vmatprep.subr.mxu0 0.0
    %652 = vmatpush1.xpose.msra.mxu0 0.0
    %653 = vmatprep.subr.mxu0 0.0
    %654 = vmatpush1.xpose.msra.mxu0 0.0
    %655 = vmatprep.subr.mxu0 0.0
    %656 = vmatpush1.xpose.msra.mxu0 0.0
    %657 = vmatprep.subr.mxu0 0.0
    %658 = vmatpush1.xpose.msra.mxu0 0.0
    %659 = vmatprep.subr.mxu0 0.0
    %660 = vmatpush1.xpose.msra.mxu0 0.0
    %661 = vmatprep.subr.mxu0 0.0
    %662 = vmatpush1.xpose.msra.mxu0 0.0
    %663 = vmatprep.subr.mxu0 0.0
    %664 = vmatpush1.xpose.msra.mxu0 0.0
    %665 = vmatprep.subr.mxu0 0.0
    %666 = vmatpush1.xpose.msra.mxu0 0.0
    %667 = vmatprep.subr.mxu0 0.0
    %668 = vmatpush1.xpose.msra.mxu0 0.0
    %669 = vmatprep.subr.mxu0 0.0
    %670 = vmatpush1.xpose.msra.mxu0 0.0
    %671 = vmatprep.subr.mxu0 0.0
    %672 = vmatpush1.xpose.msra.mxu0 0.0
    %673 = vmatprep.subr.mxu0 0.0
    %674 = vmatpush1.xpose.msra.mxu0 0.0
    %675 = vmatprep.mubr.f32.mxu0 0.0
    %676 = vmatmul.mubr.f32.gmra.mrb[0].mxu0 %v606
    %v677 = vpop.f32.mrb[0].mxu0
    %v678 = vadd.f32 0.0, %v677
    %v679 = vpop.f32.mrb[0].mxu0
    %680 = vdwg.mxu0
    %681 = vrot.lane.b32.xlu0 %v293, 120
    %v682 = vpop.permute.xlu0 %681
    %683 = vrot.lane.b32.xlu0 %v202, 120
    %v684 = vpop.permute.xlu0 %683
    %v685 = vsel %vm294, %v682, 0
    %v687 = vsel %vm294, %v684, 0
    %689 = vmatprep.subr.mxu0 0.0
    %690 = vmatpush1.xpose.msra.mxu0 %v687
    %691 = vmatprep.subr.mxu0 0.0
    %692 = vmatpush1.xpose.msra.mxu0 0.0
    %693 = vmatprep.subr.mxu0 0.0
    %694 = vmatpush1.xpose.msra.mxu0 0.0
    %695 = vmatprep.subr.mxu0 0.0
    %696 = vmatpush1.xpose.msra.mxu0 0.0
    %697 = vmatprep.subr.mxu0 0.0
    %698 = vmatpush1.xpose.msra.mxu0 0.0
    %699 = vmatprep.subr.mxu0 0.0
    %700 = vmatpush1.xpose.msra.mxu0 0.0
    %701 = vmatprep.subr.mxu0 0.0
    %702 = vmatpush1.xpose.msra.mxu0 0.0
    %703 = vmatprep.subr.mxu0 0.0
    %704 = vmatpush1.xpose.msra.mxu0 0.0
    %705 = vmatprep.subr.mxu0 0.0
    %706 = vmatpush1.xpose.msra.mxu0 0.0
    %707 = vmatprep.subr.mxu0 0.0
    %708 = vmatpush1.xpose.msra.mxu0 0.0
    %709 = vmatprep.subr.mxu0 0.0
    %710 = vmatpush1.xpose.msra.mxu0 0.0
    %711 = vmatprep.subr.mxu0 0.0
    %712 = vmatpush1.xpose.msra.mxu0 0.0
    %713 = vmatprep.subr.mxu0 0.0
    %714 = vmatpush1.xpose.msra.mxu0 0.0
    %715 = vmatprep.subr.mxu0 0.0
    %716 = vmatpush1.xpose.msra.mxu0 0.0
    %717 = vmatprep.subr.mxu0 0.0
    %718 = vmatpush1.xpose.msra.mxu0 0.0
    %719 = vmatprep.subr.mxu0 0.0
    %720 = vmatpush1.xpose.msra.mxu0 0.0
    %721 = vmatprep.subr.mxu0 0.0
    %722 = vmatpush1.xpose.msra.mxu0 0.0
    %723 = vmatprep.subr.mxu0 0.0
    %724 = vmatpush1.xpose.msra.mxu0 0.0
    %725 = vmatprep.subr.mxu0 0.0
    %726 = vmatpush1.xpose.msra.mxu0 0.0
    %727 = vmatprep.subr.mxu0 0.0
    %728 = vmatpush1.xpose.msra.mxu0 0.0
    %729 = vmatprep.subr.mxu0 0.0
    %730 = vmatpush1.xpose.msra.mxu0 0.0
    %731 = vmatprep.subr.mxu0 0.0
    %732 = vmatpush1.xpose.msra.mxu0 0.0
    %733 = vmatprep.subr.mxu0 0.0
    %734 = vmatpush1.xpose.msra.mxu0 0.0
    %735 = vmatprep.subr.mxu0 0.0
    %736 = vmatpush1.xpose.msra.mxu0 0.0
    %737 = vmatprep.subr.mxu0 0.0
    %738 = vmatpush1.xpose.msra.mxu0 0.0
    %739 = vmatprep.subr.mxu0 0.0
    %740 = vmatpush1.xpose.msra.mxu0 0.0
    %741 = vmatprep.subr.mxu0 0.0
    %742 = vmatpush1.xpose.msra.mxu0 0.0
    %743 = vmatprep.subr.mxu0 0.0
    %744 = vmatpush1.xpose.msra.mxu0 0.0
    %745 = vmatprep.subr.mxu0 0.0
    %746 = vmatpush1.xpose.msra.mxu0 0.0
    %747 = vmatprep.subr.mxu0 0.0
    %748 = vmatpush1.xpose.msra.mxu0 0.0
    %749 = vmatprep.subr.mxu0 0.0
    %750 = vmatpush1.xpose.msra.mxu0 0.0
    %751 = vmatprep.subr.mxu0 0.0
    %752 = vmatpush1.xpose.msra.mxu0 0.0
    %753 = vmatprep.mubr.f32.mxu0 0.0
    %754 = vmatmul.mubr.f32.gmra.mrb[0].mxu0 %v685
    %v755 = vpop.f32.mrb[0].mxu0
    %v756 = vadd.f32 0.0, %v755
    %v757 = vpop.f32.mrb[0].mxu0
    %758 = vdwg.mxu0
    %759 = vrot.lane.b32.xlu0 %v293, 112
    %v760 = vpop.permute.xlu0 %759
    %761 = vrot.lane.b32.xlu0 %v202, 112
    %v762 = vpop.permute.xlu0 %761
    %v763 = vsel %vm294, %v760, 0
    %v765 = vsel %vm294, %v762, 0
    %767 = vmatprep.subr.mxu0 0.0
    %768 = vmatpush1.xpose.msra.mxu0 %v765
    %769 = vmatprep.subr.mxu0 0.0
    %770 = vmatpush1.xpose.msra.mxu0 0.0
    %771 = vmatprep.subr.mxu0 0.0
    %772 = vmatpush1.xpose.msra.mxu0 0.0
    %773 = vmatprep.subr.mxu0 0.0
    %774 = vmatpush1.xpose.msra.mxu0 0.0
    %775 = vmatprep.subr.mxu0 0.0
    %776 = vmatpush1.xpose.msra.mxu0 0.0
    %777 = vmatprep.subr.mxu0 0.0
    %778 = vmatpush1.xpose.msra.mxu0 0.0
    %779 = vmatprep.subr.mxu0 0.0
    %780 = vmatpush1.xpose.msra.mxu0 0.0
    %781 = vmatprep.subr.mxu0 0.0
    %782 = vmatpush1.xpose.msra.mxu0 0.0
    %783 = vmatprep.subr.mxu0 0.0
    %784 = vmatpush1.xpose.msra.mxu0 0.0
    %785 = vmatprep.subr.mxu0 0.0
    %786 = vmatpush1.xpose.msra.mxu0 0.0
    %787 = vmatprep.subr.mxu0 0.0
    %788 = vmatpush1.xpose.msra.mxu0 0.0
    %789 = vmatprep.subr.mxu0 0.0
    %790 = vmatpush1.xpose.msra.mxu0 0.0
    %791 = vmatprep.subr.mxu0 0.0
    %792 = vmatpush1.xpose.msra.mxu0 0.0
    %793 = vmatprep.subr.mxu0 0.0
    %794 = vmatpush1.xpose.msra.mxu0 0.0
    %795 = vmatprep.subr.mxu0 0.0
    %796 = vmatpush1.xpose.msra.mxu0 0.0
    %797 = vmatprep.subr.mxu0 0.0
    %798 = vmatpush1.xpose.msra.mxu0 0.0
    %799 = vmatprep.subr.mxu0 0.0
    %800 = vmatpush1.xpose.msra.mxu0 0.0
    %801 = vmatprep.subr.mxu0 0.0
    %802 = vmatpush1.xpose.msra.mxu0 0.0
    %803 = vmatprep.subr.mxu0 0.0
    %804 = vmatpush1.xpose.msra.mxu0 0.0
    %805 = vmatprep.subr.mxu0 0.0
    %806 = vmatpush1.xpose.msra.mxu0 0.0
    %807 = vmatprep.subr.mxu0 0.0
    %808 = vmatpush1.xpose.msra.mxu0 0.0
    %809 = vmatprep.subr.mxu0 0.0
    %810 = vmatpush1.xpose.msra.mxu0 0.0
    %811 = vmatprep.subr.mxu0 0.0
    %812 = vmatpush1.xpose.msra.mxu0 0.0
    %813 = vmatprep.subr.mxu0 0.0
    %814 = vmatpush1.xpose.msra.mxu0 0.0
    %815 = vmatprep.subr.mxu0 0.0
    %816 = vmatpush1.xpose.msra.mxu0 0.0
    %817 = vmatprep.subr.mxu0 0.0
    %818 = vmatpush1.xpose.msra.mxu0 0.0
    %819 = vmatprep.subr.mxu0 0.0
    %820 = vmatpush1.xpose.msra.mxu0 0.0
    %821 = vmatprep.subr.mxu0 0.0
    %822 = vmatpush1.xpose.msra.mxu0 0.0
    %823 = vmatprep.subr.mxu0 0.0
    %824 = vmatpush1.xpose.msra.mxu0 0.0
    %825 = vmatprep.subr.mxu0 0.0
    %826 = vmatpush1.xpose.msra.mxu0 0.0
    %827 = vmatprep.subr.mxu0 0.0
    %828 = vmatpush1.xpose.msra.mxu0 0.0
    %829 = vmatprep.subr.mxu0 0.0
    %830 = vmatpush1.xpose.msra.mxu0 0.0
    %831 = vmatprep.mubr.f32.mxu0 0.0
    %832 = vmatmul.mubr.f32.gmra.mrb[0].mxu0 %v763
    %v833 = vpop.f32.mrb[0].mxu0
    %v834 = vadd.f32 0.0, %v833
    %v835 = vpop.f32.mrb[0].mxu0
    %836 = vdwg.mxu0
    %837 = vrot.lane.b32.xlu0 %v293, 104
    %v838 = vpop.permute.xlu0 %837
    %839 = vrot.lane.b32.xlu0 %v202, 104
    %v840 = vpop.permute.xlu0 %839
    %v841 = vsel %vm294, %v838, 0
    %v843 = vsel %vm294, %v840, 0
    %845 = vmatprep.subr.mxu0 0.0
    %846 = vmatpush1.xpose.msra.mxu0 %v843
    %847 = vmatprep.subr.mxu0 0.0
    %848 = vmatpush1.xpose.msra.mxu0 0.0
    %849 = vmatprep.subr.mxu0 0.0
    %850 = vmatpush1.xpose.msra.mxu0 0.0
    %851 = vmatprep.subr.mxu0 0.0
    %852 = vmatpush1.xpose.msra.mxu0 0.0
    %853 = vmatprep.subr.mxu0 0.0
    %854 = vmatpush1.xpose.msra.mxu0 0.0
    %855 = vmatprep.subr.mxu0 0.0
    %856 = vmatpush1.xpose.msra.mxu0 0.0
    %857 = vmatprep.subr.mxu0 0.0
    %858 = vmatpush1.xpose.msra.mxu0 0.0
    %859 = vmatprep.subr.mxu0 0.0
    %860 = vmatpush1.xpose.msra.mxu0 0.0
    %861 = vmatprep.subr.mxu0 0.0
    %862 = vmatpush1.xpose.msra.mxu0 0.0
    %863 = vmatprep.subr.mxu0 0.0
    %864 = vmatpush1.xpose.msra.mxu0 0.0
    %865 = vmatprep.subr.mxu0 0.0
    %866 = vmatpush1.xpose.msra.mxu0 0.0
    %867 = vmatprep.subr.mxu0 0.0
    %868 = vmatpush1.xpose.msra.mxu0 0.0
    %869 = vmatprep.subr.mxu0 0.0
    %870 = vmatpush1.xpose.msra.mxu0 0.0
    %871 = vmatprep.subr.mxu0 0.0
    %872 = vmatpush1.xpose.msra.mxu0 0.0
    %873 = vmatprep.subr.mxu0 0.0
    %874 = vmatpush1.xpose.msra.mxu0 0.0
    %875 = vmatprep.subr.mxu0 0.0
    %876 = vmatpush1.xpose.msra.mxu0 0.0
    %877 = vmatprep.subr.mxu0 0.0
    %878 = vmatpush1.xpose.msra.mxu0 0.0
    %879 = vmatprep.subr.mxu0 0.0
    %880 = vmatpush1.xpose.msra.mxu0 0.0
    %881 = vmatprep.subr.mxu0 0.0
    %882 = vmatpush1.xpose.msra.mxu0 0.0
    %883 = vmatprep.subr.mxu0 0.0
    %884 = vmatpush1.xpose.msra.mxu0 0.0
    %885 = vmatprep.subr.mxu0 0.0
    %886 = vmatpush1.xpose.msra.mxu0 0.0
    %887 = vmatprep.subr.mxu0 0.0
    %888 = vmatpush1.xpose.msra.mxu0 0.0
    %889 = vmatprep.subr.mxu0 0.0
    %890 = vmatpush1.xpose.msra.mxu0 0.0
    %891 = vmatprep.subr.mxu0 0.0
    %892 = vmatpush1.xpose.msra.mxu0 0.0
    %893 = vmatprep.subr.mxu0 0.0
    %894 = vmatpush1.xpose.msra.mxu0 0.0
    %895 = vmatprep.subr.mxu0 0.0
    %896 = vmatpush1.xpose.msra.mxu0 0.0
    %897 = vmatprep.subr.mxu0 0.0
    %898 = vmatpush1.xpose.msra.mxu0 0.0
    %899 = vmatprep.subr.mxu0 0.0
    %900 = vmatpush1.xpose.msra.mxu0 0.0
    %901 = vmatprep.subr.mxu0 0.0
    %902 = vmatpush1.xpose.msra.mxu0 0.0
    %903 = vmatprep.subr.mxu0 0.0
    %904 = vmatpush1.xpose.msra.mxu0 0.0
    %905 = vmatprep.subr.mxu0 0.0
    %906 = vmatpush1.xpose.msra.mxu0 0.0
    %907 = vmatprep.subr.mxu0 0.0
    %908 = vmatpush1.xpose.msra.mxu0 0.0
    %909 = vmatprep.mubr.f32.mxu0 0.0
    %910 = vmatmul.mubr.f32.gmra.mrb[0].mxu0 %v841
    %v911 = vpop.f32.mrb[0].mxu0
    %v912 = vadd.f32 0.0, %v911
    %v913 = vpop.f32.mrb[0].mxu0
    %914 = vdwg.mxu0
    %v915 = vsel %vm294, %v368, -inf
    %916 = vmax.xlane.f32.xlu0 %v915
    %v917 = vpop.xlane.xlu0 %916
    %v918 = vsel %vm294, %v446, -inf
    %919 = vmax.xlane.f32.xlu0 %v918
    %v920 = vpop.xlane.xlu0 %919
    %v921 = vsel %vm294, %v524, -inf
    %922 = vmax.xlane.f32.xlu0 %v921
    %v923 = vpop.xlane.xlu0 %922
    %v924 = vsel %vm294, %v602, -inf
    %925 = vmax.xlane.f32.xlu0 %v924
    %v926 = vpop.xlane.xlu0 %925
    %v927 = vsel %vm294, %v678, -inf
    %928 = vmax.xlane.f32.xlu0 %v927
    %v929 = vpop.xlane.xlu0 %928
    %v930 = vsel %vm294, %v756, -inf
    %931 = vmax.xlane.f32.xlu0 %v930
    %v932 = vpop.xlane.xlu0 %931
    %v933 = vsel %vm294, %v834, -inf
    %934 = vmax.xlane.f32.xlu0 %v933
    %v935 = vpop.xlane.xlu0 %934
    %v936 = vsel %vm294, %v912, -inf
    %937 = vmax.xlane.f32.xlu0 %v936
    %v938 = vpop.xlane.xlu0 %937
    %v939 = vsub.f32 %v368, %v917
    %v940 = vsub.f32 %v446, %v920
    %v941 = vsub.f32 %v524, %v923
    %v942 = vsub.f32 %v602, %v926
    %v943 = vsub.f32 %v678, %v929
    %v944 = vsub.f32 %v756, %v932
    %v945 = vsub.f32 %v834, %v935
    %v946 = vsub.f32 %v912, %v938
    %v947 = vmul.f32 %v939, 1.442695
    %v948 = vpow.pop %v947
    %v949 = vmul.f32 %v940, 1.442695
    %v950 = vpow.pop %v949
    %v951 = vmul.f32 %v941, 1.442695
    %v952 = vpow.pop %v951
    %v953 = vmul.f32 %v942, 1.442695
    %v954 = vpow.pop %v953
    %v955 = vmul.f32 %v943, 1.442695
    %v956 = vpow.pop %v955
    %v957 = vmul.f32 %v944, 1.442695
    %v958 = vpow.pop %v957
    %v959 = vmul.f32 %v945, 1.442695
    %v960 = vpow.pop %v959
    %v961 = vmul.f32 %v946, 1.442695
    %v962 = vpow.pop %v961
    %v963 = vsel %vm294, %v948, 0.0
    %964 = vadd.xlane.f32.xlu0 %v963
    %v965 = vpop.xlane.xlu0 %964
    %v966 = vsel %vm294, %v950, 0.0
    %967 = vadd.xlane.f32.xlu0 %v966
    %v968 = vpop.xlane.xlu0 %967
    %v969 = vsel %vm294, %v952, 0.0
    %970 = vadd.xlane.f32.xlu0 %v969
    %v971 = vpop.xlane.xlu0 %970
    %v972 = vsel %vm294, %v954, 0.0
    %973 = vadd.xlane.f32.xlu0 %v972
    %v974 = vpop.xlane.xlu0 %973
    %v975 = vsel %vm294, %v956, 0.0
    %976 = vadd.xlane.f32.xlu0 %v975
    %v977 = vpop.xlane.xlu0 %976
    %v978 = vsel %vm294, %v958, 0.0
    %979 = vadd.xlane.f32.xlu0 %v978
    %v980 = vpop.xlane.xlu0 %979
    %v981 = vsel %vm294, %v960, 0.0
    %982 = vadd.xlane.f32.xlu0 %v981
    %v983 = vpop.xlane.xlu0 %982
    %v984 = vsel %vm294, %v962, 0.0
    %985 = vadd.xlane.f32.xlu0 %v984
    %v986 = vpop.xlane.xlu0 %985
    %v987 = vrcp.pop %v965
    %v988 = vrcp.pop %v968
    %v989 = vrcp.pop %v971
    %v990 = vrcp.pop %v974
    %v991 = vrcp.pop %v977
    %v992 = vrcp.pop %v980
    %v993 = vrcp.pop %v983
    %v994 = vrcp.pop %v986
    %v995 = vmul.f32 %v948, %v987
    %v996 = vmul.f32 %v950, %v988
    %v997 = vmul.f32 %v952, %v989
    %v998 = vmul.f32 %v954, %v990
    %v999 = vmul.f32 %v956, %v991
    %v1000 = vmul.f32 %v958, %v992
    %v1001 = vmul.f32 %v960, %v993
    %v1002 = vmul.f32 %v962, %v994
    %v1004 = vsel %vm294, %v995, 0
    %1006 = vmatprep.subr.mxu0 0.0
    %1007 = vmatpush1.msra.mxu0 %v280
    %1008 = vmatprep.subr.mxu0 0.0
    %1009 = vmatpush1.msra.mxu0 0.0
    %1010 = vmatprep.subr.mxu0 0.0
    %1011 = vmatpush1.msra.mxu0 0.0
    %1012 = vmatprep.subr.mxu0 0.0
    %1013 = vmatpush1.msra.mxu0 0.0
    %1014 = vmatprep.subr.mxu0 0.0
    %1015 = vmatpush1.msra.mxu0 0.0
    %1016 = vmatprep.subr.mxu0 0.0
    %1017 = vmatpush1.msra.mxu0 0.0
    %1018 = vmatprep.subr.mxu0 0.0
    %1019 = vmatpush1.msra.mxu0 0.0
    %1020 = vmatprep.subr.mxu0 0.0
    %1021 = vmatpush1.msra.mxu0 0.0
    %1022 = vmatprep.subr.mxu0 0.0
    %1023 = vmatpush1.msra.mxu0 0.0
    %1024 = vmatprep.subr.mxu0 0.0
    %1025 = vmatpush1.msra.mxu0 0.0
    %1026 = vmatprep.subr.mxu0 0.0
    %1027 = vmatpush1.msra.mxu0 0.0
    %1028 = vmatprep.subr.mxu0 0.0
    %1029 = vmatpush1.msra.mxu0 0.0
    %1030 = vmatprep.subr.mxu0 0.0
    %1031 = vmatpush1.msra.mxu0 0.0
    %1032 = vmatprep.subr.mxu0 0.0
    %1033 = vmatpush1.msra.mxu0 0.0
    %1034 = vmatprep.subr.mxu0 0.0
    %1035 = vmatpush1.msra.mxu0 0.0
    %1036 = vmatprep.subr.mxu0 0.0
    %1037 = vmatpush1.msra.mxu0 0.0
    %1038 = vmatprep.subr.mxu0 0.0
    %1039 = vmatpush1.msra.mxu0 0.0
    %1040 = vmatprep.subr.mxu0 0.0
    %1041 = vmatpush1.msra.mxu0 0.0
    %1042 = vmatprep.subr.mxu0 0.0
    %1043 = vmatpush1.msra.mxu0 0.0
    %1044 = vmatprep.subr.mxu0 0.0
    %1045 = vmatpush1.msra.mxu0 0.0
    %1046 = vmatprep.subr.mxu0 0.0
    %1047 = vmatpush1.msra.mxu0 0.0
    %1048 = vmatprep.subr.mxu0 0.0
    %1049 = vmatpush1.msra.mxu0 0.0
    %1050 = vmatprep.subr.mxu0 0.0
    %1051 = vmatpush1.msra.mxu0 0.0
    %1052 = vmatprep.subr.mxu0 0.0
    %1053 = vmatpush1.msra.mxu0 0.0
    %1054 = vmatprep.subr.mxu0 0.0
    %1055 = vmatpush1.msra.mxu0 0.0
    %1056 = vmatprep.subr.mxu0 0.0
    %1057 = vmatpush1.msra.mxu0 0.0
    %1058 = vmatprep.subr.mxu0 0.0
    %1059 = vmatpush1.msra.mxu0 0.0
    %1060 = vmatprep.subr.mxu0 0.0
    %1061 = vmatpush1.msra.mxu0 0.0
    %1062 = vmatprep.subr.mxu0 0.0
    %1063 = vmatpush1.msra.mxu0 0.0
    %1064 = vmatprep.subr.mxu0 0.0
    %1065 = vmatpush1.msra.mxu0 0.0
    %1066 = vmatprep.subr.mxu0 0.0
    %1067 = vmatpush1.msra.mxu0 0.0
    %1068 = vmatprep.subr.mxu0 0.0
    %1069 = vmatpush1.msra.mxu0 0.0
    %1070 = vmatprep.mubr.f32.mxu0 0.0
    %1071 = vmatmul.mubr.f32.gmra.mrb[0].mxu0 %v1004
    %v1072 = vpop.f32.mrb[0].mxu0
    %v1073 = vadd.f32 0.0, %v1072
    %v1074 = vpop.f32.mrb[0].mxu0
    %1075 = vdwg.mxu0
    %1077 = vrot.lane.b32.xlu0 %v280, 120
    %v1078 = vpop.permute.xlu0 %1077
    %v1081 = vsel %vm294, %v996, 0
    %1083 = vmatprep.subr.mxu0 0.0
    %1084 = vmatpush1.msra.mxu0 %v1078
    %1085 = vmatprep.subr.mxu0 0.0
    %1086 = vmatpush1.msra.mxu0 0.0
    %1087 = vmatprep.subr.mxu0 0.0
    %1088 = vmatpush1.msra.mxu0 0.0
    %1089 = vmatprep.subr.mxu0 0.0
    %1090 = vmatpush1.msra.mxu0 0.0
    %1091 = vmatprep.subr.mxu0 0.0
    %1092 = vmatpush1.msra.mxu0 0.0
    %1093 = vmatprep.subr.mxu0 0.0
    %1094 = vmatpush1.msra.mxu0 0.0
    %1095 = vmatprep.subr.mxu0 0.0
    %1096 = vmatpush1.msra.mxu0 0.0
    %1097 = vmatprep.subr.mxu0 0.0
    %1098 = vmatpush1.msra.mxu0 0.0
    %1099 = vmatprep.subr.mxu0 0.0
    %1100 = vmatpush1.msra.mxu0 0.0
    %1101 = vmatprep.subr.mxu0 0.0
    %1102 = vmatpush1.msra.mxu0 0.0
    %1103 = vmatprep.subr.mxu0 0.0
    %1104 = vmatpush1.msra.mxu0 0.0
    %1105 = vmatprep.subr.mxu0 0.0
    %1106 = vmatpush1.msra.mxu0 0.0
    %1107 = vmatprep.subr.mxu0 0.0
    %1108 = vmatpush1.msra.mxu0 0.0
    %1109 = vmatprep.subr.mxu0 0.0
    %1110 = vmatpush1.msra.mxu0 0.0
    %1111 = vmatprep.subr.mxu0 0.0
    %1112 = vmatpush1.msra.mxu0 0.0
    %1113 = vmatprep.subr.mxu0 0.0
    %1114 = vmatpush1.msra.mxu0 0.0
    %1115 = vmatprep.subr.mxu0 0.0
    %1116 = vmatpush1.msra.mxu0 0.0
    %1117 = vmatprep.subr.mxu0 0.0
    %1118 = vmatpush1.msra.mxu0 0.0
    %1119 = vmatprep.subr.mxu0 0.0
    %1120 = vmatpush1.msra.mxu0 0.0
    %1121 = vmatprep.subr.mxu0 0.0
    %1122 = vmatpush1.msra.mxu0 0.0
    %1123 = vmatprep.subr.mxu0 0.0
    %1124 = vmatpush1.msra.mxu0 0.0
    %1125 = vmatprep.subr.mxu0 0.0
    %1126 = vmatpush1.msra.mxu0 0.0
    %1127 = vmatprep.subr.mxu0 0.0
    %1128 = vmatpush1.msra.mxu0 0.0
    %1129 = vmatprep.subr.mxu0 0.0
    %1130 = vmatpush1.msra.mxu0 0.0
    %1131 = vmatprep.subr.mxu0 0.0
    %1132 = vmatpush1.msra.mxu0 0.0
    %1133 = vmatprep.subr.mxu0 0.0
    %1134 = vmatpush1.msra.mxu0 0.0
    %1135 = vmatprep.subr.mxu0 0.0
    %1136 = vmatpush1.msra.mxu0 0.0
    %1137 = vmatprep.subr.mxu0 0.0
    %1138 = vmatpush1.msra.mxu0 0.0
    %1139 = vmatprep.subr.mxu0 0.0
    %1140 = vmatpush1.msra.mxu0 0.0
    %1141 = vmatprep.subr.mxu0 0.0
    %1142 = vmatpush1.msra.mxu0 0.0
    %1143 = vmatprep.subr.mxu0 0.0
    %1144 = vmatpush1.msra.mxu0 0.0
    %1145 = vmatprep.subr.mxu0 0.0
    %1146 = vmatpush1.msra.mxu0 0.0
    %1147 = vmatprep.mubr.f32.mxu0 0.0
    %1148 = vmatmul.mubr.f32.gmra.mrb[0].mxu0 %v1081
    %v1149 = vpop.f32.mrb[0].mxu0
    %v1150 = vadd.f32 0.0, %v1149
    %v1151 = vpop.f32.mrb[0].mxu0
    %1152 = vdwg.mxu0
    %1153 = vrot.lane.b32.xlu0 %v280, 112
    %v1154 = vpop.permute.xlu0 %1153
    %v1157 = vsel %vm294, %v997, 0
    %1159 = vmatprep.subr.mxu0 0.0
    %1160 = vmatpush1.msra.mxu0 %v1154
    %1161 = vmatprep.subr.mxu0 0.0
    %1162 = vmatpush1.msra.mxu0 0.0
    %1163 = vmatprep.subr.mxu0 0.0
    %1164 = vmatpush1.msra.mxu0 0.0
    %1165 = vmatprep.subr.mxu0 0.0
    %1166 = vmatpush1.msra.mxu0 0.0
    %1167 = vmatprep.subr.mxu0 0.0
    %1168 = vmatpush1.msra.mxu0 0.0
    %1169 = vmatprep.subr.mxu0 0.0
    %1170 = vmatpush1.msra.mxu0 0.0
    %1171 = vmatprep.subr.mxu0 0.0
    %1172 = vmatpush1.msra.mxu0 0.0
    %1173 = vmatprep.subr.mxu0 0.0
    %1174 = vmatpush1.msra.mxu0 0.0
    %1175 = vmatprep.subr.mxu0 0.0
    %1176 = vmatpush1.msra.mxu0 0.0
    %1177 = vmatprep.subr.mxu0 0.0
    %1178 = vmatpush1.msra.mxu0 0.0
    %1179 = vmatprep.subr.mxu0 0.0
    %1180 = vmatpush1.msra.mxu0 0.0
    %1181 = vmatprep.subr.mxu0 0.0
    %1182 = vmatpush1.msra.mxu0 0.0
    %1183 = vmatprep.subr.mxu0 0.0
    %1184 = vmatpush1.msra.mxu0 0.0
    %1185 = vmatprep.subr.mxu0 0.0
    %1186 = vmatpush1.msra.mxu0 0.0
    %1187 = vmatprep.subr.mxu0 0.0
    %1188 = vmatpush1.msra.mxu0 0.0
    %1189 = vmatprep.subr.mxu0 0.0
    %1190 = vmatpush1.msra.mxu0 0.0
    %1191 = vmatprep.subr.mxu0 0.0
    %1192 = vmatpush1.msra.mxu0 0.0
    %1193 = vmatprep.subr.mxu0 0.0
    %1194 = vmatpush1.msra.mxu0 0.0
    %1195 = vmatprep.subr.mxu0 0.0
    %1196 = vmatpush1.msra.mxu0 0.0
    %1197 = vmatprep.subr.mxu0 0.0
    %1198 = vmatpush1.msra.mxu0 0.0
    %1199 = vmatprep.subr.mxu0 0.0
    %1200 = vmatpush1.msra.mxu0 0.0
    %1201 = vmatprep.subr.mxu0 0.0
    %1202 = vmatpush1.msra.mxu0 0.0
    %1203 = vmatprep.subr.mxu0 0.0
    %1204 = vmatpush1.msra.mxu0 0.0
    %1205 = vmatprep.subr.mxu0 0.0
    %1206 = vmatpush1.msra.mxu0 0.0
    %1207 = vmatprep.subr.mxu0 0.0
    %1208 = vmatpush1.msra.mxu0 0.0
    %1209 = vmatprep.subr.mxu0 0.0
    %1210 = vmatpush1.msra.mxu0 0.0
    %1211 = vmatprep.subr.mxu0 0.0
    %1212 = vmatpush1.msra.mxu0 0.0
    %1213 = vmatprep.subr.mxu0 0.0
    %1214 = vmatpush1.msra.mxu0 0.0
    %1215 = vmatprep.subr.mxu0 0.0
    %1216 = vmatpush1.msra.mxu0 0.0
    %1217 = vmatprep.subr.mxu0 0.0
    %1218 = vmatpush1.msra.mxu0 0.0
    %1219 = vmatprep.subr.mxu0 0.0
    %1220 = vmatpush1.msra.mxu0 0.0
    %1221 = vmatprep.subr.mxu0 0.0
    %1222 = vmatpush1.msra.mxu0 0.0
    %1223 = vmatprep.mubr.f32.mxu0 0.0
    %1224 = vmatmul.mubr.f32.gmra.mrb[0].mxu0 %v1157
    %v1225 = vpop.f32.mrb[0].mxu0
    %v1226 = vadd.f32 0.0, %v1225
    %v1227 = vpop.f32.mrb[0].mxu0
    %1228 = vdwg.mxu0
    %1229 = vrot.lane.b32.xlu0 %v280, 104
    %v1230 = vpop.permute.xlu0 %1229
    %v1233 = vsel %vm294, %v998, 0
    %1235 = vmatprep.subr.mxu0 0.0
    %1236 = vmatpush1.msra.mxu0 %v1230
    %1237 = vmatprep.subr.mxu0 0.0
    %1238 = vmatpush1.msra.mxu0 0.0
    %1239 = vmatprep.subr.mxu0 0.0
    %1240 = vmatpush1.msra.mxu0 0.0
    %1241 = vmatprep.subr.mxu0 0.0
    %1242 = vmatpush1.msra.mxu0 0.0
    %1243 = vmatprep.subr.mxu0 0.0
    %1244 = vmatpush1.msra.mxu0 0.0
    %1245 = vmatprep.subr.mxu0 0.0
    %1246 = vmatpush1.msra.mxu0 0.0
    %1247 = vmatprep.subr.mxu0 0.0
    %1248 = vmatpush1.msra.mxu0 0.0
    %1249 = vmatprep.subr.mxu0 0.0
    %1250 = vmatpush1.msra.mxu0 0.0
    %1251 = vmatprep.subr.mxu0 0.0
    %1252 = vmatpush1.msra.mxu0 0.0
    %1253 = vmatprep.subr.mxu0 0.0
    %1254 = vmatpush1.msra.mxu0 0.0
    %1255 = vmatprep.subr.mxu0 0.0
    %1256 = vmatpush1.msra.mxu0 0.0
    %1257 = vmatprep.subr.mxu0 0.0
    %1258 = vmatpush1.msra.mxu0 0.0
    %1259 = vmatprep.subr.mxu0 0.0
    %1260 = vmatpush1.msra.mxu0 0.0
    %1261 = vmatprep.subr.mxu0 0.0
    %1262 = vmatpush1.msra.mxu0 0.0
    %1263 = vmatprep.subr.mxu0 0.0
    %1264 = vmatpush1.msra.mxu0 0.0
    %1265 = vmatprep.subr.mxu0 0.0
    %1266 = vmatpush1.msra.mxu0 0.0
    %1267 = vmatprep.subr.mxu0 0.0
    %1268 = vmatpush1.msra.mxu0 0.0
    %1269 = vmatprep.subr.mxu0 0.0
    %1270 = vmatpush1.msra.mxu0 0.0
    %1271 = vmatprep.subr.mxu0 0.0
    %1272 = vmatpush1.msra.mxu0 0.0
    %1273 = vmatprep.subr.mxu0 0.0
    %1274 = vmatpush1.msra.mxu0 0.0
    %1275 = vmatprep.subr.mxu0 0.0
    %1276 = vmatpush1.msra.mxu0 0.0
    %1277 = vmatprep.subr.mxu0 0.0
    %1278 = vmatpush1.msra.mxu0 0.0
    %1279 = vmatprep.subr.mxu0 0.0
    %1280 = vmatpush1.msra.mxu0 0.0
    %1281 = vmatprep.subr.mxu0 0.0
    %1282 = vmatpush1.msra.mxu0 0.0
    %1283 = vmatprep.subr.mxu0 0.0
    %1284 = vmatpush1.msra.mxu0 0.0
    %1285 = vmatprep.subr.mxu0 0.0
    %1286 = vmatpush1.msra.mxu0 0.0
    %1287 = vmatprep.subr.mxu0 0.0
    %1288 = vmatpush1.msra.mxu0 0.0
    %1289 = vmatprep.subr.mxu0 0.0
    %1290 = vmatpush1.msra.mxu0 0.0
    %1291 = vmatprep.subr.mxu0 0.0
    %1292 = vmatpush1.msra.mxu0 0.0
    %1293 = vmatprep.subr.mxu0 0.0
    %1294 = vmatpush1.msra.mxu0 0.0
    %1295 = vmatprep.subr.mxu0 0.0
    %1296 = vmatpush1.msra.mxu0 0.0
    %1297 = vmatprep.subr.mxu0 0.0
    %1298 = vmatpush1.msra.mxu0 0.0
    %1299 = vmatprep.mubr.f32.mxu0 0.0
    %1300 = vmatmul.mubr.f32.gmra.mrb[0].mxu0 %v1233
    %v1301 = vpop.f32.mrb[0].mxu0
    %v1302 = vadd.f32 0.0, %v1301
    %v1303 = vpop.f32.mrb[0].mxu0
    %1304 = vdwg.mxu0
    %1306 = vrot.lane.b32.xlu0 %v1150, 8
    %v1307 = vpop.permute.xlu0 %1306
    %1310 = vrot.lane.b32.xlu0 %v1226, 16
    %v1311 = vpop.permute.xlu0 %1310
    %1314 = vrot.lane.b32.xlu0 %v1302, 24
    %v1315 = vpop.permute.xlu0 %1314
    %v1317 = vsel %vm294, %v1073, %v1307
    %vm1318 = vcmask 130048
    %v1319 = vsel %vm1318, %v1317, %v1311
    %vm1320 = vcmask 195584
    %v1321 = vsel %vm1320, %v1319, %v1315
    %v1323 = vsel %vm294, %v999, 0
    %1325 = vmatprep.subr.mxu0 0.0
    %1326 = vmatpush1.msra.mxu0 %v285
    %1327 = vmatprep.subr.mxu0 0.0
    %1328 = vmatpush1.msra.mxu0 0.0
    %1329 = vmatprep.subr.mxu0 0.0
    %1330 = vmatpush1.msra.mxu0 0.0
    %1331 = vmatprep.subr.mxu0 0.0
    %1332 = vmatpush1.msra.mxu0 0.0
    %1333 = vmatprep.subr.mxu0 0.0
    %1334 = vmatpush1.msra.mxu0 0.0
    %1335 = vmatprep.subr.mxu0 0.0
    %1336 = vmatpush1.msra.mxu0 0.0
    %1337 = vmatprep.subr.mxu0 0.0
    %1338 = vmatpush1.msra.mxu0 0.0
    %1339 = vmatprep.subr.mxu0 0.0
    %1340 = vmatpush1.msra.mxu0 0.0
    %1341 = vmatprep.subr.mxu0 0.0
    %1342 = vmatpush1.msra.mxu0 0.0
    %1343 = vmatprep.subr.mxu0 0.0
    %1344 = vmatpush1.msra.mxu0 0.0
    %1345 = vmatprep.subr.mxu0 0.0
    %1346 = vmatpush1.msra.mxu0 0.0
    %1347 = vmatprep.subr.mxu0 0.0
    %1348 = vmatpush1.msra.mxu0 0.0
    %1349 = vmatprep.subr.mxu0 0.0
    %1350 = vmatpush1.msra.mxu0 0.0
    %1351 = vmatprep.subr.mxu0 0.0
    %1352 = vmatpush1.msra.mxu0 0.0
    %1353 = vmatprep.subr.mxu0 0.0
    %1354 = vmatpush1.msra.mxu0 0.0
    %1355 = vmatprep.subr.mxu0 0.0
    %1356 = vmatpush1.msra.mxu0 0.0
    %1357 = vmatprep.subr.mxu0 0.0
    %1358 = vmatpush1.msra.mxu0 0.0
    %1359 = vmatprep.subr.mxu0 0.0
    %1360 = vmatpush1.msra.mxu0 0.0
    %1361 = vmatprep.subr.mxu0 0.0
    %1362 = vmatpush1.msra.mxu0 0.0
    %1363 = vmatprep.subr.mxu0 0.0
    %1364 = vmatpush1.msra.mxu0 0.0
    %1365 = vmatprep.subr.mxu0 0.0
    %1366 = vmatpush1.msra.mxu0 0.0
    %1367 = vmatprep.subr.mxu0 0.0
    %1368 = vmatpush1.msra.mxu0 0.0
    %1369 = vmatprep.subr.mxu0 0.0
    %1370 = vmatpush1.msra.mxu0 0.0
    %1371 = vmatprep.subr.mxu0 0.0
    %1372 = vmatpush1.msra.mxu0 0.0
    %1373 = vmatprep.subr.mxu0 0.0
    %1374 = vmatpush1.msra.mxu0 0.0
    %1375 = vmatprep.subr.mxu0 0.0
    %1376 = vmatpush1.msra.mxu0 0.0
    %1377 = vmatprep.subr.mxu0 0.0
    %1378 = vmatpush1.msra.mxu0 0.0
    %1379 = vmatprep.subr.mxu0 0.0
    %1380 = vmatpush1.msra.mxu0 0.0
    %1381 = vmatprep.subr.mxu0 0.0
    %1382 = vmatpush1.msra.mxu0 0.0
    %1383 = vmatprep.subr.mxu0 0.0
    %1384 = vmatpush1.msra.mxu0 0.0
    %1385 = vmatprep.subr.mxu0 0.0
    %1386 = vmatpush1.msra.mxu0 0.0
    %1387 = vmatprep.subr.mxu0 0.0
    %1388 = vmatpush1.msra.mxu0 0.0
    %1389 = vmatprep.mubr.f32.mxu0 0.0
    %1390 = vmatmul.mubr.f32.gmra.mrb[0].mxu0 %v1323
    %v1391 = vpop.f32.mrb[0].mxu0
    %v1392 = vadd.f32 0.0, %v1391
    %v1393 = vpop.f32.mrb[0].mxu0
    %1394 = vdwg.mxu0
    %1396 = vrot.lane.b32.xlu0 %v285, 120
    %v1397 = vpop.permute.xlu0 %1396
    %v1400 = vsel %vm294, %v1000, 0
    %1402 = vmatprep.subr.mxu0 0.0
    %1403 = vmatpush1.msra.mxu0 %v1397
    %1404 = vmatprep.subr.mxu0 0.0
    %1405 = vmatpush1.msra.mxu0 0.0
    %1406 = vmatprep.subr.mxu0 0.0
    %1407 = vmatpush1.msra.mxu0 0.0
    %1408 = vmatprep.subr.mxu0 0.0
    %1409 = vmatpush1.msra.mxu0 0.0
    %1410 = vmatprep.subr.mxu0 0.0
    %1411 = vmatpush1.msra.mxu0 0.0
    %1412 = vmatprep.subr.mxu0 0.0
    %1413 = vmatpush1.msra.mxu0 0.0
    %1414 = vmatprep.subr.mxu0 0.0
    %1415 = vmatpush1.msra.mxu0 0.0
    %1416 = vmatprep.subr.mxu0 0.0
    %1417 = vmatpush1.msra.mxu0 0.0
    %1418 = vmatprep.subr.mxu0 0.0
    %1419 = vmatpush1.msra.mxu0 0.0
    %1420 = vmatprep.subr.mxu0 0.0
    %1421 = vmatpush1.msra.mxu0 0.0
    %1422 = vmatprep.subr.mxu0 0.0
    %1423 = vmatpush1.msra.mxu0 0.0
    %1424 = vmatprep.subr.mxu0 0.0
    %1425 = vmatpush1.msra.mxu0 0.0
    %1426 = vmatprep.subr.mxu0 0.0
    %1427 = vmatpush1.msra.mxu0 0.0
    %1428 = vmatprep.subr.mxu0 0.0
    %1429 = vmatpush1.msra.mxu0 0.0
    %1430 = vmatprep.subr.mxu0 0.0
    %1431 = vmatpush1.msra.mxu0 0.0
    %1432 = vmatprep.subr.mxu0 0.0
    %1433 = vmatpush1.msra.mxu0 0.0
    %1434 = vmatprep.subr.mxu0 0.0
    %1435 = vmatpush1.msra.mxu0 0.0
    %1436 = vmatprep.subr.mxu0 0.0
    %1437 = vmatpush1.msra.mxu0 0.0
    %1438 = vmatprep.subr.mxu0 0.0
    %1439 = vmatpush1.msra.mxu0 0.0
    %1440 = vmatprep.subr.mxu0 0.0
    %1441 = vmatpush1.msra.mxu0 0.0
    %1442 = vmatprep.subr.mxu0 0.0
    %1443 = vmatpush1.msra.mxu0 0.0
    %1444 = vmatprep.subr.mxu0 0.0
    %1445 = vmatpush1.msra.mxu0 0.0
    %1446 = vmatprep.subr.mxu0 0.0
    %1447 = vmatpush1.msra.mxu0 0.0
    %1448 = vmatprep.subr.mxu0 0.0
    %1449 = vmatpush1.msra.mxu0 0.0
    %1450 = vmatprep.subr.mxu0 0.0
    %1451 = vmatpush1.msra.mxu0 0.0
    %1452 = vmatprep.subr.mxu0 0.0
    %1453 = vmatpush1.msra.mxu0 0.0
    %1454 = vmatprep.subr.mxu0 0.0
    %1455 = vmatpush1.msra.mxu0 0.0
    %1456 = vmatprep.subr.mxu0 0.0
    %1457 = vmatpush1.msra.mxu0 0.0
    %1458 = vmatprep.subr.mxu0 0.0
    %1459 = vmatpush1.msra.mxu0 0.0
    %1460 = vmatprep.subr.mxu0 0.0
    %1461 = vmatpush1.msra.mxu0 0.0
    %1462 = vmatprep.subr.mxu0 0.0
    %1463 = vmatpush1.msra.mxu0 0.0
    %1464 = vmatprep.subr.mxu0 0.0
    %1465 = vmatpush1.msra.mxu0 0.0
    %1466 = vmatprep.mubr.f32.mxu0 0.0
    %1467 = vmatmul.mubr.f32.gmra.mrb[0].mxu0 %v1400
    %v1468 = vpop.f32.mrb[0].mxu0
    %v1469 = vadd.f32 0.0, %v1468
    %v1470 = vpop.f32.mrb[0].mxu0
    %1471 = vdwg.mxu0
    %1472 = vrot.lane.b32.xlu0 %v285, 112
    %v1473 = vpop.permute.xlu0 %1472
    %v1476 = vsel %vm294, %v1001, 0
    %1478 = vmatprep.subr.mxu0 0.0
    %1479 = vmatpush1.msra.mxu0 %v1473
    %1480 = vmatprep.subr.mxu0 0.0
    %1481 = vmatpush1.msra.mxu0 0.0
    %1482 = vmatprep.subr.mxu0 0.0
    %1483 = vmatpush1.msra.mxu0 0.0
    %1484 = vmatprep.subr.mxu0 0.0
    %1485 = vmatpush1.msra.mxu0 0.0
    %1486 = vmatprep.subr.mxu0 0.0
    %1487 = vmatpush1.msra.mxu0 0.0
    %1488 = vmatprep.subr.mxu0 0.0
    %1489 = vmatpush1.msra.mxu0 0.0
    %1490 = vmatprep.subr.mxu0 0.0
    %1491 = vmatpush1.msra.mxu0 0.0
    %1492 = vmatprep.subr.mxu0 0.0
    %1493 = vmatpush1.msra.mxu0 0.0
    %1494 = vmatprep.subr.mxu0 0.0
    %1495 = vmatpush1.msra.mxu0 0.0
    %1496 = vmatprep.subr.mxu0 0.0
    %1497 = vmatpush1.msra.mxu0 0.0
    %1498 = vmatprep.subr.mxu0 0.0
    %1499 = vmatpush1.msra.mxu0 0.0
    %1500 = vmatprep.subr.mxu0 0.0
    %1501 = vmatpush1.msra.mxu0 0.0
    %1502 = vmatprep.subr.mxu0 0.0
    %1503 = vmatpush1.msra.mxu0 0.0
    %1504 = vmatprep.subr.mxu0 0.0
    %1505 = vmatpush1.msra.mxu0 0.0
    %1506 = vmatprep.subr.mxu0 0.0
    %1507 = vmatpush1.msra.mxu0 0.0
    %1508 = vmatprep.subr.mxu0 0.0
    %1509 = vmatpush1.msra.mxu0 0.0
    %1510 = vmatprep.subr.mxu0 0.0
    %1511 = vmatpush1.msra.mxu0 0.0
    %1512 = vmatprep.subr.mxu0 0.0
    %1513 = vmatpush1.msra.mxu0 0.0
    %1514 = vmatprep.subr.mxu0 0.0
    %1515 = vmatpush1.msra.mxu0 0.0
    %1516 = vmatprep.subr.mxu0 0.0
    %1517 = vmatpush1.msra.mxu0 0.0
    %1518 = vmatprep.subr.mxu0 0.0
    %1519 = vmatpush1.msra.mxu0 0.0
    %1520 = vmatprep.subr.mxu0 0.0
    %1521 = vmatpush1.msra.mxu0 0.0
    %1522 = vmatprep.subr.mxu0 0.0
    %1523 = vmatpush1.msra.mxu0 0.0
    %1524 = vmatprep.subr.mxu0 0.0
    %1525 = vmatpush1.msra.mxu0 0.0
    %1526 = vmatprep.subr.mxu0 0.0
    %1527 = vmatpush1.msra.mxu0 0.0
    %1528 = vmatprep.subr.mxu0 0.0
    %1529 = vmatpush1.msra.mxu0 0.0
    %1530 = vmatprep.subr.mxu0 0.0
    %1531 = vmatpush1.msra.mxu0 0.0
    %1532 = vmatprep.subr.mxu0 0.0
    %1533 = vmatpush1.msra.mxu0 0.0
    %1534 = vmatprep.subr.mxu0 0.0
    %1535 = vmatpush1.msra.mxu0 0.0
    %1536 = vmatprep.subr.mxu0 0.0
    %1537 = vmatpush1.msra.mxu0 0.0
    %1538 = vmatprep.subr.mxu0 0.0
    %1539 = vmatpush1.msra.mxu0 0.0
    %1540 = vmatprep.subr.mxu0 0.0
    %1541 = vmatpush1.msra.mxu0 0.0
    %1542 = vmatprep.mubr.f32.mxu0 0.0
    %1543 = vmatmul.mubr.f32.gmra.mrb[0].mxu0 %v1476
    %v1544 = vpop.f32.mrb[0].mxu0
    %v1545 = vadd.f32 0.0, %v1544
    %v1546 = vpop.f32.mrb[0].mxu0
    %1547 = vdwg.mxu0
    %1548 = vrot.lane.b32.xlu0 %v285, 104
    %v1549 = vpop.permute.xlu0 %1548
    %v1552 = vsel %vm294, %v1002, 0
    %1554 = vmatprep.subr.mxu0 0.0
    %1555 = vmatpush1.msra.mxu0 %v1549
    %1556 = vmatprep.subr.mxu0 0.0
    %1557 = vmatpush1.msra.mxu0 0.0
    %1558 = vmatprep.subr.mxu0 0.0
    %1559 = vmatpush1.msra.mxu0 0.0
    %1560 = vmatprep.subr.mxu0 0.0
    %1561 = vmatpush1.msra.mxu0 0.0
    %1562 = vmatprep.subr.mxu0 0.0
    %1563 = vmatpush1.msra.mxu0 0.0
    %1564 = vmatprep.subr.mxu0 0.0
    %1565 = vmatpush1.msra.mxu0 0.0
    %1566 = vmatprep.subr.mxu0 0.0
    %1567 = vmatpush1.msra.mxu0 0.0
    %1568 = vmatprep.subr.mxu0 0.0
    %1569 = vmatpush1.msra.mxu0 0.0
    %1570 = vmatprep.subr.mxu0 0.0
    %1571 = vmatpush1.msra.mxu0 0.0
    %1572 = vmatprep.subr.mxu0 0.0
    %1573 = vmatpush1.msra.mxu0 0.0
    %1574 = vmatprep.subr.mxu0 0.0
    %1575 = vmatpush1.msra.mxu0 0.0
    %1576 = vmatprep.subr.mxu0 0.0
    %1577 = vmatpush1.msra.mxu0 0.0
    %1578 = vmatprep.subr.mxu0 0.0
    %1579 = vmatpush1.msra.mxu0 0.0
    %1580 = vmatprep.subr.mxu0 0.0
    %1581 = vmatpush1.msra.mxu0 0.0
    %1582 = vmatprep.subr.mxu0 0.0
    %1583 = vmatpush1.msra.mxu0 0.0
    %1584 = vmatprep.subr.mxu0 0.0
    %1585 = vmatpush1.msra.mxu0 0.0
    %1586 = vmatprep.subr.mxu0 0.0
    %1587 = vmatpush1.msra.mxu0 0.0
    %1588 = vmatprep.subr.mxu0 0.0
    %1589 = vmatpush1.msra.mxu0 0.0
    %1590 = vmatprep.subr.mxu0 0.0
    %1591 = vmatpush1.msra.mxu0 0.0
    %1592 = vmatprep.subr.mxu0 0.0
    %1593 = vmatpush1.msra.mxu0 0.0
    %1594 = vmatprep.subr.mxu0 0.0
    %1595 = vmatpush1.msra.mxu0 0.0
    %1596 = vmatprep.subr.mxu0 0.0
    %1597 = vmatpush1.msra.mxu0 0.0
    %1598 = vmatprep.subr.mxu0 0.0
    %1599 = vmatpush1.msra.mxu0 0.0
    %1600 = vmatprep.subr.mxu0 0.0
    %1601 = vmatpush1.msra.mxu0 0.0
    %1602 = vmatprep.subr.mxu0 0.0
    %1603 = vmatpush1.msra.mxu0 0.0
    %1604 = vmatprep.subr.mxu0 0.0
    %1605 = vmatpush1.msra.mxu0 0.0
    %1606 = vmatprep.subr.mxu0 0.0
    %1607 = vmatpush1.msra.mxu0 0.0
    %1608 = vmatprep.subr.mxu0 0.0
    %1609 = vmatpush1.msra.mxu0 0.0
    %1610 = vmatprep.subr.mxu0 0.0
    %1611 = vmatpush1.msra.mxu0 0.0
    %1612 = vmatprep.subr.mxu0 0.0
    %1613 = vmatpush1.msra.mxu0 0.0
    %1614 = vmatprep.subr.mxu0 0.0
    %1615 = vmatpush1.msra.mxu0 0.0
    %1616 = vmatprep.subr.mxu0 0.0
    %1617 = vmatpush1.msra.mxu0 0.0
    %1618 = vmatprep.mubr.f32.mxu0 0.0
    %1619 = vmatmul.mubr.f32.gmra.mrb[0].mxu0 %v1552
    %v1620 = vpop.f32.mrb[0].mxu0
    %v1621 = vadd.f32 0.0, %v1620
    %v1622 = vpop.f32.mrb[0].mxu0
    %1623 = vdwg.mxu0
    %1625 = vrot.lane.b32.xlu0 %v1469, 8
    %v1626 = vpop.permute.xlu0 %1625
    %1629 = vrot.lane.b32.xlu0 %v1545, 16
    %v1630 = vpop.permute.xlu0 %1629
    %1633 = vrot.lane.b32.xlu0 %v1621, 24
    %v1634 = vpop.permute.xlu0 %1633
    %v1636 = vsel %vm294, %v1392, %v1626
    %v1637 = vsel %vm1318, %v1636, %v1630
    %v1638 = vsel %vm1320, %v1637, %v1634
    %v1639 = vlaneseq
    %v1640 = vshrl.u32 %v1639, 7
    %v1641 = vsub.s32 3, %v1640
    %v1642 = vrot.slane %v30, %v1641
    %v1644 = vsel %vm40, %v1321, 0
    %v1647 = vsel %vm40, %v1638, 0
    %1649 = vmatprep.subr.mxu0 0.0
    %1650 = vmatpush1.msra.mxu0 %v288
    %1651 = vmatprep.subr.mxu0 0.0
    %1652 = vmatpush1.msra.mxu0 %v289
    %1653 = vmatprep.subr.mxu0 0.0
    %1654 = vmatpush1.msra.mxu0 %v290
    %1655 = vmatprep.subr.mxu0 0.0
    %1656 = vmatpush1.msra.mxu0 %v291
    %1657 = vmatprep.subr.mxu0 0.0
    %1658 = vmatpush1.msra.mxu0 0.0
    %1659 = vmatprep.subr.mxu0 0.0
    %1660 = vmatpush1.msra.mxu0 0.0
    %1661 = vmatprep.subr.mxu0 0.0
    %1662 = vmatpush1.msra.mxu0 0.0
    %1663 = vmatprep.subr.mxu0 0.0
    %1664 = vmatpush1.msra.mxu0 0.0
    %1665 = vmatprep.subr.mxu0 0.0
    %1666 = vmatpush1.msra.mxu0 0.0
    %1667 = vmatprep.subr.mxu0 0.0
    %1668 = vmatpush1.msra.mxu0 0.0
    %1669 = vmatprep.subr.mxu0 0.0
    %1670 = vmatpush1.msra.mxu0 0.0
    %1671 = vmatprep.subr.mxu0 0.0
    %1672 = vmatpush1.msra.mxu0 0.0
    %1673 = vmatprep.subr.mxu0 0.0
    %1674 = vmatpush1.msra.mxu0 0.0
    %1675 = vmatprep.subr.mxu0 0.0
    %1676 = vmatpush1.msra.mxu0 0.0
    %1677 = vmatprep.subr.mxu0 0.0
    %1678 = vmatpush1.msra.mxu0 0.0
    %1679 = vmatprep.subr.mxu0 0.0
    %1680 = vmatpush1.msra.mxu0 0.0
    %1681 = vmatprep.subr.mxu0 0.0
    %1682 = vmatpush1.msra.mxu0 0.0
    %1683 = vmatprep.subr.mxu0 0.0
    %1684 = vmatpush1.msra.mxu0 0.0
    %1685 = vmatprep.subr.mxu0 0.0
    %1686 = vmatpush1.msra.mxu0 0.0
    %1687 = vmatprep.subr.mxu0 0.0
    %1688 = vmatpush1.msra.mxu0 0.0
    %1689 = vmatprep.subr.mxu0 0.0
    %1690 = vmatpush1.msra.mxu0 0.0
    %1691 = vmatprep.subr.mxu0 0.0
    %1692 = vmatpush1.msra.mxu0 0.0
    %1693 = vmatprep.subr.mxu0 0.0
    %1694 = vmatpush1.msra.mxu0 0.0
    %1695 = vmatprep.subr.mxu0 0.0
    %1696 = vmatpush1.msra.mxu0 0.0
    %1697 = vmatprep.subr.mxu0 0.0
    %1698 = vmatpush1.msra.mxu0 0.0
    %1699 = vmatprep.subr.mxu0 0.0
    %1700 = vmatpush1.msra.mxu0 0.0
    %1701 = vmatprep.subr.mxu0 0.0
    %1702 = vmatpush1.msra.mxu0 0.0
    %1703 = vmatprep.subr.mxu0 0.0
    %1704 = vmatpush1.msra.mxu0 0.0
    %1705 = vmatprep.subr.mxu0 0.0
    %1706 = vmatpush1.msra.mxu0 0.0
    %1707 = vmatprep.subr.mxu0 0.0
    %1708 = vmatpush1.msra.mxu0 0.0
    %1709 = vmatprep.subr.mxu0 0.0
    %1710 = vmatpush1.msra.mxu0 0.0
    %1711 = vmatprep.subr.mxu0 0.0
    %1712 = vmatpush1.msra.mxu0 0.0
    %1713 = vmatprep.mubr.f32.mxu0 0.0
    %1714 = vmatmul.mubr.f32.gmra.mrb[0].mxu0 %v1644
    %v1715 = vpop.f32.mrb[0].mxu0
    %v1716 = vadd.f32 %v1642, %v1715
    %v1717 = vpop.f32.mrb[0].mxu0
    %1718 = vmatprep.mubr.f32.mxu0 0.0
    %1719 = vmatmul.mubr.f32.gmra.mrb[0].mxu0 %v1647
    %v1720 = vpop.f32.mrb[0].mxu0
    %v1721 = vadd.f32 %v1642, %v1720
    %v1722 = vpop.f32.mrb[0].mxu0
    %1723 = vdwg.mxu0
    %v1724 = vadd.f32 %v24, %v1716
    %v1725 = vadd.f32 %v25, %v1721
    %v1726 = vsel %vm40, %v1724, 0.0
    %1727 = vadd.xlane.f32.xlu0 %v1726
    %v1728 = vpop.xlane.xlu0 %1727
    %v1729 = vsel %vm40, %v1725, 0.0
    %1730 = vadd.xlane.f32.xlu0 %v1729
    %v1731 = vpop.xlane.xlu0 %1730
    %v1732 = vrcp.pop 32.0
    %v1733 = vmul.f32 %v1728, %v1732
    %v1734 = vmul.f32 %v1731, %v1732
    %v1735 = vsub.f32 %v1724, %v1733
    %v1736 = vsub.f32 %v1725, %v1734
    %v1737 = vmul.f32 %v1735, %v1735
    %v1738 = vmul.f32 %v1736, %v1736
    %v1739 = vsel %vm40, %v1737, 0.0
    %1740 = vadd.xlane.f32.xlu0 %v1739
    %v1741 = vpop.xlane.xlu0 %1740
    %v1742 = vsel %vm40, %v1738, 0.0
    %1743 = vadd.xlane.f32.xlu0 %v1742
    %v1744 = vpop.xlane.xlu0 %1743
    %v1745 = vmul.f32 %v1741, %v1732
    %v1746 = vmul.f32 %v1744, %v1732
    %v1747 = vadd.f32 %v1745, 1e-05
    %v1748 = vadd.f32 %v1746, 1e-05
    %v1749 = vrsqrt.pop %v1747
    %v1750 = vrsqrt.pop %v1748
    %v1751 = vmul.f32 %v1735, %v1749
    %v1752 = vmul.f32 %v1736, %v1750
    %v1753 = vlaneseq
    %v1754 = vshrl.u32 %v1753, 7
    %v1755 = vsub.s32 1, %v1754
    %v1756 = vrot.slane %v31, %v1755
    %v1757 = vmul.f32 %v1751, %v1756
    %v1758 = vmul.f32 %v1752, %v1756
    %v1759 = vlaneseq
    %v1760 = vshrl.u32 %v1759, 7
    %v1761 = vsub.s32 2, %v1760
    %v1762 = vrot.slane %v31, %v1761
    %v1763 = vadd.f32 %v1757, %v1762
    %v1764 = vadd.f32 %v1758, %v1762
    %v1765 = vld [vmem:[%s2 + $0x80] sm:$0xff]
    %v1766 = vld [vmem:[%s2 + $0x88] sm:$0xff]
    %v1767 = vld [vmem:[%s2 + $0x90] sm:$0xff]
    %v1768 = vld [vmem:[%s2 + $0x98] sm:$0xff]
    %v1769 = vlaneseq
    %v1770 = vshrl.u32 %v1769, 7
    %v1771 = vsub.s32 4, %v1770
    %v1772 = vrot.slane %v30, %v1771
    %v1774 = vsel %vm40, %v1763, 0
    %v1777 = vsel %vm40, %v1764, 0
    %1779 = vmatprep.subr.mxu0 0.0
    %1780 = vmatpush1.msra.mxu0 %v1765
    %1781 = vmatprep.subr.mxu0 0.0
    %1782 = vmatpush1.msra.mxu0 %v1766
    %1783 = vmatprep.subr.mxu0 0.0
    %1784 = vmatpush1.msra.mxu0 %v1767
    %1785 = vmatprep.subr.mxu0 0.0
    %1786 = vmatpush1.msra.mxu0 %v1768
    %1787 = vmatprep.subr.mxu0 0.0
    %1788 = vmatpush1.msra.mxu0 0.0
    %1789 = vmatprep.subr.mxu0 0.0
    %1790 = vmatpush1.msra.mxu0 0.0
    %1791 = vmatprep.subr.mxu0 0.0
    %1792 = vmatpush1.msra.mxu0 0.0
    %1793 = vmatprep.subr.mxu0 0.0
    %1794 = vmatpush1.msra.mxu0 0.0
    %1795 = vmatprep.subr.mxu0 0.0
    %1796 = vmatpush1.msra.mxu0 0.0
    %1797 = vmatprep.subr.mxu0 0.0
    %1798 = vmatpush1.msra.mxu0 0.0
    %1799 = vmatprep.subr.mxu0 0.0
    %1800 = vmatpush1.msra.mxu0 0.0
    %1801 = vmatprep.subr.mxu0 0.0
    %1802 = vmatpush1.msra.mxu0 0.0
    %1803 = vmatprep.subr.mxu0 0.0
    %1804 = vmatpush1.msra.mxu0 0.0
    %1805 = vmatprep.subr.mxu0 0.0
    %1806 = vmatpush1.msra.mxu0 0.0
    %1807 = vmatprep.subr.mxu0 0.0
    %1808 = vmatpush1.msra.mxu0 0.0
    %1809 = vmatprep.subr.mxu0 0.0
    %1810 = vmatpush1.msra.mxu0 0.0
    %1811 = vmatprep.subr.mxu0 0.0
    %1812 = vmatpush1.msra.mxu0 0.0
    %1813 = vmatprep.subr.mxu0 0.0
    %1814 = vmatpush1.msra.mxu0 0.0
    %1815 = vmatprep.subr.mxu0 0.0
    %1816 = vmatpush1.msra.mxu0 0.0
    %1817 = vmatprep.subr.mxu0 0.0
    %1818 = vmatpush1.msra.mxu0 0.0
    %1819 = vmatprep.subr.mxu0 0.0
    %1820 = vmatpush1.msra.mxu0 0.0
    %1821 = vmatprep.subr.mxu0 0.0
    %1822 = vmatpush1.msra.mxu0 0.0
    %1823 = vmatprep.subr.mxu0 0.0
    %1824 = vmatpush1.msra.mxu0 0.0
    %1825 = vmatprep.subr.mxu0 0.0
    %1826 = vmatpush1.msra.mxu0 0.0
    %1827 = vmatprep.subr.mxu0 0.0
    %1828 = vmatpush1.msra.mxu0 0.0
    %1829 = vmatprep.subr.mxu0 0.0
    %1830 = vmatpush1.msra.mxu0 0.0
    %1831 = vmatprep.subr.mxu0 0.0
    %1832 = vmatpush1.msra.mxu0 0.0
    %1833 = vmatprep.subr.mxu0 0.0
    %1834 = vmatpush1.msra.mxu0 0.0
    %1835 = vmatprep.subr.mxu0 0.0
    %1836 = vmatpush1.msra.mxu0 0.0
    %1837 = vmatprep.subr.mxu0 0.0
    %1838 = vmatpush1.msra.mxu0 0.0
    %1839 = vmatprep.subr.mxu0 0.0
    %1840 = vmatpush1.msra.mxu0 0.0
    %1841 = vmatprep.subr.mxu0 0.0
    %1842 = vmatpush1.msra.mxu0 0.0
    %1843 = vmatprep.mubr.f32.mxu0 0.0
    %1844 = vmatmul.mubr.f32.gmra.mrb[0].mxu0 %v1774
    %v1845 = vpop.f32.mrb[0].mxu0
    %v1846 = vadd.f32 %v1772, %v1845
    %v1847 = vpop.f32.mrb[0].mxu0
    %1848 = vmatprep.mubr.f32.mxu0 0.0
    %1849 = vmatmul.mubr.f32.gmra.mrb[0].mxu0 %v1777
    %v1850 = vpop.f32.mrb[0].mxu0
    %v1851 = vadd.f32 %v1772, %v1850
    %v1852 = vpop.f32.mrb[0].mxu0
    %1853 = vdwg.mxu0
    %v1854 = vld [vmem:[%s2 + $0xa0] sm:$0xff]
    %v1855 = vld [vmem:[%s2 + $0xa8] sm:$0xff]
    %v1856 = vld [vmem:[%s2 + $0xb0] sm:$0xff]
    %v1857 = vld [vmem:[%s2 + $0xb8] sm:$0xff]
    %v1858 = vlaneseq
    %v1859 = vshrl.u32 %v1858, 7
    %v1860 = vsub.s32 5, %v1859
    %v1861 = vrot.slane %v30, %v1860
    %v1863 = vsel %vm40, %v26, 0
    %v1866 = vsel %vm40, %v27, 0
    %v1869 = vsel %vm40, %v28, 0
    %v1872 = vsel %vm40, %v29, 0
    %1874 = vmatprep.subr.mxu0 0.0
    %1875 = vmatpush1.msra.mxu0 %v1854
    %1876 = vmatprep.subr.mxu0 0.0
    %1877 = vmatpush1.msra.mxu0 %v1855
    %1878 = vmatprep.subr.mxu0 0.0
    %1879 = vmatpush1.msra.mxu0 %v1856
    %1880 = vmatprep.subr.mxu0 0.0
    %1881 = vmatpush1.msra.mxu0 %v1857
    %1882 = vmatprep.subr.mxu0 0.0
    %1883 = vmatpush1.msra.mxu0 0.0
    %1884 = vmatprep.subr.mxu0 0.0
    %1885 = vmatpush1.msra.mxu0 0.0
    %1886 = vmatprep.subr.mxu0 0.0
    %1887 = vmatpush1.msra.mxu0 0.0
    %1888 = vmatprep.subr.mxu0 0.0
    %1889 = vmatpush1.msra.mxu0 0.0
    %1890 = vmatprep.subr.mxu0 0.0
    %1891 = vmatpush1.msra.mxu0 0.0
    %1892 = vmatprep.subr.mxu0 0.0
    %1893 = vmatpush1.msra.mxu0 0.0
    %1894 = vmatprep.subr.mxu0 0.0
    %1895 = vmatpush1.msra.mxu0 0.0
    %1896 = vmatprep.subr.mxu0 0.0
    %1897 = vmatpush1.msra.mxu0 0.0
    %1898 = vmatprep.subr.mxu0 0.0
    %1899 = vmatpush1.msra.mxu0 0.0
    %1900 = vmatprep.subr.mxu0 0.0
    %1901 = vmatpush1.msra.mxu0 0.0
    %1902 = vmatprep.subr.mxu0 0.0
    %1903 = vmatpush1.msra.mxu0 0.0
    %1904 = vmatprep.subr.mxu0 0.0
    %1905 = vmatpush1.msra.mxu0 0.0
    %1906 = vmatprep.subr.mxu0 0.0
    %1907 = vmatpush1.msra.mxu0 0.0
    %1908 = vmatprep.subr.mxu0 0.0
    %1909 = vmatpush1.msra.mxu0 0.0
    %1910 = vmatprep.subr.mxu0 0.0
    %1911 = vmatpush1.msra.mxu0 0.0
    %1912 = vmatprep.subr.mxu0 0.0
    %1913 = vmatpush1.msra.mxu0 0.0
    %1914 = vmatprep.subr.mxu0 0.0
    %1915 = vmatpush1.msra.mxu0 0.0
    %1916 = vmatprep.subr.mxu0 0.0
    %1917 = vmatpush1.msra.mxu0 0.0
    %1918 = vmatprep.subr.mxu0 0.0
    %1919 = vmatpush1.msra.mxu0 0.0
    %1920 = vmatprep.subr.mxu0 0.0
    %1921 = vmatpush1.msra.mxu0 0.0
    %1922 = vmatprep.subr.mxu0 0.0
    %1923 = vmatpush1.msra.mxu0 0.0
    %1924 = vmatprep.subr.mxu0 0.0
    %1925 = vmatpush1.msra.mxu0 0.0
    %1926 = vmatprep.subr.mxu0 0.0
    %1927 = vmatpush1.msra.mxu0 0.0
    %1928 = vmatprep.subr.mxu0 0.0
    %1929 = vmatpush1.msra.mxu0 0.0
    %1930 = vmatprep.subr.mxu0 0.0
    %1931 = vmatpush1.msra.mxu0 0.0
    %1932 = vmatprep.subr.mxu0 0.0
    %1933 = vmatpush1.msra.mxu0 0.0
    %1934 = vmatprep.subr.mxu0 0.0
    %1935 = vmatpush1.msra.mxu0 0.0
    %1936 = vmatprep.subr.mxu0 0.0
    %1937 = vmatpush1.msra.mxu0 0.0
    %1938 = vmatprep.mubr.f32.mxu0 0.0
    %1939 = vmatmul.mubr.f32.gmra.mrb[0].mxu0 %v1863
    %v1940 = vpop.f32.mrb[0].mxu0
    %v1941 = vadd.f32 %v1861, %v1940
    %v1942 = vpop.f32.mrb[0].mxu0
    %1943 = vmatprep.mubr.f32.mxu0 0.0
    %1944 = vmatmul.mubr.f32.gmra.mrb[0].mxu0 %v1866
    %v1945 = vpop.f32.mrb[0].mxu0
    %v1946 = vadd.f32 %v1861, %v1945
    %v1947 = vpop.f32.mrb[0].mxu0
    %1948 = vmatprep.mubr.f32.mxu0 0.0
    %1949 = vmatmul.mubr.f32.gmra.mrb[0].mxu0 %v1869
    %v1950 = vpop.f32.mrb[0].mxu0
    %v1951 = vadd.f32 %v1861, %v1950
    %v1952 = vpop.f32.mrb[0].mxu0
    %1953 = vmatprep.mubr.f32.mxu0 0.0
    %1954 = vmatmul.mubr.f32.gmra.mrb[0].mxu0 %v1872
    %v1955 = vpop.f32.mrb[0].mxu0
    %v1956 = vadd.f32 %v1861, %v1955
    %v1957 = vpop.f32.mrb[0].mxu0
    %1958 = vdwg.mxu0
    %v1959 = vld [vmem:[%s2 + $0xc0] sm:$0xff]
    %v1960 = vld [vmem:[%s2 + $0xc8] sm:$0xff]
    %v1961 = vld [vmem:[%s2 + $0xd0] sm:$0xff]
    %v1962 = vld [vmem:[%s2 + $0xd8] sm:$0xff]
    %v1963 = vlaneseq
    %v1964 = vshrl.u32 %v1963, 7
    %v1965 = vsub.s32 6, %v1964
    %v1966 = vrot.slane %v30, %v1965
    %1967 = vmatprep.subr.mxu0 0.0
    %1968 = vmatpush1.msra.mxu0 %v1959
    %1969 = vmatprep.subr.mxu0 0.0
    %1970 = vmatpush1.msra.mxu0 %v1960
    %1971 = vmatprep.subr.mxu0 0.0
    %1972 = vmatpush1.msra.mxu0 %v1961
    %1973 = vmatprep.subr.mxu0 0.0
    %1974 = vmatpush1.msra.mxu0 %v1962
    %1975 = vmatprep.subr.mxu0 0.0
    %1976 = vmatpush1.msra.mxu0 0.0
    %1977 = vmatprep.subr.mxu0 0.0
    %1978 = vmatpush1.msra.mxu0 0.0
    %1979 = vmatprep.subr.mxu0 0.0
    %1980 = vmatpush1.msra.mxu0 0.0
    %1981 = vmatprep.subr.mxu0 0.0
    %1982 = vmatpush1.msra.mxu0 0.0
    %1983 = vmatprep.subr.mxu0 0.0
    %1984 = vmatpush1.msra.mxu0 0.0
    %1985 = vmatprep.subr.mxu0 0.0
    %1986 = vmatpush1.msra.mxu0 0.0
    %1987 = vmatprep.subr.mxu0 0.0
    %1988 = vmatpush1.msra.mxu0 0.0
    %1989 = vmatprep.subr.mxu0 0.0
    %1990 = vmatpush1.msra.mxu0 0.0
    %1991 = vmatprep.subr.mxu0 0.0
    %1992 = vmatpush1.msra.mxu0 0.0
    %1993 = vmatprep.subr.mxu0 0.0
    %1994 = vmatpush1.msra.mxu0 0.0
    %1995 = vmatprep.subr.mxu0 0.0
    %1996 = vmatpush1.msra.mxu0 0.0
    %1997 = vmatprep.subr.mxu0 0.0
    %1998 = vmatpush1.msra.mxu0 0.0
    %1999 = vmatprep.subr.mxu0 0.0
    %2000 = vmatpush1.msra.mxu0 0.0
    %2001 = vmatprep.subr.mxu0 0.0
    %2002 = vmatpush1.msra.mxu0 0.0
    %2003 = vmatprep.subr.mxu0 0.0
    %2004 = vmatpush1.msra.mxu0 0.0
    %2005 = vmatprep.subr.mxu0 0.0
    %2006 = vmatpush1.msra.mxu0 0.0
    %2007 = vmatprep.subr.mxu0 0.0
    %2008 = vmatpush1.msra.mxu0 0.0
    %2009 = vmatprep.subr.mxu0 0.0
    %2010 = vmatpush1.msra.mxu0 0.0
    %2011 = vmatprep.subr.mxu0 0.0
    %2012 = vmatpush1.msra.mxu0 0.0
    %2013 = vmatprep.subr.mxu0 0.0
    %2014 = vmatpush1.msra.mxu0 0.0
    %2015 = vmatprep.subr.mxu0 0.0
    %2016 = vmatpush1.msra.mxu0 0.0
    %2017 = vmatprep.subr.mxu0 0.0
    %2018 = vmatpush1.msra.mxu0 0.0
    %2019 = vmatprep.subr.mxu0 0.0
    %2020 = vmatpush1.msra.mxu0 0.0
    %2021 = vmatprep.subr.mxu0 0.0
    %2022 = vmatpush1.msra.mxu0 0.0
    %2023 = vmatprep.subr.mxu0 0.0
    %2024 = vmatpush1.msra.mxu0 0.0
    %2025 = vmatprep.subr.mxu0 0.0
    %2026 = vmatpush1.msra.mxu0 0.0
    %2027 = vmatprep.subr.mxu0 0.0
    %2028 = vmatpush1.msra.mxu0 0.0
    %2029 = vmatprep.subr.mxu0 0.0
    %2030 = vmatpush1.msra.mxu0 0.0
    %2031 = vmatprep.mubr.f32.mxu0 0.0
    %2032 = vmatmul.mubr.f32.gmra.mrb[0].mxu0 %v1863
    %v2033 = vpop.f32.mrb[0].mxu0
    %v2034 = vadd.f32 %v1966, %v2033
    %v2035 = vpop.f32.mrb[0].mxu0
    %2036 = vmatprep.mubr.f32.mxu0 0.0
    %2037 = vmatmul.mubr.f32.gmra.mrb[0].mxu0 %v1866
    %v2038 = vpop.f32.mrb[0].mxu0
    %v2039 = vadd.f32 %v1966, %v2038
    %v2040 = vpop.f32.mrb[0].mxu0
    %2041 = vmatprep.mubr.f32.mxu0 0.0
    %2042 = vmatmul.mubr.f32.gmra.mrb[0].mxu0 %v1869
    %v2043 = vpop.f32.mrb[0].mxu0
    %v2044 = vadd.f32 %v1966, %v2043
    %v2045 = vpop.f32.mrb[0].mxu0
    %2046 = vmatprep.mubr.f32.mxu0 0.0
    %2047 = vmatmul.mubr.f32.gmra.mrb[0].mxu0 %v1872
    %v2048 = vpop.f32.mrb[0].mxu0
    %v2049 = vadd.f32 %v1966, %v2048
    %v2050 = vpop.f32.mrb[0].mxu0
    %2051 = vdwg.mxu0
    %v2052 = vld [vmem:[%s2 + $0xe0] sm:$0xff]
    %v2053 = vld [vmem:[%s2 + $0xe8] sm:$0xff]
    %v2054 = vld [vmem:[%s2 + $0xf0] sm:$0xff]
    %v2055 = vld [vmem:[%s2 + $0xf8] sm:$0xff]
    %v2056 = vmul.f32 %v1846, 0.35355338
    %v2057 = vmul.f32 %v1851, 0.35355338
    %v2059 = vsel %vm294, %v2056, 0
    %v2062 = vsel %vm294, %v1941, 0
    %v2065 = vsel %vm294, %v1946, 0
    %2067 = vmatprep.subr.mxu0 0.0
    %2068 = vmatpush1.xpose.msra.mxu0 %v2062
    %2069 = vmatprep.subr.mxu0 0.0
    %2070 = vmatpush1.xpose.msra.mxu0 %v2065
    %2071 = vmatprep.subr.mxu0 0.0
    %2072 = vmatpush1.xpose.msra.mxu0 0.0
    %2073 = vmatprep.subr.mxu0 0.0
    %2074 = vmatpush1.xpose.msra.mxu0 0.0
    %2075 = vmatprep.subr.mxu0 0.0
    %2076 = vmatpush1.xpose.msra.mxu0 0.0
    %2077 = vmatprep.subr.mxu0 0.0
    %2078 = vmatpush1.xpose.msra.mxu0 0.0
    %2079 = vmatprep.subr.mxu0 0.0
    %2080 = vmatpush1.xpose.msra.mxu0 0.0
    %2081 = vmatprep.subr.mxu0 0.0
    %2082 = vmatpush1.xpose.msra.mxu0 0.0
    %2083 = vmatprep.subr.mxu0 0.0
    %2084 = vmatpush1.xpose.msra.mxu0 0.0
    %2085 = vmatprep.subr.mxu0 0.0
    %2086 = vmatpush1.xpose.msra.mxu0 0.0
    %2087 = vmatprep.subr.mxu0 0.0
    %2088 = vmatpush1.xpose.msra.mxu0 0.0
    %2089 = vmatprep.subr.mxu0 0.0
    %2090 = vmatpush1.xpose.msra.mxu0 0.0
    %2091 = vmatprep.subr.mxu0 0.0
    %2092 = vmatpush1.xpose.msra.mxu0 0.0
    %2093 = vmatprep.subr.mxu0 0.0
    %2094 = vmatpush1.xpose.msra.mxu0 0.0
    %2095 = vmatprep.subr.mxu0 0.0
    %2096 = vmatpush1.xpose.msra.mxu0 0.0
    %2097 = vmatprep.subr.mxu0 0.0
    %2098 = vmatpush1.xpose.msra.mxu0 0.0
    %2099 = vmatprep.subr.mxu0 0.0
    %2100 = vmatpush1.xpose.msra.mxu0 0.0
    %2101 = vmatprep.subr.mxu0 0.0
    %2102 = vmatpush1.xpose.msra.mxu0 0.0
    %2103 = vmatprep.subr.mxu0 0.0
    %2104 = vmatpush1.xpose.msra.mxu0 0.0
    %2105 = vmatprep.subr.mxu0 0.0
    %2106 = vmatpush1.xpose.msra.mxu0 0.0
    %2107 = vmatprep.subr.mxu0 0.0
    %2108 = vmatpush1.xpose.msra.mxu0 0.0
    %2109 = vmatprep.subr.mxu0 0.0
    %2110 = vmatpush1.xpose.msra.mxu0 0.0
    %2111 = vmatprep.subr.mxu0 0.0
    %2112 = vmatpush1.xpose.msra.mxu0 0.0
    %2113 = vmatprep.subr.mxu0 0.0
    %2114 = vmatpush1.xpose.msra.mxu0 0.0
    %2115 = vmatprep.subr.mxu0 0.0
    %2116 = vmatpush1.xpose.msra.mxu0 0.0
    %2117 = vmatprep.subr.mxu0 0.0
    %2118 = vmatpush1.xpose.msra.mxu0 0.0
    %2119 = vmatprep.subr.mxu0 0.0
    %2120 = vmatpush1.xpose.msra.mxu0 0.0
    %2121 = vmatprep.subr.mxu0 0.0
    %2122 = vmatpush1.xpose.msra.mxu0 0.0
    %2123 = vmatprep.subr.mxu0 0.0
    %2124 = vmatpush1.xpose.msra.mxu0 0.0
    %2125 = vmatprep.subr.mxu0 0.0
    %2126 = vmatpush1.xpose.msra.mxu0 0.0
    %2127 = vmatprep.subr.mxu0 0.0
    %2128 = vmatpush1.xpose.msra.mxu0 0.0
    %2129 = vmatprep.subr.mxu0 0.0
    %2130 = vmatpush1.xpose.msra.mxu0 0.0
    %2131 = vmatprep.mubr.f32.mxu0 0.0
    %2132 = vmatmul.mubr.f32.gmra.mrb[0].mxu0 %v2059
    %v2133 = vpop.f32.mrb[0].mxu0
    %v2134 = vadd.f32 0.0, %v2133
    %v2135 = vpop.f32.mrb[0].mxu0
    %2136 = vdwg.mxu0
    %2137 = vrot.lane.b32.xlu0 %v2056, 120
    %v2138 = vpop.permute.xlu0 %2137
    %2139 = vrot.lane.b32.xlu0 %v1941, 120
    %v2140 = vpop.permute.xlu0 %2139
    %2141 = vrot.lane.b32.xlu0 %v1946, 120
    %v2142 = vpop.permute.xlu0 %2141
    %v2143 = vsel %vm294, %v2138, 0
    %v2145 = vsel %vm294, %v2140, 0
    %v2147 = vsel %vm294, %v2142, 0
    %2149 = vmatprep.subr.mxu0 0.0
    %2150 = vmatpush1.xpose.msra.mxu0 %v2145
    %2151 = vmatprep.subr.mxu0 0.0
    %2152 = vmatpush1.xpose.msra.mxu0 %v2147
    %2153 = vmatprep.subr.mxu0 0.0
    %2154 = vmatpush1.xpose.msra.mxu0 0.0
    %2155 = vmatprep.subr.mxu0 0.0
    %2156 = vmatpush1.xpose.msra.mxu0 0.0
    %2157 = vmatprep.subr.mxu0 0.0
    %2158 = vmatpush1.xpose.msra.mxu0 0.0
    %2159 = vmatprep.subr.mxu0 0.0
    %2160 = vmatpush1.xpose.msra.mxu0 0.0
    %2161 = vmatprep.subr.mxu0 0.0
    %2162 = vmatpush1.xpose.msra.mxu0 0.0
    %2163 = vmatprep.subr.mxu0 0.0
    %2164 = vmatpush1.xpose.msra.mxu0 0.0
    %2165 = vmatprep.subr.mxu0 0.0
    %2166 = vmatpush1.xpose.msra.mxu0 0.0
    %2167 = vmatprep.subr.mxu0 0.0
    %2168 = vmatpush1.xpose.msra.mxu0 0.0
    %2169 = vmatprep.subr.mxu0 0.0
    %2170 = vmatpush1.xpose.msra.mxu0 0.0
    %2171 = vmatprep.subr.mxu0 0.0
    %2172 = vmatpush1.xpose.msra.mxu0 0.0
    %2173 = vmatprep.subr.mxu0 0.0
    %2174 = vmatpush1.xpose.msra.mxu0 0.0
    %2175 = vmatprep.subr.mxu0 0.0
    %2176 = vmatpush1.xpose.msra.mxu0 0.0
    %2177 = vmatprep.subr.mxu0 0.0
    %2178 = vmatpush1.xpose.msra.mxu0 0.0
    %2179 = vmatprep.subr.mxu0 0.0
    %2180 = vmatpush1.xpose.msra.mxu0 0.0
    %2181 = vmatprep.subr.mxu0 0.0
    %2182 = vmatpush1.xpose.msra.mxu0 0.0
    %2183 = vmatprep.subr.mxu0 0.0
    %2184 = vmatpush1.xpose.msra.mxu0 0.0
    %2185 = vmatprep.subr.mxu0 0.0
    %2186 = vmatpush1.xpose.msra.mxu0 0.0
    %2187 = vmatprep.subr.mxu0 0.0
    %2188 = vmatpush1.xpose.msra.mxu0 0.0
    %2189 = vmatprep.subr.mxu0 0.0
    %2190 = vmatpush1.xpose.msra.mxu0 0.0
    %2191 = vmatprep.subr.mxu0 0.0
    %2192 = vmatpush1.xpose.msra.mxu0 0.0
    %2193 = vmatprep.subr.mxu0 0.0
    %2194 = vmatpush1.xpose.msra.mxu0 0.0
    %2195 = vmatprep.subr.mxu0 0.0
    %2196 = vmatpush1.xpose.msra.mxu0 0.0
    %2197 = vmatprep.subr.mxu0 0.0
    %2198 = vmatpush1.xpose.msra.mxu0 0.0
    %2199 = vmatprep.subr.mxu0 0.0
    %2200 = vmatpush1.xpose.msra.mxu0 0.0
    %2201 = vmatprep.subr.mxu0 0.0
    %2202 = vmatpush1.xpose.msra.mxu0 0.0
    %2203 = vmatprep.subr.mxu0 0.0
    %2204 = vmatpush1.xpose.msra.mxu0 0.0
    %2205 = vmatprep.subr.mxu0 0.0
    %2206 = vmatpush1.xpose.msra.mxu0 0.0
    %2207 = vmatprep.subr.mxu0 0.0
    %2208 = vmatpush1.xpose.msra.mxu0 0.0
    %2209 = vmatprep.subr.mxu0 0.0
    %2210 = vmatpush1.xpose.msra.mxu0 0.0
    %2211 = vmatprep.subr.mxu0 0.0
    %2212 = vmatpush1.xpose.msra.mxu0 0.0
    %2213 = vmatprep.mubr.f32.mxu0 0.0
    %2214 = vmatmul.mubr.f32.gmra.mrb[0].mxu0 %v2143
    %v2215 = vpop.f32.mrb[0].mxu0
    %v2216 = vadd.f32 0.0, %v2215
    %v2217 = vpop.f32.mrb[0].mxu0
    %2218 = vdwg.mxu0
    %2219 = vrot.lane.b32.xlu0 %v2056, 112
    %v2220 = vpop.permute.xlu0 %2219
    %2221 = vrot.lane.b32.xlu0 %v1941, 112
    %v2222 = vpop.permute.xlu0 %2221
    %2223 = vrot.lane.b32.xlu0 %v1946, 112
    %v2224 = vpop.permute.xlu0 %2223
    %v2225 = vsel %vm294, %v2220, 0
    %v2227 = vsel %vm294, %v2222, 0
    %v2229 = vsel %vm294, %v2224, 0
    %2231 = vmatprep.subr.mxu0 0.0
    %2232 = vmatpush1.xpose.msra.mxu0 %v2227
    %2233 = vmatprep.subr.mxu0 0.0
    %2234 = vmatpush1.xpose.msra.mxu0 %v2229
    %2235 = vmatprep.subr.mxu0 0.0
    %2236 = vmatpush1.xpose.msra.mxu0 0.0
    %2237 = vmatprep.subr.mxu0 0.0
    %2238 = vmatpush1.xpose.msra.mxu0 0.0
    %2239 = vmatprep.subr.mxu0 0.0
    %2240 = vmatpush1.xpose.msra.mxu0 0.0
    %2241 = vmatprep.subr.mxu0 0.0
    %2242 = vmatpush1.xpose.msra.mxu0 0.0
    %2243 = vmatprep.subr.mxu0 0.0
    %2244 = vmatpush1.xpose.msra.mxu0 0.0
    %2245 = vmatprep.subr.mxu0 0.0
    %2246 = vmatpush1.xpose.msra.mxu0 0.0
    %2247 = vmatprep.subr.mxu0 0.0
    %2248 = vmatpush1.xpose.msra.mxu0 0.0
    %2249 = vmatprep.subr.mxu0 0.0
    %2250 = vmatpush1.xpose.msra.mxu0 0.0
    %2251 = vmatprep.subr.mxu0 0.0
    %2252 = vmatpush1.xpose.msra.mxu0 0.0
    %2253 = vmatprep.subr.mxu0 0.0
    %2254 = vmatpush1.xpose.msra.mxu0 0.0
    %2255 = vmatprep.subr.mxu0 0.0
    %2256 = vmatpush1.xpose.msra.mxu0 0.0
    %2257 = vmatprep.subr.mxu0 0.0
    %2258 = vmatpush1.xpose.msra.mxu0 0.0
    %2259 = vmatprep.subr.mxu0 0.0
    %2260 = vmatpush1.xpose.msra.mxu0 0.0
    %2261 = vmatprep.subr.mxu0 0.0
    %2262 = vmatpush1.xpose.msra.mxu0 0.0
    %2263 = vmatprep.subr.mxu0 0.0
    %2264 = vmatpush1.xpose.msra.mxu0 0.0
    %2265 = vmatprep.subr.mxu0 0.0
    %2266 = vmatpush1.xpose.msra.mxu0 0.0
    %2267 = vmatprep.subr.mxu0 0.0
    %2268 = vmatpush1.xpose.msra.mxu0 0.0
    %2269 = vmatprep.subr.mxu0 0.0
    %2270 = vmatpush1.xpose.msra.mxu0 0.0
    %2271 = vmatprep.subr.mxu0 0.0
    %2272 = vmatpush1.xpose.msra.mxu0 0.0
    %2273 = vmatprep.subr.mxu0 0.0
    %2274 = vmatpush1.xpose.msra.mxu0 0.0
    %2275 = vmatprep.subr.mxu0 0.0
    %2276 = vmatpush1.xpose.msra.mxu0 0.0
    %2277 = vmatprep.subr.mxu0 0.0
    %2278 = vmatpush1.xpose.msra.mxu0 0.0
    %2279 = vmatprep.subr.mxu0 0.0
    %2280 = vmatpush1.xpose.msra.mxu0 0.0
    %2281 = vmatprep.subr.mxu0 0.0
    %2282 = vmatpush1.xpose.msra.mxu0 0.0
    %2283 = vmatprep.subr.mxu0 0.0
    %2284 = vmatpush1.xpose.msra.mxu0 0.0
    %2285 = vmatprep.subr.mxu0 0.0
    %2286 = vmatpush1.xpose.msra.mxu0 0.0
    %2287 = vmatprep.subr.mxu0 0.0
    %2288 = vmatpush1.xpose.msra.mxu0 0.0
    %2289 = vmatprep.subr.mxu0 0.0
    %2290 = vmatpush1.xpose.msra.mxu0 0.0
    %2291 = vmatprep.subr.mxu0 0.0
    %2292 = vmatpush1.xpose.msra.mxu0 0.0
    %2293 = vmatprep.subr.mxu0 0.0
    %2294 = vmatpush1.xpose.msra.mxu0 0.0
    %2295 = vmatprep.mubr.f32.mxu0 0.0
    %2296 = vmatmul.mubr.f32.gmra.mrb[0].mxu0 %v2225
    %v2297 = vpop.f32.mrb[0].mxu0
    %v2298 = vadd.f32 0.0, %v2297
    %v2299 = vpop.f32.mrb[0].mxu0
    %2300 = vdwg.mxu0
    %2301 = vrot.lane.b32.xlu0 %v2056, 104
    %v2302 = vpop.permute.xlu0 %2301
    %2303 = vrot.lane.b32.xlu0 %v1941, 104
    %v2304 = vpop.permute.xlu0 %2303
    %2305 = vrot.lane.b32.xlu0 %v1946, 104
    %v2306 = vpop.permute.xlu0 %2305
    %v2307 = vsel %vm294, %v2302, 0
    %v2309 = vsel %vm294, %v2304, 0
    %v2311 = vsel %vm294, %v2306, 0
    %2313 = vmatprep.subr.mxu0 0.0
    %2314 = vmatpush1.xpose.msra.mxu0 %v2309
    %2315 = vmatprep.subr.mxu0 0.0
    %2316 = vmatpush1.xpose.msra.mxu0 %v2311
    %2317 = vmatprep.subr.mxu0 0.0
    %2318 = vmatpush1.xpose.msra.mxu0 0.0
    %2319 = vmatprep.subr.mxu0 0.0
    %2320 = vmatpush1.xpose.msra.mxu0 0.0
    %2321 = vmatprep.subr.mxu0 0.0
    %2322 = vmatpush1.xpose.msra.mxu0 0.0
    %2323 = vmatprep.subr.mxu0 0.0
    %2324 = vmatpush1.xpose.msra.mxu0 0.0
    %2325 = vmatprep.subr.mxu0 0.0
    %2326 = vmatpush1.xpose.msra.mxu0 0.0
    %2327 = vmatprep.subr.mxu0 0.0
    %2328 = vmatpush1.xpose.msra.mxu0 0.0
    %2329 = vmatprep.subr.mxu0 0.0
    %2330 = vmatpush1.xpose.msra.mxu0 0.0
    %2331 = vmatprep.subr.mxu0 0.0
    %2332 = vmatpush1.xpose.msra.mxu0 0.0
    %2333 = vmatprep.subr.mxu0 0.0
    %2334 = vmatpush1.xpose.msra.mxu0 0.0
    %2335 = vmatprep.subr.mxu0 0.0
    %2336 = vmatpush1.xpose.msra.mxu0 0.0
    %2337 = vmatprep.subr.mxu0 0.0
    %2338 = vmatpush1.xpose.msra.mxu0 0.0
    %2339 = vmatprep.subr.mxu0 0.0
    %2340 = vmatpush1.xpose.msra.mxu0 0.0
    %2341 = vmatprep.subr.mxu0 0.0
    %2342 = vmatpush1.xpose.msra.mxu0 0.0
    %2343 = vmatprep.subr.mxu0 0.0
    %2344 = vmatpush1.xpose.msra.mxu0 0.0
    %2345 = vmatprep.subr.mxu0 0.0
    %2346 = vmatpush1.xpose.msra.mxu0 0.0
    %2347 = vmatprep.subr.mxu0 0.0
    %2348 = vmatpush1.xpose.msra.mxu0 0.0
    %2349 = vmatprep.subr.mxu0 0.0
    %2350 = vmatpush1.xpose.msra.mxu0 0.0
    %2351 = vmatprep.subr.mxu0 0.0
    %2352 = vmatpush1.xpose.msra.mxu0 0.0
    %2353 = vmatprep.subr.mxu0 0.0
    %2354 = vmatpush1.xpose.msra.mxu0 0.0
    %2355 = vmatprep.subr.mxu0 0.0
    %2356 = vmatpush1.xpose.msra.mxu0 0.0
    %2357 = vmatprep.subr.mxu0 0.0
    %2358 = vmatpush1.xpose.msra.mxu0 0.0
    %2359 = vmatprep.subr.mxu0 0.0
    %2360 = vmatpush1.xpose.msra.mxu0 0.0
    %2361 = vmatprep.subr.mxu0 0.0
    %2362 = vmatpush1.xpose.msra.mxu0 0.0
    %2363 = vmatprep.subr.mxu0 0.0
    %2364 = vmatpush1.xpose.msra.mxu0 0.0
    %2365 = vmatprep.subr.mxu0 0.0
    %2366 = vmatpush1.xpose.msra.mxu0 0.0
    %2367 = vmatprep.subr.mxu0 0.0
    %2368 = vmatpush1.xpose.msra.mxu0 0.0
    %2369 = vmatprep.subr.mxu0 0.0
    %2370 = vmatpush1.xpose.msra.mxu0 0.0
    %2371 = vmatprep.subr.mxu0 0.0
    %2372 = vmatpush1.xpose.msra.mxu0 0.0
    %2373 = vmatprep.subr.mxu0 0.0
    %2374 = vmatpush1.xpose.msra.mxu0 0.0
    %2375 = vmatprep.subr.mxu0 0.0
    %2376 = vmatpush1.xpose.msra.mxu0 0.0
    %2377 = vmatprep.mubr.f32.mxu0 0.0
    %2378 = vmatmul.mubr.f32.gmra.mrb[0].mxu0 %v2307
    %v2379 = vpop.f32.mrb[0].mxu0
    %v2380 = vadd.f32 0.0, %v2379
    %v2381 = vpop.f32.mrb[0].mxu0
    %2382 = vdwg.mxu0
    %v2384 = vsel %vm294, %v2057, 0
    %v2387 = vsel %vm294, %v1951, 0
    %v2390 = vsel %vm294, %v1956, 0
    %2392 = vmatprep.subr.mxu0 0.0
    %2393 = vmatpush1.xpose.msra.mxu0 %v2387
    %2394 = vmatprep.subr.mxu0 0.0
    %2395 = vmatpush1.xpose.msra.mxu0 %v2390
    %2396 = vmatprep.subr.mxu0 0.0
    %2397 = vmatpush1.xpose.msra.mxu0 0.0
    %2398 = vmatprep.subr.mxu0 0.0
    %2399 = vmatpush1.xpose.msra.mxu0 0.0
    %2400 = vmatprep.subr.mxu0 0.0
    %2401 = vmatpush1.xpose.msra.mxu0 0.0
    %2402 = vmatprep.subr.mxu0 0.0
    %2403 = vmatpush1.xpose.msra.mxu0 0.0
    %2404 = vmatprep.subr.mxu0 0.0
    %2405 = vmatpush1.xpose.msra.mxu0 0.0
    %2406 = vmatprep.subr.mxu0 0.0
    %2407 = vmatpush1.xpose.msra.mxu0 0.0
    %2408 = vmatprep.subr.mxu0 0.0
    %2409 = vmatpush1.xpose.msra.mxu0 0.0
    %2410 = vmatprep.subr.mxu0 0.0
    %2411 = vmatpush1.xpose.msra.mxu0 0.0
    %2412 = vmatprep.subr.mxu0 0.0
    %2413 = vmatpush1.xpose.msra.mxu0 0.0
    %2414 = vmatprep.subr.mxu0 0.0
    %2415 = vmatpush1.xpose.msra.mxu0 0.0
    %2416 = vmatprep.subr.mxu0 0.0
    %2417 = vmatpush1.xpose.msra.mxu0 0.0
    %2418 = vmatprep.subr.mxu0 0.0
    %2419 = vmatpush1.xpose.msra.mxu0 0.0
    %2420 = vmatprep.subr.mxu0 0.0
    %2421 = vmatpush1.xpose.msra.mxu0 0.0
    %2422 = vmatprep.subr.mxu0 0.0
    %2423 = vmatpush1.xpose.msra.mxu0 0.0
    %2424 = vmatprep.subr.mxu0 0.0
    %2425 = vmatpush1.xpose.msra.mxu0 0.0
    %2426 = vmatprep.subr.mxu0 0.0
    %2427 = vmatpush1.xpose.msra.mxu0 0.0
    %2428 = vmatprep.subr.mxu0 0.0
    %2429 = vmatpush1.xpose.msra.mxu0 0.0
    %2430 = vmatprep.subr.mxu0 0.0
    %2431 = vmatpush1.xpose.msra.mxu0 0.0
    %2432 = vmatprep.subr.mxu0 0.0
    %2433 = vmatpush1.xpose.msra.mxu0 0.0
    %2434 = vmatprep.subr.mxu0 0.0
    %2435 = vmatpush1.xpose.msra.mxu0 0.0
    %2436 = vmatprep.subr.mxu0 0.0
    %2437 = vmatpush1.xpose.msra.mxu0 0.0
    %2438 = vmatprep.subr.mxu0 0.0
    %2439 = vmatpush1.xpose.msra.mxu0 0.0
    %2440 = vmatprep.subr.mxu0 0.0
    %2441 = vmatpush1.xpose.msra.mxu0 0.0
    %2442 = vmatprep.subr.mxu0 0.0
    %2443 = vmatpush1.xpose.msra.mxu0 0.0
    %2444 = vmatprep.subr.mxu0 0.0
    %2445 = vmatpush1.xpose.msra.mxu0 0.0
    %2446 = vmatprep.subr.mxu0 0.0
    %2447 = vmatpush1.xpose.msra.mxu0 0.0
    %2448 = vmatprep.subr.mxu0 0.0
    %2449 = vmatpush1.xpose.msra.mxu0 0.0
    %2450 = vmatprep.subr.mxu0 0.0
    %2451 = vmatpush1.xpose.msra.mxu0 0.0
    %2452 = vmatprep.subr.mxu0 0.0
    %2453 = vmatpush1.xpose.msra.mxu0 0.0
    %2454 = vmatprep.subr.mxu0 0.0
    %2455 = vmatpush1.xpose.msra.mxu0 0.0
    %2456 = vmatprep.mubr.f32.mxu0 0.0
    %2457 = vmatmul.mubr.f32.gmra.mrb[0].mxu0 %v2384
    %v2458 = vpop.f32.mrb[0].mxu0
    %v2459 = vadd.f32 0.0, %v2458
    %v2460 = vpop.f32.mrb[0].mxu0
    %2461 = vdwg.mxu0
    %2462 = vrot.lane.b32.xlu0 %v2057, 120
    %v2463 = vpop.permute.xlu0 %2462
    %2464 = vrot.lane.b32.xlu0 %v1951, 120
    %v2465 = vpop.permute.xlu0 %2464
    %2466 = vrot.lane.b32.xlu0 %v1956, 120
    %v2467 = vpop.permute.xlu0 %2466
    %v2468 = vsel %vm294, %v2463, 0
    %v2470 = vsel %vm294, %v2465, 0
    %v2472 = vsel %vm294, %v2467, 0
    %2474 = vmatprep.subr.mxu0 0.0
    %2475 = vmatpush1.xpose.msra.mxu0 %v2470
    %2476 = vmatprep.subr.mxu0 0.0
    %2477 = vmatpush1.xpose.msra.mxu0 %v2472
    %2478 = vmatprep.subr.mxu0 0.0
    %2479 = vmatpush1.xpose.msra.mxu0 0.0
    %2480 = vmatprep.subr.mxu0 0.0
    %2481 = vmatpush1.xpose.msra.mxu0 0.0
    %2482 = vmatprep.subr.mxu0 0.0
    %2483 = vmatpush1.xpose.msra.mxu0 0.0
    %2484 = vmatprep.subr.mxu0 0.0
    %2485 = vmatpush1.xpose.msra.mxu0 0.0
    %2486 = vmatprep.subr.mxu0 0.0
    %2487 = vmatpush1.xpose.msra.mxu0 0.0
    %2488 = vmatprep.subr.mxu0 0.0
    %2489 = vmatpush1.xpose.msra.mxu0 0.0
    %2490 = vmatprep.subr.mxu0 0.0
    %2491 = vmatpush1.xpose.msra.mxu0 0.0
    %2492 = vmatprep.subr.mxu0 0.0
    %2493 = vmatpush1.xpose.msra.mxu0 0.0
    %2494 = vmatprep.subr.mxu0 0.0
    %2495 = vmatpush1.xpose.msra.mxu0 0.0
    %2496 = vmatprep.subr.mxu0 0.0
    %2497 = vmatpush1.xpose.msra.mxu0 0.0
    %2498 = vmatprep.subr.mxu0 0.0
    %2499 = vmatpush1.xpose.msra.mxu0 0.0
    %2500 = vmatprep.subr.mxu0 0.0
    %2501 = vmatpush1.xpose.msra.mxu0 0.0
    %2502 = vmatprep.subr.mxu0 0.0
    %2503 = vmatpush1.xpose.msra.mxu0 0.0
    %2504 = vmatprep.subr.mxu0 0.0
    %2505 = vmatpush1.xpose.msra.mxu0 0.0
    %2506 = vmatprep.subr.mxu0 0.0
    %2507 = vmatpush1.xpose.msra.mxu0 0.0
    %2508 = vmatprep.subr.mxu0 0.0
    %2509 = vmatpush1.xpose.msra.mxu0 0.0
    %2510 = vmatprep.subr.mxu0 0.0
    %2511 = vmatpush1.xpose.msra.mxu0 0.0
    %2512 = vmatprep.subr.mxu0 0.0
    %2513 = vmatpush1.xpose.msra.mxu0 0.0
    %2514 = vmatprep.subr.mxu0 0.0
    %2515 = vmatpush1.xpose.msra.mxu0 0.0
    %2516 = vmatprep.subr.mxu0 0.0
    %2517 = vmatpush1.xpose.msra.mxu0 0.0
    %2518 = vmatprep.subr.mxu0 0.0
    %2519 = vmatpush1.xpose.msra.mxu0 0.0
    %2520 = vmatprep.subr.mxu0 0.0
    %2521 = vmatpush1.xpose.msra.mxu0 0.0
    %2522 = vmatprep.subr.mxu0 0.0
    %2523 = vmatpush1.xpose.msra.mxu0 0.0
    %2524 = vmatprep.subr.mxu0 0.0
    %2525 = vmatpush1.xpose.msra.mxu0 0.0
    %2526 = vmatprep.subr.mxu0 0.0
    %2527 = vmatpush1.xpose.msra.mxu0 0.0
    %2528 = vmatprep.subr.mxu0 0.0
    %2529 = vmatpush1.xpose.msra.mxu0 0.0
    %2530 = vmatprep.subr.mxu0 0.0
    %2531 = vmatpush1.xpose.msra.mxu0 0.0
    %2532 = vmatprep.subr.mxu0 0.0
    %2533 = vmatpush1.xpose.msra.mxu0 0.0
    %2534 = vmatprep.subr.mxu0 0.0
    %2535 = vmatpush1.xpose.msra.mxu0 0.0
    %2536 = vmatprep.subr.mxu0 0.0
    %2537 = vmatpush1.xpose.msra.mxu0 0.0
    %2538 = vmatprep.mubr.f32.mxu0 0.0
    %2539 = vmatmul.mubr.f32.gmra.mrb[0].mxu0 %v2468
    %v2540 = vpop.f32.mrb[0].mxu0
    %v2541 = vadd.f32 0.0, %v2540
    %v2542 = vpop.f32.mrb[0].mxu0
    %2543 = vdwg.mxu0
    %2544 = vrot.lane.b32.xlu0 %v2057, 112
    %v2545 = vpop.permute.xlu0 %2544
    %2546 = vrot.lane.b32.xlu0 %v1951, 112
    %v2547 = vpop.permute.xlu0 %2546
    %2548 = vrot.lane.b32.xlu0 %v1956, 112
    %v2549 = vpop.permute.xlu0 %2548
    %v2550 = vsel %vm294, %v2545, 0
    %v2552 = vsel %vm294, %v2547, 0
    %v2554 = vsel %vm294, %v2549, 0
    %2556 = vmatprep.subr.mxu0 0.0
    %2557 = vmatpush1.xpose.msra.mxu0 %v2552
    %2558 = vmatprep.subr.mxu0 0.0
    %2559 = vmatpush1.xpose.msra.mxu0 %v2554
    %2560 = vmatprep.subr.mxu0 0.0
    %2561 = vmatpush1.xpose.msra.mxu0 0.0
    %2562 = vmatprep.subr.mxu0 0.0
    %2563 = vmatpush1.xpose.msra.mxu0 0.0
    %2564 = vmatprep.subr.mxu0 0.0
    %2565 = vmatpush1.xpose.msra.mxu0 0.0
    %2566 = vmatprep.subr.mxu0 0.0
    %2567 = vmatpush1.xpose.msra.mxu0 0.0
    %2568 = vmatprep.subr.mxu0 0.0
    %2569 = vmatpush1.xpose.msra.mxu0 0.0
    %2570 = vmatprep.subr.mxu0 0.0
    %2571 = vmatpush1.xpose.msra.mxu0 0.0
    %2572 = vmatprep.subr.mxu0 0.0
    %2573 = vmatpush1.xpose.msra.mxu0 0.0
    %2574 = vmatprep.subr.mxu0 0.0
    %2575 = vmatpush1.xpose.msra.mxu0 0.0
    %2576 = vmatprep.subr.mxu0 0.0
    %2577 = vmatpush1.xpose.msra.mxu0 0.0
    %2578 = vmatprep.subr.mxu0 0.0
    %2579 = vmatpush1.xpose.msra.mxu0 0.0
    %2580 = vmatprep.subr.mxu0 0.0
    %2581 = vmatpush1.xpose.msra.mxu0 0.0
    %2582 = vmatprep.subr.mxu0 0.0
    %2583 = vmatpush1.xpose.msra.mxu0 0.0
    %2584 = vmatprep.subr.mxu0 0.0
    %2585 = vmatpush1.xpose.msra.mxu0 0.0
    %2586 = vmatprep.subr.mxu0 0.0
    %2587 = vmatpush1.xpose.msra.mxu0 0.0
    %2588 = vmatprep.subr.mxu0 0.0
    %2589 = vmatpush1.xpose.msra.mxu0 0.0
    %2590 = vmatprep.subr.mxu0 0.0
    %2591 = vmatpush1.xpose.msra.mxu0 0.0
    %2592 = vmatprep.subr.mxu0 0.0
    %2593 = vmatpush1.xpose.msra.mxu0 0.0
    %2594 = vmatprep.subr.mxu0 0.0
    %2595 = vmatpush1.xpose.msra.mxu0 0.0
    %2596 = vmatprep.subr.mxu0 0.0
    %2597 = vmatpush1.xpose.msra.mxu0 0.0
    %2598 = vmatprep.subr.mxu0 0.0
    %2599 = vmatpush1.xpose.msra.mxu0 0.0
    %2600 = vmatprep.subr.mxu0 0.0
    %2601 = vmatpush1.xpose.msra.mxu0 0.0
    %2602 = vmatprep.subr.mxu0 0.0
    %2603 = vmatpush1.xpose.msra.mxu0 0.0
    %2604 = vmatprep.subr.mxu0 0.0
    %2605 = vmatpush1.xpose.msra.mxu0 0.0
    %2606 = vmatprep.subr.mxu0 0.0
    %2607 = vmatpush1.xpose.msra.mxu0 0.0
    %2608 = vmatprep.subr.mxu0 0.0
    %2609 = vmatpush1.xpose.msra.mxu0 0.0
    %2610 = vmatprep.subr.mxu0 0.0
    %2611 = vmatpush1.xpose.msra.mxu0 0.0
    %2612 = vmatprep.subr.mxu0 0.0
    %2613 = vmatpush1.xpose.msra.mxu0 0.0
    %2614 = vmatprep.subr.mxu0 0.0
    %2615 = vmatpush1.xpose.msra.mxu0 0.0
    %2616 = vmatprep.subr.mxu0 0.0
    %2617 = vmatpush1.xpose.msra.mxu0 0.0
    %2618 = vmatprep.subr.mxu0 0.0
    %2619 = vmatpush1.xpose.msra.mxu0 0.0
    %2620 = vmatprep.mubr.f32.mxu0 0.0
    %2621 = vmatmul.mubr.f32.gmra.mrb[0].mxu0 %v2550
    %v2622 = vpop.f32.mrb[0].mxu0
    %v2623 = vadd.f32 0.0, %v2622
    %v2624 = vpop.f32.mrb[0].mxu0
    %2625 = vdwg.mxu0
    %2626 = vrot.lane.b32.xlu0 %v2057, 104
    %v2627 = vpop.permute.xlu0 %2626
    %2628 = vrot.lane.b32.xlu0 %v1951, 104
    %v2629 = vpop.permute.xlu0 %2628
    %2630 = vrot.lane.b32.xlu0 %v1956, 104
    %v2631 = vpop.permute.xlu0 %2630
    %v2632 = vsel %vm294, %v2627, 0
    %v2634 = vsel %vm294, %v2629, 0
    %v2636 = vsel %vm294, %v2631, 0
    %2638 = vmatprep.subr.mxu0 0.0
    %2639 = vmatpush1.xpose.msra.mxu0 %v2634
    %2640 = vmatprep.subr.mxu0 0.0
    %2641 = vmatpush1.xpose.msra.mxu0 %v2636
    %2642 = vmatprep.subr.mxu0 0.0
    %2643 = vmatpush1.xpose.msra.mxu0 0.0
    %2644 = vmatprep.subr.mxu0 0.0
    %2645 = vmatpush1.xpose.msra.mxu0 0.0
    %2646 = vmatprep.subr.mxu0 0.0
    %2647 = vmatpush1.xpose.msra.mxu0 0.0
    %2648 = vmatprep.subr.mxu0 0.0
    %2649 = vmatpush1.xpose.msra.mxu0 0.0
    %2650 = vmatprep.subr.mxu0 0.0
    %2651 = vmatpush1.xpose.msra.mxu0 0.0
    %2652 = vmatprep.subr.mxu0 0.0
    %2653 = vmatpush1.xpose.msra.mxu0 0.0
    %2654 = vmatprep.subr.mxu0 0.0
    %2655 = vmatpush1.xpose.msra.mxu0 0.0
    %2656 = vmatprep.subr.mxu0 0.0
    %2657 = vmatpush1.xpose.msra.mxu0 0.0
    %2658 = vmatprep.subr.mxu0 0.0
    %2659 = vmatpush1.xpose.msra.mxu0 0.0
    %2660 = vmatprep.subr.mxu0 0.0
    %2661 = vmatpush1.xpose.msra.mxu0 0.0
    %2662 = vmatprep.subr.mxu0 0.0
    %2663 = vmatpush1.xpose.msra.mxu0 0.0
    %2664 = vmatprep.subr.mxu0 0.0
    %2665 = vmatpush1.xpose.msra.mxu0 0.0
    %2666 = vmatprep.subr.mxu0 0.0
    %2667 = vmatpush1.xpose.msra.mxu0 0.0
    %2668 = vmatprep.subr.mxu0 0.0
    %2669 = vmatpush1.xpose.msra.mxu0 0.0
    %2670 = vmatprep.subr.mxu0 0.0
    %2671 = vmatpush1.xpose.msra.mxu0 0.0
    %2672 = vmatprep.subr.mxu0 0.0
    %2673 = vmatpush1.xpose.msra.mxu0 0.0
    %2674 = vmatprep.subr.mxu0 0.0
    %2675 = vmatpush1.xpose.msra.mxu0 0.0
    %2676 = vmatprep.subr.mxu0 0.0
    %2677 = vmatpush1.xpose.msra.mxu0 0.0
    %2678 = vmatprep.subr.mxu0 0.0
    %2679 = vmatpush1.xpose.msra.mxu0 0.0
    %2680 = vmatprep.subr.mxu0 0.0
    %2681 = vmatpush1.xpose.msra.mxu0 0.0
    %2682 = vmatprep.subr.mxu0 0.0
    %2683 = vmatpush1.xpose.msra.mxu0 0.0
    %2684 = vmatprep.subr.mxu0 0.0
    %2685 = vmatpush1.xpose.msra.mxu0 0.0
    %2686 = vmatprep.subr.mxu0 0.0
    %2687 = vmatpush1.xpose.msra.mxu0 0.0
    %2688 = vmatprep.subr.mxu0 0.0
    %2689 = vmatpush1.xpose.msra.mxu0 0.0
    %2690 = vmatprep.subr.mxu0 0.0
    %2691 = vmatpush1.xpose.msra.mxu0 0.0
    %2692 = vmatprep.subr.mxu0 0.0
    %2693 = vmatpush1.xpose.msra.mxu0 0.0
    %2694 = vmatprep.subr.mxu0 0.0
    %2695 = vmatpush1.xpose.msra.mxu0 0.0
    %2696 = vmatprep.subr.mxu0 0.0
    %2697 = vmatpush1.xpose.msra.mxu0 0.0
    %2698 = vmatprep.subr.mxu0 0.0
    %2699 = vmatpush1.xpose.msra.mxu0 0.0
    %2700 = vmatprep.subr.mxu0 0.0
    %2701 = vmatpush1.xpose.msra.mxu0 0.0
    %2702 = vmatprep.mubr.f32.mxu0 0.0
    %2703 = vmatmul.mubr.f32.gmra.mrb[0].mxu0 %v2632
    %v2704 = vpop.f32.mrb[0].mxu0
    %v2705 = vadd.f32 0.0, %v2704
    %v2706 = vpop.f32.mrb[0].mxu0
    %2707 = vdwg.mxu0
    %v2708 = vsel %vm1318, %v2134, -inf
    %2709 = vmax.xlane.f32.xlu0 %v2708
    %v2710 = vpop.xlane.xlu0 %2709
    %v2711 = vsel %vm1318, %v2216, -inf
    %2712 = vmax.xlane.f32.xlu0 %v2711
    %v2713 = vpop.xlane.xlu0 %2712
    %v2714 = vsel %vm1318, %v2298, -inf
    %2715 = vmax.xlane.f32.xlu0 %v2714
    %v2716 = vpop.xlane.xlu0 %2715
    %v2717 = vsel %vm1318, %v2380, -inf
    %2718 = vmax.xlane.f32.xlu0 %v2717
    %v2719 = vpop.xlane.xlu0 %2718
    %v2720 = vsel %vm1318, %v2459, -inf
    %2721 = vmax.xlane.f32.xlu0 %v2720
    %v2722 = vpop.xlane.xlu0 %2721
    %v2723 = vsel %vm1318, %v2541, -inf
    %2724 = vmax.xlane.f32.xlu0 %v2723
    %v2725 = vpop.xlane.xlu0 %2724
    %v2726 = vsel %vm1318, %v2623, -inf
    %2727 = vmax.xlane.f32.xlu0 %v2726
    %v2728 = vpop.xlane.xlu0 %2727
    %v2729 = vsel %vm1318, %v2705, -inf
    %2730 = vmax.xlane.f32.xlu0 %v2729
    %v2731 = vpop.xlane.xlu0 %2730
    %v2732 = vsub.f32 %v2134, %v2710
    %v2733 = vsub.f32 %v2216, %v2713
    %v2734 = vsub.f32 %v2298, %v2716
    %v2735 = vsub.f32 %v2380, %v2719
    %v2736 = vsub.f32 %v2459, %v2722
    %v2737 = vsub.f32 %v2541, %v2725
    %v2738 = vsub.f32 %v2623, %v2728
    %v2739 = vsub.f32 %v2705, %v2731
    %v2740 = vmul.f32 %v2732, 1.442695
    %v2741 = vpow.pop %v2740
    %v2742 = vmul.f32 %v2733, 1.442695
    %v2743 = vpow.pop %v2742
    %v2744 = vmul.f32 %v2734, 1.442695
    %v2745 = vpow.pop %v2744
    %v2746 = vmul.f32 %v2735, 1.442695
    %v2747 = vpow.pop %v2746
    %v2748 = vmul.f32 %v2736, 1.442695
    %v2749 = vpow.pop %v2748
    %v2750 = vmul.f32 %v2737, 1.442695
    %v2751 = vpow.pop %v2750
    %v2752 = vmul.f32 %v2738, 1.442695
    %v2753 = vpow.pop %v2752
    %v2754 = vmul.f32 %v2739, 1.442695
    %v2755 = vpow.pop %v2754
    %v2756 = vsel %vm1318, %v2741, 0.0
    %2757 = vadd.xlane.f32.xlu0 %v2756
    %v2758 = vpop.xlane.xlu0 %2757
    %v2759 = vsel %vm1318, %v2743, 0.0
    %2760 = vadd.xlane.f32.xlu0 %v2759
    %v2761 = vpop.xlane.xlu0 %2760
    %v2762 = vsel %vm1318, %v2745, 0.0
    %2763 = vadd.xlane.f32.xlu0 %v2762
    %v2764 = vpop.xlane.xlu0 %2763
    %v2765 = vsel %vm1318, %v2747, 0.0
    %2766 = vadd.xlane.f32.xlu0 %v2765
    %v2767 = vpop.xlane.xlu0 %2766
    %v2768 = vsel %vm1318, %v2749, 0.0
    %2769 = vadd.xlane.f32.xlu0 %v2768
    %v2770 = vpop.xlane.xlu0 %2769
    %v2771 = vsel %vm1318, %v2751, 0.0
    %2772 = vadd.xlane.f32.xlu0 %v2771
    %v2773 = vpop.xlane.xlu0 %2772
    %v2774 = vsel %vm1318, %v2753, 0.0
    %2775 = vadd.xlane.f32.xlu0 %v2774
    %v2776 = vpop.xlane.xlu0 %2775
    %v2777 = vsel %vm1318, %v2755, 0.0
    %2778 = vadd.xlane.f32.xlu0 %v2777
    %v2779 = vpop.xlane.xlu0 %2778
    %v2780 = vrcp.pop %v2758
    %v2781 = vrcp.pop %v2761
    %v2782 = vrcp.pop %v2764
    %v2783 = vrcp.pop %v2767
    %v2784 = vrcp.pop %v2770
    %v2785 = vrcp.pop %v2773
    %v2786 = vrcp.pop %v2776
    %v2787 = vrcp.pop %v2779
    %v2788 = vmul.f32 %v2741, %v2780
    %v2789 = vmul.f32 %v2743, %v2781
    %v2790 = vmul.f32 %v2745, %v2782
    %v2791 = vmul.f32 %v2747, %v2783
    %v2792 = vmul.f32 %v2749, %v2784
    %v2793 = vmul.f32 %v2751, %v2785
    %v2794 = vmul.f32 %v2753, %v2786
    %v2795 = vmul.f32 %v2755, %v2787
    %v2797 = vsel %vm1318, %v2788, 0
    %2799 = vmatprep.subr.mxu0 0.0
    %2800 = vmatpush1.msra.mxu0 %v2034
    %2801 = vmatprep.subr.mxu0 0.0
    %2802 = vmatpush1.msra.mxu0 %v2039
    %2803 = vmatprep.subr.mxu0 0.0
    %2804 = vmatpush1.msra.mxu0 0.0
    %2805 = vmatprep.subr.mxu0 0.0
    %2806 = vmatpush1.msra.mxu0 0.0
    %2807 = vmatprep.subr.mxu0 0.0
    %2808 = vmatpush1.msra.mxu0 0.0
    %2809 = vmatprep.subr.mxu0 0.0
    %2810 = vmatpush1.msra.mxu0 0.0
    %2811 = vmatprep.subr.mxu0 0.0
    %2812 = vmatpush1.msra.mxu0 0.0
    %2813 = vmatprep.subr.mxu0 0.0
    %2814 = vmatpush1.msra.mxu0 0.0
    %2815 = vmatprep.subr.mxu0 0.0
    %2816 = vmatpush1.msra.mxu0 0.0
    %2817 = vmatprep.subr.mxu0 0.0
    %2818 = vmatpush1.msra.mxu0 0.0
    %2819 = vmatprep.subr.mxu0 0.0
    %2820 = vmatpush1.msra.mxu0 0.0
    %2821 = vmatprep.subr.mxu0 0.0
    %2822 = vmatpush1.msra.mxu0 0.0
    %2823 = vmatprep.subr.mxu0 0.0
    %2824 = vmatpush1.msra.mxu0 0.0
    %2825 = vmatprep.subr.mxu0 0.0
    %2826 = vmatpush1.msra.mxu0 0.0
    %2827 = vmatprep.subr.mxu0 0.0
    %2828 = vmatpush1.msra.mxu0 0.0
    %2829 = vmatprep.subr.mxu0 0.0
    %2830 = vmatpush1.msra.mxu0 0.0
    %2831 = vmatprep.subr.mxu0 0.0
    %2832 = vmatpush1.msra.mxu0 0.0
    %2833 = vmatprep.subr.mxu0 0.0
    %2834 = vmatpush1.msra.mxu0 0.0
    %2835 = vmatprep.subr.mxu0 0.0
    %2836 = vmatpush1.msra.mxu0 0.0
    %2837 = vmatprep.subr.mxu0 0.0
    %2838 = vmatpush1.msra.mxu0 0.0
    %2839 = vmatprep.subr.mxu0 0.0
    %2840 = vmatpush1.msra.mxu0 0.0
    %2841 = vmatprep.subr.mxu0 0.0
    %2842 = vmatpush1.msra.mxu0 0.0
    %2843 = vmatprep.subr.mxu0 0.0
    %2844 = vmatpush1.msra.mxu0 0.0
    %2845 = vmatprep.subr.mxu0 0.0
    %2846 = vmatpush1.msra.mxu0 0.0
    %2847 = vmatprep.subr.mxu0 0.0
    %2848 = vmatpush1.msra.mxu0 0.0
    %2849 = vmatprep.subr.mxu0 0.0
    %2850 = vmatpush1.msra.mxu0 0.0
    %2851 = vmatprep.subr.mxu0 0.0
    %2852 = vmatpush1.msra.mxu0 0.0
    %2853 = vmatprep.subr.mxu0 0.0
    %2854 = vmatpush1.msra.mxu0 0.0
    %2855 = vmatprep.subr.mxu0 0.0
    %2856 = vmatpush1.msra.mxu0 0.0
    %2857 = vmatprep.subr.mxu0 0.0
    %2858 = vmatpush1.msra.mxu0 0.0
    %2859 = vmatprep.subr.mxu0 0.0
    %2860 = vmatpush1.msra.mxu0 0.0
    %2861 = vmatprep.subr.mxu0 0.0
    %2862 = vmatpush1.msra.mxu0 0.0
    %2863 = vmatprep.mubr.f32.mxu0 0.0
    %2864 = vmatmul.mubr.f32.gmra.mrb[0].mxu0 %v2797
    %v2865 = vpop.f32.mrb[0].mxu0
    %v2866 = vadd.f32 0.0, %v2865
    %v2867 = vpop.f32.mrb[0].mxu0
    %2868 = vdwg.mxu0
    %2871 = vrot.lane.b32.xlu0 %v2034, 120
    %v2872 = vpop.permute.xlu0 %2871
    %2873 = vrot.lane.b32.xlu0 %v2039, 120
    %v2874 = vpop.permute.xlu0 %2873
    %v2878 = vsel %vm1318, %v2789, 0
    %2880 = vmatprep.subr.mxu0 0.0
    %2881 = vmatpush1.msra.mxu0 %v2872
    %2882 = vmatprep.subr.mxu0 0.0
    %2883 = vmatpush1.msra.mxu0 %v2874
    %2884 = vmatprep.subr.mxu0 0.0
    %2885 = vmatpush1.msra.mxu0 0.0
    %2886 = vmatprep.subr.mxu0 0.0
    %2887 = vmatpush1.msra.mxu0 0.0
    %2888 = vmatprep.subr.mxu0 0.0
    %2889 = vmatpush1.msra.mxu0 0.0
    %2890 = vmatprep.subr.mxu0 0.0
    %2891 = vmatpush1.msra.mxu0 0.0
    %2892 = vmatprep.subr.mxu0 0.0
    %2893 = vmatpush1.msra.mxu0 0.0
    %2894 = vmatprep.subr.mxu0 0.0
    %2895 = vmatpush1.msra.mxu0 0.0
    %2896 = vmatprep.subr.mxu0 0.0
    %2897 = vmatpush1.msra.mxu0 0.0
    %2898 = vmatprep.subr.mxu0 0.0
    %2899 = vmatpush1.msra.mxu0 0.0
    %2900 = vmatprep.subr.mxu0 0.0
    %2901 = vmatpush1.msra.mxu0 0.0
    %2902 = vmatprep.subr.mxu0 0.0
    %2903 = vmatpush1.msra.mxu0 0.0
    %2904 = vmatprep.subr.mxu0 0.0
    %2905 = vmatpush1.msra.mxu0 0.0
    %2906 = vmatprep.subr.mxu0 0.0
    %2907 = vmatpush1.msra.mxu0 0.0
    %2908 = vmatprep.subr.mxu0 0.0
    %2909 = vmatpush1.msra.mxu0 0.0
    %2910 = vmatprep.subr.mxu0 0.0
    %2911 = vmatpush1.msra.mxu0 0.0
    %2912 = vmatprep.subr.mxu0 0.0
    %2913 = vmatpush1.msra.mxu0 0.0
    %2914 = vmatprep.subr.mxu0 0.0
    %2915 = vmatpush1.msra.mxu0 0.0
    %2916 = vmatprep.subr.mxu0 0.0
    %2917 = vmatpush1.msra.mxu0 0.0
    %2918 = vmatprep.subr.mxu0 0.0
    %2919 = vmatpush1.msra.mxu0 0.0
    %2920 = vmatprep.subr.mxu0 0.0
    %2921 = vmatpush1.msra.mxu0 0.0
    %2922 = vmatprep.subr.mxu0 0.0
    %2923 = vmatpush1.msra.mxu0 0.0
    %2924 = vmatprep.subr.mxu0 0.0
    %2925 = vmatpush1.msra.mxu0 0.0
    %2926 = vmatprep.subr.mxu0 0.0
    %2927 = vmatpush1.msra.mxu0 0.0
    %2928 = vmatprep.subr.mxu0 0.0
    %2929 = vmatpush1.msra.mxu0 0.0
    %2930 = vmatprep.subr.mxu0 0.0
    %2931 = vmatpush1.msra.mxu0 0.0
    %2932 = vmatprep.subr.mxu0 0.0
    %2933 = vmatpush1.msra.mxu0 0.0
    %2934 = vmatprep.subr.mxu0 0.0
    %2935 = vmatpush1.msra.mxu0 0.0
    %2936 = vmatprep.subr.mxu0 0.0
    %2937 = vmatpush1.msra.mxu0 0.0
    %2938 = vmatprep.subr.mxu0 0.0
    %2939 = vmatpush1.msra.mxu0 0.0
    %2940 = vmatprep.subr.mxu0 0.0
    %2941 = vmatpush1.msra.mxu0 0.0
    %2942 = vmatprep.subr.mxu0 0.0
    %2943 = vmatpush1.msra.mxu0 0.0
    %2944 = vmatprep.mubr.f32.mxu0 0.0
    %2945 = vmatmul.mubr.f32.gmra.mrb[0].mxu0 %v2878
    %v2946 = vpop.f32.mrb[0].mxu0
    %v2947 = vadd.f32 0.0, %v2946
    %v2948 = vpop.f32.mrb[0].mxu0
    %2949 = vdwg.mxu0
    %2950 = vrot.lane.b32.xlu0 %v2034, 112
    %v2951 = vpop.permute.xlu0 %2950
    %2952 = vrot.lane.b32.xlu0 %v2039, 112
    %v2953 = vpop.permute.xlu0 %2952
    %v2957 = vsel %vm1318, %v2790, 0
    %2959 = vmatprep.subr.mxu0 0.0
    %2960 = vmatpush1.msra.mxu0 %v2951
    %2961 = vmatprep.subr.mxu0 0.0
    %2962 = vmatpush1.msra.mxu0 %v2953
    %2963 = vmatprep.subr.mxu0 0.0
    %2964 = vmatpush1.msra.mxu0 0.0
    %2965 = vmatprep.subr.mxu0 0.0
    %2966 = vmatpush1.msra.mxu0 0.0
    %2967 = vmatprep.subr.mxu0 0.0
    %2968 = vmatpush1.msra.mxu0 0.0
    %2969 = vmatprep.subr.mxu0 0.0
    %2970 = vmatpush1.msra.mxu0 0.0
    %2971 = vmatprep.subr.mxu0 0.0
    %2972 = vmatpush1.msra.mxu0 0.0
    %2973 = vmatprep.subr.mxu0 0.0
    %2974 = vmatpush1.msra.mxu0 0.0
    %2975 = vmatprep.subr.mxu0 0.0
    %2976 = vmatpush1.msra.mxu0 0.0
    %2977 = vmatprep.subr.mxu0 0.0
    %2978 = vmatpush1.msra.mxu0 0.0
    %2979 = vmatprep.subr.mxu0 0.0
    %2980 = vmatpush1.msra.mxu0 0.0
    %2981 = vmatprep.subr.mxu0 0.0
    %2982 = vmatpush1.msra.mxu0 0.0
    %2983 = vmatprep.subr.mxu0 0.0
    %2984 = vmatpush1.msra.mxu0 0.0
    %2985 = vmatprep.subr.mxu0 0.0
    %2986 = vmatpush1.msra.mxu0 0.0
    %2987 = vmatprep.subr.mxu0 0.0
    %2988 = vmatpush1.msra.mxu0 0.0
    %2989 = vmatprep.subr.mxu0 0.0
    %2990 = vmatpush1.msra.mxu0 0.0
    %2991 = vmatprep.subr.mxu0 0.0
    %2992 = vmatpush1.msra.mxu0 0.0
    %2993 = vmatprep.subr.mxu0 0.0
    %2994 = vmatpush1.msra.mxu0 0.0
    %2995 = vmatprep.subr.mxu0 0.0
    %2996 = vmatpush1.msra.mxu0 0.0
    %2997 = vmatprep.subr.mxu0 0.0
    %2998 = vmatpush1.msra.mxu0 0.0
    %2999 = vmatprep.subr.mxu0 0.0
    %3000 = vmatpush1.msra.mxu0 0.0
    %3001 = vmatprep.subr.mxu0 0.0
    %3002 = vmatpush1.msra.mxu0 0.0
    %3003 = vmatprep.subr.mxu0 0.0
    %3004 = vmatpush1.msra.mxu0 0.0
    %3005 = vmatprep.subr.mxu0 0.0
    %3006 = vmatpush1.msra.mxu0 0.0
    %3007 = vmatprep.subr.mxu0 0.0
    %3008 = vmatpush1.msra.mxu0 0.0
    %3009 = vmatprep.subr.mxu0 0.0
    %3010 = vmatpush1.msra.mxu0 0.0
    %3011 = vmatprep.subr.mxu0 0.0
    %3012 = vmatpush1.msra.mxu0 0.0
    %3013 = vmatprep.subr.mxu0 0.0
    %3014 = vmatpush1.msra.mxu0 0.0
    %3015 = vmatprep.subr.mxu0 0.0
    %3016 = vmatpush1.msra.mxu0 0.0
    %3017 = vmatprep.subr.mxu0 0.0
    %3018 = vmatpush1.msra.mxu0 0.0
    %3019 = vmatprep.subr.mxu0 0.0
    %3020 = vmatpush1.msra.mxu0 0.0
    %3021 = vmatprep.subr.mxu0 0.0
    %3022 = vmatpush1.msra.mxu0 0.0
    %3023 = vmatprep.mubr.f32.mxu0 0.0
    %3024 = vmatmul.mubr.f32.gmra.mrb[0].mxu0 %v2957
    %v3025 = vpop.f32.mrb[0].mxu0
    %v3026 = vadd.f32 0.0, %v3025
    %v3027 = vpop.f32.mrb[0].mxu0
    %3028 = vdwg.mxu0
    %3029 = vrot.lane.b32.xlu0 %v2034, 104
    %v3030 = vpop.permute.xlu0 %3029
    %3031 = vrot.lane.b32.xlu0 %v2039, 104
    %v3032 = vpop.permute.xlu0 %3031
    %v3036 = vsel %vm1318, %v2791, 0
    %3038 = vmatprep.subr.mxu0 0.0
    %3039 = vmatpush1.msra.mxu0 %v3030
    %3040 = vmatprep.subr.mxu0 0.0
    %3041 = vmatpush1.msra.mxu0 %v3032
    %3042 = vmatprep.subr.mxu0 0.0
    %3043 = vmatpush1.msra.mxu0 0.0
    %3044 = vmatprep.subr.mxu0 0.0
    %3045 = vmatpush1.msra.mxu0 0.0
    %3046 = vmatprep.subr.mxu0 0.0
    %3047 = vmatpush1.msra.mxu0 0.0
    %3048 = vmatprep.subr.mxu0 0.0
    %3049 = vmatpush1.msra.mxu0 0.0
    %3050 = vmatprep.subr.mxu0 0.0
    %3051 = vmatpush1.msra.mxu0 0.0
    %3052 = vmatprep.subr.mxu0 0.0
    %3053 = vmatpush1.msra.mxu0 0.0
    %3054 = vmatprep.subr.mxu0 0.0
    %3055 = vmatpush1.msra.mxu0 0.0
    %3056 = vmatprep.subr.mxu0 0.0
    %3057 = vmatpush1.msra.mxu0 0.0
    %3058 = vmatprep.subr.mxu0 0.0
    %3059 = vmatpush1.msra.mxu0 0.0
    %3060 = vmatprep.subr.mxu0 0.0
    %3061 = vmatpush1.msra.mxu0 0.0
    %3062 = vmatprep.subr.mxu0 0.0
    %3063 = vmatpush1.msra.mxu0 0.0
    %3064 = vmatprep.subr.mxu0 0.0
    %3065 = vmatpush1.msra.mxu0 0.0
    %3066 = vmatprep.subr.mxu0 0.0
    %3067 = vmatpush1.msra.mxu0 0.0
    %3068 = vmatprep.subr.mxu0 0.0
    %3069 = vmatpush1.msra.mxu0 0.0
    %3070 = vmatprep.subr.mxu0 0.0
    %3071 = vmatpush1.msra.mxu0 0.0
    %3072 = vmatprep.subr.mxu0 0.0
    %3073 = vmatpush1.msra.mxu0 0.0
    %3074 = vmatprep.subr.mxu0 0.0
    %3075 = vmatpush1.msra.mxu0 0.0
    %3076 = vmatprep.subr.mxu0 0.0
    %3077 = vmatpush1.msra.mxu0 0.0
    %3078 = vmatprep.subr.mxu0 0.0
    %3079 = vmatpush1.msra.mxu0 0.0
    %3080 = vmatprep.subr.mxu0 0.0
    %3081 = vmatpush1.msra.mxu0 0.0
    %3082 = vmatprep.subr.mxu0 0.0
    %3083 = vmatpush1.msra.mxu0 0.0
    %3084 = vmatprep.subr.mxu0 0.0
    %3085 = vmatpush1.msra.mxu0 0.0
    %3086 = vmatprep.subr.mxu0 0.0
    %3087 = vmatpush1.msra.mxu0 0.0
    %3088 = vmatprep.subr.mxu0 0.0
    %3089 = vmatpush1.msra.mxu0 0.0
    %3090 = vmatprep.subr.mxu0 0.0
    %3091 = vmatpush1.msra.mxu0 0.0
    %3092 = vmatprep.subr.mxu0 0.0
    %3093 = vmatpush1.msra.mxu0 0.0
    %3094 = vmatprep.subr.mxu0 0.0
    %3095 = vmatpush1.msra.mxu0 0.0
    %3096 = vmatprep.subr.mxu0 0.0
    %3097 = vmatpush1.msra.mxu0 0.0
    %3098 = vmatprep.subr.mxu0 0.0
    %3099 = vmatpush1.msra.mxu0 0.0
    %3100 = vmatprep.subr.mxu0 0.0
    %3101 = vmatpush1.msra.mxu0 0.0
    %3102 = vmatprep.mubr.f32.mxu0 0.0
    %3103 = vmatmul.mubr.f32.gmra.mrb[0].mxu0 %v3036
    %v3104 = vpop.f32.mrb[0].mxu0
    %v3105 = vadd.f32 0.0, %v3104
    %v3106 = vpop.f32.mrb[0].mxu0
    %3107 = vdwg.mxu0
    %3109 = vrot.lane.b32.xlu0 %v2947, 8
    %v3110 = vpop.permute.xlu0 %3109
    %3113 = vrot.lane.b32.xlu0 %v3026, 16
    %v3114 = vpop.permute.xlu0 %3113
    %3117 = vrot.lane.b32.xlu0 %v3105, 24
    %v3118 = vpop.permute.xlu0 %3117
    %v3120 = vsel %vm294, %v2866, %v3110
    %v3121 = vsel %vm1318, %v3120, %v3114
    %v3122 = vsel %vm1320, %v3121, %v3118
    %v3124 = vsel %vm1318, %v2792, 0
    %3126 = vmatprep.subr.mxu0 0.0
    %3127 = vmatpush1.msra.mxu0 %v2044
    %3128 = vmatprep.subr.mxu0 0.0
    %3129 = vmatpush1.msra.mxu0 %v2049
    %3130 = vmatprep.subr.mxu0 0.0
    %3131 = vmatpush1.msra.mxu0 0.0
    %3132 = vmatprep.subr.mxu0 0.0
    %3133 = vmatpush1.msra.mxu0 0.0
    %3134 = vmatprep.subr.mxu0 0.0
    %3135 = vmatpush1.msra.mxu0 0.0
    %3136 = vmatprep.subr.mxu0 0.0
    %3137 = vmatpush1.msra.mxu0 0.0
    %3138 = vmatprep.subr.mxu0 0.0
    %3139 = vmatpush1.msra.mxu0 0.0
    %3140 = vmatprep.subr.mxu0 0.0
    %3141 = vmatpush1.msra.mxu0 0.0
    %3142 = vmatprep.subr.mxu0 0.0
    %3143 = vmatpush1.msra.mxu0 0.0
    %3144 = vmatprep.subr.mxu0 0.0
    %3145 = vmatpush1.msra.mxu0 0.0
    %3146 = vmatprep.subr.mxu0 0.0
    %3147 = vmatpush1.msra.mxu0 0.0
    %3148 = vmatprep.subr.mxu0 0.0
    %3149 = vmatpush1.msra.mxu0 0.0
    %3150 = vmatprep.subr.mxu0 0.0
    %3151 = vmatpush1.msra.mxu0 0.0
    %3152 = vmatprep.subr.mxu0 0.0
    %3153 = vmatpush1.msra.mxu0 0.0
    %3154 = vmatprep.subr.mxu0 0.0
    %3155 = vmatpush1.msra.mxu0 0.0
    %3156 = vmatprep.subr.mxu0 0.0
    %3157 = vmatpush1.msra.mxu0 0.0
    %3158 = vmatprep.subr.mxu0 0.0
    %3159 = vmatpush1.msra.mxu0 0.0
    %3160 = vmatprep.subr.mxu0 0.0
    %3161 = vmatpush1.msra.mxu0 0.0
    %3162 = vmatprep.subr.mxu0 0.0
    %3163 = vmatpush1.msra.mxu0 0.0
    %3164 = vmatprep.subr.mxu0 0.0
    %3165 = vmatpush1.msra.mxu0 0.0
    %3166 = vmatprep.subr.mxu0 0.0
    %3167 = vmatpush1.msra.mxu0 0.0
    %3168 = vmatprep.subr.mxu0 0.0
    %3169 = vmatpush1.msra.mxu0 0.0
    %3170 = vmatprep.subr.mxu0 0.0
    %3171 = vmatpush1.msra.mxu0 0.0
    %3172 = vmatprep.subr.mxu0 0.0
    %3173 = vmatpush1.msra.mxu0 0.0
    %3174 = vmatprep.subr.mxu0 0.0
    %3175 = vmatpush1.msra.mxu0 0.0
    %3176 = vmatprep.subr.mxu0 0.0
    %3177 = vmatpush1.msra.mxu0 0.0
    %3178 = vmatprep.subr.mxu0 0.0
    %3179 = vmatpush1.msra.mxu0 0.0
    %3180 = vmatprep.subr.mxu0 0.0
    %3181 = vmatpush1.msra.mxu0 0.0
    %3182 = vmatprep.subr.mxu0 0.0
    %3183 = vmatpush1.msra.mxu0 0.0
    %3184 = vmatprep.subr.mxu0 0.0
    %3185 = vmatpush1.msra.mxu0 0.0
    %3186 = vmatprep.subr.mxu0 0.0
    %3187 = vmatpush1.msra.mxu0 0.0
    %3188 = vmatprep.subr.mxu0 0.0
    %3189 = vmatpush1.msra.mxu0 0.0
    %3190 = vmatprep.mubr.f32.mxu0 0.0
    %3191 = vmatmul.mubr.f32.gmra.mrb[0].mxu0 %v3124
    %v3192 = vpop.f32.mrb[0].mxu0
    %v3193 = vadd.f32 0.0, %v3192
    %v3194 = vpop.f32.mrb[0].mxu0
    %3195 = vdwg.mxu0
    %3198 = vrot.lane.b32.xlu0 %v2044, 120
    %v3199 = vpop.permute.xlu0 %3198
    %3200 = vrot.lane.b32.xlu0 %v2049, 120
    %v3201 = vpop.permute.xlu0 %3200
    %v3205 = vsel %vm1318, %v2793, 0
    %3207 = vmatprep.subr.mxu0 0.0
    %3208 = vmatpush1.msra.mxu0 %v3199
    %3209 = vmatprep.subr.mxu0 0.0
    %3210 = vmatpush1.msra.mxu0 %v3201
    %3211 = vmatprep.subr.mxu0 0.0
    %3212 = vmatpush1.msra.mxu0 0.0
    %3213 = vmatprep.subr.mxu0 0.0
    %3214 = vmatpush1.msra.mxu0 0.0
    %3215 = vmatprep.subr.mxu0 0.0
    %3216 = vmatpush1.msra.mxu0 0.0
    %3217 = vmatprep.subr.mxu0 0.0
    %3218 = vmatpush1.msra.mxu0 0.0
    %3219 = vmatprep.subr.mxu0 0.0
    %3220 = vmatpush1.msra.mxu0 0.0
    %3221 = vmatprep.subr.mxu0 0.0
    %3222 = vmatpush1.msra.mxu0 0.0
    %3223 = vmatprep.subr.mxu0 0.0
    %3224 = vmatpush1.msra.mxu0 0.0
    %3225 = vmatprep.subr.mxu0 0.0
    %3226 = vmatpush1.msra.mxu0 0.0
    %3227 = vmatprep.subr.mxu0 0.0
    %3228 = vmatpush1.msra.mxu0 0.0
    %3229 = vmatprep.subr.mxu0 0.0
    %3230 = vmatpush1.msra.mxu0 0.0
    %3231 = vmatprep.subr.mxu0 0.0
    %3232 = vmatpush1.msra.mxu0 0.0
    %3233 = vmatprep.subr.mxu0 0.0
    %3234 = vmatpush1.msra.mxu0 0.0
    %3235 = vmatprep.subr.mxu0 0.0
    %3236 = vmatpush1.msra.mxu0 0.0
    %3237 = vmatprep.subr.mxu0 0.0
    %3238 = vmatpush1.msra.mxu0 0.0
    %3239 = vmatprep.subr.mxu0 0.0
    %3240 = vmatpush1.msra.mxu0 0.0
    %3241 = vmatprep.subr.mxu0 0.0
    %3242 = vmatpush1.msra.mxu0 0.0
    %3243 = vmatprep.subr.mxu0 0.0
    %3244 = vmatpush1.msra.mxu0 0.0
    %3245 = vmatprep.subr.mxu0 0.0
    %3246 = vmatpush1.msra.mxu0 0.0
    %3247 = vmatprep.subr.mxu0 0.0
    %3248 = vmatpush1.msra.mxu0 0.0
    %3249 = vmatprep.subr.mxu0 0.0
    %3250 = vmatpush1.msra.mxu0 0.0
    %3251 = vmatprep.subr.mxu0 0.0
    %3252 = vmatpush1.msra.mxu0 0.0
    %3253 = vmatprep.subr.mxu0 0.0
    %3254 = vmatpush1.msra.mxu0 0.0
    %3255 = vmatprep.subr.mxu0 0.0
    %3256 = vmatpush1.msra.mxu0 0.0
    %3257 = vmatprep.subr.mxu0 0.0
    %3258 = vmatpush1.msra.mxu0 0.0
    %3259 = vmatprep.subr.mxu0 0.0
    %3260 = vmatpush1.msra.mxu0 0.0
    %3261 = vmatprep.subr.mxu0 0.0
    %3262 = vmatpush1.msra.mxu0 0.0
    %3263 = vmatprep.subr.mxu0 0.0
    %3264 = vmatpush1.msra.mxu0 0.0
    %3265 = vmatprep.subr.mxu0 0.0
    %3266 = vmatpush1.msra.mxu0 0.0
    %3267 = vmatprep.subr.mxu0 0.0
    %3268 = vmatpush1.msra.mxu0 0.0
    %3269 = vmatprep.subr.mxu0 0.0
    %3270 = vmatpush1.msra.mxu0 0.0
    %3271 = vmatprep.mubr.f32.mxu0 0.0
    %3272 = vmatmul.mubr.f32.gmra.mrb[0].mxu0 %v3205
    %v3273 = vpop.f32.mrb[0].mxu0
    %v3274 = vadd.f32 0.0, %v3273
    %v3275 = vpop.f32.mrb[0].mxu0
    %3276 = vdwg.mxu0
    %3277 = vrot.lane.b32.xlu0 %v2044, 112
    %v3278 = vpop.permute.xlu0 %3277
    %3279 = vrot.lane.b32.xlu0 %v2049, 112
    %v3280 = vpop.permute.xlu0 %3279
    %v3284 = vsel %vm1318, %v2794, 0
    %3286 = vmatprep.subr.mxu0 0.0
    %3287 = vmatpush1.msra.mxu0 %v3278
    %3288 = vmatprep.subr.mxu0 0.0
    %3289 = vmatpush1.msra.mxu0 %v3280
    %3290 = vmatprep.subr.mxu0 0.0
    %3291 = vmatpush1.msra.mxu0 0.0
    %3292 = vmatprep.subr.mxu0 0.0
    %3293 = vmatpush1.msra.mxu0 0.0
    %3294 = vmatprep.subr.mxu0 0.0
    %3295 = vmatpush1.msra.mxu0 0.0
    %3296 = vmatprep.subr.mxu0 0.0
    %3297 = vmatpush1.msra.mxu0 0.0
    %3298 = vmatprep.subr.mxu0 0.0
    %3299 = vmatpush1.msra.mxu0 0.0
    %3300 = vmatprep.subr.mxu0 0.0
    %3301 = vmatpush1.msra.mxu0 0.0
    %3302 = vmatprep.subr.mxu0 0.0
    %3303 = vmatpush1.msra.mxu0 0.0
    %3304 = vmatprep.subr.mxu0 0.0
    %3305 = vmatpush1.msra.mxu0 0.0
    %3306 = vmatprep.subr.mxu0 0.0
    %3307 = vmatpush1.msra.mxu0 0.0
    %3308 = vmatprep.subr.mxu0 0.0
    %3309 = vmatpush1.msra.mxu0 0.0
    %3310 = vmatprep.subr.mxu0 0.0
    %3311 = vmatpush1.msra.mxu0 0.0
    %3312 = vmatprep.subr.mxu0 0.0
    %3313 = vmatpush1.msra.mxu0 0.0
    %3314 = vmatprep.subr.mxu0 0.0
    %3315 = vmatpush1.msra.mxu0 0.0
    %3316 = vmatprep.subr.mxu0 0.0
    %3317 = vmatpush1.msra.mxu0 0.0
    %3318 = vmatprep.subr.mxu0 0.0
    %3319 = vmatpush1.msra.mxu0 0.0
    %3320 = vmatprep.subr.mxu0 0.0
    %3321 = vmatpush1.msra.mxu0 0.0
    %3322 = vmatprep.subr.mxu0 0.0
    %3323 = vmatpush1.msra.mxu0 0.0
    %3324 = vmatprep.subr.mxu0 0.0
    %3325 = vmatpush1.msra.mxu0 0.0
    %3326 = vmatprep.subr.mxu0 0.0
    %3327 = vmatpush1.msra.mxu0 0.0
    %3328 = vmatprep.subr.mxu0 0.0
    %3329 = vmatpush1.msra.mxu0 0.0
    %3330 = vmatprep.subr.mxu0 0.0
    %3331 = vmatpush1.msra.mxu0 0.0
    %3332 = vmatprep.subr.mxu0 0.0
    %3333 = vmatpush1.msra.mxu0 0.0
    %3334 = vmatprep.subr.mxu0 0.0
    %3335 = vmatpush1.msra.mxu0 0.0
    %3336 = vmatprep.subr.mxu0 0.0
    %3337 = vmatpush1.msra.mxu0 0.0
    %3338 = vmatprep.subr.mxu0 0.0
    %3339 = vmatpush1.msra.mxu0 0.0
    %3340 = vmatprep.subr.mxu0 0.0
    %3341 = vmatpush1.msra.mxu0 0.0
    %3342 = vmatprep.subr.mxu0 0.0
    %3343 = vmatpush1.msra.mxu0 0.0
    %3344 = vmatprep.subr.mxu0 0.0
    %3345 = vmatpush1.msra.mxu0 0.0
    %3346 = vmatprep.subr.mxu0 0.0
    %3347 = vmatpush1.msra.mxu0 0.0
    %3348 = vmatprep.subr.mxu0 0.0
    %3349 = vmatpush1.msra.mxu0 0.0
    %3350 = vmatprep.mubr.f32.mxu0 0.0
    %3351 = vmatmul.mubr.f32.gmra.mrb[0].mxu0 %v3284
    %v3352 = vpop.f32.mrb[0].mxu0
    %v3353 = vadd.f32 0.0, %v3352
    %v3354 = vpop.f32.mrb[0].mxu0
    %3355 = vdwg.mxu0
    %3356 = vrot.lane.b32.xlu0 %v2044, 104
    %v3357 = vpop.permute.xlu0 %3356
    %3358 = vrot.lane.b32.xlu0 %v2049, 104
    %v3359 = vpop.permute.xlu0 %3358
    %v3363 = vsel %vm1318, %v2795, 0
    %3365 = vmatprep.subr.mxu0 0.0
    %3366 = vmatpush1.msra.mxu0 %v3357
    %3367 = vmatprep.subr.mxu0 0.0
    %3368 = vmatpush1.msra.mxu0 %v3359
    %3369 = vmatprep.subr.mxu0 0.0
    %3370 = vmatpush1.msra.mxu0 0.0
    %3371 = vmatprep.subr.mxu0 0.0
    %3372 = vmatpush1.msra.mxu0 0.0
    %3373 = vmatprep.subr.mxu0 0.0
    %3374 = vmatpush1.msra.mxu0 0.0
    %3375 = vmatprep.subr.mxu0 0.0
    %3376 = vmatpush1.msra.mxu0 0.0
    %3377 = vmatprep.subr.mxu0 0.0
    %3378 = vmatpush1.msra.mxu0 0.0
    %3379 = vmatprep.subr.mxu0 0.0
    %3380 = vmatpush1.msra.mxu0 0.0
    %3381 = vmatprep.subr.mxu0 0.0
    %3382 = vmatpush1.msra.mxu0 0.0
    %3383 = vmatprep.subr.mxu0 0.0
    %3384 = vmatpush1.msra.mxu0 0.0
    %3385 = vmatprep.subr.mxu0 0.0
    %3386 = vmatpush1.msra.mxu0 0.0
    %3387 = vmatprep.subr.mxu0 0.0
    %3388 = vmatpush1.msra.mxu0 0.0
    %3389 = vmatprep.subr.mxu0 0.0
    %3390 = vmatpush1.msra.mxu0 0.0
    %3391 = vmatprep.subr.mxu0 0.0
    %3392 = vmatpush1.msra.mxu0 0.0
    %3393 = vmatprep.subr.mxu0 0.0
    %3394 = vmatpush1.msra.mxu0 0.0
    %3395 = vmatprep.subr.mxu0 0.0
    %3396 = vmatpush1.msra.mxu0 0.0
    %3397 = vmatprep.subr.mxu0 0.0
    %3398 = vmatpush1.msra.mxu0 0.0
    %3399 = vmatprep.subr.mxu0 0.0
    %3400 = vmatpush1.msra.mxu0 0.0
    %3401 = vmatprep.subr.mxu0 0.0
    %3402 = vmatpush1.msra.mxu0 0.0
    %3403 = vmatprep.subr.mxu0 0.0
    %3404 = vmatpush1.msra.mxu0 0.0
    %3405 = vmatprep.subr.mxu0 0.0
    %3406 = vmatpush1.msra.mxu0 0.0
    %3407 = vmatprep.subr.mxu0 0.0
    %3408 = vmatpush1.msra.mxu0 0.0
    %3409 = vmatprep.subr.mxu0 0.0
    %3410 = vmatpush1.msra.mxu0 0.0
    %3411 = vmatprep.subr.mxu0 0.0
    %3412 = vmatpush1.msra.mxu0 0.0
    %3413 = vmatprep.subr.mxu0 0.0
    %3414 = vmatpush1.msra.mxu0 0.0
    %3415 = vmatprep.subr.mxu0 0.0
    %3416 = vmatpush1.msra.mxu0 0.0
    %3417 = vmatprep.subr.mxu0 0.0
    %3418 = vmatpush1.msra.mxu0 0.0
    %3419 = vmatprep.subr.mxu0 0.0
    %3420 = vmatpush1.msra.mxu0 0.0
    %3421 = vmatprep.subr.mxu0 0.0
    %3422 = vmatpush1.msra.mxu0 0.0
    %3423 = vmatprep.subr.mxu0 0.0
    %3424 = vmatpush1.msra.mxu0 0.0
    %3425 = vmatprep.subr.mxu0 0.0
    %3426 = vmatpush1.msra.mxu0 0.0
    %3427 = vmatprep.subr.mxu0 0.0
    %3428 = vmatpush1.msra.mxu0 0.0
    %3429 = vmatprep.mubr.f32.mxu0 0.0
    %3430 = vmatmul.mubr.f32.gmra.mrb[0].mxu0 %v3363
    %v3431 = vpop.f32.mrb[0].mxu0
    %v3432 = vadd.f32 0.0, %v3431
    %v3433 = vpop.f32.mrb[0].mxu0
    %3434 = vdwg.mxu0
    %3436 = vrot.lane.b32.xlu0 %v3274, 8
    %v3437 = vpop.permute.xlu0 %3436
    %3440 = vrot.lane.b32.xlu0 %v3353, 16
    %v3441 = vpop.permute.xlu0 %3440
    %3444 = vrot.lane.b32.xlu0 %v3432, 24
    %v3445 = vpop.permute.xlu0 %3444
    %v3447 = vsel %vm294, %v3193, %v3437
    %v3448 = vsel %vm1318, %v3447, %v3441
    %v3449 = vsel %vm1320, %v3448, %v3445
    %v3450 = vlaneseq
    %v3451 = vshrl.u32 %v3450, 7
    %v3452 = vsub.s32 7, %v3451
    %v3453 = vrot.slane %v30, %v3452
    %v3455 = vsel %vm40, %v3122, 0
    %v3458 = vsel %vm40, %v3449, 0
    %3460 = vmatprep.subr.mxu0 0.0
    %3461 = vmatpush1.msra.mxu0 %v2052
    %3462 = vmatprep.subr.mxu0 0.0
    %3463 = vmatpush1.msra.mxu0 %v2053
    %3464 = vmatprep.subr.mxu0 0.0
    %3465 = vmatpush1.msra.mxu0 %v2054
    %3466 = vmatprep.subr.mxu0 0.0
    %3467 = vmatpush1.msra.mxu0 %v2055
    %3468 = vmatprep.subr.mxu0 0.0
    %3469 = vmatpush1.msra.mxu0 0.0
    %3470 = vmatprep.subr.mxu0 0.0
    %3471 = vmatpush1.msra.mxu0 0.0
    %3472 = vmatprep.subr.mxu0 0.0
    %3473 = vmatpush1.msra.mxu0 0.0
    %3474 = vmatprep.subr.mxu0 0.0
    %3475 = vmatpush1.msra.mxu0 0.0
    %3476 = vmatprep.subr.mxu0 0.0
    %3477 = vmatpush1.msra.mxu0 0.0
    %3478 = vmatprep.subr.mxu0 0.0
    %3479 = vmatpush1.msra.mxu0 0.0
    %3480 = vmatprep.subr.mxu0 0.0
    %3481 = vmatpush1.msra.mxu0 0.0
    %3482 = vmatprep.subr.mxu0 0.0
    %3483 = vmatpush1.msra.mxu0 0.0
    %3484 = vmatprep.subr.mxu0 0.0
    %3485 = vmatpush1.msra.mxu0 0.0
    %3486 = vmatprep.subr.mxu0 0.0
    %3487 = vmatpush1.msra.mxu0 0.0
    %3488 = vmatprep.subr.mxu0 0.0
    %3489 = vmatpush1.msra.mxu0 0.0
    %3490 = vmatprep.subr.mxu0 0.0
    %3491 = vmatpush1.msra.mxu0 0.0
    %3492 = vmatprep.subr.mxu0 0.0
    %3493 = vmatpush1.msra.mxu0 0.0
    %3494 = vmatprep.subr.mxu0 0.0
    %3495 = vmatpush1.msra.mxu0 0.0
    %3496 = vmatprep.subr.mxu0 0.0
    %3497 = vmatpush1.msra.mxu0 0.0
    %3498 = vmatprep.subr.mxu0 0.0
    %3499 = vmatpush1.msra.mxu0 0.0
    %3500 = vmatprep.subr.mxu0 0.0
    %3501 = vmatpush1.msra.mxu0 0.0
    %3502 = vmatprep.subr.mxu0 0.0
    %3503 = vmatpush1.msra.mxu0 0.0
    %3504 = vmatprep.subr.mxu0 0.0
    %3505 = vmatpush1.msra.mxu0 0.0
    %3506 = vmatprep.subr.mxu0 0.0
    %3507 = vmatpush1.msra.mxu0 0.0
    %3508 = vmatprep.subr.mxu0 0.0
    %3509 = vmatpush1.msra.mxu0 0.0
    %3510 = vmatprep.subr.mxu0 0.0
    %3511 = vmatpush1.msra.mxu0 0.0
    %3512 = vmatprep.subr.mxu0 0.0
    %3513 = vmatpush1.msra.mxu0 0.0
    %3514 = vmatprep.subr.mxu0 0.0
    %3515 = vmatpush1.msra.mxu0 0.0
    %3516 = vmatprep.subr.mxu0 0.0
    %3517 = vmatpush1.msra.mxu0 0.0
    %3518 = vmatprep.subr.mxu0 0.0
    %3519 = vmatpush1.msra.mxu0 0.0
    %3520 = vmatprep.subr.mxu0 0.0
    %3521 = vmatpush1.msra.mxu0 0.0
    %3522 = vmatprep.subr.mxu0 0.0
    %3523 = vmatpush1.msra.mxu0 0.0
    %3524 = vmatprep.mubr.f32.mxu0 0.0
    %3525 = vmatmul.mubr.f32.gmra.mrb[0].mxu0 %v3455
    %v3526 = vpop.f32.mrb[0].mxu0
    %v3527 = vadd.f32 %v3453, %v3526
    %v3528 = vpop.f32.mrb[0].mxu0
    %3529 = vmatprep.mubr.f32.mxu0 0.0
    %3530 = vmatmul.mubr.f32.gmra.mrb[0].mxu0 %v3458
    %v3531 = vpop.f32.mrb[0].mxu0
    %v3532 = vadd.f32 %v3453, %v3531
    %v3533 = vpop.f32.mrb[0].mxu0
    %3534 = vdwg.mxu0
    %v3535 = vadd.f32 %v1763, %v3527
    %v3536 = vadd.f32 %v1764, %v3532
    %v3537 = vsel %vm40, %v3535, 0.0
    %3538 = vadd.xlane.f32.xlu0 %v3537
    %v3539 = vpop.xlane.xlu0 %3538
    %v3540 = vsel %vm40, %v3536, 0.0
    %3541 = vadd.xlane.f32.xlu0 %v3540
    %v3542 = vpop.xlane.xlu0 %3541
    %v3543 = vmul.f32 %v3539, %v1732
    %v3544 = vmul.f32 %v3542, %v1732
    %v3545 = vsub.f32 %v3535, %v3543
    %v3546 = vsub.f32 %v3536, %v3544
    %v3547 = vmul.f32 %v3545, %v3545
    %v3548 = vmul.f32 %v3546, %v3546
    %v3549 = vsel %vm40, %v3547, 0.0
    %3550 = vadd.xlane.f32.xlu0 %v3549
    %v3551 = vpop.xlane.xlu0 %3550
    %v3552 = vsel %vm40, %v3548, 0.0
    %3553 = vadd.xlane.f32.xlu0 %v3552
    %v3554 = vpop.xlane.xlu0 %3553
    %v3555 = vmul.f32 %v3551, %v1732
    %v3556 = vmul.f32 %v3554, %v1732
    %v3557 = vadd.f32 %v3555, 1e-05
    %v3558 = vadd.f32 %v3556, 1e-05
    %v3559 = vrsqrt.pop %v3557
    %v3560 = vrsqrt.pop %v3558
    %v3561 = vmul.f32 %v3545, %v3559
    %v3562 = vmul.f32 %v3546, %v3560
    %v3563 = vlaneseq
    %v3564 = vshrl.u32 %v3563, 7
    %v3565 = vsub.s32 3, %v3564
    %v3566 = vrot.slane %v31, %v3565
    %v3567 = vmul.f32 %v3561, %v3566
    %v3568 = vmul.f32 %v3562, %v3566
    %v3569 = vlaneseq
    %v3570 = vshrl.u32 %v3569, 7
    %v3571 = vsub.s32 4, %v3570
    %v3572 = vrot.slane %v31, %v3571
    %v3573 = vadd.f32 %v3567, %v3572
    %v3574 = vadd.f32 %v3568, %v3572
    %v3575 = vld [vmem:[%s3] sm:$0xff]
    %v3576 = vld [vmem:[%s3 + $0x8] sm:$0xff]
    %v3577 = vld [vmem:[%s3 + $0x10] sm:$0xff]
    %v3578 = vld [vmem:[%s3 + $0x18] sm:$0xff]
    %v3579 = vld [vmem:[%s3 + $0x20] sm:$0x1]
    %v3580 = vld [vmem:[%s4] sm:$0xff]
    %v3581 = vld [vmem:[%s4 + $0x8] sm:$0xff]
    %v3582 = vld [vmem:[%s4 + $0x10] sm:$0xff]
    %v3583 = vld [vmem:[%s4 + $0x18] sm:$0xff]
    %v3584 = vld [vmem:[%s4 + $0x20] sm:$0xff]
    %v3585 = vld [vmem:[%s4 + $0x28] sm:$0xff]
    %v3586 = vld [vmem:[%s4 + $0x30] sm:$0xff]
    %v3587 = vld [vmem:[%s4 + $0x38] sm:$0xff]
    %v3588 = vlaneseq
    %v3589 = vshrl.u32 %v3588, 7
    %v3590 = vsub.s32 0, %v3589
    %v3591 = vrot.slane %v3579, %v3590
    %v3593 = vsel %vm40, %v3573, 0
    %v3596 = vsel %vm40, %v3574, 0
    %3598 = vmatprep.subr.mxu0 0.0
    %3599 = vmatpush1.msra.mxu0 %v3575
    %3600 = vmatprep.subr.mxu0 0.0
    %3601 = vmatpush1.msra.mxu0 %v3576
    %3602 = vmatprep.subr.mxu0 0.0
    %3603 = vmatpush1.msra.mxu0 %v3577
    %3604 = vmatprep.subr.mxu0 0.0
    %3605 = vmatpush1.msra.mxu0 %v3578
    %3606 = vmatprep.subr.mxu0 0.0
    %3607 = vmatpush1.msra.mxu0 0.0
    %3608 = vmatprep.subr.mxu0 0.0
    %3609 = vmatpush1.msra.mxu0 0.0
    %3610 = vmatprep.subr.mxu0 0.0
    %3611 = vmatpush1.msra.mxu0 0.0
    %3612 = vmatprep.subr.mxu0 0.0
    %3613 = vmatpush1.msra.mxu0 0.0
    %3614 = vmatprep.subr.mxu0 0.0
    %3615 = vmatpush1.msra.mxu0 0.0
    %3616 = vmatprep.subr.mxu0 0.0
    %3617 = vmatpush1.msra.mxu0 0.0
    %3618 = vmatprep.subr.mxu0 0.0
    %3619 = vmatpush1.msra.mxu0 0.0
    %3620 = vmatprep.subr.mxu0 0.0
    %3621 = vmatpush1.msra.mxu0 0.0
    %3622 = vmatprep.subr.mxu0 0.0
    %3623 = vmatpush1.msra.mxu0 0.0
    %3624 = vmatprep.subr.mxu0 0.0
    %3625 = vmatpush1.msra.mxu0 0.0
    %3626 = vmatprep.subr.mxu0 0.0
    %3627 = vmatpush1.msra.mxu0 0.0
    %3628 = vmatprep.subr.mxu0 0.0
    %3629 = vmatpush1.msra.mxu0 0.0
    %3630 = vmatprep.subr.mxu0 0.0
    %3631 = vmatpush1.msra.mxu0 0.0
    %3632 = vmatprep.subr.mxu0 0.0
    %3633 = vmatpush1.msra.mxu0 0.0
    %3634 = vmatprep.subr.mxu0 0.0
    %3635 = vmatpush1.msra.mxu0 0.0
    %3636 = vmatprep.subr.mxu0 0.0
    %3637 = vmatpush1.msra.mxu0 0.0
    %3638 = vmatprep.subr.mxu0 0.0
    %3639 = vmatpush1.msra.mxu0 0.0
    %3640 = vmatprep.subr.mxu0 0.0
    %3641 = vmatpush1.msra.mxu0 0.0
    %3642 = vmatprep.subr.mxu0 0.0
    %3643 = vmatpush1.msra.mxu0 0.0
    %3644 = vmatprep.subr.mxu0 0.0
    %3645 = vmatpush1.msra.mxu0 0.0
    %3646 = vmatprep.subr.mxu0 0.0
    %3647 = vmatpush1.msra.mxu0 0.0
    %3648 = vmatprep.subr.mxu0 0.0
    %3649 = vmatpush1.msra.mxu0 0.0
    %3650 = vmatprep.subr.mxu0 0.0
    %3651 = vmatpush1.msra.mxu0 0.0
    %3652 = vmatprep.subr.mxu0 0.0
    %3653 = vmatpush1.msra.mxu0 0.0
    %3654 = vmatprep.subr.mxu0 0.0
    %3655 = vmatpush1.msra.mxu0 0.0
    %3656 = vmatprep.subr.mxu0 0.0
    %3657 = vmatpush1.msra.mxu0 0.0
    %3658 = vmatprep.subr.mxu0 0.0
    %3659 = vmatpush1.msra.mxu0 0.0
    %3660 = vmatprep.subr.mxu0 0.0
    %3661 = vmatpush1.msra.mxu0 0.0
    %3662 = vmatprep.mubr.f32.mxu0 0.0
    %3663 = vmatmul.mubr.f32.gmra.mrb[0].mxu0 %v3593
    %v3664 = vpop.f32.mrb[0].mxu0
    %v3665 = vadd.f32 %v3591, %v3664
    %v3666 = vpop.f32.mrb[0].mxu0
    %3667 = vmatprep.mubr.f32.mxu0 0.0
    %3668 = vmatmul.mubr.f32.gmra.mrb[0].mxu0 %v3596
    %v3669 = vpop.f32.mrb[0].mxu0
    %v3670 = vadd.f32 %v3591, %v3669
    %v3671 = vpop.f32.mrb[0].mxu0
    %3672 = vdwg.mxu0
    %v3673 = vmax.f32 %v3665, 0.0
    %v3674 = vmax.f32 %v3670, 0.0
    %v3675 = vlaneseq
    %v3676 = vshrl.u32 %v3675, 7
    %v3677 = vsub.s32 0, %v3676
    %v3678 = vrot.slane %v31, %v3677
    %vm3679 = vcmask 523264
    %v3681 = vsel %vm3679, %v3673, 0
    %v3684 = vsel %vm3679, %v3674, 0
    %3686 = vmatprep.subr.mxu0 0.0
    %3687 = vmatpush1.msra.mxu0 %v3580
    %3688 = vmatprep.subr.mxu0 0.0
    %3689 = vmatpush1.msra.mxu0 %v3581
    %3690 = vmatprep.subr.mxu0 0.0
    %3691 = vmatpush1.msra.mxu0 %v3582
    %3692 = vmatprep.subr.mxu0 0.0
    %3693 = vmatpush1.msra.mxu0 %v3583
    %3694 = vmatprep.subr.mxu0 0.0
    %3695 = vmatpush1.msra.mxu0 %v3584
    %3696 = vmatprep.subr.mxu0 0.0
    %3697 = vmatpush1.msra.mxu0 %v3585
    %3698 = vmatprep.subr.mxu0 0.0
    %3699 = vmatpush1.msra.mxu0 %v3586
    %3700 = vmatprep.subr.mxu0 0.0
    %3701 = vmatpush1.msra.mxu0 %v3587
    %3702 = vmatprep.subr.mxu0 0.0
    %3703 = vmatpush1.msra.mxu0 0.0
    %3704 = vmatprep.subr.mxu0 0.0
    %3705 = vmatpush1.msra.mxu0 0.0
    %3706 = vmatprep.subr.mxu0 0.0
    %3707 = vmatpush1.msra.mxu0 0.0
    %3708 = vmatprep.subr.mxu0 0.0
    %3709 = vmatpush1.msra.mxu0 0.0
    %3710 = vmatprep.subr.mxu0 0.0
    %3711 = vmatpush1.msra.mxu0 0.0
    %3712 = vmatprep.subr.mxu0 0.0
    %3713 = vmatpush1.msra.mxu0 0.0
    %3714 = vmatprep.subr.mxu0 0.0
    %3715 = vmatpush1.msra.mxu0 0.0
    %3716 = vmatprep.subr.mxu0 0.0
    %3717 = vmatpush1.msra.mxu0 0.0
    %3718 = vmatprep.subr.mxu0 0.0
    %3719 = vmatpush1.msra.mxu0 0.0
    %3720 = vmatprep.subr.mxu0 0.0
    %3721 = vmatpush1.msra.mxu0 0.0
    %3722 = vmatprep.subr.mxu0 0.0
    %3723 = vmatpush1.msra.mxu0 0.0
    %3724 = vmatprep.subr.mxu0 0.0
    %3725 = vmatpush1.msra.mxu0 0.0
    %3726 = vmatprep.subr.mxu0 0.0
    %3727 = vmatpush1.msra.mxu0 0.0
    %3728 = vmatprep.subr.mxu0 0.0
    %3729 = vmatpush1.msra.mxu0 0.0
    %3730 = vmatprep.subr.mxu0 0.0
    %3731 = vmatpush1.msra.mxu0 0.0
    %3732 = vmatprep.subr.mxu0 0.0
    %3733 = vmatpush1.msra.mxu0 0.0
    %3734 = vmatprep.subr.mxu0 0.0
    %3735 = vmatpush1.msra.mxu0 0.0
    %3736 = vmatprep.subr.mxu0 0.0
    %3737 = vmatpush1.msra.mxu0 0.0
    %3738 = vmatprep.subr.mxu0 0.0
    %3739 = vmatpush1.msra.mxu0 0.0
    %3740 = vmatprep.subr.mxu0 0.0
    %3741 = vmatpush1.msra.mxu0 0.0
    %3742 = vmatprep.subr.mxu0 0.0
    %3743 = vmatpush1.msra.mxu0 0.0
    %3744 = vmatprep.subr.mxu0 0.0
    %3745 = vmatpush1.msra.mxu0 0.0
    %3746 = vmatprep.subr.mxu0 0.0
    %3747 = vmatpush1.msra.mxu0 0.0
    %3748 = vmatprep.subr.mxu0 0.0
    %3749 = vmatpush1.msra.mxu0 0.0
    %3750 = vmatprep.mubr.f32.mxu0 0.0
    %3751 = vmatmul.mubr.f32.gmra.mrb[0].mxu0 %v3681
    %v3752 = vpop.f32.mrb[0].mxu0
    %v3753 = vadd.f32 %v3678, %v3752
    %v3754 = vpop.f32.mrb[0].mxu0
    %3755 = vmatprep.mubr.f32.mxu0 0.0
    %3756 = vmatmul.mubr.f32.gmra.mrb[0].mxu0 %v3684
    %v3757 = vpop.f32.mrb[0].mxu0
    %v3758 = vadd.f32 %v3678, %v3757
    %v3759 = vpop.f32.mrb[0].mxu0
    %3760 = vdwg.mxu0
    %v3761 = vadd.f32 %v3573, %v3753
    %v3762 = vadd.f32 %v3574, %v3758
    %v3763 = vsel %vm40, %v3761, 0.0
    %3764 = vadd.xlane.f32.xlu0 %v3763
    %v3765 = vpop.xlane.xlu0 %3764
    %v3766 = vsel %vm40, %v3762, 0.0
    %3767 = vadd.xlane.f32.xlu0 %v3766
    %v3768 = vpop.xlane.xlu0 %3767
    %v3769 = vmul.f32 %v3765, %v1732
    %v3770 = vmul.f32 %v3768, %v1732
    %v3771 = vsub.f32 %v3761, %v3769
    %v3772 = vsub.f32 %v3762, %v3770
    %v3773 = vmul.f32 %v3771, %v3771
    %v3774 = vmul.f32 %v3772, %v3772
    %v3775 = vsel %vm40, %v3773, 0.0
    %3776 = vadd.xlane.f32.xlu0 %v3775
    %v3777 = vpop.xlane.xlu0 %3776
    %v3778 = vsel %vm40, %v3774, 0.0
    %3779 = vadd.xlane.f32.xlu0 %v3778
    %v3780 = vpop.xlane.xlu0 %3779
    %v3781 = vmul.f32 %v3777, %v1732
    %v3782 = vmul.f32 %v3780, %v1732
    %v3783 = vadd.f32 %v3781, 1e-05
    %v3784 = vadd.f32 %v3782, 1e-05
    %v3785 = vrsqrt.pop %v3783
    %v3786 = vrsqrt.pop %v3784
    %v3787 = vmul.f32 %v3771, %v3785
    %v3788 = vmul.f32 %v3772, %v3786
    %v3789 = vlaneseq
    %v3790 = vshrl.u32 %v3789, 7
    %v3791 = vsub.s32 5, %v3790
    %v3792 = vrot.slane %v31, %v3791
    %v3793 = vmul.f32 %v3787, %v3792
    %v3794 = vmul.f32 %v3788, %v3792
    %v3795 = vlaneseq
    %v3796 = vshrl.u32 %v3795, 7
    %v3797 = vsub.s32 6, %v3796
    %v3798 = vrot.slane %v31, %v3797
    %v3799 = vadd.f32 %v3793, %v3798
    %v3800 = vadd.f32 %v3794, %v3798
    %s3801 = scalar_lea.vmem %s5, 24
    %v3802 = vld [vmem:[%s3801] sm:$0xff]
    %v3803 = vld [vmem:[%s3801 + $0x8] sm:$0xff]
    %v3804 = vld [vmem:[%s3801 + $0x10] sm:$0x1]
    %s3805 = scalar_lea.vmem %s2, 256
    %v3806 = vld [vmem:[%s3805] sm:$0xff]
    %v3807 = vld [vmem:[%s3805 + $0x8] sm:$0xff]
    %v3808 = vld [vmem:[%s3805 + $0x10] sm:$0xff]
    %v3809 = vld [vmem:[%s3805 + $0x18] sm:$0xff]
    %v3810 = vlaneseq
    %v3811 = vshrl.u32 %v3810, 7
    %v3812 = vsub.s32 0, %v3811
    %v3813 = vrot.slane %v3802, %v3812
    %v3815 = vsel %vm40, %v3799, 0
    %v3818 = vsel %vm40, %v3800, 0
    %3820 = vmatprep.subr.mxu0 0.0
    %3821 = vmatpush1.msra.mxu0 %v3806
    %3822 = vmatprep.subr.mxu0 0.0
    %3823 = vmatpush1.msra.mxu0 %v3807
    %3824 = vmatprep.subr.mxu0 0.0
    %3825 = vmatpush1.msra.mxu0 %v3808
    %3826 = vmatprep.subr.mxu0 0.0
    %3827 = vmatpush1.msra.mxu0 %v3809
    %3828 = vmatprep.subr.mxu0 0.0
    %3829 = vmatpush1.msra.mxu0 0.0
    %3830 = vmatprep.subr.mxu0 0.0
    %3831 = vmatpush1.msra.mxu0 0.0
    %3832 = vmatprep.subr.mxu0 0.0
    %3833 = vmatpush1.msra.mxu0 0.0
    %3834 = vmatprep.subr.mxu0 0.0
    %3835 = vmatpush1.msra.mxu0 0.0
    %3836 = vmatprep.subr.mxu0 0.0
    %3837 = vmatpush1.msra.mxu0 0.0
    %3838 = vmatprep.subr.mxu0 0.0
    %3839 = vmatpush1.msra.mxu0 0.0
    %3840 = vmatprep.subr.mxu0 0.0
    %3841 = vmatpush1.msra.mxu0 0.0
    %3842 = vmatprep.subr.mxu0 0.0
    %3843 = vmatpush1.msra.mxu0 0.0
    %3844 = vmatprep.subr.mxu0 0.0
    %3845 = vmatpush1.msra.mxu0 0.0
    %3846 = vmatprep.subr.mxu0 0.0
    %3847 = vmatpush1.msra.mxu0 0.0
    %3848 = vmatprep.subr.mxu0 0.0
    %3849 = vmatpush1.msra.mxu0 0.0
    %3850 = vmatprep.subr.mxu0 0.0
    %3851 = vmatpush1.msra.mxu0 0.0
    %3852 = vmatprep.subr.mxu0 0.0
    %3853 = vmatpush1.msra.mxu0 0.0
    %3854 = vmatprep.subr.mxu0 0.0
    %3855 = vmatpush1.msra.mxu0 0.0
    %3856 = vmatprep.subr.mxu0 0.0
    %3857 = vmatpush1.msra.mxu0 0.0
    %3858 = vmatprep.subr.mxu0 0.0
    %3859 = vmatpush1.msra.mxu0 0.0
    %3860 = vmatprep.subr.mxu0 0.0
    %3861 = vmatpush1.msra.mxu0 0.0
    %3862 = vmatprep.subr.mxu0 0.0
    %3863 = vmatpush1.msra.mxu0 0.0
    %3864 = vmatprep.subr.mxu0 0.0
    %3865 = vmatpush1.msra.mxu0 0.0
    %3866 = vmatprep.subr.mxu0 0.0
    %3867 = vmatpush1.msra.mxu0 0.0
    %3868 = vmatprep.subr.mxu0 0.0
    %3869 = vmatpush1.msra.mxu0 0.0
    %3870 = vmatprep.subr.mxu0 0.0
    %3871 = vmatpush1.msra.mxu0 0.0
    %3872 = vmatprep.subr.mxu0 0.0
    %3873 = vmatpush1.msra.mxu0 0.0
    %3874 = vmatprep.subr.mxu0 0.0
    %3875 = vmatpush1.msra.mxu0 0.0
    %3876 = vmatprep.subr.mxu0 0.0
    %3877 = vmatpush1.msra.mxu0 0.0
    %3878 = vmatprep.subr.mxu0 0.0
    %3879 = vmatpush1.msra.mxu0 0.0
    %3880 = vmatprep.subr.mxu0 0.0
    %3881 = vmatpush1.msra.mxu0 0.0
    %3882 = vmatprep.subr.mxu0 0.0
    %3883 = vmatpush1.msra.mxu0 0.0
    %3884 = vmatprep.mubr.f32.mxu0 0.0
    %3885 = vmatmul.mubr.f32.gmra.mrb[0].mxu0 %v3815
    %v3886 = vpop.f32.mrb[0].mxu0
    %v3887 = vadd.f32 %v3813, %v3886
    %v3888 = vpop.f32.mrb[0].mxu0
    %3889 = vmatprep.mubr.f32.mxu0 0.0
    %3890 = vmatmul.mubr.f32.gmra.mrb[0].mxu0 %v3818
    %v3891 = vpop.f32.mrb[0].mxu0
    %v3892 = vadd.f32 %v3813, %v3891
    %v3893 = vpop.f32.mrb[0].mxu0
    %3894 = vdwg.mxu0
    %v3895 = vld [vmem:[%s3805 + $0x20] sm:$0xff]
    %v3896 = vld [vmem:[%s3805 + $0x28] sm:$0xff]
    %v3897 = vld [vmem:[%s3805 + $0x30] sm:$0xff]
    %v3898 = vld [vmem:[%s3805 + $0x38] sm:$0xff]
    %v3899 = vlaneseq
    %v3900 = vshrl.u32 %v3899, 7
    %v3901 = vsub.s32 1, %v3900
    %v3902 = vrot.slane %v3802, %v3901
    %3903 = vmatprep.subr.mxu0 0.0
    %3904 = vmatpush1.msra.mxu0 %v3895
    %3905 = vmatprep.subr.mxu0 0.0
    %3906 = vmatpush1.msra.mxu0 %v3896
    %3907 = vmatprep.subr.mxu0 0.0
    %3908 = vmatpush1.msra.mxu0 %v3897
    %3909 = vmatprep.subr.mxu0 0.0
    %3910 = vmatpush1.msra.mxu0 %v3898
    %3911 = vmatprep.subr.mxu0 0.0
    %3912 = vmatpush1.msra.mxu0 0.0
    %3913 = vmatprep.subr.mxu0 0.0
    %3914 = vmatpush1.msra.mxu0 0.0
    %3915 = vmatprep.subr.mxu0 0.0
    %3916 = vmatpush1.msra.mxu0 0.0
    %3917 = vmatprep.subr.mxu0 0.0
    %3918 = vmatpush1.msra.mxu0 0.0
    %3919 = vmatprep.subr.mxu0 0.0
    %3920 = vmatpush1.msra.mxu0 0.0
    %3921 = vmatprep.subr.mxu0 0.0
    %3922 = vmatpush1.msra.mxu0 0.0
    %3923 = vmatprep.subr.mxu0 0.0
    %3924 = vmatpush1.msra.mxu0 0.0
    %3925 = vmatprep.subr.mxu0 0.0
    %3926 = vmatpush1.msra.mxu0 0.0
    %3927 = vmatprep.subr.mxu0 0.0
    %3928 = vmatpush1.msra.mxu0 0.0
    %3929 = vmatprep.subr.mxu0 0.0
    %3930 = vmatpush1.msra.mxu0 0.0
    %3931 = vmatprep.subr.mxu0 0.0
    %3932 = vmatpush1.msra.mxu0 0.0
    %3933 = vmatprep.subr.mxu0 0.0
    %3934 = vmatpush1.msra.mxu0 0.0
    %3935 = vmatprep.subr.mxu0 0.0
    %3936 = vmatpush1.msra.mxu0 0.0
    %3937 = vmatprep.subr.mxu0 0.0
    %3938 = vmatpush1.msra.mxu0 0.0
    %3939 = vmatprep.subr.mxu0 0.0
    %3940 = vmatpush1.msra.mxu0 0.0
    %3941 = vmatprep.subr.mxu0 0.0
    %3942 = vmatpush1.msra.mxu0 0.0
    %3943 = vmatprep.subr.mxu0 0.0
    %3944 = vmatpush1.msra.mxu0 0.0
    %3945 = vmatprep.subr.mxu0 0.0
    %3946 = vmatpush1.msra.mxu0 0.0
    %3947 = vmatprep.subr.mxu0 0.0
    %3948 = vmatpush1.msra.mxu0 0.0
    %3949 = vmatprep.subr.mxu0 0.0
    %3950 = vmatpush1.msra.mxu0 0.0
    %3951 = vmatprep.subr.mxu0 0.0
    %3952 = vmatpush1.msra.mxu0 0.0
    %3953 = vmatprep.subr.mxu0 0.0
    %3954 = vmatpush1.msra.mxu0 0.0
    %3955 = vmatprep.subr.mxu0 0.0
    %3956 = vmatpush1.msra.mxu0 0.0
    %3957 = vmatprep.subr.mxu0 0.0
    %3958 = vmatpush1.msra.mxu0 0.0
    %3959 = vmatprep.subr.mxu0 0.0
    %3960 = vmatpush1.msra.mxu0 0.0
    %3961 = vmatprep.subr.mxu0 0.0
    %3962 = vmatpush1.msra.mxu0 0.0
    %3963 = vmatprep.subr.mxu0 0.0
    %3964 = vmatpush1.msra.mxu0 0.0
    %3965 = vmatprep.subr.mxu0 0.0
    %3966 = vmatpush1.msra.mxu0 0.0
    %3967 = vmatprep.mubr.f32.mxu0 0.0
    %3968 = vmatmul.mubr.f32.gmra.mrb[0].mxu0 %v3815
    %v3969 = vpop.f32.mrb[0].mxu0
    %v3970 = vadd.f32 %v3902, %v3969
    %v3971 = vpop.f32.mrb[0].mxu0
    %3972 = vmatprep.mubr.f32.mxu0 0.0
    %3973 = vmatmul.mubr.f32.gmra.mrb[0].mxu0 %v3818
    %v3974 = vpop.f32.mrb[0].mxu0
    %v3975 = vadd.f32 %v3902, %v3974
    %v3976 = vpop.f32.mrb[0].mxu0
    %3977 = vdwg.mxu0
    %v3978 = vld [vmem:[%s3805 + $0x40] sm:$0xff]
    %v3979 = vld [vmem:[%s3805 + $0x48] sm:$0xff]
    %v3980 = vld [vmem:[%s3805 + $0x50] sm:$0xff]
    %v3981 = vld [vmem:[%s3805 + $0x58] sm:$0xff]
    %v3982 = vlaneseq
    %v3983 = vshrl.u32 %v3982, 7
    %v3984 = vsub.s32 2, %v3983
    %v3985 = vrot.slane %v3802, %v3984
    %3986 = vmatprep.subr.mxu0 0.0
    %3987 = vmatpush1.msra.mxu0 %v3978
    %3988 = vmatprep.subr.mxu0 0.0
    %3989 = vmatpush1.msra.mxu0 %v3979
    %3990 = vmatprep.subr.mxu0 0.0
    %3991 = vmatpush1.msra.mxu0 %v3980
    %3992 = vmatprep.subr.mxu0 0.0
    %3993 = vmatpush1.msra.mxu0 %v3981
    %3994 = vmatprep.subr.mxu0 0.0
    %3995 = vmatpush1.msra.mxu0 0.0
    %3996 = vmatprep.subr.mxu0 0.0
    %3997 = vmatpush1.msra.mxu0 0.0
    %3998 = vmatprep.subr.mxu0 0.0
    %3999 = vmatpush1.msra.mxu0 0.0
    %4000 = vmatprep.subr.mxu0 0.0
    %4001 = vmatpush1.msra.mxu0 0.0
    %4002 = vmatprep.subr.mxu0 0.0
    %4003 = vmatpush1.msra.mxu0 0.0
    %4004 = vmatprep.subr.mxu0 0.0
    %4005 = vmatpush1.msra.mxu0 0.0
    %4006 = vmatprep.subr.mxu0 0.0
    %4007 = vmatpush1.msra.mxu0 0.0
    %4008 = vmatprep.subr.mxu0 0.0
    %4009 = vmatpush1.msra.mxu0 0.0
    %4010 = vmatprep.subr.mxu0 0.0
    %4011 = vmatpush1.msra.mxu0 0.0
    %4012 = vmatprep.subr.mxu0 0.0
    %4013 = vmatpush1.msra.mxu0 0.0
    %4014 = vmatprep.subr.mxu0 0.0
    %4015 = vmatpush1.msra.mxu0 0.0
    %4016 = vmatprep.subr.mxu0 0.0
    %4017 = vmatpush1.msra.mxu0 0.0
    %4018 = vmatprep.subr.mxu0 0.0
    %4019 = vmatpush1.msra.mxu0 0.0
    %4020 = vmatprep.subr.mxu0 0.0
    %4021 = vmatpush1.msra.mxu0 0.0
    %4022 = vmatprep.subr.mxu0 0.0
    %4023 = vmatpush1.msra.mxu0 0.0
    %4024 = vmatprep.subr.mxu0 0.0
    %4025 = vmatpush1.msra.mxu0 0.0
    %4026 = vmatprep.subr.mxu0 0.0
    %4027 = vmatpush1.msra.mxu0 0.0
    %4028 = vmatprep.subr.mxu0 0.0
    %4029 = vmatpush1.msra.mxu0 0.0
    %4030 = vmatprep.subr.mxu0 0.0
    %4031 = vmatpush1.msra.mxu0 0.0
    %4032 = vmatprep.subr.mxu0 0.0
    %4033 = vmatpush1.msra.mxu0 0.0
    %4034 = vmatprep.subr.mxu0 0.0
    %4035 = vmatpush1.msra.mxu0 0.0
    %4036 = vmatprep.subr.mxu0 0.0
    %4037 = vmatpush1.msra.mxu0 0.0
    %4038 = vmatprep.subr.mxu0 0.0
    %4039 = vmatpush1.msra.mxu0 0.0
    %4040 = vmatprep.subr.mxu0 0.0
    %4041 = vmatpush1.msra.mxu0 0.0
    %4042 = vmatprep.subr.mxu0 0.0
    %4043 = vmatpush1.msra.mxu0 0.0
    %4044 = vmatprep.subr.mxu0 0.0
    %4045 = vmatpush1.msra.mxu0 0.0
    %4046 = vmatprep.subr.mxu0 0.0
    %4047 = vmatpush1.msra.mxu0 0.0
    %4048 = vmatprep.subr.mxu0 0.0
    %4049 = vmatpush1.msra.mxu0 0.0
    %4050 = vmatprep.mubr.f32.mxu0 0.0
    %4051 = vmatmul.mubr.f32.gmra.mrb[0].mxu0 %v3815
    %v4052 = vpop.f32.mrb[0].mxu0
    %v4053 = vadd.f32 %v3985, %v4052
    %v4054 = vpop.f32.mrb[0].mxu0
    %4055 = vmatprep.mubr.f32.mxu0 0.0
    %4056 = vmatmul.mubr.f32.gmra.mrb[0].mxu0 %v3818
    %v4057 = vpop.f32.mrb[0].mxu0
    %v4058 = vadd.f32 %v3985, %v4057
    %v4059 = vpop.f32.mrb[0].mxu0
    %4060 = vdwg.mxu0
    %v4061 = vld [vmem:[%s3805 + $0x60] sm:$0xff]
    %v4062 = vld [vmem:[%s3805 + $0x68] sm:$0xff]
    %v4063 = vld [vmem:[%s3805 + $0x70] sm:$0xff]
    %v4064 = vld [vmem:[%s3805 + $0x78] sm:$0xff]
    %v4065 = vmul.f32 %v3887, 0.35355338
    %v4066 = vmul.f32 %v3892, 0.35355338
    %v4068 = vsel %vm294, %v4065, 0
    %v4071 = vsel %vm294, %v3970, 0
    %4073 = vmatprep.subr.mxu0 0.0
    %4074 = vmatpush1.xpose.msra.mxu0 %v4071
    %4075 = vmatprep.subr.mxu0 0.0
    %4076 = vmatpush1.xpose.msra.mxu0 0.0
    %4077 = vmatprep.subr.mxu0 0.0
    %4078 = vmatpush1.xpose.msra.mxu0 0.0
    %4079 = vmatprep.subr.mxu0 0.0
    %4080 = vmatpush1.xpose.msra.mxu0 0.0
    %4081 = vmatprep.subr.mxu0 0.0
    %4082 = vmatpush1.xpose.msra.mxu0 0.0
    %4083 = vmatprep.subr.mxu0 0.0
    %4084 = vmatpush1.xpose.msra.mxu0 0.0
    %4085 = vmatprep.subr.mxu0 0.0
    %4086 = vmatpush1.xpose.msra.mxu0 0.0
    %4087 = vmatprep.subr.mxu0 0.0
    %4088 = vmatpush1.xpose.msra.mxu0 0.0
    %4089 = vmatprep.subr.mxu0 0.0
    %4090 = vmatpush1.xpose.msra.mxu0 0.0
    %4091 = vmatprep.subr.mxu0 0.0
    %4092 = vmatpush1.xpose.msra.mxu0 0.0
    %4093 = vmatprep.subr.mxu0 0.0
    %4094 = vmatpush1.xpose.msra.mxu0 0.0
    %4095 = vmatprep.subr.mxu0 0.0
    %4096 = vmatpush1.xpose.msra.mxu0 0.0
    %4097 = vmatprep.subr.mxu0 0.0
    %4098 = vmatpush1.xpose.msra.mxu0 0.0
    %4099 = vmatprep.subr.mxu0 0.0
    %4100 = vmatpush1.xpose.msra.mxu0 0.0
    %4101 = vmatprep.subr.mxu0 0.0
    %4102 = vmatpush1.xpose.msra.mxu0 0.0
    %4103 = vmatprep.subr.mxu0 0.0
    %4104 = vmatpush1.xpose.msra.mxu0 0.0
    %4105 = vmatprep.subr.mxu0 0.0
    %4106 = vmatpush1.xpose.msra.mxu0 0.0
    %4107 = vmatprep.subr.mxu0 0.0
    %4108 = vmatpush1.xpose.msra.mxu0 0.0
    %4109 = vmatprep.subr.mxu0 0.0
    %4110 = vmatpush1.xpose.msra.mxu0 0.0
    %4111 = vmatprep.subr.mxu0 0.0
    %4112 = vmatpush1.xpose.msra.mxu0 0.0
    %4113 = vmatprep.subr.mxu0 0.0
    %4114 = vmatpush1.xpose.msra.mxu0 0.0
    %4115 = vmatprep.subr.mxu0 0.0
    %4116 = vmatpush1.xpose.msra.mxu0 0.0
    %4117 = vmatprep.subr.mxu0 0.0
    %4118 = vmatpush1.xpose.msra.mxu0 0.0
    %4119 = vmatprep.subr.mxu0 0.0
    %4120 = vmatpush1.xpose.msra.mxu0 0.0
    %4121 = vmatprep.subr.mxu0 0.0
    %4122 = vmatpush1.xpose.msra.mxu0 0.0
    %4123 = vmatprep.subr.mxu0 0.0
    %4124 = vmatpush1.xpose.msra.mxu0 0.0
    %4125 = vmatprep.subr.mxu0 0.0
    %4126 = vmatpush1.xpose.msra.mxu0 0.0
    %4127 = vmatprep.subr.mxu0 0.0
    %4128 = vmatpush1.xpose.msra.mxu0 0.0
    %4129 = vmatprep.subr.mxu0 0.0
    %4130 = vmatpush1.xpose.msra.mxu0 0.0
    %4131 = vmatprep.subr.mxu0 0.0
    %4132 = vmatpush1.xpose.msra.mxu0 0.0
    %4133 = vmatprep.subr.mxu0 0.0
    %4134 = vmatpush1.xpose.msra.mxu0 0.0
    %4135 = vmatprep.subr.mxu0 0.0
    %4136 = vmatpush1.xpose.msra.mxu0 0.0
    %4137 = vmatprep.mubr.f32.mxu0 0.0
    %4138 = vmatmul.mubr.f32.gmra.mrb[0].mxu0 %v4068
    %v4139 = vpop.f32.mrb[0].mxu0
    %v4140 = vadd.f32 0.0, %v4139
    %v4141 = vpop.f32.mrb[0].mxu0
    %4142 = vdwg.mxu0
    %4143 = vrot.lane.b32.xlu0 %v4065, 120
    %v4144 = vpop.permute.xlu0 %4143
    %4145 = vrot.lane.b32.xlu0 %v3970, 120
    %v4146 = vpop.permute.xlu0 %4145
    %v4147 = vsel %vm294, %v4144, 0
    %v4149 = vsel %vm294, %v4146, 0
    %4151 = vmatprep.subr.mxu0 0.0
    %4152 = vmatpush1.xpose.msra.mxu0 %v4149
    %4153 = vmatprep.subr.mxu0 0.0
    %4154 = vmatpush1.xpose.msra.mxu0 0.0
    %4155 = vmatprep.subr.mxu0 0.0
    %4156 = vmatpush1.xpose.msra.mxu0 0.0
    %4157 = vmatprep.subr.mxu0 0.0
    %4158 = vmatpush1.xpose.msra.mxu0 0.0
    %4159 = vmatprep.subr.mxu0 0.0
    %4160 = vmatpush1.xpose.msra.mxu0 0.0
    %4161 = vmatprep.subr.mxu0 0.0
    %4162 = vmatpush1.xpose.msra.mxu0 0.0
    %4163 = vmatprep.subr.mxu0 0.0
    %4164 = vmatpush1.xpose.msra.mxu0 0.0
    %4165 = vmatprep.subr.mxu0 0.0
    %4166 = vmatpush1.xpose.msra.mxu0 0.0
    %4167 = vmatprep.subr.mxu0 0.0
    %4168 = vmatpush1.xpose.msra.mxu0 0.0
    %4169 = vmatprep.subr.mxu0 0.0
    %4170 = vmatpush1.xpose.msra.mxu0 0.0
    %4171 = vmatprep.subr.mxu0 0.0
    %4172 = vmatpush1.xpose.msra.mxu0 0.0
    %4173 = vmatprep.subr.mxu0 0.0
    %4174 = vmatpush1.xpose.msra.mxu0 0.0
    %4175 = vmatprep.subr.mxu0 0.0
    %4176 = vmatpush1.xpose.msra.mxu0 0.0
    %4177 = vmatprep.subr.mxu0 0.0
    %4178 = vmatpush1.xpose.msra.mxu0 0.0
    %4179 = vmatprep.subr.mxu0 0.0
    %4180 = vmatpush1.xpose.msra.mxu0 0.0
    %4181 = vmatprep.subr.mxu0 0.0
    %4182 = vmatpush1.xpose.msra.mxu0 0.0
    %4183 = vmatprep.subr.mxu0 0.0
    %4184 = vmatpush1.xpose.msra.mxu0 0.0
    %4185 = vmatprep.subr.mxu0 0.0
    %4186 = vmatpush1.xpose.msra.mxu0 0.0
    %4187 = vmatprep.subr.mxu0 0.0
    %4188 = vmatpush1.xpose.msra.mxu0 0.0
    %4189 = vmatprep.subr.mxu0 0.0
    %4190 = vmatpush1.xpose.msra.mxu0 0.0
    %4191 = vmatprep.subr.mxu0 0.0
    %4192 = vmatpush1.xpose.msra.mxu0 0.0
    %4193 = vmatprep.subr.mxu0 0.0
    %4194 = vmatpush1.xpose.msra.mxu0 0.0
    %4195 = vmatprep.subr.mxu0 0.0
    %4196 = vmatpush1.xpose.msra.mxu0 0.0
    %4197 = vmatprep.subr.mxu0 0.0
    %4198 = vmatpush1.xpose.msra.mxu0 0.0
    %4199 = vmatprep.subr.mxu0 0.0
    %4200 = vmatpush1.xpose.msra.mxu0 0.0
    %4201 = vmatprep.subr.mxu0 0.0
    %4202 = vmatpush1.xpose.msra.mxu0 0.0
    %4203 = vmatprep.subr.mxu0 0.0
    %4204 = vmatpush1.xpose.msra.mxu0 0.0
    %4205 = vmatprep.subr.mxu0 0.0
    %4206 = vmatpush1.xpose.msra.mxu0 0.0
    %4207 = vmatprep.subr.mxu0 0.0
    %4208 = vmatpush1.xpose.msra.mxu0 0.0
    %4209 = vmatprep.subr.mxu0 0.0
    %4210 = vmatpush1.xpose.msra.mxu0 0.0
    %4211 = vmatprep.subr.mxu0 0.0
    %4212 = vmatpush1.xpose.msra.mxu0 0.0
    %4213 = vmatprep.subr.mxu0 0.0
    %4214 = vmatpush1.xpose.msra.mxu0 0.0
    %4215 = vmatprep.mubr.f32.mxu0 0.0
    %4216 = vmatmul.mubr.f32.gmra.mrb[0].mxu0 %v4147
    %v4217 = vpop.f32.mrb[0].mxu0
    %v4218 = vadd.f32 0.0, %v4217
    %v4219 = vpop.f32.mrb[0].mxu0
    %4220 = vdwg.mxu0
    %4221 = vrot.lane.b32.xlu0 %v4065, 112
    %v4222 = vpop.permute.xlu0 %4221
    %4223 = vrot.lane.b32.xlu0 %v3970, 112
    %v4224 = vpop.permute.xlu0 %4223
    %v4225 = vsel %vm294, %v4222, 0
    %v4227 = vsel %vm294, %v4224, 0
    %4229 = vmatprep.subr.mxu0 0.0
    %4230 = vmatpush1.xpose.msra.mxu0 %v4227
    %4231 = vmatprep.subr.mxu0 0.0
    %4232 = vmatpush1.xpose.msra.mxu0 0.0
    %4233 = vmatprep.subr.mxu0 0.0
    %4234 = vmatpush1.xpose.msra.mxu0 0.0
    %4235 = vmatprep.subr.mxu0 0.0
    %4236 = vmatpush1.xpose.msra.mxu0 0.0
    %4237 = vmatprep.subr.mxu0 0.0
    %4238 = vmatpush1.xpose.msra.mxu0 0.0
    %4239 = vmatprep.subr.mxu0 0.0
    %4240 = vmatpush1.xpose.msra.mxu0 0.0
    %4241 = vmatprep.subr.mxu0 0.0
    %4242 = vmatpush1.xpose.msra.mxu0 0.0
    %4243 = vmatprep.subr.mxu0 0.0
    %4244 = vmatpush1.xpose.msra.mxu0 0.0
    %4245 = vmatprep.subr.mxu0 0.0
    %4246 = vmatpush1.xpose.msra.mxu0 0.0
    %4247 = vmatprep.subr.mxu0 0.0
    %4248 = vmatpush1.xpose.msra.mxu0 0.0
    %4249 = vmatprep.subr.mxu0 0.0
    %4250 = vmatpush1.xpose.msra.mxu0 0.0
    %4251 = vmatprep.subr.mxu0 0.0
    %4252 = vmatpush1.xpose.msra.mxu0 0.0
    %4253 = vmatprep.subr.mxu0 0.0
    %4254 = vmatpush1.xpose.msra.mxu0 0.0
    %4255 = vmatprep.subr.mxu0 0.0
    %4256 = vmatpush1.xpose.msra.mxu0 0.0
    %4257 = vmatprep.subr.mxu0 0.0
    %4258 = vmatpush1.xpose.msra.mxu0 0.0
    %4259 = vmatprep.subr.mxu0 0.0
    %4260 = vmatpush1.xpose.msra.mxu0 0.0
    %4261 = vmatprep.subr.mxu0 0.0
    %4262 = vmatpush1.xpose.msra.mxu0 0.0
    %4263 = vmatprep.subr.mxu0 0.0
    %4264 = vmatpush1.xpose.msra.mxu0 0.0
    %4265 = vmatprep.subr.mxu0 0.0
    %4266 = vmatpush1.xpose.msra.mxu0 0.0
    %4267 = vmatprep.subr.mxu0 0.0
    %4268 = vmatpush1.xpose.msra.mxu0 0.0
    %4269 = vmatprep.subr.mxu0 0.0
    %4270 = vmatpush1.xpose.msra.mxu0 0.0
    %4271 = vmatprep.subr.mxu0 0.0
    %4272 = vmatpush1.xpose.msra.mxu0 0.0
    %4273 = vmatprep.subr.mxu0 0.0
    %4274 = vmatpush1.xpose.msra.mxu0 0.0
    %4275 = vmatprep.subr.mxu0 0.0
    %4276 = vmatpush1.xpose.msra.mxu0 0.0
    %4277 = vmatprep.subr.mxu0 0.0
    %4278 = vmatpush1.xpose.msra.mxu0 0.0
    %4279 = vmatprep.subr.mxu0 0.0
    %4280 = vmatpush1.xpose.msra.mxu0 0.0
    %4281 = vmatprep.subr.mxu0 0.0
    %4282 = vmatpush1.xpose.msra.mxu0 0.0
    %4283 = vmatprep.subr.mxu0 0.0
    %4284 = vmatpush1.xpose.msra.mxu0 0.0
    %4285 = vmatprep.subr.mxu0 0.0
    %4286 = vmatpush1.xpose.msra.mxu0 0.0
    %4287 = vmatprep.subr.mxu0 0.0
    %4288 = vmatpush1.xpose.msra.mxu0 0.0
    %4289 = vmatprep.subr.mxu0 0.0
    %4290 = vmatpush1.xpose.msra.mxu0 0.0
    %4291 = vmatprep.subr.mxu0 0.0
    %4292 = vmatpush1.xpose.msra.mxu0 0.0
    %4293 = vmatprep.mubr.f32.mxu0 0.0
    %4294 = vmatmul.mubr.f32.gmra.mrb[0].mxu0 %v4225
    %v4295 = vpop.f32.mrb[0].mxu0
    %v4296 = vadd.f32 0.0, %v4295
    %v4297 = vpop.f32.mrb[0].mxu0
    %4298 = vdwg.mxu0
    %4299 = vrot.lane.b32.xlu0 %v4065, 104
    %v4300 = vpop.permute.xlu0 %4299
    %4301 = vrot.lane.b32.xlu0 %v3970, 104
    %v4302 = vpop.permute.xlu0 %4301
    %v4303 = vsel %vm294, %v4300, 0
    %v4305 = vsel %vm294, %v4302, 0
    %4307 = vmatprep.subr.mxu0 0.0
    %4308 = vmatpush1.xpose.msra.mxu0 %v4305
    %4309 = vmatprep.subr.mxu0 0.0
    %4310 = vmatpush1.xpose.msra.mxu0 0.0
    %4311 = vmatprep.subr.mxu0 0.0
    %4312 = vmatpush1.xpose.msra.mxu0 0.0
    %4313 = vmatprep.subr.mxu0 0.0
    %4314 = vmatpush1.xpose.msra.mxu0 0.0
    %4315 = vmatprep.subr.mxu0 0.0
    %4316 = vmatpush1.xpose.msra.mxu0 0.0
    %4317 = vmatprep.subr.mxu0 0.0
    %4318 = vmatpush1.xpose.msra.mxu0 0.0
    %4319 = vmatprep.subr.mxu0 0.0
    %4320 = vmatpush1.xpose.msra.mxu0 0.0
    %4321 = vmatprep.subr.mxu0 0.0
    %4322 = vmatpush1.xpose.msra.mxu0 0.0
    %4323 = vmatprep.subr.mxu0 0.0
    %4324 = vmatpush1.xpose.msra.mxu0 0.0
    %4325 = vmatprep.subr.mxu0 0.0
    %4326 = vmatpush1.xpose.msra.mxu0 0.0
    %4327 = vmatprep.subr.mxu0 0.0
    %4328 = vmatpush1.xpose.msra.mxu0 0.0
    %4329 = vmatprep.subr.mxu0 0.0
    %4330 = vmatpush1.xpose.msra.mxu0 0.0
    %4331 = vmatprep.subr.mxu0 0.0
    %4332 = vmatpush1.xpose.msra.mxu0 0.0
    %4333 = vmatprep.subr.mxu0 0.0
    %4334 = vmatpush1.xpose.msra.mxu0 0.0
    %4335 = vmatprep.subr.mxu0 0.0
    %4336 = vmatpush1.xpose.msra.mxu0 0.0
    %4337 = vmatprep.subr.mxu0 0.0
    %4338 = vmatpush1.xpose.msra.mxu0 0.0
    %4339 = vmatprep.subr.mxu0 0.0
    %4340 = vmatpush1.xpose.msra.mxu0 0.0
    %4341 = vmatprep.subr.mxu0 0.0
    %4342 = vmatpush1.xpose.msra.mxu0 0.0
    %4343 = vmatprep.subr.mxu0 0.0
    %4344 = vmatpush1.xpose.msra.mxu0 0.0
    %4345 = vmatprep.subr.mxu0 0.0
    %4346 = vmatpush1.xpose.msra.mxu0 0.0
    %4347 = vmatprep.subr.mxu0 0.0
    %4348 = vmatpush1.xpose.msra.mxu0 0.0
    %4349 = vmatprep.subr.mxu0 0.0
    %4350 = vmatpush1.xpose.msra.mxu0 0.0
    %4351 = vmatprep.subr.mxu0 0.0
    %4352 = vmatpush1.xpose.msra.mxu0 0.0
    %4353 = vmatprep.subr.mxu0 0.0
    %4354 = vmatpush1.xpose.msra.mxu0 0.0
    %4355 = vmatprep.subr.mxu0 0.0
    %4356 = vmatpush1.xpose.msra.mxu0 0.0
    %4357 = vmatprep.subr.mxu0 0.0
    %4358 = vmatpush1.xpose.msra.mxu0 0.0
    %4359 = vmatprep.subr.mxu0 0.0
    %4360 = vmatpush1.xpose.msra.mxu0 0.0
    %4361 = vmatprep.subr.mxu0 0.0
    %4362 = vmatpush1.xpose.msra.mxu0 0.0
    %4363 = vmatprep.subr.mxu0 0.0
    %4364 = vmatpush1.xpose.msra.mxu0 0.0
    %4365 = vmatprep.subr.mxu0 0.0
    %4366 = vmatpush1.xpose.msra.mxu0 0.0
    %4367 = vmatprep.subr.mxu0 0.0
    %4368 = vmatpush1.xpose.msra.mxu0 0.0
    %4369 = vmatprep.subr.mxu0 0.0
    %4370 = vmatpush1.xpose.msra.mxu0 0.0
    %4371 = vmatprep.mubr.f32.mxu0 0.0
    %4372 = vmatmul.mubr.f32.gmra.mrb[0].mxu0 %v4303
    %v4373 = vpop.f32.mrb[0].mxu0
    %v4374 = vadd.f32 0.0, %v4373
    %v4375 = vpop.f32.mrb[0].mxu0
    %4376 = vdwg.mxu0
    %v4378 = vsel %vm294, %v4066, 0
    %v4381 = vsel %vm294, %v3975, 0
    %4383 = vmatprep.subr.mxu0 0.0
    %4384 = vmatpush1.xpose.msra.mxu0 %v4381
    %4385 = vmatprep.subr.mxu0 0.0
    %4386 = vmatpush1.xpose.msra.mxu0 0.0
    %4387 = vmatprep.subr.mxu0 0.0
    %4388 = vmatpush1.xpose.msra.mxu0 0.0
    %4389 = vmatprep.subr.mxu0 0.0
    %4390 = vmatpush1.xpose.msra.mxu0 0.0
    %4391 = vmatprep.subr.mxu0 0.0
    %4392 = vmatpush1.xpose.msra.mxu0 0.0
    %4393 = vmatprep.subr.mxu0 0.0
    %4394 = vmatpush1.xpose.msra.mxu0 0.0
    %4395 = vmatprep.subr.mxu0 0.0
    %4396 = vmatpush1.xpose.msra.mxu0 0.0
    %4397 = vmatprep.subr.mxu0 0.0
    %4398 = vmatpush1.xpose.msra.mxu0 0.0
    %4399 = vmatprep.subr.mxu0 0.0
    %4400 = vmatpush1.xpose.msra.mxu0 0.0
    %4401 = vmatprep.subr.mxu0 0.0
    %4402 = vmatpush1.xpose.msra.mxu0 0.0
    %4403 = vmatprep.subr.mxu0 0.0
    %4404 = vmatpush1.xpose.msra.mxu0 0.0
    %4405 = vmatprep.subr.mxu0 0.0
    %4406 = vmatpush1.xpose.msra.mxu0 0.0
    %4407 = vmatprep.subr.mxu0 0.0
    %4408 = vmatpush1.xpose.msra.mxu0 0.0
    %4409 = vmatprep.subr.mxu0 0.0
    %4410 = vmatpush1.xpose.msra.mxu0 0.0
    %4411 = vmatprep.subr.mxu0 0.0
    %4412 = vmatpush1.xpose.msra.mxu0 0.0
    %4413 = vmatprep.subr.mxu0 0.0
    %4414 = vmatpush1.xpose.msra.mxu0 0.0
    %4415 = vmatprep.subr.mxu0 0.0
    %4416 = vmatpush1.xpose.msra.mxu0 0.0
    %4417 = vmatprep.subr.mxu0 0.0
    %4418 = vmatpush1.xpose.msra.mxu0 0.0
    %4419 = vmatprep.subr.mxu0 0.0
    %4420 = vmatpush1.xpose.msra.mxu0 0.0
    %4421 = vmatprep.subr.mxu0 0.0
    %4422 = vmatpush1.xpose.msra.mxu0 0.0
    %4423 = vmatprep.subr.mxu0 0.0
    %4424 = vmatpush1.xpose.msra.mxu0 0.0
    %4425 = vmatprep.subr.mxu0 0.0
    %4426 = vmatpush1.xpose.msra.mxu0 0.0
    %4427 = vmatprep.subr.mxu0 0.0
    %4428 = vmatpush1.xpose.msra.mxu0 0.0
    %4429 = vmatprep.subr.mxu0 0.0
    %4430 = vmatpush1.xpose.msra.mxu0 0.0
    %4431 = vmatprep.subr.mxu0 0.0
    %4432 = vmatpush1.xpose.msra.mxu0 0.0
    %4433 = vmatprep.subr.mxu0 0.0
    %4434 = vmatpush1.xpose.msra.mxu0 0.0
    %4435 = vmatprep.subr.mxu0 0.0
    %4436 = vmatpush1.xpose.msra.mxu0 0.0
    %4437 = vmatprep.subr.mxu0 0.0
    %4438 = vmatpush1.xpose.msra.mxu0 0.0
    %4439 = vmatprep.subr.mxu0 0.0
    %4440 = vmatpush1.xpose.msra.mxu0 0.0
    %4441 = vmatprep.subr.mxu0 0.0
    %4442 = vmatpush1.xpose.msra.mxu0 0.0
    %4443 = vmatprep.subr.mxu0 0.0
    %4444 = vmatpush1.xpose.msra.mxu0 0.0
    %4445 = vmatprep.subr.mxu0 0.0
    %4446 = vmatpush1.xpose.msra.mxu0 0.0
    %4447 = vmatprep.mubr.f32.mxu0 0.0
    %4448 = vmatmul.mubr.f32.gmra.mrb[0].mxu0 %v4378
    %v4449 = vpop.f32.mrb[0].mxu0
    %v4450 = vadd.f32 0.0, %v4449
    %v4451 = vpop.f32.mrb[0].mxu0
    %4452 = vdwg.mxu0
    %4453 = vrot.lane.b32.xlu0 %v4066, 120
    %v4454 = vpop.permute.xlu0 %4453
    %4455 = vrot.lane.b32.xlu0 %v3975, 120
    %v4456 = vpop.permute.xlu0 %4455
    %v4457 = vsel %vm294, %v4454, 0
    %v4459 = vsel %vm294, %v4456, 0
    %4461 = vmatprep.subr.mxu0 0.0
    %4462 = vmatpush1.xpose.msra.mxu0 %v4459
    %4463 = vmatprep.subr.mxu0 0.0
    %4464 = vmatpush1.xpose.msra.mxu0 0.0
    %4465 = vmatprep.subr.mxu0 0.0
    %4466 = vmatpush1.xpose.msra.mxu0 0.0
    %4467 = vmatprep.subr.mxu0 0.0
    %4468 = vmatpush1.xpose.msra.mxu0 0.0
    %4469 = vmatprep.subr.mxu0 0.0
    %4470 = vmatpush1.xpose.msra.mxu0 0.0
    %4471 = vmatprep.subr.mxu0 0.0
    %4472 = vmatpush1.xpose.msra.mxu0 0.0
    %4473 = vmatprep.subr.mxu0 0.0
    %4474 = vmatpush1.xpose.msra.mxu0 0.0
    %4475 = vmatprep.subr.mxu0 0.0
    %4476 = vmatpush1.xpose.msra.mxu0 0.0
    %4477 = vmatprep.subr.mxu0 0.0
    %4478 = vmatpush1.xpose.msra.mxu0 0.0
    %4479 = vmatprep.subr.mxu0 0.0
    %4480 = vmatpush1.xpose.msra.mxu0 0.0
    %4481 = vmatprep.subr.mxu0 0.0
    %4482 = vmatpush1.xpose.msra.mxu0 0.0
    %4483 = vmatprep.subr.mxu0 0.0
    %4484 = vmatpush1.xpose.msra.mxu0 0.0
    %4485 = vmatprep.subr.mxu0 0.0
    %4486 = vmatpush1.xpose.msra.mxu0 0.0
    %4487 = vmatprep.subr.mxu0 0.0
    %4488 = vmatpush1.xpose.msra.mxu0 0.0
    %4489 = vmatprep.subr.mxu0 0.0
    %4490 = vmatpush1.xpose.msra.mxu0 0.0
    %4491 = vmatprep.subr.mxu0 0.0
    %4492 = vmatpush1.xpose.msra.mxu0 0.0
    %4493 = vmatprep.subr.mxu0 0.0
    %4494 = vmatpush1.xpose.msra.mxu0 0.0
    %4495 = vmatprep.subr.mxu0 0.0
    %4496 = vmatpush1.xpose.msra.mxu0 0.0
    %4497 = vmatprep.subr.mxu0 0.0
    %4498 = vmatpush1.xpose.msra.mxu0 0.0
    %4499 = vmatprep.subr.mxu0 0.0
    %4500 = vmatpush1.xpose.msra.mxu0 0.0
    %4501 = vmatprep.subr.mxu0 0.0
    %4502 = vmatpush1.xpose.msra.mxu0 0.0
    %4503 = vmatprep.subr.mxu0 0.0
    %4504 = vmatpush1.xpose.msra.mxu0 0.0
    %4505 = vmatprep.subr.mxu0 0.0
    %4506 = vmatpush1.xpose.msra.mxu0 0.0
    %4507 = vmatprep.subr.mxu0 0.0
    %4508 = vmatpush1.xpose.msra.mxu0 0.0
    %4509 = vmatprep.subr.mxu0 0.0
    %4510 = vmatpush1.xpose.msra.mxu0 0.0
    %4511 = vmatprep.subr.mxu0 0.0
    %4512 = vmatpush1.xpose.msra.mxu0 0.0
    %4513 = vmatprep.subr.mxu0 0.0
    %4514 = vmatpush1.xpose.msra.mxu0 0.0
    %4515 = vmatprep.subr.mxu0 0.0
    %4516 = vmatpush1.xpose.msra.mxu0 0.0
    %4517 = vmatprep.subr.mxu0 0.0
    %4518 = vmatpush1.xpose.msra.mxu0 0.0
    %4519 = vmatprep.subr.mxu0 0.0
    %4520 = vmatpush1.xpose.msra.mxu0 0.0
    %4521 = vmatprep.subr.mxu0 0.0
    %4522 = vmatpush1.xpose.msra.mxu0 0.0
    %4523 = vmatprep.subr.mxu0 0.0
    %4524 = vmatpush1.xpose.msra.mxu0 0.0
    %4525 = vmatprep.mubr.f32.mxu0 0.0
    %4526 = vmatmul.mubr.f32.gmra.mrb[0].mxu0 %v4457
    %v4527 = vpop.f32.mrb[0].mxu0
    %v4528 = vadd.f32 0.0, %v4527
    %v4529 = vpop.f32.mrb[0].mxu0
    %4530 = vdwg.mxu0
    %4531 = vrot.lane.b32.xlu0 %v4066, 112
    %v4532 = vpop.permute.xlu0 %4531
    %4533 = vrot.lane.b32.xlu0 %v3975, 112
    %v4534 = vpop.permute.xlu0 %4533
    %v4535 = vsel %vm294, %v4532, 0
    %v4537 = vsel %vm294, %v4534, 0
    %4539 = vmatprep.subr.mxu0 0.0
    %4540 = vmatpush1.xpose.msra.mxu0 %v4537
    %4541 = vmatprep.subr.mxu0 0.0
    %4542 = vmatpush1.xpose.msra.mxu0 0.0
    %4543 = vmatprep.subr.mxu0 0.0
    %4544 = vmatpush1.xpose.msra.mxu0 0.0
    %4545 = vmatprep.subr.mxu0 0.0
    %4546 = vmatpush1.xpose.msra.mxu0 0.0
    %4547 = vmatprep.subr.mxu0 0.0
    %4548 = vmatpush1.xpose.msra.mxu0 0.0
    %4549 = vmatprep.subr.mxu0 0.0
    %4550 = vmatpush1.xpose.msra.mxu0 0.0
    %4551 = vmatprep.subr.mxu0 0.0
    %4552 = vmatpush1.xpose.msra.mxu0 0.0
    %4553 = vmatprep.subr.mxu0 0.0
    %4554 = vmatpush1.xpose.msra.mxu0 0.0
    %4555 = vmatprep.subr.mxu0 0.0
    %4556 = vmatpush1.xpose.msra.mxu0 0.0
    %4557 = vmatprep.subr.mxu0 0.0
    %4558 = vmatpush1.xpose.msra.mxu0 0.0
    %4559 = vmatprep.subr.mxu0 0.0
    %4560 = vmatpush1.xpose.msra.mxu0 0.0
    %4561 = vmatprep.subr.mxu0 0.0
    %4562 = vmatpush1.xpose.msra.mxu0 0.0
    %4563 = vmatprep.subr.mxu0 0.0
    %4564 = vmatpush1.xpose.msra.mxu0 0.0
    %4565 = vmatprep.subr.mxu0 0.0
    %4566 = vmatpush1.xpose.msra.mxu0 0.0
    %4567 = vmatprep.subr.mxu0 0.0
    %4568 = vmatpush1.xpose.msra.mxu0 0.0
    %4569 = vmatprep.subr.mxu0 0.0
    %4570 = vmatpush1.xpose.msra.mxu0 0.0
    %4571 = vmatprep.subr.mxu0 0.0
    %4572 = vmatpush1.xpose.msra.mxu0 0.0
    %4573 = vmatprep.subr.mxu0 0.0
    %4574 = vmatpush1.xpose.msra.mxu0 0.0
    %4575 = vmatprep.subr.mxu0 0.0
    %4576 = vmatpush1.xpose.msra.mxu0 0.0
    %4577 = vmatprep.subr.mxu0 0.0
    %4578 = vmatpush1.xpose.msra.mxu0 0.0
    %4579 = vmatprep.subr.mxu0 0.0
    %4580 = vmatpush1.xpose.msra.mxu0 0.0
    %4581 = vmatprep.subr.mxu0 0.0
    %4582 = vmatpush1.xpose.msra.mxu0 0.0
    %4583 = vmatprep.subr.mxu0 0.0
    %4584 = vmatpush1.xpose.msra.mxu0 0.0
    %4585 = vmatprep.subr.mxu0 0.0
    %4586 = vmatpush1.xpose.msra.mxu0 0.0
    %4587 = vmatprep.subr.mxu0 0.0
    %4588 = vmatpush1.xpose.msra.mxu0 0.0
    %4589 = vmatprep.subr.mxu0 0.0
    %4590 = vmatpush1.xpose.msra.mxu0 0.0
    %4591 = vmatprep.subr.mxu0 0.0
    %4592 = vmatpush1.xpose.msra.mxu0 0.0
    %4593 = vmatprep.subr.mxu0 0.0
    %4594 = vmatpush1.xpose.msra.mxu0 0.0
    %4595 = vmatprep.subr.mxu0 0.0
    %4596 = vmatpush1.xpose.msra.mxu0 0.0
    %4597 = vmatprep.subr.mxu0 0.0
    %4598 = vmatpush1.xpose.msra.mxu0 0.0
    %4599 = vmatprep.subr.mxu0 0.0
    %4600 = vmatpush1.xpose.msra.mxu0 0.0
    %4601 = vmatprep.subr.mxu0 0.0
    %4602 = vmatpush1.xpose.msra.mxu0 0.0
    %4603 = vmatprep.mubr.f32.mxu0 0.0
    %4604 = vmatmul.mubr.f32.gmra.mrb[0].mxu0 %v4535
    %v4605 = vpop.f32.mrb[0].mxu0
    %v4606 = vadd.f32 0.0, %v4605
    %v4607 = vpop.f32.mrb[0].mxu0
    %4608 = vdwg.mxu0
    %4609 = vrot.lane.b32.xlu0 %v4066, 104
    %v4610 = vpop.permute.xlu0 %4609
    %4611 = vrot.lane.b32.xlu0 %v3975, 104
    %v4612 = vpop.permute.xlu0 %4611
    %v4613 = vsel %vm294, %v4610, 0
    %v4615 = vsel %vm294, %v4612, 0
    %4617 = vmatprep.subr.mxu0 0.0
    %4618 = vmatpush1.xpose.msra.mxu0 %v4615
    %4619 = vmatprep.subr.mxu0 0.0
    %4620 = vmatpush1.xpose.msra.mxu0 0.0
    %4621 = vmatprep.subr.mxu0 0.0
    %4622 = vmatpush1.xpose.msra.mxu0 0.0
    %4623 = vmatprep.subr.mxu0 0.0
    %4624 = vmatpush1.xpose.msra.mxu0 0.0
    %4625 = vmatprep.subr.mxu0 0.0
    %4626 = vmatpush1.xpose.msra.mxu0 0.0
    %4627 = vmatprep.subr.mxu0 0.0
    %4628 = vmatpush1.xpose.msra.mxu0 0.0
    %4629 = vmatprep.subr.mxu0 0.0
    %4630 = vmatpush1.xpose.msra.mxu0 0.0
    %4631 = vmatprep.subr.mxu0 0.0
    %4632 = vmatpush1.xpose.msra.mxu0 0.0
    %4633 = vmatprep.subr.mxu0 0.0
    %4634 = vmatpush1.xpose.msra.mxu0 0.0
    %4635 = vmatprep.subr.mxu0 0.0
    %4636 = vmatpush1.xpose.msra.mxu0 0.0
    %4637 = vmatprep.subr.mxu0 0.0
    %4638 = vmatpush1.xpose.msra.mxu0 0.0
    %4639 = vmatprep.subr.mxu0 0.0
    %4640 = vmatpush1.xpose.msra.mxu0 0.0
    %4641 = vmatprep.subr.mxu0 0.0
    %4642 = vmatpush1.xpose.msra.mxu0 0.0
    %4643 = vmatprep.subr.mxu0 0.0
    %4644 = vmatpush1.xpose.msra.mxu0 0.0
    %4645 = vmatprep.subr.mxu0 0.0
    %4646 = vmatpush1.xpose.msra.mxu0 0.0
    %4647 = vmatprep.subr.mxu0 0.0
    %4648 = vmatpush1.xpose.msra.mxu0 0.0
    %4649 = vmatprep.subr.mxu0 0.0
    %4650 = vmatpush1.xpose.msra.mxu0 0.0
    %4651 = vmatprep.subr.mxu0 0.0
    %4652 = vmatpush1.xpose.msra.mxu0 0.0
    %4653 = vmatprep.subr.mxu0 0.0
    %4654 = vmatpush1.xpose.msra.mxu0 0.0
    %4655 = vmatprep.subr.mxu0 0.0
    %4656 = vmatpush1.xpose.msra.mxu0 0.0
    %4657 = vmatprep.subr.mxu0 0.0
    %4658 = vmatpush1.xpose.msra.mxu0 0.0
    %4659 = vmatprep.subr.mxu0 0.0
    %4660 = vmatpush1.xpose.msra.mxu0 0.0
    %4661 = vmatprep.subr.mxu0 0.0
    %4662 = vmatpush1.xpose.msra.mxu0 0.0
    %4663 = vmatprep.subr.mxu0 0.0
    %4664 = vmatpush1.xpose.msra.mxu0 0.0
    %4665 = vmatprep.subr.mxu0 0.0
    %4666 = vmatpush1.xpose.msra.mxu0 0.0
    %4667 = vmatprep.subr.mxu0 0.0
    %4668 = vmatpush1.xpose.msra.mxu0 0.0
    %4669 = vmatprep.subr.mxu0 0.0
    %4670 = vmatpush1.xpose.msra.mxu0 0.0
    %4671 = vmatprep.subr.mxu0 0.0
    %4672 = vmatpush1.xpose.msra.mxu0 0.0
    %4673 = vmatprep.subr.mxu0 0.0
    %4674 = vmatpush1.xpose.msra.mxu0 0.0
    %4675 = vmatprep.subr.mxu0 0.0
    %4676 = vmatpush1.xpose.msra.mxu0 0.0
    %4677 = vmatprep.subr.mxu0 0.0
    %4678 = vmatpush1.xpose.msra.mxu0 0.0
    %4679 = vmatprep.subr.mxu0 0.0
    %4680 = vmatpush1.xpose.msra.mxu0 0.0
    %4681 = vmatprep.mubr.f32.mxu0 0.0
    %4682 = vmatmul.mubr.f32.gmra.mrb[0].mxu0 %v4613
    %v4683 = vpop.f32.mrb[0].mxu0
    %v4684 = vadd.f32 0.0, %v4683
    %v4685 = vpop.f32.mrb[0].mxu0
    %4686 = vdwg.mxu0
    %v4687 = vsel %vm294, %v4140, -inf
    %4688 = vmax.xlane.f32.xlu0 %v4687
    %v4689 = vpop.xlane.xlu0 %4688
    %v4690 = vsel %vm294, %v4218, -inf
    %4691 = vmax.xlane.f32.xlu0 %v4690
    %v4692 = vpop.xlane.xlu0 %4691
    %v4693 = vsel %vm294, %v4296, -inf
    %4694 = vmax.xlane.f32.xlu0 %v4693
    %v4695 = vpop.xlane.xlu0 %4694
    %v4696 = vsel %vm294, %v4374, -inf
    %4697 = vmax.xlane.f32.xlu0 %v4696
    %v4698 = vpop.xlane.xlu0 %4697
    %v4699 = vsel %vm294, %v4450, -inf
    %4700 = vmax.xlane.f32.xlu0 %v4699
    %v4701 = vpop.xlane.xlu0 %4700
    %v4702 = vsel %vm294, %v4528, -inf
    %4703 = vmax.xlane.f32.xlu0 %v4702
    %v4704 = vpop.xlane.xlu0 %4703
    %v4705 = vsel %vm294, %v4606, -inf
    %4706 = vmax.xlane.f32.xlu0 %v4705
    %v4707 = vpop.xlane.xlu0 %4706
    %v4708 = vsel %vm294, %v4684, -inf
    %4709 = vmax.xlane.f32.xlu0 %v4708
    %v4710 = vpop.xlane.xlu0 %4709
    %v4711 = vsub.f32 %v4140, %v4689
    %v4712 = vsub.f32 %v4218, %v4692
    %v4713 = vsub.f32 %v4296, %v4695
    %v4714 = vsub.f32 %v4374, %v4698
    %v4715 = vsub.f32 %v4450, %v4701
    %v4716 = vsub.f32 %v4528, %v4704
    %v4717 = vsub.f32 %v4606, %v4707
    %v4718 = vsub.f32 %v4684, %v4710
    %v4719 = vmul.f32 %v4711, 1.442695
    %v4720 = vpow.pop %v4719
    %v4721 = vmul.f32 %v4712, 1.442695
    %v4722 = vpow.pop %v4721
    %v4723 = vmul.f32 %v4713, 1.442695
    %v4724 = vpow.pop %v4723
    %v4725 = vmul.f32 %v4714, 1.442695
    %v4726 = vpow.pop %v4725
    %v4727 = vmul.f32 %v4715, 1.442695
    %v4728 = vpow.pop %v4727
    %v4729 = vmul.f32 %v4716, 1.442695
    %v4730 = vpow.pop %v4729
    %v4731 = vmul.f32 %v4717, 1.442695
    %v4732 = vpow.pop %v4731
    %v4733 = vmul.f32 %v4718, 1.442695
    %v4734 = vpow.pop %v4733
    %v4735 = vsel %vm294, %v4720, 0.0
    %4736 = vadd.xlane.f32.xlu0 %v4735
    %v4737 = vpop.xlane.xlu0 %4736
    %v4738 = vsel %vm294, %v4722, 0.0
    %4739 = vadd.xlane.f32.xlu0 %v4738
    %v4740 = vpop.xlane.xlu0 %4739
    %v4741 = vsel %vm294, %v4724, 0.0
    %4742 = vadd.xlane.f32.xlu0 %v4741
    %v4743 = vpop.xlane.xlu0 %4742
    %v4744 = vsel %vm294, %v4726, 0.0
    %4745 = vadd.xlane.f32.xlu0 %v4744
    %v4746 = vpop.xlane.xlu0 %4745
    %v4747 = vsel %vm294, %v4728, 0.0
    %4748 = vadd.xlane.f32.xlu0 %v4747
    %v4749 = vpop.xlane.xlu0 %4748
    %v4750 = vsel %vm294, %v4730, 0.0
    %4751 = vadd.xlane.f32.xlu0 %v4750
    %v4752 = vpop.xlane.xlu0 %4751
    %v4753 = vsel %vm294, %v4732, 0.0
    %4754 = vadd.xlane.f32.xlu0 %v4753
    %v4755 = vpop.xlane.xlu0 %4754
    %v4756 = vsel %vm294, %v4734, 0.0
    %4757 = vadd.xlane.f32.xlu0 %v4756
    %v4758 = vpop.xlane.xlu0 %4757
    %v4759 = vrcp.pop %v4737
    %v4760 = vrcp.pop %v4740
    %v4761 = vrcp.pop %v4743
    %v4762 = vrcp.pop %v4746
    %v4763 = vrcp.pop %v4749
    %v4764 = vrcp.pop %v4752
    %v4765 = vrcp.pop %v4755
    %v4766 = vrcp.pop %v4758
    %v4767 = vmul.f32 %v4720, %v4759
    %v4768 = vmul.f32 %v4722, %v4760
    %v4769 = vmul.f32 %v4724, %v4761
    %v4770 = vmul.f32 %v4726, %v4762
    %v4771 = vmul.f32 %v4728, %v4763
    %v4772 = vmul.f32 %v4730, %v4764
    %v4773 = vmul.f32 %v4732, %v4765
    %v4774 = vmul.f32 %v4734, %v4766
    %v4776 = vsel %vm294, %v4767, 0
    %4778 = vmatprep.subr.mxu0 0.0
    %4779 = vmatpush1.msra.mxu0 %v4053
    %4780 = vmatprep.subr.mxu0 0.0
    %4781 = vmatpush1.msra.mxu0 0.0
    %4782 = vmatprep.subr.mxu0 0.0
    %4783 = vmatpush1.msra.mxu0 0.0
    %4784 = vmatprep.subr.mxu0 0.0
    %4785 = vmatpush1.msra.mxu0 0.0
    %4786 = vmatprep.subr.mxu0 0.0
    %4787 = vmatpush1.msra.mxu0 0.0
    %4788 = vmatprep.subr.mxu0 0.0
    %4789 = vmatpush1.msra.mxu0 0.0
    %4790 = vmatprep.subr.mxu0 0.0
    %4791 = vmatpush1.msra.mxu0 0.0
    %4792 = vmatprep.subr.mxu0 0.0
    %4793 = vmatpush1.msra.mxu0 0.0
    %4794 = vmatprep.subr.mxu0 0.0
    %4795 = vmatpush1.msra.mxu0 0.0
    %4796 = vmatprep.subr.mxu0 0.0
    %4797 = vmatpush1.msra.mxu0 0.0
    %4798 = vmatprep.subr.mxu0 0.0
    %4799 = vmatpush1.msra.mxu0 0.0
    %4800 = vmatprep.subr.mxu0 0.0
    %4801 = vmatpush1.msra.mxu0 0.0
    %4802 = vmatprep.subr.mxu0 0.0
    %4803 = vmatpush1.msra.mxu0 0.0
    %4804 = vmatprep.subr.mxu0 0.0
    %4805 = vmatpush1.msra.mxu0 0.0
    %4806 = vmatprep.subr.mxu0 0.0
    %4807 = vmatpush1.msra.mxu0 0.0
    %4808 = vmatprep.subr.mxu0 0.0
    %4809 = vmatpush1.msra.mxu0 0.0
    %4810 = vmatprep.subr.mxu0 0.0
    %4811 = vmatpush1.msra.mxu0 0.0
    %4812 = vmatprep.subr.mxu0 0.0
    %4813 = vmatpush1.msra.mxu0 0.0
    %4814 = vmatprep.subr.mxu0 0.0
    %4815 = vmatpush1.msra.mxu0 0.0
    %4816 = vmatprep.subr.mxu0 0.0
    %4817 = vmatpush1.msra.mxu0 0.0
    %4818 = vmatprep.subr.mxu0 0.0
    %4819 = vmatpush1.msra.mxu0 0.0
    %4820 = vmatprep.subr.mxu0 0.0
    %4821 = vmatpush1.msra.mxu0 0.0
    %4822 = vmatprep.subr.mxu0 0.0
    %4823 = vmatpush1.msra.mxu0 0.0
    %4824 = vmatprep.subr.mxu0 0.0
    %4825 = vmatpush1.msra.mxu0 0.0
    %4826 = vmatprep.subr.mxu0 0.0
    %4827 = vmatpush1.msra.mxu0 0.0
    %4828 = vmatprep.subr.mxu0 0.0
    %4829 = vmatpush1.msra.mxu0 0.0
    %4830 = vmatprep.subr.mxu0 0.0
    %4831 = vmatpush1.msra.mxu0 0.0
    %4832 = vmatprep.subr.mxu0 0.0
    %4833 = vmatpush1.msra.mxu0 0.0
    %4834 = vmatprep.subr.mxu0 0.0
    %4835 = vmatpush1.msra.mxu0 0.0
    %4836 = vmatprep.subr.mxu0 0.0
    %4837 = vmatpush1.msra.mxu0 0.0
    %4838 = vmatprep.subr.mxu0 0.0
    %4839 = vmatpush1.msra.mxu0 0.0
    %4840 = vmatprep.subr.mxu0 0.0
    %4841 = vmatpush1.msra.mxu0 0.0
    %4842 = vmatprep.mubr.f32.mxu0 0.0
    %4843 = vmatmul.mubr.f32.gmra.mrb[0].mxu0 %v4776
    %v4844 = vpop.f32.mrb[0].mxu0
    %v4845 = vadd.f32 0.0, %v4844
    %v4846 = vpop.f32.mrb[0].mxu0
    %4847 = vdwg.mxu0
    %4849 = vrot.lane.b32.xlu0 %v4053, 120
    %v4850 = vpop.permute.xlu0 %4849
    %v4853 = vsel %vm294, %v4768, 0
    %4855 = vmatprep.subr.mxu0 0.0
    %4856 = vmatpush1.msra.mxu0 %v4850
    %4857 = vmatprep.subr.mxu0 0.0
    %4858 = vmatpush1.msra.mxu0 0.0
    %4859 = vmatprep.subr.mxu0 0.0
    %4860 = vmatpush1.msra.mxu0 0.0
    %4861 = vmatprep.subr.mxu0 0.0
    %4862 = vmatpush1.msra.mxu0 0.0
    %4863 = vmatprep.subr.mxu0 0.0
    %4864 = vmatpush1.msra.mxu0 0.0
    %4865 = vmatprep.subr.mxu0 0.0
    %4866 = vmatpush1.msra.mxu0 0.0
    %4867 = vmatprep.subr.mxu0 0.0
    %4868 = vmatpush1.msra.mxu0 0.0
    %4869 = vmatprep.subr.mxu0 0.0
    %4870 = vmatpush1.msra.mxu0 0.0
    %4871 = vmatprep.subr.mxu0 0.0
    %4872 = vmatpush1.msra.mxu0 0.0
    %4873 = vmatprep.subr.mxu0 0.0
    %4874 = vmatpush1.msra.mxu0 0.0
    %4875 = vmatprep.subr.mxu0 0.0
    %4876 = vmatpush1.msra.mxu0 0.0
    %4877 = vmatprep.subr.mxu0 0.0
    %4878 = vmatpush1.msra.mxu0 0.0
    %4879 = vmatprep.subr.mxu0 0.0
    %4880 = vmatpush1.msra.mxu0 0.0
    %4881 = vmatprep.subr.mxu0 0.0
    %4882 = vmatpush1.msra.mxu0 0.0
    %4883 = vmatprep.subr.mxu0 0.0
    %4884 = vmatpush1.msra.mxu0 0.0
    %4885 = vmatprep.subr.mxu0 0.0
    %4886 = vmatpush1.msra.mxu0 0.0
    %4887 = vmatprep.subr.mxu0 0.0
    %4888 = vmatpush1.msra.mxu0 0.0
    %4889 = vmatprep.subr.mxu0 0.0
    %4890 = vmatpush1.msra.mxu0 0.0
    %4891 = vmatprep.subr.mxu0 0.0
    %4892 = vmatpush1.msra.mxu0 0.0
    %4893 = vmatprep.subr.mxu0 0.0
    %4894 = vmatpush1.msra.mxu0 0.0
    %4895 = vmatprep.subr.mxu0 0.0
    %4896 = vmatpush1.msra.mxu0 0.0
    %4897 = vmatprep.subr.mxu0 0.0
    %4898 = vmatpush1.msra.mxu0 0.0
    %4899 = vmatprep.subr.mxu0 0.0
    %4900 = vmatpush1.msra.mxu0 0.0
    %4901 = vmatprep.subr.mxu0 0.0
    %4902 = vmatpush1.msra.mxu0 0.0
    %4903 = vmatprep.subr.mxu0 0.0
    %4904 = vmatpush1.msra.mxu0 0.0
    %4905 = vmatprep.subr.mxu0 0.0
    %4906 = vmatpush1.msra.mxu0 0.0
    %4907 = vmatprep.subr.mxu0 0.0
    %4908 = vmatpush1.msra.mxu0 0.0
    %4909 = vmatprep.subr.mxu0 0.0
    %4910 = vmatpush1.msra.mxu0 0.0
    %4911 = vmatprep.subr.mxu0 0.0
    %4912 = vmatpush1.msra.mxu0 0.0
    %4913 = vmatprep.subr.mxu0 0.0
    %4914 = vmatpush1.msra.mxu0 0.0
    %4915 = vmatprep.subr.mxu0 0.0
    %4916 = vmatpush1.msra.mxu0 0.0
    %4917 = vmatprep.subr.mxu0 0.0
    %4918 = vmatpush1.msra.mxu0 0.0
    %4919 = vmatprep.mubr.f32.mxu0 0.0
    %4920 = vmatmul.mubr.f32.gmra.mrb[0].mxu0 %v4853
    %v4921 = vpop.f32.mrb[0].mxu0
    %v4922 = vadd.f32 0.0, %v4921
    %v4923 = vpop.f32.mrb[0].mxu0
    %4924 = vdwg.mxu0
    %4925 = vrot.lane.b32.xlu0 %v4053, 112
    %v4926 = vpop.permute.xlu0 %4925
    %v4929 = vsel %vm294, %v4769, 0
    %4931 = vmatprep.subr.mxu0 0.0
    %4932 = vmatpush1.msra.mxu0 %v4926
    %4933 = vmatprep.subr.mxu0 0.0
    %4934 = vmatpush1.msra.mxu0 0.0
    %4935 = vmatprep.subr.mxu0 0.0
    %4936 = vmatpush1.msra.mxu0 0.0
    %4937 = vmatprep.subr.mxu0 0.0
    %4938 = vmatpush1.msra.mxu0 0.0
    %4939 = vmatprep.subr.mxu0 0.0
    %4940 = vmatpush1.msra.mxu0 0.0
    %4941 = vmatprep.subr.mxu0 0.0
    %4942 = vmatpush1.msra.mxu0 0.0
    %4943 = vmatprep.subr.mxu0 0.0
    %4944 = vmatpush1.msra.mxu0 0.0
    %4945 = vmatprep.subr.mxu0 0.0
    %4946 = vmatpush1.msra.mxu0 0.0
    %4947 = vmatprep.subr.mxu0 0.0
    %4948 = vmatpush1.msra.mxu0 0.0
    %4949 = vmatprep.subr.mxu0 0.0
    %4950 = vmatpush1.msra.mxu0 0.0
    %4951 = vmatprep.subr.mxu0 0.0
    %4952 = vmatpush1.msra.mxu0 0.0
    %4953 = vmatprep.subr.mxu0 0.0
    %4954 = vmatpush1.msra.mxu0 0.0
    %4955 = vmatprep.subr.mxu0 0.0
    %4956 = vmatpush1.msra.mxu0 0.0
    %4957 = vmatprep.subr.mxu0 0.0
    %4958 = vmatpush1.msra.mxu0 0.0
    %4959 = vmatprep.subr.mxu0 0.0
    %4960 = vmatpush1.msra.mxu0 0.0
    %4961 = vmatprep.subr.mxu0 0.0
    %4962 = vmatpush1.msra.mxu0 0.0
    %4963 = vmatprep.subr.mxu0 0.0
    %4964 = vmatpush1.msra.mxu0 0.0
    %4965 = vmatprep.subr.mxu0 0.0
    %4966 = vmatpush1.msra.mxu0 0.0
    %4967 = vmatprep.subr.mxu0 0.0
    %4968 = vmatpush1.msra.mxu0 0.0
    %4969 = vmatprep.subr.mxu0 0.0
    %4970 = vmatpush1.msra.mxu0 0.0
    %4971 = vmatprep.subr.mxu0 0.0
    %4972 = vmatpush1.msra.mxu0 0.0
    %4973 = vmatprep.subr.mxu0 0.0
    %4974 = vmatpush1.msra.mxu0 0.0
    %4975 = vmatprep.subr.mxu0 0.0
    %4976 = vmatpush1.msra.mxu0 0.0
    %4977 = vmatprep.subr.mxu0 0.0
    %4978 = vmatpush1.msra.mxu0 0.0
    %4979 = vmatprep.subr.mxu0 0.0
    %4980 = vmatpush1.msra.mxu0 0.0
    %4981 = vmatprep.subr.mxu0 0.0
    %4982 = vmatpush1.msra.mxu0 0.0
    %4983 = vmatprep.subr.mxu0 0.0
    %4984 = vmatpush1.msra.mxu0 0.0
    %4985 = vmatprep.subr.mxu0 0.0
    %4986 = vmatpush1.msra.mxu0 0.0
    %4987 = vmatprep.subr.mxu0 0.0
    %4988 = vmatpush1.msra.mxu0 0.0
    %4989 = vmatprep.subr.mxu0 0.0
    %4990 = vmatpush1.msra.mxu0 0.0
    %4991 = vmatprep.subr.mxu0 0.0
    %4992 = vmatpush1.msra.mxu0 0.0
    %4993 = vmatprep.subr.mxu0 0.0
    %4994 = vmatpush1.msra.mxu0 0.0
    %4995 = vmatprep.mubr.f32.mxu0 0.0
    %4996 = vmatmul.mubr.f32.gmra.mrb[0].mxu0 %v4929
    %v4997 = vpop.f32.mrb[0].mxu0
    %v4998 = vadd.f32 0.0, %v4997
    %v4999 = vpop.f32.mrb[0].mxu0
    %5000 = vdwg.mxu0
    %5001 = vrot.lane.b32.xlu0 %v4053, 104
    %v5002 = vpop.permute.xlu0 %5001
    %v5005 = vsel %vm294, %v4770, 0
    %5007 = vmatprep.subr.mxu0 0.0
    %5008 = vmatpush1.msra.mxu0 %v5002
    %5009 = vmatprep.subr.mxu0 0.0
    %5010 = vmatpush1.msra.mxu0 0.0
    %5011 = vmatprep.subr.mxu0 0.0
    %5012 = vmatpush1.msra.mxu0 0.0
    %5013 = vmatprep.subr.mxu0 0.0
    %5014 = vmatpush1.msra.mxu0 0.0
    %5015 = vmatprep.subr.mxu0 0.0
    %5016 = vmatpush1.msra.mxu0 0.0
    %5017 = vmatprep.subr.mxu0 0.0
    %5018 = vmatpush1.msra.mxu0 0.0
    %5019 = vmatprep.subr.mxu0 0.0
    %5020 = vmatpush1.msra.mxu0 0.0
    %5021 = vmatprep.subr.mxu0 0.0
    %5022 = vmatpush1.msra.mxu0 0.0
    %5023 = vmatprep.subr.mxu0 0.0
    %5024 = vmatpush1.msra.mxu0 0.0
    %5025 = vmatprep.subr.mxu0 0.0
    %5026 = vmatpush1.msra.mxu0 0.0
    %5027 = vmatprep.subr.mxu0 0.0
    %5028 = vmatpush1.msra.mxu0 0.0
    %5029 = vmatprep.subr.mxu0 0.0
    %5030 = vmatpush1.msra.mxu0 0.0
    %5031 = vmatprep.subr.mxu0 0.0
    %5032 = vmatpush1.msra.mxu0 0.0
    %5033 = vmatprep.subr.mxu0 0.0
    %5034 = vmatpush1.msra.mxu0 0.0
    %5035 = vmatprep.subr.mxu0 0.0
    %5036 = vmatpush1.msra.mxu0 0.0
    %5037 = vmatprep.subr.mxu0 0.0
    %5038 = vmatpush1.msra.mxu0 0.0
    %5039 = vmatprep.subr.mxu0 0.0
    %5040 = vmatpush1.msra.mxu0 0.0
    %5041 = vmatprep.subr.mxu0 0.0
    %5042 = vmatpush1.msra.mxu0 0.0
    %5043 = vmatprep.subr.mxu0 0.0
    %5044 = vmatpush1.msra.mxu0 0.0
    %5045 = vmatprep.subr.mxu0 0.0
    %5046 = vmatpush1.msra.mxu0 0.0
    %5047 = vmatprep.subr.mxu0 0.0
    %5048 = vmatpush1.msra.mxu0 0.0
    %5049 = vmatprep.subr.mxu0 0.0
    %5050 = vmatpush1.msra.mxu0 0.0
    %5051 = vmatprep.subr.mxu0 0.0
    %5052 = vmatpush1.msra.mxu0 0.0
    %5053 = vmatprep.subr.mxu0 0.0
    %5054 = vmatpush1.msra.mxu0 0.0
    %5055 = vmatprep.subr.mxu0 0.0
    %5056 = vmatpush1.msra.mxu0 0.0
    %5057 = vmatprep.subr.mxu0 0.0
    %5058 = vmatpush1.msra.mxu0 0.0
    %5059 = vmatprep.subr.mxu0 0.0
    %5060 = vmatpush1.msra.mxu0 0.0
    %5061 = vmatprep.subr.mxu0 0.0
    %5062 = vmatpush1.msra.mxu0 0.0
    %5063 = vmatprep.subr.mxu0 0.0
    %5064 = vmatpush1.msra.mxu0 0.0
    %5065 = vmatprep.subr.mxu0 0.0
    %5066 = vmatpush1.msra.mxu0 0.0
    %5067 = vmatprep.subr.mxu0 0.0
    %5068 = vmatpush1.msra.mxu0 0.0
    %5069 = vmatprep.subr.mxu0 0.0
    %5070 = vmatpush1.msra.mxu0 0.0
    %5071 = vmatprep.mubr.f32.mxu0 0.0
    %5072 = vmatmul.mubr.f32.gmra.mrb[0].mxu0 %v5005
    %v5073 = vpop.f32.mrb[0].mxu0
    %v5074 = vadd.f32 0.0, %v5073
    %v5075 = vpop.f32.mrb[0].mxu0
    %5076 = vdwg.mxu0
    %5078 = vrot.lane.b32.xlu0 %v4922, 8
    %v5079 = vpop.permute.xlu0 %5078
    %5082 = vrot.lane.b32.xlu0 %v4998, 16
    %v5083 = vpop.permute.xlu0 %5082
    %5086 = vrot.lane.b32.xlu0 %v5074, 24
    %v5087 = vpop.permute.xlu0 %5086
    %v5089 = vsel %vm294, %v4845, %v5079
    %v5090 = vsel %vm1318, %v5089, %v5083
    %v5091 = vsel %vm1320, %v5090, %v5087
    %v5093 = vsel %vm294, %v4771, 0
    %5095 = vmatprep.subr.mxu0 0.0
    %5096 = vmatpush1.msra.mxu0 %v4058
    %5097 = vmatprep.subr.mxu0 0.0
    %5098 = vmatpush1.msra.mxu0 0.0
    %5099 = vmatprep.subr.mxu0 0.0
    %5100 = vmatpush1.msra.mxu0 0.0
    %5101 = vmatprep.subr.mxu0 0.0
    %5102 = vmatpush1.msra.mxu0 0.0
    %5103 = vmatprep.subr.mxu0 0.0
    %5104 = vmatpush1.msra.mxu0 0.0
    %5105 = vmatprep.subr.mxu0 0.0
    %5106 = vmatpush1.msra.mxu0 0.0
    %5107 = vmatprep.subr.mxu0 0.0
    %5108 = vmatpush1.msra.mxu0 0.0
    %5109 = vmatprep.subr.mxu0 0.0
    %5110 = vmatpush1.msra.mxu0 0.0
    %5111 = vmatprep.subr.mxu0 0.0
    %5112 = vmatpush1.msra.mxu0 0.0
    %5113 = vmatprep.subr.mxu0 0.0
    %5114 = vmatpush1.msra.mxu0 0.0
    %5115 = vmatprep.subr.mxu0 0.0
    %5116 = vmatpush1.msra.mxu0 0.0
    %5117 = vmatprep.subr.mxu0 0.0
    %5118 = vmatpush1.msra.mxu0 0.0
    %5119 = vmatprep.subr.mxu0 0.0
    %5120 = vmatpush1.msra.mxu0 0.0
    %5121 = vmatprep.subr.mxu0 0.0
    %5122 = vmatpush1.msra.mxu0 0.0
    %5123 = vmatprep.subr.mxu0 0.0
    %5124 = vmatpush1.msra.mxu0 0.0
    %5125 = vmatprep.subr.mxu0 0.0
    %5126 = vmatpush1.msra.mxu0 0.0
    %5127 = vmatprep.subr.mxu0 0.0
    %5128 = vmatpush1.msra.mxu0 0.0
    %5129 = vmatprep.subr.mxu0 0.0
    %5130 = vmatpush1.msra.mxu0 0.0
    %5131 = vmatprep.subr.mxu0 0.0
    %5132 = vmatpush1.msra.mxu0 0.0
    %5133 = vmatprep.subr.mxu0 0.0
    %5134 = vmatpush1.msra.mxu0 0.0
    %5135 = vmatprep.subr.mxu0 0.0
    %5136 = vmatpush1.msra.mxu0 0.0
    %5137 = vmatprep.subr.mxu0 0.0
    %5138 = vmatpush1.msra.mxu0 0.0
    %5139 = vmatprep.subr.mxu0 0.0
    %5140 = vmatpush1.msra.mxu0 0.0
    %5141 = vmatprep.subr.mxu0 0.0
    %5142 = vmatpush1.msra.mxu0 0.0
    %5143 = vmatprep.subr.mxu0 0.0
    %5144 = vmatpush1.msra.mxu0 0.0
    %5145 = vmatprep.subr.mxu0 0.0
    %5146 = vmatpush1.msra.mxu0 0.0
    %5147 = vmatprep.subr.mxu0 0.0
    %5148 = vmatpush1.msra.mxu0 0.0
    %5149 = vmatprep.subr.mxu0 0.0
    %5150 = vmatpush1.msra.mxu0 0.0
    %5151 = vmatprep.subr.mxu0 0.0
    %5152 = vmatpush1.msra.mxu0 0.0
    %5153 = vmatprep.subr.mxu0 0.0
    %5154 = vmatpush1.msra.mxu0 0.0
    %5155 = vmatprep.subr.mxu0 0.0
    %5156 = vmatpush1.msra.mxu0 0.0
    %5157 = vmatprep.subr.mxu0 0.0
    %5158 = vmatpush1.msra.mxu0 0.0
    %5159 = vmatprep.mubr.f32.mxu0 0.0
    %5160 = vmatmul.mubr.f32.gmra.mrb[0].mxu0 %v5093
    %v5161 = vpop.f32.mrb[0].mxu0
    %v5162 = vadd.f32 0.0, %v5161
    %v5163 = vpop.f32.mrb[0].mxu0
    %5164 = vdwg.mxu0
    %5166 = vrot.lane.b32.xlu0 %v4058, 120
    %v5167 = vpop.permute.xlu0 %5166
    %v5170 = vsel %vm294, %v4772, 0
    %5172 = vmatprep.subr.mxu0 0.0
    %5173 = vmatpush1.msra.mxu0 %v5167
    %5174 = vmatprep.subr.mxu0 0.0
    %5175 = vmatpush1.msra.mxu0 0.0
    %5176 = vmatprep.subr.mxu0 0.0
    %5177 = vmatpush1.msra.mxu0 0.0
    %5178 = vmatprep.subr.mxu0 0.0
    %5179 = vmatpush1.msra.mxu0 0.0
    %5180 = vmatprep.subr.mxu0 0.0
    %5181 = vmatpush1.msra.mxu0 0.0
    %5182 = vmatprep.subr.mxu0 0.0
    %5183 = vmatpush1.msra.mxu0 0.0
    %5184 = vmatprep.subr.mxu0 0.0
    %5185 = vmatpush1.msra.mxu0 0.0
    %5186 = vmatprep.subr.mxu0 0.0
    %5187 = vmatpush1.msra.mxu0 0.0
    %5188 = vmatprep.subr.mxu0 0.0
    %5189 = vmatpush1.msra.mxu0 0.0
    %5190 = vmatprep.subr.mxu0 0.0
    %5191 = vmatpush1.msra.mxu0 0.0
    %5192 = vmatprep.subr.mxu0 0.0
    %5193 = vmatpush1.msra.mxu0 0.0
    %5194 = vmatprep.subr.mxu0 0.0
    %5195 = vmatpush1.msra.mxu0 0.0
    %5196 = vmatprep.subr.mxu0 0.0
    %5197 = vmatpush1.msra.mxu0 0.0
    %5198 = vmatprep.subr.mxu0 0.0
    %5199 = vmatpush1.msra.mxu0 0.0
    %5200 = vmatprep.subr.mxu0 0.0
    %5201 = vmatpush1.msra.mxu0 0.0
    %5202 = vmatprep.subr.mxu0 0.0
    %5203 = vmatpush1.msra.mxu0 0.0
    %5204 = vmatprep.subr.mxu0 0.0
    %5205 = vmatpush1.msra.mxu0 0.0
    %5206 = vmatprep.subr.mxu0 0.0
    %5207 = vmatpush1.msra.mxu0 0.0
    %5208 = vmatprep.subr.mxu0 0.0
    %5209 = vmatpush1.msra.mxu0 0.0
    %5210 = vmatprep.subr.mxu0 0.0
    %5211 = vmatpush1.msra.mxu0 0.0
    %5212 = vmatprep.subr.mxu0 0.0
    %5213 = vmatpush1.msra.mxu0 0.0
    %5214 = vmatprep.subr.mxu0 0.0
    %5215 = vmatpush1.msra.mxu0 0.0
    %5216 = vmatprep.subr.mxu0 0.0
    %5217 = vmatpush1.msra.mxu0 0.0
    %5218 = vmatprep.subr.mxu0 0.0
    %5219 = vmatpush1.msra.mxu0 0.0
    %5220 = vmatprep.subr.mxu0 0.0
    %5221 = vmatpush1.msra.mxu0 0.0
    %5222 = vmatprep.subr.mxu0 0.0
    %5223 = vmatpush1.msra.mxu0 0.0
    %5224 = vmatprep.subr.mxu0 0.0
    %5225 = vmatpush1.msra.mxu0 0.0
    %5226 = vmatprep.subr.mxu0 0.0
    %5227 = vmatpush1.msra.mxu0 0.0
    %5228 = vmatprep.subr.mxu0 0.0
    %5229 = vmatpush1.msra.mxu0 0.0
    %5230 = vmatprep.subr.mxu0 0.0
    %5231 = vmatpush1.msra.mxu0 0.0
    %5232 = vmatprep.subr.mxu0 0.0
    %5233 = vmatpush1.msra.mxu0 0.0
    %5234 = vmatprep.subr.mxu0 0.0
    %5235 = vmatpush1.msra.mxu0 0.0
    %5236 = vmatprep.mubr.f32.mxu0 0.0
    %5237 = vmatmul.mubr.f32.gmra.mrb[0].mxu0 %v5170
    %v5238 = vpop.f32.mrb[0].mxu0
    %v5239 = vadd.f32 0.0, %v5238
    %v5240 = vpop.f32.mrb[0].mxu0
    %5241 = vdwg.mxu0
    %5242 = vrot.lane.b32.xlu0 %v4058, 112
    %v5243 = vpop.permute.xlu0 %5242
    %v5246 = vsel %vm294, %v4773, 0
    %5248 = vmatprep.subr.mxu0 0.0
    %5249 = vmatpush1.msra.mxu0 %v5243
    %5250 = vmatprep.subr.mxu0 0.0
    %5251 = vmatpush1.msra.mxu0 0.0
    %5252 = vmatprep.subr.mxu0 0.0
    %5253 = vmatpush1.msra.mxu0 0.0
    %5254 = vmatprep.subr.mxu0 0.0
    %5255 = vmatpush1.msra.mxu0 0.0
    %5256 = vmatprep.subr.mxu0 0.0
    %5257 = vmatpush1.msra.mxu0 0.0
    %5258 = vmatprep.subr.mxu0 0.0
    %5259 = vmatpush1.msra.mxu0 0.0
    %5260 = vmatprep.subr.mxu0 0.0
    %5261 = vmatpush1.msra.mxu0 0.0
    %5262 = vmatprep.subr.mxu0 0.0
    %5263 = vmatpush1.msra.mxu0 0.0
    %5264 = vmatprep.subr.mxu0 0.0
    %5265 = vmatpush1.msra.mxu0 0.0
    %5266 = vmatprep.subr.mxu0 0.0
    %5267 = vmatpush1.msra.mxu0 0.0
    %5268 = vmatprep.subr.mxu0 0.0
    %5269 = vmatpush1.msra.mxu0 0.0
    %5270 = vmatprep.subr.mxu0 0.0
    %5271 = vmatpush1.msra.mxu0 0.0
    %5272 = vmatprep.subr.mxu0 0.0
    %5273 = vmatpush1.msra.mxu0 0.0
    %5274 = vmatprep.subr.mxu0 0.0
    %5275 = vmatpush1.msra.mxu0 0.0
    %5276 = vmatprep.subr.mxu0 0.0
    %5277 = vmatpush1.msra.mxu0 0.0
    %5278 = vmatprep.subr.mxu0 0.0
    %5279 = vmatpush1.msra.mxu0 0.0
    %5280 = vmatprep.subr.mxu0 0.0
    %5281 = vmatpush1.msra.mxu0 0.0
    %5282 = vmatprep.subr.mxu0 0.0
    %5283 = vmatpush1.msra.mxu0 0.0
    %5284 = vmatprep.subr.mxu0 0.0
    %5285 = vmatpush1.msra.mxu0 0.0
    %5286 = vmatprep.subr.mxu0 0.0
    %5287 = vmatpush1.msra.mxu0 0.0
    %5288 = vmatprep.subr.mxu0 0.0
    %5289 = vmatpush1.msra.mxu0 0.0
    %5290 = vmatprep.subr.mxu0 0.0
    %5291 = vmatpush1.msra.mxu0 0.0
    %5292 = vmatprep.subr.mxu0 0.0
    %5293 = vmatpush1.msra.mxu0 0.0
    %5294 = vmatprep.subr.mxu0 0.0
    %5295 = vmatpush1.msra.mxu0 0.0
    %5296 = vmatprep.subr.mxu0 0.0
    %5297 = vmatpush1.msra.mxu0 0.0
    %5298 = vmatprep.subr.mxu0 0.0
    %5299 = vmatpush1.msra.mxu0 0.0
    %5300 = vmatprep.subr.mxu0 0.0
    %5301 = vmatpush1.msra.mxu0 0.0
    %5302 = vmatprep.subr.mxu0 0.0
    %5303 = vmatpush1.msra.mxu0 0.0
    %5304 = vmatprep.subr.mxu0 0.0
    %5305 = vmatpush1.msra.mxu0 0.0
    %5306 = vmatprep.subr.mxu0 0.0
    %5307 = vmatpush1.msra.mxu0 0.0
    %5308 = vmatprep.subr.mxu0 0.0
    %5309 = vmatpush1.msra.mxu0 0.0
    %5310 = vmatprep.subr.mxu0 0.0
    %5311 = vmatpush1.msra.mxu0 0.0
    %5312 = vmatprep.mubr.f32.mxu0 0.0
    %5313 = vmatmul.mubr.f32.gmra.mrb[0].mxu0 %v5246
    %v5314 = vpop.f32.mrb[0].mxu0
    %v5315 = vadd.f32 0.0, %v5314
    %v5316 = vpop.f32.mrb[0].mxu0
    %5317 = vdwg.mxu0
    %5318 = vrot.lane.b32.xlu0 %v4058, 104
    %v5319 = vpop.permute.xlu0 %5318
    %v5322 = vsel %vm294, %v4774, 0
    %5324 = vmatprep.subr.mxu0 0.0
    %5325 = vmatpush1.msra.mxu0 %v5319
    %5326 = vmatprep.subr.mxu0 0.0
    %5327 = vmatpush1.msra.mxu0 0.0
    %5328 = vmatprep.subr.mxu0 0.0
    %5329 = vmatpush1.msra.mxu0 0.0
    %5330 = vmatprep.subr.mxu0 0.0
    %5331 = vmatpush1.msra.mxu0 0.0
    %5332 = vmatprep.subr.mxu0 0.0
    %5333 = vmatpush1.msra.mxu0 0.0
    %5334 = vmatprep.subr.mxu0 0.0
    %5335 = vmatpush1.msra.mxu0 0.0
    %5336 = vmatprep.subr.mxu0 0.0
    %5337 = vmatpush1.msra.mxu0 0.0
    %5338 = vmatprep.subr.mxu0 0.0
    %5339 = vmatpush1.msra.mxu0 0.0
    %5340 = vmatprep.subr.mxu0 0.0
    %5341 = vmatpush1.msra.mxu0 0.0
    %5342 = vmatprep.subr.mxu0 0.0
    %5343 = vmatpush1.msra.mxu0 0.0
    %5344 = vmatprep.subr.mxu0 0.0
    %5345 = vmatpush1.msra.mxu0 0.0
    %5346 = vmatprep.subr.mxu0 0.0
    %5347 = vmatpush1.msra.mxu0 0.0
    %5348 = vmatprep.subr.mxu0 0.0
    %5349 = vmatpush1.msra.mxu0 0.0
    %5350 = vmatprep.subr.mxu0 0.0
    %5351 = vmatpush1.msra.mxu0 0.0
    %5352 = vmatprep.subr.mxu0 0.0
    %5353 = vmatpush1.msra.mxu0 0.0
    %5354 = vmatprep.subr.mxu0 0.0
    %5355 = vmatpush1.msra.mxu0 0.0
    %5356 = vmatprep.subr.mxu0 0.0
    %5357 = vmatpush1.msra.mxu0 0.0
    %5358 = vmatprep.subr.mxu0 0.0
    %5359 = vmatpush1.msra.mxu0 0.0
    %5360 = vmatprep.subr.mxu0 0.0
    %5361 = vmatpush1.msra.mxu0 0.0
    %5362 = vmatprep.subr.mxu0 0.0
    %5363 = vmatpush1.msra.mxu0 0.0
    %5364 = vmatprep.subr.mxu0 0.0
    %5365 = vmatpush1.msra.mxu0 0.0
    %5366 = vmatprep.subr.mxu0 0.0
    %5367 = vmatpush1.msra.mxu0 0.0
    %5368 = vmatprep.subr.mxu0 0.0
    %5369 = vmatpush1.msra.mxu0 0.0
    %5370 = vmatprep.subr.mxu0 0.0
    %5371 = vmatpush1.msra.mxu0 0.0
    %5372 = vmatprep.subr.mxu0 0.0
    %5373 = vmatpush1.msra.mxu0 0.0
    %5374 = vmatprep.subr.mxu0 0.0
    %5375 = vmatpush1.msra.mxu0 0.0
    %5376 = vmatprep.subr.mxu0 0.0
    %5377 = vmatpush1.msra.mxu0 0.0
    %5378 = vmatprep.subr.mxu0 0.0
    %5379 = vmatpush1.msra.mxu0 0.0
    %5380 = vmatprep.subr.mxu0 0.0
    %5381 = vmatpush1.msra.mxu0 0.0
    %5382 = vmatprep.subr.mxu0 0.0
    %5383 = vmatpush1.msra.mxu0 0.0
    %5384 = vmatprep.subr.mxu0 0.0
    %5385 = vmatpush1.msra.mxu0 0.0
    %5386 = vmatprep.subr.mxu0 0.0
    %5387 = vmatpush1.msra.mxu0 0.0
    %5388 = vmatprep.mubr.f32.mxu0 0.0
    %5389 = vmatmul.mubr.f32.gmra.mrb[0].mxu0 %v5322
    %v5390 = vpop.f32.mrb[0].mxu0
    %v5391 = vadd.f32 0.0, %v5390
    %v5392 = vpop.f32.mrb[0].mxu0
    %5393 = vdwg.mxu0
    %5395 = vrot.lane.b32.xlu0 %v5239, 8
    %v5396 = vpop.permute.xlu0 %5395
    %5399 = vrot.lane.b32.xlu0 %v5315, 16
    %v5400 = vpop.permute.xlu0 %5399
    %5403 = vrot.lane.b32.xlu0 %v5391, 24
    %v5404 = vpop.permute.xlu0 %5403
    %v5406 = vsel %vm294, %v5162, %v5396
    %v5407 = vsel %vm1318, %v5406, %v5400
    %v5408 = vsel %vm1320, %v5407, %v5404
    %v5409 = vlaneseq
    %v5410 = vshrl.u32 %v5409, 7
    %v5411 = vsub.s32 3, %v5410
    %v5412 = vrot.slane %v3802, %v5411
    %v5414 = vsel %vm40, %v5091, 0
    %v5417 = vsel %vm40, %v5408, 0
    %5419 = vmatprep.subr.mxu0 0.0
    %5420 = vmatpush1.msra.mxu0 %v4061
    %5421 = vmatprep.subr.mxu0 0.0
    %5422 = vmatpush1.msra.mxu0 %v4062
    %5423 = vmatprep.subr.mxu0 0.0
    %5424 = vmatpush1.msra.mxu0 %v4063
    %5425 = vmatprep.subr.mxu0 0.0
    %5426 = vmatpush1.msra.mxu0 %v4064
    %5427 = vmatprep.subr.mxu0 0.0
    %5428 = vmatpush1.msra.mxu0 0.0
    %5429 = vmatprep.subr.mxu0 0.0
    %5430 = vmatpush1.msra.mxu0 0.0
    %5431 = vmatprep.subr.mxu0 0.0
    %5432 = vmatpush1.msra.mxu0 0.0
    %5433 = vmatprep.subr.mxu0 0.0
    %5434 = vmatpush1.msra.mxu0 0.0
    %5435 = vmatprep.subr.mxu0 0.0
    %5436 = vmatpush1.msra.mxu0 0.0
    %5437 = vmatprep.subr.mxu0 0.0
    %5438 = vmatpush1.msra.mxu0 0.0
    %5439 = vmatprep.subr.mxu0 0.0
    %5440 = vmatpush1.msra.mxu0 0.0
    %5441 = vmatprep.subr.mxu0 0.0
    %5442 = vmatpush1.msra.mxu0 0.0
    %5443 = vmatprep.subr.mxu0 0.0
    %5444 = vmatpush1.msra.mxu0 0.0
    %5445 = vmatprep.subr.mxu0 0.0
    %5446 = vmatpush1.msra.mxu0 0.0
    %5447 = vmatprep.subr.mxu0 0.0
    %5448 = vmatpush1.msra.mxu0 0.0
    %5449 = vmatprep.subr.mxu0 0.0
    %5450 = vmatpush1.msra.mxu0 0.0
    %5451 = vmatprep.subr.mxu0 0.0
    %5452 = vmatpush1.msra.mxu0 0.0
    %5453 = vmatprep.subr.mxu0 0.0
    %5454 = vmatpush1.msra.mxu0 0.0
    %5455 = vmatprep.subr.mxu0 0.0
    %5456 = vmatpush1.msra.mxu0 0.0
    %5457 = vmatprep.subr.mxu0 0.0
    %5458 = vmatpush1.msra.mxu0 0.0
    %5459 = vmatprep.subr.mxu0 0.0
    %5460 = vmatpush1.msra.mxu0 0.0
    %5461 = vmatprep.subr.mxu0 0.0
    %5462 = vmatpush1.msra.mxu0 0.0
    %5463 = vmatprep.subr.mxu0 0.0
    %5464 = vmatpush1.msra.mxu0 0.0
    %5465 = vmatprep.subr.mxu0 0.0
    %5466 = vmatpush1.msra.mxu0 0.0
    %5467 = vmatprep.subr.mxu0 0.0
    %5468 = vmatpush1.msra.mxu0 0.0
    %5469 = vmatprep.subr.mxu0 0.0
    %5470 = vmatpush1.msra.mxu0 0.0
    %5471 = vmatprep.subr.mxu0 0.0
    %5472 = vmatpush1.msra.mxu0 0.0
    %5473 = vmatprep.subr.mxu0 0.0
    %5474 = vmatpush1.msra.mxu0 0.0
    %5475 = vmatprep.subr.mxu0 0.0
    %5476 = vmatpush1.msra.mxu0 0.0
    %5477 = vmatprep.subr.mxu0 0.0
    %5478 = vmatpush1.msra.mxu0 0.0
    %5479 = vmatprep.subr.mxu0 0.0
    %5480 = vmatpush1.msra.mxu0 0.0
    %5481 = vmatprep.subr.mxu0 0.0
    %5482 = vmatpush1.msra.mxu0 0.0
    %5483 = vmatprep.mubr.f32.mxu0 0.0
    %5484 = vmatmul.mubr.f32.gmra.mrb[0].mxu0 %v5414
    %v5485 = vpop.f32.mrb[0].mxu0
    %v5486 = vadd.f32 %v5412, %v5485
    %v5487 = vpop.f32.mrb[0].mxu0
    %5488 = vmatprep.mubr.f32.mxu0 0.0
    %5489 = vmatmul.mubr.f32.gmra.mrb[0].mxu0 %v5417
    %v5490 = vpop.f32.mrb[0].mxu0
    %v5491 = vadd.f32 %v5412, %v5490
    %v5492 = vpop.f32.mrb[0].mxu0
    %5493 = vdwg.mxu0
    %v5494 = vadd.f32 %v3799, %v5486
    %v5495 = vadd.f32 %v3800, %v5491
    %v5496 = vsel %vm40, %v5494, 0.0
    %5497 = vadd.xlane.f32.xlu0 %v5496
    %v5498 = vpop.xlane.xlu0 %5497
    %v5499 = vsel %vm40, %v5495, 0.0
    %5500 = vadd.xlane.f32.xlu0 %v5499
    %v5501 = vpop.xlane.xlu0 %5500
    %v5502 = vmul.f32 %v5498, %v1732
    %v5503 = vmul.f32 %v5501, %v1732
    %v5504 = vsub.f32 %v5494, %v5502
    %v5505 = vsub.f32 %v5495, %v5503
    %v5506 = vmul.f32 %v5504, %v5504
    %v5507 = vmul.f32 %v5505, %v5505
    %v5508 = vsel %vm40, %v5506, 0.0
    %5509 = vadd.xlane.f32.xlu0 %v5508
    %v5510 = vpop.xlane.xlu0 %5509
    %v5511 = vsel %vm40, %v5507, 0.0
    %5512 = vadd.xlane.f32.xlu0 %v5511
    %v5513 = vpop.xlane.xlu0 %5512
    %v5514 = vmul.f32 %v5510, %v1732
    %v5515 = vmul.f32 %v5513, %v1732
    %v5516 = vadd.f32 %v5514, 1e-05
    %v5517 = vadd.f32 %v5515, 1e-05
    %v5518 = vrsqrt.pop %v5516
    %v5519 = vrsqrt.pop %v5517
    %v5520 = vmul.f32 %v5504, %v5518
    %v5521 = vmul.f32 %v5505, %v5519
    %v5522 = vlaneseq
    %v5523 = vshrl.u32 %v5522, 7
    %v5524 = vsub.s32 1, %v5523
    %v5525 = vrot.slane %v3803, %v5524
    %v5526 = vmul.f32 %v5520, %v5525
    %v5527 = vmul.f32 %v5521, %v5525
    %v5528 = vlaneseq
    %v5529 = vshrl.u32 %v5528, 7
    %v5530 = vsub.s32 2, %v5529
    %v5531 = vrot.slane %v3803, %v5530
    %v5532 = vadd.f32 %v5526, %v5531
    %v5533 = vadd.f32 %v5527, %v5531
    %v5534 = vld [vmem:[%s3805 + $0x80] sm:$0xff]
    %v5535 = vld [vmem:[%s3805 + $0x88] sm:$0xff]
    %v5536 = vld [vmem:[%s3805 + $0x90] sm:$0xff]
    %v5537 = vld [vmem:[%s3805 + $0x98] sm:$0xff]
    %v5538 = vlaneseq
    %v5539 = vshrl.u32 %v5538, 7
    %v5540 = vsub.s32 4, %v5539
    %v5541 = vrot.slane %v3802, %v5540
    %v5543 = vsel %vm40, %v5532, 0
    %v5546 = vsel %vm40, %v5533, 0
    %5548 = vmatprep.subr.mxu0 0.0
    %5549 = vmatpush1.msra.mxu0 %v5534
    %5550 = vmatprep.subr.mxu0 0.0
    %5551 = vmatpush1.msra.mxu0 %v5535
    %5552 = vmatprep.subr.mxu0 0.0
    %5553 = vmatpush1.msra.mxu0 %v5536
    %5554 = vmatprep.subr.mxu0 0.0
    %5555 = vmatpush1.msra.mxu0 %v5537
    %5556 = vmatprep.subr.mxu0 0.0
    %5557 = vmatpush1.msra.mxu0 0.0
    %5558 = vmatprep.subr.mxu0 0.0
    %5559 = vmatpush1.msra.mxu0 0.0
    %5560 = vmatprep.subr.mxu0 0.0
    %5561 = vmatpush1.msra.mxu0 0.0
    %5562 = vmatprep.subr.mxu0 0.0
    %5563 = vmatpush1.msra.mxu0 0.0
    %5564 = vmatprep.subr.mxu0 0.0
    %5565 = vmatpush1.msra.mxu0 0.0
    %5566 = vmatprep.subr.mxu0 0.0
    %5567 = vmatpush1.msra.mxu0 0.0
    %5568 = vmatprep.subr.mxu0 0.0
    %5569 = vmatpush1.msra.mxu0 0.0
    %5570 = vmatprep.subr.mxu0 0.0
    %5571 = vmatpush1.msra.mxu0 0.0
    %5572 = vmatprep.subr.mxu0 0.0
    %5573 = vmatpush1.msra.mxu0 0.0
    %5574 = vmatprep.subr.mxu0 0.0
    %5575 = vmatpush1.msra.mxu0 0.0
    %5576 = vmatprep.subr.mxu0 0.0
    %5577 = vmatpush1.msra.mxu0 0.0
    %5578 = vmatprep.subr.mxu0 0.0
    %5579 = vmatpush1.msra.mxu0 0.0
    %5580 = vmatprep.subr.mxu0 0.0
    %5581 = vmatpush1.msra.mxu0 0.0
    %5582 = vmatprep.subr.mxu0 0.0
    %5583 = vmatpush1.msra.mxu0 0.0
    %5584 = vmatprep.subr.mxu0 0.0
    %5585 = vmatpush1.msra.mxu0 0.0
    %5586 = vmatprep.subr.mxu0 0.0
    %5587 = vmatpush1.msra.mxu0 0.0
    %5588 = vmatprep.subr.mxu0 0.0
    %5589 = vmatpush1.msra.mxu0 0.0
    %5590 = vmatprep.subr.mxu0 0.0
    %5591 = vmatpush1.msra.mxu0 0.0
    %5592 = vmatprep.subr.mxu0 0.0
    %5593 = vmatpush1.msra.mxu0 0.0
    %5594 = vmatprep.subr.mxu0 0.0
    %5595 = vmatpush1.msra.mxu0 0.0
    %5596 = vmatprep.subr.mxu0 0.0
    %5597 = vmatpush1.msra.mxu0 0.0
    %5598 = vmatprep.subr.mxu0 0.0
    %5599 = vmatpush1.msra.mxu0 0.0
    %5600 = vmatprep.subr.mxu0 0.0
    %5601 = vmatpush1.msra.mxu0 0.0
    %5602 = vmatprep.subr.mxu0 0.0
    %5603 = vmatpush1.msra.mxu0 0.0
    %5604 = vmatprep.subr.mxu0 0.0
    %5605 = vmatpush1.msra.mxu0 0.0
    %5606 = vmatprep.subr.mxu0 0.0
    %5607 = vmatpush1.msra.mxu0 0.0
    %5608 = vmatprep.subr.mxu0 0.0
    %5609 = vmatpush1.msra.mxu0 0.0
    %5610 = vmatprep.subr.mxu0 0.0
    %5611 = vmatpush1.msra.mxu0 0.0
    %5612 = vmatprep.mubr.f32.mxu0 0.0
    %5613 = vmatmul.mubr.f32.gmra.mrb[0].mxu0 %v5543
    %v5614 = vpop.f32.mrb[0].mxu0
    %v5615 = vadd.f32 %v5541, %v5614
    %v5616 = vpop.f32.mrb[0].mxu0
    %5617 = vmatprep.mubr.f32.mxu0 0.0
    %5618 = vmatmul.mubr.f32.gmra.mrb[0].mxu0 %v5546
    %v5619 = vpop.f32.mrb[0].mxu0
    %v5620 = vadd.f32 %v5541, %v5619
    %v5621 = vpop.f32.mrb[0].mxu0
    %5622 = vdwg.mxu0
    %v5623 = vld [vmem:[%s3805 + $0xa0] sm:$0xff]
    %v5624 = vld [vmem:[%s3805 + $0xa8] sm:$0xff]
    %v5625 = vld [vmem:[%s3805 + $0xb0] sm:$0xff]
    %v5626 = vld [vmem:[%s3805 + $0xb8] sm:$0xff]
    %v5627 = vlaneseq
    %v5628 = vshrl.u32 %v5627, 7
    %v5629 = vsub.s32 5, %v5628
    %v5630 = vrot.slane %v3802, %v5629
    %5631 = vmatprep.subr.mxu0 0.0
    %5632 = vmatpush1.msra.mxu0 %v5623
    %5633 = vmatprep.subr.mxu0 0.0
    %5634 = vmatpush1.msra.mxu0 %v5624
    %5635 = vmatprep.subr.mxu0 0.0
    %5636 = vmatpush1.msra.mxu0 %v5625
    %5637 = vmatprep.subr.mxu0 0.0
    %5638 = vmatpush1.msra.mxu0 %v5626
    %5639 = vmatprep.subr.mxu0 0.0
    %5640 = vmatpush1.msra.mxu0 0.0
    %5641 = vmatprep.subr.mxu0 0.0
    %5642 = vmatpush1.msra.mxu0 0.0
    %5643 = vmatprep.subr.mxu0 0.0
    %5644 = vmatpush1.msra.mxu0 0.0
    %5645 = vmatprep.subr.mxu0 0.0
    %5646 = vmatpush1.msra.mxu0 0.0
    %5647 = vmatprep.subr.mxu0 0.0
    %5648 = vmatpush1.msra.mxu0 0.0
    %5649 = vmatprep.subr.mxu0 0.0
    %5650 = vmatpush1.msra.mxu0 0.0
    %5651 = vmatprep.subr.mxu0 0.0
    %5652 = vmatpush1.msra.mxu0 0.0
    %5653 = vmatprep.subr.mxu0 0.0
    %5654 = vmatpush1.msra.mxu0 0.0
    %5655 = vmatprep.subr.mxu0 0.0
    %5656 = vmatpush1.msra.mxu0 0.0
    %5657 = vmatprep.subr.mxu0 0.0
    %5658 = vmatpush1.msra.mxu0 0.0
    %5659 = vmatprep.subr.mxu0 0.0
    %5660 = vmatpush1.msra.mxu0 0.0
    %5661 = vmatprep.subr.mxu0 0.0
    %5662 = vmatpush1.msra.mxu0 0.0
    %5663 = vmatprep.subr.mxu0 0.0
    %5664 = vmatpush1.msra.mxu0 0.0
    %5665 = vmatprep.subr.mxu0 0.0
    %5666 = vmatpush1.msra.mxu0 0.0
    %5667 = vmatprep.subr.mxu0 0.0
    %5668 = vmatpush1.msra.mxu0 0.0
    %5669 = vmatprep.subr.mxu0 0.0
    %5670 = vmatpush1.msra.mxu0 0.0
    %5671 = vmatprep.subr.mxu0 0.0
    %5672 = vmatpush1.msra.mxu0 0.0
    %5673 = vmatprep.subr.mxu0 0.0
    %5674 = vmatpush1.msra.mxu0 0.0
    %5675 = vmatprep.subr.mxu0 0.0
    %5676 = vmatpush1.msra.mxu0 0.0
    %5677 = vmatprep.subr.mxu0 0.0
    %5678 = vmatpush1.msra.mxu0 0.0
    %5679 = vmatprep.subr.mxu0 0.0
    %5680 = vmatpush1.msra.mxu0 0.0
    %5681 = vmatprep.subr.mxu0 0.0
    %5682 = vmatpush1.msra.mxu0 0.0
    %5683 = vmatprep.subr.mxu0 0.0
    %5684 = vmatpush1.msra.mxu0 0.0
    %5685 = vmatprep.subr.mxu0 0.0
    %5686 = vmatpush1.msra.mxu0 0.0
    %5687 = vmatprep.subr.mxu0 0.0
    %5688 = vmatpush1.msra.mxu0 0.0
    %5689 = vmatprep.subr.mxu0 0.0
    %5690 = vmatpush1.msra.mxu0 0.0
    %5691 = vmatprep.subr.mxu0 0.0
    %5692 = vmatpush1.msra.mxu0 0.0
    %5693 = vmatprep.subr.mxu0 0.0
    %5694 = vmatpush1.msra.mxu0 0.0
    %5695 = vmatprep.mubr.f32.mxu0 0.0
    %5696 = vmatmul.mubr.f32.gmra.mrb[0].mxu0 %v1863
    %v5697 = vpop.f32.mrb[0].mxu0
    %v5698 = vadd.f32 %v5630, %v5697
    %v5699 = vpop.f32.mrb[0].mxu0
    %5700 = vmatprep.mubr.f32.mxu0 0.0
    %5701 = vmatmul.mubr.f32.gmra.mrb[0].mxu0 %v1866
    %v5702 = vpop.f32.mrb[0].mxu0
    %v5703 = vadd.f32 %v5630, %v5702
    %v5704 = vpop.f32.mrb[0].mxu0
    %5705 = vmatprep.mubr.f32.mxu0 0.0
    %5706 = vmatmul.mubr.f32.gmra.mrb[0].mxu0 %v1869
    %v5707 = vpop.f32.mrb[0].mxu0
    %v5708 = vadd.f32 %v5630, %v5707
    %v5709 = vpop.f32.mrb[0].mxu0
    %5710 = vmatprep.mubr.f32.mxu0 0.0
    %5711 = vmatmul.mubr.f32.gmra.mrb[0].mxu0 %v1872
    %v5712 = vpop.f32.mrb[0].mxu0
    %v5713 = vadd.f32 %v5630, %v5712
    %v5714 = vpop.f32.mrb[0].mxu0
    %5715 = vdwg.mxu0
    %v5716 = vld [vmem:[%s3805 + $0xc0] sm:$0xff]
    %v5717 = vld [vmem:[%s3805 + $0xc8] sm:$0xff]
    %v5718 = vld [vmem:[%s3805 + $0xd0] sm:$0xff]
    %v5719 = vld [vmem:[%s3805 + $0xd8] sm:$0xff]
    %v5720 = vlaneseq
    %v5721 = vshrl.u32 %v5720, 7
    %v5722 = vsub.s32 6, %v5721
    %v5723 = vrot.slane %v3802, %v5722
    %5724 = vmatprep.subr.mxu0 0.0
    %5725 = vmatpush1.msra.mxu0 %v5716
    %5726 = vmatprep.subr.mxu0 0.0
    %5727 = vmatpush1.msra.mxu0 %v5717
    %5728 = vmatprep.subr.mxu0 0.0
    %5729 = vmatpush1.msra.mxu0 %v5718
    %5730 = vmatprep.subr.mxu0 0.0
    %5731 = vmatpush1.msra.mxu0 %v5719
    %5732 = vmatprep.subr.mxu0 0.0
    %5733 = vmatpush1.msra.mxu0 0.0
    %5734 = vmatprep.subr.mxu0 0.0
    %5735 = vmatpush1.msra.mxu0 0.0
    %5736 = vmatprep.subr.mxu0 0.0
    %5737 = vmatpush1.msra.mxu0 0.0
    %5738 = vmatprep.subr.mxu0 0.0
    %5739 = vmatpush1.msra.mxu0 0.0
    %5740 = vmatprep.subr.mxu0 0.0
    %5741 = vmatpush1.msra.mxu0 0.0
    %5742 = vmatprep.subr.mxu0 0.0
    %5743 = vmatpush1.msra.mxu0 0.0
    %5744 = vmatprep.subr.mxu0 0.0
    %5745 = vmatpush1.msra.mxu0 0.0
    %5746 = vmatprep.subr.mxu0 0.0
    %5747 = vmatpush1.msra.mxu0 0.0
    %5748 = vmatprep.subr.mxu0 0.0
    %5749 = vmatpush1.msra.mxu0 0.0
    %5750 = vmatprep.subr.mxu0 0.0
    %5751 = vmatpush1.msra.mxu0 0.0
    %5752 = vmatprep.subr.mxu0 0.0
    %5753 = vmatpush1.msra.mxu0 0.0
    %5754 = vmatprep.subr.mxu0 0.0
    %5755 = vmatpush1.msra.mxu0 0.0
    %5756 = vmatprep.subr.mxu0 0.0
    %5757 = vmatpush1.msra.mxu0 0.0
    %5758 = vmatprep.subr.mxu0 0.0
    %5759 = vmatpush1.msra.mxu0 0.0
    %5760 = vmatprep.subr.mxu0 0.0
    %5761 = vmatpush1.msra.mxu0 0.0
    %5762 = vmatprep.subr.mxu0 0.0
    %5763 = vmatpush1.msra.mxu0 0.0
    %5764 = vmatprep.subr.mxu0 0.0
    %5765 = vmatpush1.msra.mxu0 0.0
    %5766 = vmatprep.subr.mxu0 0.0
    %5767 = vmatpush1.msra.mxu0 0.0
    %5768 = vmatprep.subr.mxu0 0.0
    %5769 = vmatpush1.msra.mxu0 0.0
    %5770 = vmatprep.subr.mxu0 0.0
    %5771 = vmatpush1.msra.mxu0 0.0
    %5772 = vmatprep.subr.mxu0 0.0
    %5773 = vmatpush1.msra.mxu0 0.0
    %5774 = vmatprep.subr.mxu0 0.0
    %5775 = vmatpush1.msra.mxu0 0.0
    %5776 = vmatprep.subr.mxu0 0.0
    %5777 = vmatpush1.msra.mxu0 0.0
    %5778 = vmatprep.subr.mxu0 0.0
    %5779 = vmatpush1.msra.mxu0 0.0
    %5780 = vmatprep.subr.mxu0 0.0
    %5781 = vmatpush1.msra.mxu0 0.0
    %5782 = vmatprep.subr.mxu0 0.0
    %5783 = vmatpush1.msra.mxu0 0.0
    %5784 = vmatprep.subr.mxu0 0.0
    %5785 = vmatpush1.msra.mxu0 0.0
    %5786 = vmatprep.subr.mxu0 0.0
    %5787 = vmatpush1.msra.mxu0 0.0
    %5788 = vmatprep.mubr.f32.mxu0 0.0
    %5789 = vmatmul.mubr.f32.gmra.mrb[0].mxu0 %v1863
    %v5790 = vpop.f32.mrb[0].mxu0
    %v5791 = vadd.f32 %v5723, %v5790
    %v5792 = vpop.f32.mrb[0].mxu0
    %5793 = vmatprep.mubr.f32.mxu0 0.0
    %5794 = vmatmul.mubr.f32.gmra.mrb[0].mxu0 %v1866
    %v5795 = vpop.f32.mrb[0].mxu0
    %v5796 = vadd.f32 %v5723, %v5795
    %v5797 = vpop.f32.mrb[0].mxu0
    %5798 = vmatprep.mubr.f32.mxu0 0.0
    %5799 = vmatmul.mubr.f32.gmra.mrb[0].mxu0 %v1869
    %v5800 = vpop.f32.mrb[0].mxu0
    %v5801 = vadd.f32 %v5723, %v5800
    %v5802 = vpop.f32.mrb[0].mxu0
    %5803 = vmatprep.mubr.f32.mxu0 0.0
    %5804 = vmatmul.mubr.f32.gmra.mrb[0].mxu0 %v1872
    %v5805 = vpop.f32.mrb[0].mxu0
    %v5806 = vadd.f32 %v5723, %v5805
    %v5807 = vpop.f32.mrb[0].mxu0
    %5808 = vdwg.mxu0
    %v5809 = vld [vmem:[%s3805 + $0xe0] sm:$0xff]
    %v5810 = vld [vmem:[%s3805 + $0xe8] sm:$0xff]
    %v5811 = vld [vmem:[%s3805 + $0xf0] sm:$0xff]
    %v5812 = vld [vmem:[%s3805 + $0xf8] sm:$0xff]
    %v5813 = vmul.f32 %v5615, 0.35355338
    %v5814 = vmul.f32 %v5620, 0.35355338
    %v5816 = vsel %vm294, %v5813, 0
    %v5819 = vsel %vm294, %v5698, 0
    %v5822 = vsel %vm294, %v5703, 0
    %5824 = vmatprep.subr.mxu0 0.0
    %5825 = vmatpush1.xpose.msra.mxu0 %v5819
    %5826 = vmatprep.subr.mxu0 0.0
    %5827 = vmatpush1.xpose.msra.mxu0 %v5822
    %5828 = vmatprep.subr.mxu0 0.0
    %5829 = vmatpush1.xpose.msra.mxu0 0.0
    %5830 = vmatprep.subr.mxu0 0.0
    %5831 = vmatpush1.xpose.msra.mxu0 0.0
    %5832 = vmatprep.subr.mxu0 0.0
    %5833 = vmatpush1.xpose.msra.mxu0 0.0
    %5834 = vmatprep.subr.mxu0 0.0
    %5835 = vmatpush1.xpose.msra.mxu0 0.0
    %5836 = vmatprep.subr.mxu0 0.0
    %5837 = vmatpush1.xpose.msra.mxu0 0.0
    %5838 = vmatprep.subr.mxu0 0.0
    %5839 = vmatpush1.xpose.msra.mxu0 0.0
    %5840 = vmatprep.subr.mxu0 0.0
    %5841 = vmatpush1.xpose.msra.mxu0 0.0
    %5842 = vmatprep.subr.mxu0 0.0
    %5843 = vmatpush1.xpose.msra.mxu0 0.0
    %5844 = vmatprep.subr.mxu0 0.0
    %5845 = vmatpush1.xpose.msra.mxu0 0.0
    %5846 = vmatprep.subr.mxu0 0.0
    %5847 = vmatpush1.xpose.msra.mxu0 0.0
    %5848 = vmatprep.subr.mxu0 0.0
    %5849 = vmatpush1.xpose.msra.mxu0 0.0
    %5850 = vmatprep.subr.mxu0 0.0
    %5851 = vmatpush1.xpose.msra.mxu0 0.0
    %5852 = vmatprep.subr.mxu0 0.0
    %5853 = vmatpush1.xpose.msra.mxu0 0.0
    %5854 = vmatprep.subr.mxu0 0.0
    %5855 = vmatpush1.xpose.msra.mxu0 0.0
    %5856 = vmatprep.subr.mxu0 0.0
    %5857 = vmatpush1.xpose.msra.mxu0 0.0
    %5858 = vmatprep.subr.mxu0 0.0
    %5859 = vmatpush1.xpose.msra.mxu0 0.0
    %5860 = vmatprep.subr.mxu0 0.0
    %5861 = vmatpush1.xpose.msra.mxu0 0.0
    %5862 = vmatprep.subr.mxu0 0.0
    %5863 = vmatpush1.xpose.msra.mxu0 0.0
    %5864 = vmatprep.subr.mxu0 0.0
    %5865 = vmatpush1.xpose.msra.mxu0 0.0
    %5866 = vmatprep.subr.mxu0 0.0
    %5867 = vmatpush1.xpose.msra.mxu0 0.0
    %5868 = vmatprep.subr.mxu0 0.0
    %5869 = vmatpush1.xpose.msra.mxu0 0.0
    %5870 = vmatprep.subr.mxu0 0.0
    %5871 = vmatpush1.xpose.msra.mxu0 0.0
    %5872 = vmatprep.subr.mxu0 0.0
    %5873 = vmatpush1.xpose.msra.mxu0 0.0
    %5874 = vmatprep.subr.mxu0 0.0
    %5875 = vmatpush1.xpose.msra.mxu0 0.0
    %5876 = vmatprep.subr.mxu0 0.0
    %5877 = vmatpush1.xpose.msra.mxu0 0.0
    %5878 = vmatprep.subr.mxu0 0.0
    %5879 = vmatpush1.xpose.msra.mxu0 0.0
    %5880 = vmatprep.subr.mxu0 0.0
    %5881 = vmatpush1.xpose.msra.mxu0 0.0
    %5882 = vmatprep.subr.mxu0 0.0
    %5883 = vmatpush1.xpose.msra.mxu0 0.0
    %5884 = vmatprep.subr.mxu0 0.0
    %5885 = vmatpush1.xpose.msra.mxu0 0.0
    %5886 = vmatprep.subr.mxu0 0.0
    %5887 = vmatpush1.xpose.msra.mxu0 0.0
    %5888 = vmatprep.mubr.f32.mxu0 0.0
    %5889 = vmatmul.mubr.f32.gmra.mrb[0].mxu0 %v5816
    %v5890 = vpop.f32.mrb[0].mxu0
    %v5891 = vadd.f32 0.0, %v5890
    %v5892 = vpop.f32.mrb[0].mxu0
    %5893 = vdwg.mxu0
    %5894 = vrot.lane.b32.xlu0 %v5813, 120
    %v5895 = vpop.permute.xlu0 %5894
    %5896 = vrot.lane.b32.xlu0 %v5698, 120
    %v5897 = vpop.permute.xlu0 %5896
    %5898 = vrot.lane.b32.xlu0 %v5703, 120
    %v5899 = vpop.permute.xlu0 %5898
    %v5900 = vsel %vm294, %v5895, 0
    %v5902 = vsel %vm294, %v5897, 0
    %v5904 = vsel %vm294, %v5899, 0
    %5906 = vmatprep.subr.mxu0 0.0
    %5907 = vmatpush1.xpose.msra.mxu0 %v5902
    %5908 = vmatprep.subr.mxu0 0.0
    %5909 = vmatpush1.xpose.msra.mxu0 %v5904
    %5910 = vmatprep.subr.mxu0 0.0
    %5911 = vmatpush1.xpose.msra.mxu0 0.0
    %5912 = vmatprep.subr.mxu0 0.0
    %5913 = vmatpush1.xpose.msra.mxu0 0.0
    %5914 = vmatprep.subr.mxu0 0.0
    %5915 = vmatpush1.xpose.msra.mxu0 0.0
    %5916 = vmatprep.subr.mxu0 0.0
    %5917 = vmatpush1.xpose.msra.mxu0 0.0
    %5918 = vmatprep.subr.mxu0 0.0
    %5919 = vmatpush1.xpose.msra.mxu0 0.0
    %5920 = vmatprep.subr.mxu0 0.0
    %5921 = vmatpush1.xpose.msra.mxu0 0.0
    %5922 = vmatprep.subr.mxu0 0.0
    %5923 = vmatpush1.xpose.msra.mxu0 0.0
    %5924 = vmatprep.subr.mxu0 0.0
    %5925 = vmatpush1.xpose.msra.mxu0 0.0
    %5926 = vmatprep.subr.mxu0 0.0
    %5927 = vmatpush1.xpose.msra.mxu0 0.0
    %5928 = vmatprep.subr.mxu0 0.0
    %5929 = vmatpush1.xpose.msra.mxu0 0.0
    %5930 = vmatprep.subr.mxu0 0.0
    %5931 = vmatpush1.xpose.msra.mxu0 0.0
    %5932 = vmatprep.subr.mxu0 0.0
    %5933 = vmatpush1.xpose.msra.mxu0 0.0
    %5934 = vmatprep.subr.mxu0 0.0
    %5935 = vmatpush1.xpose.msra.mxu0 0.0
    %5936 = vmatprep.subr.mxu0 0.0
    %5937 = vmatpush1.xpose.msra.mxu0 0.0
    %5938 = vmatprep.subr.mxu0 0.0
    %5939 = vmatpush1.xpose.msra.mxu0 0.0
    %5940 = vmatprep.subr.mxu0 0.0
    %5941 = vmatpush1.xpose.msra.mxu0 0.0
    %5942 = vmatprep.subr.mxu0 0.0
    %5943 = vmatpush1.xpose.msra.mxu0 0.0
    %5944 = vmatprep.subr.mxu0 0.0
    %5945 = vmatpush1.xpose.msra.mxu0 0.0
    %5946 = vmatprep.subr.mxu0 0.0
    %5947 = vmatpush1.xpose.msra.mxu0 0.0
    %5948 = vmatprep.subr.mxu0 0.0
    %5949 = vmatpush1.xpose.msra.mxu0 0.0
    %5950 = vmatprep.subr.mxu0 0.0
    %5951 = vmatpush1.xpose.msra.mxu0 0.0
    %5952 = vmatprep.subr.mxu0 0.0
    %5953 = vmatpush1.xpose.msra.mxu0 0.0
    %5954 = vmatprep.subr.mxu0 0.0
    %5955 = vmatpush1.xpose.msra.mxu0 0.0
    %5956 = vmatprep.subr.mxu0 0.0
    %5957 = vmatpush1.xpose.msra.mxu0 0.0
    %5958 = vmatprep.subr.mxu0 0.0
    %5959 = vmatpush1.xpose.msra.mxu0 0.0
    %5960 = vmatprep.subr.mxu0 0.0
    %5961 = vmatpush1.xpose.msra.mxu0 0.0
    %5962 = vmatprep.subr.mxu0 0.0
    %5963 = vmatpush1.xpose.msra.mxu0 0.0
    %5964 = vmatprep.subr.mxu0 0.0
    %5965 = vmatpush1.xpose.msra.mxu0 0.0
    %5966 = vmatprep.subr.mxu0 0.0
    %5967 = vmatpush1.xpose.msra.mxu0 0.0
    %5968 = vmatprep.subr.mxu0 0.0
    %5969 = vmatpush1.xpose.msra.mxu0 0.0
    %5970 = vmatprep.mubr.f32.mxu0 0.0
    %5971 = vmatmul.mubr.f32.gmra.mrb[0].mxu0 %v5900
    %v5972 = vpop.f32.mrb[0].mxu0
    %v5973 = vadd.f32 0.0, %v5972
    %v5974 = vpop.f32.mrb[0].mxu0
    %5975 = vdwg.mxu0
    %5976 = vrot.lane.b32.xlu0 %v5813, 112
    %v5977 = vpop.permute.xlu0 %5976
    %5978 = vrot.lane.b32.xlu0 %v5698, 112
    %v5979 = vpop.permute.xlu0 %5978
    %5980 = vrot.lane.b32.xlu0 %v5703, 112
    %v5981 = vpop.permute.xlu0 %5980
    %v5982 = vsel %vm294, %v5977, 0
    %v5984 = vsel %vm294, %v5979, 0
    %v5986 = vsel %vm294, %v5981, 0
    %5988 = vmatprep.subr.mxu0 0.0
    %5989 = vmatpush1.xpose.msra.mxu0 %v5984
    %5990 = vmatprep.subr.mxu0 0.0
    %5991 = vmatpush1.xpose.msra.mxu0 %v5986
    %5992 = vmatprep.subr.mxu0 0.0
    %5993 = vmatpush1.xpose.msra.mxu0 0.0
    %5994 = vmatprep.subr.mxu0 0.0
    %5995 = vmatpush1.xpose.msra.mxu0 0.0
    %5996 = vmatprep.subr.mxu0 0.0
    %5997 = vmatpush1.xpose.msra.mxu0 0.0
    %5998 = vmatprep.subr.mxu0 0.0
    %5999 = vmatpush1.xpose.msra.mxu0 0.0
    %6000 = vmatprep.subr.mxu0 0.0
    %6001 = vmatpush1.xpose.msra.mxu0 0.0
    %6002 = vmatprep.subr.mxu0 0.0
    %6003 = vmatpush1.xpose.msra.mxu0 0.0
    %6004 = vmatprep.subr.mxu0 0.0
    %6005 = vmatpush1.xpose.msra.mxu0 0.0
    %6006 = vmatprep.subr.mxu0 0.0
    %6007 = vmatpush1.xpose.msra.mxu0 0.0
    %6008 = vmatprep.subr.mxu0 0.0
    %6009 = vmatpush1.xpose.msra.mxu0 0.0
    %6010 = vmatprep.subr.mxu0 0.0
    %6011 = vmatpush1.xpose.msra.mxu0 0.0
    %6012 = vmatprep.subr.mxu0 0.0
    %6013 = vmatpush1.xpose.msra.mxu0 0.0
    %6014 = vmatprep.subr.mxu0 0.0
    %6015 = vmatpush1.xpose.msra.mxu0 0.0
    %6016 = vmatprep.subr.mxu0 0.0
    %6017 = vmatpush1.xpose.msra.mxu0 0.0
    %6018 = vmatprep.subr.mxu0 0.0
    %6019 = vmatpush1.xpose.msra.mxu0 0.0
    %6020 = vmatprep.subr.mxu0 0.0
    %6021 = vmatpush1.xpose.msra.mxu0 0.0
    %6022 = vmatprep.subr.mxu0 0.0
    %6023 = vmatpush1.xpose.msra.mxu0 0.0
    %6024 = vmatprep.subr.mxu0 0.0
    %6025 = vmatpush1.xpose.msra.mxu0 0.0
    %6026 = vmatprep.subr.mxu0 0.0
    %6027 = vmatpush1.xpose.msra.mxu0 0.0
    %6028 = vmatprep.subr.mxu0 0.0
    %6029 = vmatpush1.xpose.msra.mxu0 0.0
    %6030 = vmatprep.subr.mxu0 0.0
    %6031 = vmatpush1.xpose.msra.mxu0 0.0
    %6032 = vmatprep.subr.mxu0 0.0
    %6033 = vmatpush1.xpose.msra.mxu0 0.0
    %6034 = vmatprep.subr.mxu0 0.0
    %6035 = vmatpush1.xpose.msra.mxu0 0.0
    %6036 = vmatprep.subr.mxu0 0.0
    %6037 = vmatpush1.xpose.msra.mxu0 0.0
    %6038 = vmatprep.subr.mxu0 0.0
    %6039 = vmatpush1.xpose.msra.mxu0 0.0
    %6040 = vmatprep.subr.mxu0 0.0
    %6041 = vmatpush1.xpose.msra.mxu0 0.0
    %6042 = vmatprep.subr.mxu0 0.0
    %6043 = vmatpush1.xpose.msra.mxu0 0.0
    %6044 = vmatprep.subr.mxu0 0.0
    %6045 = vmatpush1.xpose.msra.mxu0 0.0
    %6046 = vmatprep.subr.mxu0 0.0
    %6047 = vmatpush1.xpose.msra.mxu0 0.0
    %6048 = vmatprep.subr.mxu0 0.0
    %6049 = vmatpush1.xpose.msra.mxu0 0.0
    %6050 = vmatprep.subr.mxu0 0.0
    %6051 = vmatpush1.xpose.msra.mxu0 0.0
    %6052 = vmatprep.mubr.f32.mxu0 0.0
    %6053 = vmatmul.mubr.f32.gmra.mrb[0].mxu0 %v5982
    %v6054 = vpop.f32.mrb[0].mxu0
    %v6055 = vadd.f32 0.0, %v6054
    %v6056 = vpop.f32.mrb[0].mxu0
    %6057 = vdwg.mxu0
    %6058 = vrot.lane.b32.xlu0 %v5813, 104
    %v6059 = vpop.permute.xlu0 %6058
    %6060 = vrot.lane.b32.xlu0 %v5698, 104
    %v6061 = vpop.permute.xlu0 %6060
    %6062 = vrot.lane.b32.xlu0 %v5703, 104
    %v6063 = vpop.permute.xlu0 %6062
    %v6064 = vsel %vm294, %v6059, 0
    %v6066 = vsel %vm294, %v6061, 0
    %v6068 = vsel %vm294, %v6063, 0
    %6070 = vmatprep.subr.mxu0 0.0
    %6071 = vmatpush1.xpose.msra.mxu0 %v6066
    %6072 = vmatprep.subr.mxu0 0.0
    %6073 = vmatpush1.xpose.msra.mxu0 %v6068
    %6074 = vmatprep.subr.mxu0 0.0
    %6075 = vmatpush1.xpose.msra.mxu0 0.0
    %6076 = vmatprep.subr.mxu0 0.0
    %6077 = vmatpush1.xpose.msra.mxu0 0.0
    %6078 = vmatprep.subr.mxu0 0.0
    %6079 = vmatpush1.xpose.msra.mxu0 0.0
    %6080 = vmatprep.subr.mxu0 0.0
    %6081 = vmatpush1.xpose.msra.mxu0 0.0
    %6082 = vmatprep.subr.mxu0 0.0
    %6083 = vmatpush1.xpose.msra.mxu0 0.0
    %6084 = vmatprep.subr.mxu0 0.0
    %6085 = vmatpush1.xpose.msra.mxu0 0.0
    %6086 = vmatprep.subr.mxu0 0.0
    %6087 = vmatpush1.xpose.msra.mxu0 0.0
    %6088 = vmatprep.subr.mxu0 0.0
    %6089 = vmatpush1.xpose.msra.mxu0 0.0
    %6090 = vmatprep.subr.mxu0 0.0
    %6091 = vmatpush1.xpose.msra.mxu0 0.0
    %6092 = vmatprep.subr.mxu0 0.0
    %6093 = vmatpush1.xpose.msra.mxu0 0.0
    %6094 = vmatprep.subr.mxu0 0.0
    %6095 = vmatpush1.xpose.msra.mxu0 0.0
    %6096 = vmatprep.subr.mxu0 0.0
    %6097 = vmatpush1.xpose.msra.mxu0 0.0
    %6098 = vmatprep.subr.mxu0 0.0
    %6099 = vmatpush1.xpose.msra.mxu0 0.0
    %6100 = vmatprep.subr.mxu0 0.0
    %6101 = vmatpush1.xpose.msra.mxu0 0.0
    %6102 = vmatprep.subr.mxu0 0.0
    %6103 = vmatpush1.xpose.msra.mxu0 0.0
    %6104 = vmatprep.subr.mxu0 0.0
    %6105 = vmatpush1.xpose.msra.mxu0 0.0
    %6106 = vmatprep.subr.mxu0 0.0
    %6107 = vmatpush1.xpose.msra.mxu0 0.0
    %6108 = vmatprep.subr.mxu0 0.0
    %6109 = vmatpush1.xpose.msra.mxu0 0.0
    %6110 = vmatprep.subr.mxu0 0.0
    %6111 = vmatpush1.xpose.msra.mxu0 0.0
    %6112 = vmatprep.subr.mxu0 0.0
    %6113 = vmatpush1.xpose.msra.mxu0 0.0
    %6114 = vmatprep.subr.mxu0 0.0
    %6115 = vmatpush1.xpose.msra.mxu0 0.0
    %6116 = vmatprep.subr.mxu0 0.0
    %6117 = vmatpush1.xpose.msra.mxu0 0.0
    %6118 = vmatprep.subr.mxu0 0.0
    %6119 = vmatpush1.xpose.msra.mxu0 0.0
    %6120 = vmatprep.subr.mxu0 0.0
    %6121 = vmatpush1.xpose.msra.mxu0 0.0
    %6122 = vmatprep.subr.mxu0 0.0
    %6123 = vmatpush1.xpose.msra.mxu0 0.0
    %6124 = vmatprep.subr.mxu0 0.0
    %6125 = vmatpush1.xpose.msra.mxu0 0.0
    %6126 = vmatprep.subr.mxu0 0.0
    %6127 = vmatpush1.xpose.msra.mxu0 0.0
    %6128 = vmatprep.subr.mxu0 0.0
    %6129 = vmatpush1.xpose.msra.mxu0 0.0
    %6130 = vmatprep.subr.mxu0 0.0
    %6131 = vmatpush1.xpose.msra.mxu0 0.0
    %6132 = vmatprep.subr.mxu0 0.0
    %6133 = vmatpush1.xpose.msra.mxu0 0.0
    %6134 = vmatprep.mubr.f32.mxu0 0.0
    %6135 = vmatmul.mubr.f32.gmra.mrb[0].mxu0 %v6064
    %v6136 = vpop.f32.mrb[0].mxu0
    %v6137 = vadd.f32 0.0, %v6136
    %v6138 = vpop.f32.mrb[0].mxu0
    %6139 = vdwg.mxu0
    %v6141 = vsel %vm294, %v5814, 0
    %v6144 = vsel %vm294, %v5708, 0
    %v6147 = vsel %vm294, %v5713, 0
    %6149 = vmatprep.subr.mxu0 0.0
    %6150 = vmatpush1.xpose.msra.mxu0 %v6144
    %6151 = vmatprep.subr.mxu0 0.0
    %6152 = vmatpush1.xpose.msra.mxu0 %v6147
    %6153 = vmatprep.subr.mxu0 0.0
    %6154 = vmatpush1.xpose.msra.mxu0 0.0
    %6155 = vmatprep.subr.mxu0 0.0
    %6156 = vmatpush1.xpose.msra.mxu0 0.0
    %6157 = vmatprep.subr.mxu0 0.0
    %6158 = vmatpush1.xpose.msra.mxu0 0.0
    %6159 = vmatprep.subr.mxu0 0.0
    %6160 = vmatpush1.xpose.msra.mxu0 0.0
    %6161 = vmatprep.subr.mxu0 0.0
    %6162 = vmatpush1.xpose.msra.mxu0 0.0
    %6163 = vmatprep.subr.mxu0 0.0
    %6164 = vmatpush1.xpose.msra.mxu0 0.0
    %6165 = vmatprep.subr.mxu0 0.0
    %6166 = vmatpush1.xpose.msra.mxu0 0.0
    %6167 = vmatprep.subr.mxu0 0.0
    %6168 = vmatpush1.xpose.msra.mxu0 0.0
    %6169 = vmatprep.subr.mxu0 0.0
    %6170 = vmatpush1.xpose.msra.mxu0 0.0
    %6171 = vmatprep.subr.mxu0 0.0
    %6172 = vmatpush1.xpose.msra.mxu0 0.0
    %6173 = vmatprep.subr.mxu0 0.0
    %6174 = vmatpush1.xpose.msra.mxu0 0.0
    %6175 = vmatprep.subr.mxu0 0.0
    %6176 = vmatpush1.xpose.msra.mxu0 0.0
    %6177 = vmatprep.subr.mxu0 0.0
    %6178 = vmatpush1.xpose.msra.mxu0 0.0
    %6179 = vmatprep.subr.mxu0 0.0
    %6180 = vmatpush1.xpose.msra.mxu0 0.0
    %6181 = vmatprep.subr.mxu0 0.0
    %6182 = vmatpush1.xpose.msra.mxu0 0.0
    %6183 = vmatprep.subr.mxu0 0.0
    %6184 = vmatpush1.xpose.msra.mxu0 0.0
    %6185 = vmatprep.subr.mxu0 0.0
    %6186 = vmatpush1.xpose.msra.mxu0 0.0
    %6187 = vmatprep.subr.mxu0 0.0
    %6188 = vmatpush1.xpose.msra.mxu0 0.0
    %6189 = vmatprep.subr.mxu0 0.0
    %6190 = vmatpush1.xpose.msra.mxu0 0.0
    %6191 = vmatprep.subr.mxu0 0.0
    %6192 = vmatpush1.xpose.msra.mxu0 0.0
    %6193 = vmatprep.subr.mxu0 0.0
    %6194 = vmatpush1.xpose.msra.mxu0 0.0
    %6195 = vmatprep.subr.mxu0 0.0
    %6196 = vmatpush1.xpose.msra.mxu0 0.0
    %6197 = vmatprep.subr.mxu0 0.0
    %6198 = vmatpush1.xpose.msra.mxu0 0.0
    %6199 = vmatprep.subr.mxu0 0.0
    %6200 = vmatpush1.xpose.msra.mxu0 0.0
    %6201 = vmatprep.subr.mxu0 0.0
    %6202 = vmatpush1.xpose.msra.mxu0 0.0
    %6203 = vmatprep.subr.mxu0 0.0
    %6204 = vmatpush1.xpose.msra.mxu0 0.0
    %6205 = vmatprep.subr.mxu0 0.0
    %6206 = vmatpush1.xpose.msra.mxu0 0.0
    %6207 = vmatprep.subr.mxu0 0.0
    %6208 = vmatpush1.xpose.msra.mxu0 0.0
    %6209 = vmatprep.subr.mxu0 0.0
    %6210 = vmatpush1.xpose.msra.mxu0 0.0
    %6211 = vmatprep.subr.mxu0 0.0
    %6212 = vmatpush1.xpose.msra.mxu0 0.0
    %6213 = vmatprep.mubr.f32.mxu0 0.0
    %6214 = vmatmul.mubr.f32.gmra.mrb[0].mxu0 %v6141
    %v6215 = vpop.f32.mrb[0].mxu0
    %v6216 = vadd.f32 0.0, %v6215
    %v6217 = vpop.f32.mrb[0].mxu0
    %6218 = vdwg.mxu0
    %6219 = vrot.lane.b32.xlu0 %v5814, 120
    %v6220 = vpop.permute.xlu0 %6219
    %6221 = vrot.lane.b32.xlu0 %v5708, 120
    %v6222 = vpop.permute.xlu0 %6221
    %6223 = vrot.lane.b32.xlu0 %v5713, 120
    %v6224 = vpop.permute.xlu0 %6223
    %v6225 = vsel %vm294, %v6220, 0
    %v6227 = vsel %vm294, %v6222, 0
    %v6229 = vsel %vm294, %v6224, 0
    %6231 = vmatprep.subr.mxu0 0.0
    %6232 = vmatpush1.xpose.msra.mxu0 %v6227
    %6233 = vmatprep.subr.mxu0 0.0
    %6234 = vmatpush1.xpose.msra.mxu0 %v6229
    %6235 = vmatprep.subr.mxu0 0.0
    %6236 = vmatpush1.xpose.msra.mxu0 0.0
    %6237 = vmatprep.subr.mxu0 0.0
    %6238 = vmatpush1.xpose.msra.mxu0 0.0
    %6239 = vmatprep.subr.mxu0 0.0
    %6240 = vmatpush1.xpose.msra.mxu0 0.0
    %6241 = vmatprep.subr.mxu0 0.0
    %6242 = vmatpush1.xpose.msra.mxu0 0.0
    %6243 = vmatprep.subr.mxu0 0.0
    %6244 = vmatpush1.xpose.msra.mxu0 0.0
    %6245 = vmatprep.subr.mxu0 0.0
    %6246 = vmatpush1.xpose.msra.mxu0 0.0
    %6247 = vmatprep.subr.mxu0 0.0
    %6248 = vmatpush1.xpose.msra.mxu0 0.0
    %6249 = vmatprep.subr.mxu0 0.0
    %6250 = vmatpush1.xpose.msra.mxu0 0.0
    %6251 = vmatprep.subr.mxu0 0.0
    %6252 = vmatpush1.xpose.msra.mxu0 0.0
    %6253 = vmatprep.subr.mxu0 0.0
    %6254 = vmatpush1.xpose.msra.mxu0 0.0
    %6255 = vmatprep.subr.mxu0 0.0
    %6256 = vmatpush1.xpose.msra.mxu0 0.0
    %6257 = vmatprep.subr.mxu0 0.0
    %6258 = vmatpush1.xpose.msra.mxu0 0.0
    %6259 = vmatprep.subr.mxu0 0.0
    %6260 = vmatpush1.xpose.msra.mxu0 0.0
    %6261 = vmatprep.subr.mxu0 0.0
    %6262 = vmatpush1.xpose.msra.mxu0 0.0
    %6263 = vmatprep.subr.mxu0 0.0
    %6264 = vmatpush1.xpose.msra.mxu0 0.0
    %6265 = vmatprep.subr.mxu0 0.0
    %6266 = vmatpush1.xpose.msra.mxu0 0.0
    %6267 = vmatprep.subr.mxu0 0.0
    %6268 = vmatpush1.xpose.msra.mxu0 0.0
    %6269 = vmatprep.subr.mxu0 0.0
    %6270 = vmatpush1.xpose.msra.mxu0 0.0
    %6271 = vmatprep.subr.mxu0 0.0
    %6272 = vmatpush1.xpose.msra.mxu0 0.0
    %6273 = vmatprep.subr.mxu0 0.0
    %6274 = vmatpush1.xpose.msra.mxu0 0.0
    %6275 = vmatprep.subr.mxu0 0.0
    %6276 = vmatpush1.xpose.msra.mxu0 0.0
    %6277 = vmatprep.subr.mxu0 0.0
    %6278 = vmatpush1.xpose.msra.mxu0 0.0
    %6279 = vmatprep.subr.mxu0 0.0
    %6280 = vmatpush1.xpose.msra.mxu0 0.0
    %6281 = vmatprep.subr.mxu0 0.0
    %6282 = vmatpush1.xpose.msra.mxu0 0.0
    %6283 = vmatprep.subr.mxu0 0.0
    %6284 = vmatpush1.xpose.msra.mxu0 0.0
    %6285 = vmatprep.subr.mxu0 0.0
    %6286 = vmatpush1.xpose.msra.mxu0 0.0
    %6287 = vmatprep.subr.mxu0 0.0
    %6288 = vmatpush1.xpose.msra.mxu0 0.0
    %6289 = vmatprep.subr.mxu0 0.0
    %6290 = vmatpush1.xpose.msra.mxu0 0.0
    %6291 = vmatprep.subr.mxu0 0.0
    %6292 = vmatpush1.xpose.msra.mxu0 0.0
    %6293 = vmatprep.subr.mxu0 0.0
    %6294 = vmatpush1.xpose.msra.mxu0 0.0
    %6295 = vmatprep.mubr.f32.mxu0 0.0
    %6296 = vmatmul.mubr.f32.gmra.mrb[0].mxu0 %v6225
    %v6297 = vpop.f32.mrb[0].mxu0
    %v6298 = vadd.f32 0.0, %v6297
    %v6299 = vpop.f32.mrb[0].mxu0
    %6300 = vdwg.mxu0
    %6301 = vrot.lane.b32.xlu0 %v5814, 112
    %v6302 = vpop.permute.xlu0 %6301
    %6303 = vrot.lane.b32.xlu0 %v5708, 112
    %v6304 = vpop.permute.xlu0 %6303
    %6305 = vrot.lane.b32.xlu0 %v5713, 112
    %v6306 = vpop.permute.xlu0 %6305
    %v6307 = vsel %vm294, %v6302, 0
    %v6309 = vsel %vm294, %v6304, 0
    %v6311 = vsel %vm294, %v6306, 0
    %6313 = vmatprep.subr.mxu0 0.0
    %6314 = vmatpush1.xpose.msra.mxu0 %v6309
    %6315 = vmatprep.subr.mxu0 0.0
    %6316 = vmatpush1.xpose.msra.mxu0 %v6311
    %6317 = vmatprep.subr.mxu0 0.0
    %6318 = vmatpush1.xpose.msra.mxu0 0.0
    %6319 = vmatprep.subr.mxu0 0.0
    %6320 = vmatpush1.xpose.msra.mxu0 0.0
    %6321 = vmatprep.subr.mxu0 0.0
    %6322 = vmatpush1.xpose.msra.mxu0 0.0
    %6323 = vmatprep.subr.mxu0 0.0
    %6324 = vmatpush1.xpose.msra.mxu0 0.0
    %6325 = vmatprep.subr.mxu0 0.0
    %6326 = vmatpush1.xpose.msra.mxu0 0.0
    %6327 = vmatprep.subr.mxu0 0.0
    %6328 = vmatpush1.xpose.msra.mxu0 0.0
    %6329 = vmatprep.subr.mxu0 0.0
    %6330 = vmatpush1.xpose.msra.mxu0 0.0
    %6331 = vmatprep.subr.mxu0 0.0
    %6332 = vmatpush1.xpose.msra.mxu0 0.0
    %6333 = vmatprep.subr.mxu0 0.0
    %6334 = vmatpush1.xpose.msra.mxu0 0.0
    %6335 = vmatprep.subr.mxu0 0.0
    %6336 = vmatpush1.xpose.msra.mxu0 0.0
    %6337 = vmatprep.subr.mxu0 0.0
    %6338 = vmatpush1.xpose.msra.mxu0 0.0
    %6339 = vmatprep.subr.mxu0 0.0
    %6340 = vmatpush1.xpose.msra.mxu0 0.0
    %6341 = vmatprep.subr.mxu0 0.0
    %6342 = vmatpush1.xpose.msra.mxu0 0.0
    %6343 = vmatprep.subr.mxu0 0.0
    %6344 = vmatpush1.xpose.msra.mxu0 0.0
    %6345 = vmatprep.subr.mxu0 0.0
    %6346 = vmatpush1.xpose.msra.mxu0 0.0
    %6347 = vmatprep.subr.mxu0 0.0
    %6348 = vmatpush1.xpose.msra.mxu0 0.0
    %6349 = vmatprep.subr.mxu0 0.0
    %6350 = vmatpush1.xpose.msra.mxu0 0.0
    %6351 = vmatprep.subr.mxu0 0.0
    %6352 = vmatpush1.xpose.msra.mxu0 0.0
    %6353 = vmatprep.subr.mxu0 0.0
    %6354 = vmatpush1.xpose.msra.mxu0 0.0
    %6355 = vmatprep.subr.mxu0 0.0
    %6356 = vmatpush1.xpose.msra.mxu0 0.0
    %6357 = vmatprep.subr.mxu0 0.0
    %6358 = vmatpush1.xpose.msra.mxu0 0.0
    %6359 = vmatprep.subr.mxu0 0.0
    %6360 = vmatpush1.xpose.msra.mxu0 0.0
    %6361 = vmatprep.subr.mxu0 0.0
    %6362 = vmatpush1.xpose.msra.mxu0 0.0
    %6363 = vmatprep.subr.mxu0 0.0
    %6364 = vmatpush1.xpose.msra.mxu0 0.0
    %6365 = vmatprep.subr.mxu0 0.0
    %6366 = vmatpush1.xpose.msra.mxu0 0.0
    %6367 = vmatprep.subr.mxu0 0.0
    %6368 = vmatpush1.xpose.msra.mxu0 0.0
    %6369 = vmatprep.subr.mxu0 0.0
    %6370 = vmatpush1.xpose.msra.mxu0 0.0
    %6371 = vmatprep.subr.mxu0 0.0
    %6372 = vmatpush1.xpose.msra.mxu0 0.0
    %6373 = vmatprep.subr.mxu0 0.0
    %6374 = vmatpush1.xpose.msra.mxu0 0.0
    %6375 = vmatprep.subr.mxu0 0.0
    %6376 = vmatpush1.xpose.msra.mxu0 0.0
    %6377 = vmatprep.mubr.f32.mxu0 0.0
    %6378 = vmatmul.mubr.f32.gmra.mrb[0].mxu0 %v6307
    %v6379 = vpop.f32.mrb[0].mxu0
    %v6380 = vadd.f32 0.0, %v6379
    %v6381 = vpop.f32.mrb[0].mxu0
    %6382 = vdwg.mxu0
    %6383 = vrot.lane.b32.xlu0 %v5814, 104
    %v6384 = vpop.permute.xlu0 %6383
    %6385 = vrot.lane.b32.xlu0 %v5708, 104
    %v6386 = vpop.permute.xlu0 %6385
    %6387 = vrot.lane.b32.xlu0 %v5713, 104
    %v6388 = vpop.permute.xlu0 %6387
    %v6389 = vsel %vm294, %v6384, 0
    %v6391 = vsel %vm294, %v6386, 0
    %v6393 = vsel %vm294, %v6388, 0
    %6395 = vmatprep.subr.mxu0 0.0
    %6396 = vmatpush1.xpose.msra.mxu0 %v6391
    %6397 = vmatprep.subr.mxu0 0.0
    %6398 = vmatpush1.xpose.msra.mxu0 %v6393
    %6399 = vmatprep.subr.mxu0 0.0
    %6400 = vmatpush1.xpose.msra.mxu0 0.0
    %6401 = vmatprep.subr.mxu0 0.0
    %6402 = vmatpush1.xpose.msra.mxu0 0.0
    %6403 = vmatprep.subr.mxu0 0.0
    %6404 = vmatpush1.xpose.msra.mxu0 0.0
    %6405 = vmatprep.subr.mxu0 0.0
    %6406 = vmatpush1.xpose.msra.mxu0 0.0
    %6407 = vmatprep.subr.mxu0 0.0
    %6408 = vmatpush1.xpose.msra.mxu0 0.0
    %6409 = vmatprep.subr.mxu0 0.0
    %6410 = vmatpush1.xpose.msra.mxu0 0.0
    %6411 = vmatprep.subr.mxu0 0.0
    %6412 = vmatpush1.xpose.msra.mxu0 0.0
    %6413 = vmatprep.subr.mxu0 0.0
    %6414 = vmatpush1.xpose.msra.mxu0 0.0
    %6415 = vmatprep.subr.mxu0 0.0
    %6416 = vmatpush1.xpose.msra.mxu0 0.0
    %6417 = vmatprep.subr.mxu0 0.0
    %6418 = vmatpush1.xpose.msra.mxu0 0.0
    %6419 = vmatprep.subr.mxu0 0.0
    %6420 = vmatpush1.xpose.msra.mxu0 0.0
    %6421 = vmatprep.subr.mxu0 0.0
    %6422 = vmatpush1.xpose.msra.mxu0 0.0
    %6423 = vmatprep.subr.mxu0 0.0
    %6424 = vmatpush1.xpose.msra.mxu0 0.0
    %6425 = vmatprep.subr.mxu0 0.0
    %6426 = vmatpush1.xpose.msra.mxu0 0.0
    %6427 = vmatprep.subr.mxu0 0.0
    %6428 = vmatpush1.xpose.msra.mxu0 0.0
    %6429 = vmatprep.subr.mxu0 0.0
    %6430 = vmatpush1.xpose.msra.mxu0 0.0
    %6431 = vmatprep.subr.mxu0 0.0
    %6432 = vmatpush1.xpose.msra.mxu0 0.0
    %6433 = vmatprep.subr.mxu0 0.0
    %6434 = vmatpush1.xpose.msra.mxu0 0.0
    %6435 = vmatprep.subr.mxu0 0.0
    %6436 = vmatpush1.xpose.msra.mxu0 0.0
    %6437 = vmatprep.subr.mxu0 0.0
    %6438 = vmatpush1.xpose.msra.mxu0 0.0
    %6439 = vmatprep.subr.mxu0 0.0
    %6440 = vmatpush1.xpose.msra.mxu0 0.0
    %6441 = vmatprep.subr.mxu0 0.0
    %6442 = vmatpush1.xpose.msra.mxu0 0.0
    %6443 = vmatprep.subr.mxu0 0.0
    %6444 = vmatpush1.xpose.msra.mxu0 0.0
    %6445 = vmatprep.subr.mxu0 0.0
    %6446 = vmatpush1.xpose.msra.mxu0 0.0
    %6447 = vmatprep.subr.mxu0 0.0
    %6448 = vmatpush1.xpose.msra.mxu0 0.0
    %6449 = vmatprep.subr.mxu0 0.0
    %6450 = vmatpush1.xpose.msra.mxu0 0.0
    %6451 = vmatprep.subr.mxu0 0.0
    %6452 = vmatpush1.xpose.msra.mxu0 0.0
    %6453 = vmatprep.subr.mxu0 0.0
    %6454 = vmatpush1.xpose.msra.mxu0 0.0
    %6455 = vmatprep.subr.mxu0 0.0
    %6456 = vmatpush1.xpose.msra.mxu0 0.0
    %6457 = vmatprep.subr.mxu0 0.0
    %6458 = vmatpush1.xpose.msra.mxu0 0.0
    %6459 = vmatprep.mubr.f32.mxu0 0.0
    %6460 = vmatmul.mubr.f32.gmra.mrb[0].mxu0 %v6389
    %v6461 = vpop.f32.mrb[0].mxu0
    %v6462 = vadd.f32 0.0, %v6461
    %v6463 = vpop.f32.mrb[0].mxu0
    %6464 = vdwg.mxu0
    %v6465 = vsel %vm1318, %v5891, -inf
    %6466 = vmax.xlane.f32.xlu0 %v6465
    %v6467 = vpop.xlane.xlu0 %6466
    %v6468 = vsel %vm1318, %v5973, -inf
    %6469 = vmax.xlane.f32.xlu0 %v6468
    %v6470 = vpop.xlane.xlu0 %6469
    %v6471 = vsel %vm1318, %v6055, -inf
    %6472 = vmax.xlane.f32.xlu0 %v6471
    %v6473 = vpop.xlane.xlu0 %6472
    %v6474 = vsel %vm1318, %v6137, -inf
    %6475 = vmax.xlane.f32.xlu0 %v6474
    %v6476 = vpop.xlane.xlu0 %6475
    %v6477 = vsel %vm1318, %v6216, -inf
    %6478 = vmax.xlane.f32.xlu0 %v6477
    %v6479 = vpop.xlane.xlu0 %6478
    %v6480 = vsel %vm1318, %v6298, -inf
    %6481 = vmax.xlane.f32.xlu0 %v6480
    %v6482 = vpop.xlane.xlu0 %6481
    %v6483 = vsel %vm1318, %v6380, -inf
    %6484 = vmax.xlane.f32.xlu0 %v6483
    %v6485 = vpop.xlane.xlu0 %6484
    %v6486 = vsel %vm1318, %v6462, -inf
    %6487 = vmax.xlane.f32.xlu0 %v6486
    %v6488 = vpop.xlane.xlu0 %6487
    %v6489 = vsub.f32 %v5891, %v6467
    %v6490 = vsub.f32 %v5973, %v6470
    %v6491 = vsub.f32 %v6055, %v6473
    %v6492 = vsub.f32 %v6137, %v6476
    %v6493 = vsub.f32 %v6216, %v6479
    %v6494 = vsub.f32 %v6298, %v6482
    %v6495 = vsub.f32 %v6380, %v6485
    %v6496 = vsub.f32 %v6462, %v6488
    %v6497 = vmul.f32 %v6489, 1.442695
    %v6498 = vpow.pop %v6497
    %v6499 = vmul.f32 %v6490, 1.442695
    %v6500 = vpow.pop %v6499
    %v6501 = vmul.f32 %v6491, 1.442695
    %v6502 = vpow.pop %v6501
    %v6503 = vmul.f32 %v6492, 1.442695
    %v6504 = vpow.pop %v6503
    %v6505 = vmul.f32 %v6493, 1.442695
    %v6506 = vpow.pop %v6505
    %v6507 = vmul.f32 %v6494, 1.442695
    %v6508 = vpow.pop %v6507
    %v6509 = vmul.f32 %v6495, 1.442695
    %v6510 = vpow.pop %v6509
    %v6511 = vmul.f32 %v6496, 1.442695
    %v6512 = vpow.pop %v6511
    %v6513 = vsel %vm1318, %v6498, 0.0
    %6514 = vadd.xlane.f32.xlu0 %v6513
    %v6515 = vpop.xlane.xlu0 %6514
    %v6516 = vsel %vm1318, %v6500, 0.0
    %6517 = vadd.xlane.f32.xlu0 %v6516
    %v6518 = vpop.xlane.xlu0 %6517
    %v6519 = vsel %vm1318, %v6502, 0.0
    %6520 = vadd.xlane.f32.xlu0 %v6519
    %v6521 = vpop.xlane.xlu0 %6520
    %v6522 = vsel %vm1318, %v6504, 0.0
    %6523 = vadd.xlane.f32.xlu0 %v6522
    %v6524 = vpop.xlane.xlu0 %6523
    %v6525 = vsel %vm1318, %v6506, 0.0
    %6526 = vadd.xlane.f32.xlu0 %v6525
    %v6527 = vpop.xlane.xlu0 %6526
    %v6528 = vsel %vm1318, %v6508, 0.0
    %6529 = vadd.xlane.f32.xlu0 %v6528
    %v6530 = vpop.xlane.xlu0 %6529
    %v6531 = vsel %vm1318, %v6510, 0.0
    %6532 = vadd.xlane.f32.xlu0 %v6531
    %v6533 = vpop.xlane.xlu0 %6532
    %v6534 = vsel %vm1318, %v6512, 0.0
    %6535 = vadd.xlane.f32.xlu0 %v6534
    %v6536 = vpop.xlane.xlu0 %6535
    %v6537 = vrcp.pop %v6515
    %v6538 = vrcp.pop %v6518
    %v6539 = vrcp.pop %v6521
    %v6540 = vrcp.pop %v6524
    %v6541 = vrcp.pop %v6527
    %v6542 = vrcp.pop %v6530
    %v6543 = vrcp.pop %v6533
    %v6544 = vrcp.pop %v6536
    %v6545 = vmul.f32 %v6498, %v6537
    %v6546 = vmul.f32 %v6500, %v6538
    %v6547 = vmul.f32 %v6502, %v6539
    %v6548 = vmul.f32 %v6504, %v6540
    %v6549 = vmul.f32 %v6506, %v6541
    %v6550 = vmul.f32 %v6508, %v6542
    %v6551 = vmul.f32 %v6510, %v6543
    %v6552 = vmul.f32 %v6512, %v6544
    %v6554 = vsel %vm1318, %v6545, 0
    %6556 = vmatprep.subr.mxu0 0.0
    %6557 = vmatpush1.msra.mxu0 %v5791
    %6558 = vmatprep.subr.mxu0 0.0
    %6559 = vmatpush1.msra.mxu0 %v5796
    %6560 = vmatprep.subr.mxu0 0.0
    %6561 = vmatpush1.msra.mxu0 0.0
    %6562 = vmatprep.subr.mxu0 0.0
    %6563 = vmatpush1.msra.mxu0 0.0
    %6564 = vmatprep.subr.mxu0 0.0
    %6565 = vmatpush1.msra.mxu0 0.0
    %6566 = vmatprep.subr.mxu0 0.0
    %6567 = vmatpush1.msra.mxu0 0.0
    %6568 = vmatprep.subr.mxu0 0.0
    %6569 = vmatpush1.msra.mxu0 0.0
    %6570 = vmatprep.subr.mxu0 0.0
    %6571 = vmatpush1.msra.mxu0 0.0
    %6572 = vmatprep.subr.mxu0 0.0
    %6573 = vmatpush1.msra.mxu0 0.0
    %6574 = vmatprep.subr.mxu0 0.0
    %6575 = vmatpush1.msra.mxu0 0.0
    %6576 = vmatprep.subr.mxu0 0.0
    %6577 = vmatpush1.msra.mxu0 0.0
    %6578 = vmatprep.subr.mxu0 0.0
    %6579 = vmatpush1.msra.mxu0 0.0
    %6580 = vmatprep.subr.mxu0 0.0
    %6581 = vmatpush1.msra.mxu0 0.0
    %6582 = vmatprep.subr.mxu0 0.0
    %6583 = vmatpush1.msra.mxu0 0.0
    %6584 = vmatprep.subr.mxu0 0.0
    %6585 = vmatpush1.msra.mxu0 0.0
    %6586 = vmatprep.subr.mxu0 0.0
    %6587 = vmatpush1.msra.mxu0 0.0
    %6588 = vmatprep.subr.mxu0 0.0
    %6589 = vmatpush1.msra.mxu0 0.0
    %6590 = vmatprep.subr.mxu0 0.0
    %6591 = vmatpush1.msra.mxu0 0.0
    %6592 = vmatprep.subr.mxu0 0.0
    %6593 = vmatpush1.msra.mxu0 0.0
    %6594 = vmatprep.subr.mxu0 0.0
    %6595 = vmatpush1.msra.mxu0 0.0
    %6596 = vmatprep.subr.mxu0 0.0
    %6597 = vmatpush1.msra.mxu0 0.0
    %6598 = vmatprep.subr.mxu0 0.0
    %6599 = vmatpush1.msra.mxu0 0.0
    %6600 = vmatprep.subr.mxu0 0.0
    %6601 = vmatpush1.msra.mxu0 0.0
    %6602 = vmatprep.subr.mxu0 0.0
    %6603 = vmatpush1.msra.mxu0 0.0
    %6604 = vmatprep.subr.mxu0 0.0
    %6605 = vmatpush1.msra.mxu0 0.0
    %6606 = vmatprep.subr.mxu0 0.0
    %6607 = vmatpush1.msra.mxu0 0.0
    %6608 = vmatprep.subr.mxu0 0.0
    %6609 = vmatpush1.msra.mxu0 0.0
    %6610 = vmatprep.subr.mxu0 0.0
    %6611 = vmatpush1.msra.mxu0 0.0
    %6612 = vmatprep.subr.mxu0 0.0
    %6613 = vmatpush1.msra.mxu0 0.0
    %6614 = vmatprep.subr.mxu0 0.0
    %6615 = vmatpush1.msra.mxu0 0.0
    %6616 = vmatprep.subr.mxu0 0.0
    %6617 = vmatpush1.msra.mxu0 0.0
    %6618 = vmatprep.subr.mxu0 0.0
    %6619 = vmatpush1.msra.mxu0 0.0
    %6620 = vmatprep.mubr.f32.mxu0 0.0
    %6621 = vmatmul.mubr.f32.gmra.mrb[0].mxu0 %v6554
    %v6622 = vpop.f32.mrb[0].mxu0
    %v6623 = vadd.f32 0.0, %v6622
    %v6624 = vpop.f32.mrb[0].mxu0
    %6625 = vdwg.mxu0
    %6628 = vrot.lane.b32.xlu0 %v5791, 120
    %v6629 = vpop.permute.xlu0 %6628
    %6630 = vrot.lane.b32.xlu0 %v5796, 120
    %v6631 = vpop.permute.xlu0 %6630
    %v6635 = vsel %vm1318, %v6546, 0
    %6637 = vmatprep.subr.mxu0 0.0
    %6638 = vmatpush1.msra.mxu0 %v6629
    %6639 = vmatprep.subr.mxu0 0.0
    %6640 = vmatpush1.msra.mxu0 %v6631
    %6641 = vmatprep.subr.mxu0 0.0
    %6642 = vmatpush1.msra.mxu0 0.0
    %6643 = vmatprep.subr.mxu0 0.0
    %6644 = vmatpush1.msra.mxu0 0.0
    %6645 = vmatprep.subr.mxu0 0.0
    %6646 = vmatpush1.msra.mxu0 0.0
    %6647 = vmatprep.subr.mxu0 0.0
    %6648 = vmatpush1.msra.mxu0 0.0
    %6649 = vmatprep.subr.mxu0 0.0
    %6650 = vmatpush1.msra.mxu0 0.0
    %6651 = vmatprep.subr.mxu0 0.0
    %6652 = vmatpush1.msra.mxu0 0.0
    %6653 = vmatprep.subr.mxu0 0.0
    %6654 = vmatpush1.msra.mxu0 0.0
    %6655 = vmatprep.subr.mxu0 0.0
    %6656 = vmatpush1.msra.mxu0 0.0
    %6657 = vmatprep.subr.mxu0 0.0
    %6658 = vmatpush1.msra.mxu0 0.0
    %6659 = vmatprep.subr.mxu0 0.0
    %6660 = vmatpush1.msra.mxu0 0.0
    %6661 = vmatprep.subr.mxu0 0.0
    %6662 = vmatpush1.msra.mxu0 0.0
    %6663 = vmatprep.subr.mxu0 0.0
    %6664 = vmatpush1.msra.mxu0 0.0
    %6665 = vmatprep.subr.mxu0 0.0
    %6666 = vmatpush1.msra.mxu0 0.0
    %6667 = vmatprep.subr.mxu0 0.0
    %6668 = vmatpush1.msra.mxu0 0.0
    %6669 = vmatprep.subr.mxu0 0.0
    %6670 = vmatpush1.msra.mxu0 0.0
    %6671 = vmatprep.subr.mxu0 0.0
    %6672 = vmatpush1.msra.mxu0 0.0
    %6673 = vmatprep.subr.mxu0 0.0
    %6674 = vmatpush1.msra.mxu0 0.0
    %6675 = vmatprep.subr.mxu0 0.0
    %6676 = vmatpush1.msra.mxu0 0.0
    %6677 = vmatprep.subr.mxu0 0.0
    %6678 = vmatpush1.msra.mxu0 0.0
    %6679 = vmatprep.subr.mxu0 0.0
    %6680 = vmatpush1.msra.mxu0 0.0
    %6681 = vmatprep.subr.mxu0 0.0
    %6682 = vmatpush1.msra.mxu0 0.0
    %6683 = vmatprep.subr.mxu0 0.0
    %6684 = vmatpush1.msra.mxu0 0.0
    %6685 = vmatprep.subr.mxu0 0.0
    %6686 = vmatpush1.msra.mxu0 0.0
    %6687 = vmatprep.subr.mxu0 0.0
    %6688 = vmatpush1.msra.mxu0 0.0
    %6689 = vmatprep.subr.mxu0 0.0
    %6690 = vmatpush1.msra.mxu0 0.0
    %6691 = vmatprep.subr.mxu0 0.0
    %6692 = vmatpush1.msra.mxu0 0.0
    %6693 = vmatprep.subr.mxu0 0.0
    %6694 = vmatpush1.msra.mxu0 0.0
    %6695 = vmatprep.subr.mxu0 0.0
    %6696 = vmatpush1.msra.mxu0 0.0
    %6697 = vmatprep.subr.mxu0 0.0
    %6698 = vmatpush1.msra.mxu0 0.0
    %6699 = vmatprep.subr.mxu0 0.0
    %6700 = vmatpush1.msra.mxu0 0.0
    %6701 = vmatprep.mubr.f32.mxu0 0.0
    %6702 = vmatmul.mubr.f32.gmra.mrb[0].mxu0 %v6635
    %v6703 = vpop.f32.mrb[0].mxu0
    %v6704 = vadd.f32 0.0, %v6703
    %v6705 = vpop.f32.mrb[0].mxu0
    %6706 = vdwg.mxu0
    %6707 = vrot.lane.b32.xlu0 %v5791, 112
    %v6708 = vpop.permute.xlu0 %6707
    %6709 = vrot.lane.b32.xlu0 %v5796, 112
    %v6710 = vpop.permute.xlu0 %6709
    %v6714 = vsel %vm1318, %v6547, 0
    %6716 = vmatprep.subr.mxu0 0.0
    %6717 = vmatpush1.msra.mxu0 %v6708
    %6718 = vmatprep.subr.mxu0 0.0
    %6719 = vmatpush1.msra.mxu0 %v6710
    %6720 = vmatprep.subr.mxu0 0.0
    %6721 = vmatpush1.msra.mxu0 0.0
    %6722 = vmatprep.subr.mxu0 0.0
    %6723 = vmatpush1.msra.mxu0 0.0
    %6724 = vmatprep.subr.mxu0 0.0
    %6725 = vmatpush1.msra.mxu0 0.0
    %6726 = vmatprep.subr.mxu0 0.0
    %6727 = vmatpush1.msra.mxu0 0.0
    %6728 = vmatprep.subr.mxu0 0.0
    %6729 = vmatpush1.msra.mxu0 0.0
    %6730 = vmatprep.subr.mxu0 0.0
    %6731 = vmatpush1.msra.mxu0 0.0
    %6732 = vmatprep.subr.mxu0 0.0
    %6733 = vmatpush1.msra.mxu0 0.0
    %6734 = vmatprep.subr.mxu0 0.0
    %6735 = vmatpush1.msra.mxu0 0.0
    %6736 = vmatprep.subr.mxu0 0.0
    %6737 = vmatpush1.msra.mxu0 0.0
    %6738 = vmatprep.subr.mxu0 0.0
    %6739 = vmatpush1.msra.mxu0 0.0
    %6740 = vmatprep.subr.mxu0 0.0
    %6741 = vmatpush1.msra.mxu0 0.0
    %6742 = vmatprep.subr.mxu0 0.0
    %6743 = vmatpush1.msra.mxu0 0.0
    %6744 = vmatprep.subr.mxu0 0.0
    %6745 = vmatpush1.msra.mxu0 0.0
    %6746 = vmatprep.subr.mxu0 0.0
    %6747 = vmatpush1.msra.mxu0 0.0
    %6748 = vmatprep.subr.mxu0 0.0
    %6749 = vmatpush1.msra.mxu0 0.0
    %6750 = vmatprep.subr.mxu0 0.0
    %6751 = vmatpush1.msra.mxu0 0.0
    %6752 = vmatprep.subr.mxu0 0.0
    %6753 = vmatpush1.msra.mxu0 0.0
    %6754 = vmatprep.subr.mxu0 0.0
    %6755 = vmatpush1.msra.mxu0 0.0
    %6756 = vmatprep.subr.mxu0 0.0
    %6757 = vmatpush1.msra.mxu0 0.0
    %6758 = vmatprep.subr.mxu0 0.0
    %6759 = vmatpush1.msra.mxu0 0.0
    %6760 = vmatprep.subr.mxu0 0.0
    %6761 = vmatpush1.msra.mxu0 0.0
    %6762 = vmatprep.subr.mxu0 0.0
    %6763 = vmatpush1.msra.mxu0 0.0
    %6764 = vmatprep.subr.mxu0 0.0
    %6765 = vmatpush1.msra.mxu0 0.0
    %6766 = vmatprep.subr.mxu0 0.0
    %6767 = vmatpush1.msra.mxu0 0.0
    %6768 = vmatprep.subr.mxu0 0.0
    %6769 = vmatpush1.msra.mxu0 0.0
    %6770 = vmatprep.subr.mxu0 0.0
    %6771 = vmatpush1.msra.mxu0 0.0
    %6772 = vmatprep.subr.mxu0 0.0
    %6773 = vmatpush1.msra.mxu0 0.0
    %6774 = vmatprep.subr.mxu0 0.0
    %6775 = vmatpush1.msra.mxu0 0.0
    %6776 = vmatprep.subr.mxu0 0.0
    %6777 = vmatpush1.msra.mxu0 0.0
    %6778 = vmatprep.subr.mxu0 0.0
    %6779 = vmatpush1.msra.mxu0 0.0
    %6780 = vmatprep.mubr.f32.mxu0 0.0
    %6781 = vmatmul.mubr.f32.gmra.mrb[0].mxu0 %v6714
    %v6782 = vpop.f32.mrb[0].mxu0
    %v6783 = vadd.f32 0.0, %v6782
    %v6784 = vpop.f32.mrb[0].mxu0
    %6785 = vdwg.mxu0
    %6786 = vrot.lane.b32.xlu0 %v5791, 104
    %v6787 = vpop.permute.xlu0 %6786
    %6788 = vrot.lane.b32.xlu0 %v5796, 104
    %v6789 = vpop.permute.xlu0 %6788
    %v6793 = vsel %vm1318, %v6548, 0
    %6795 = vmatprep.subr.mxu0 0.0
    %6796 = vmatpush1.msra.mxu0 %v6787
    %6797 = vmatprep.subr.mxu0 0.0
    %6798 = vmatpush1.msra.mxu0 %v6789
    %6799 = vmatprep.subr.mxu0 0.0
    %6800 = vmatpush1.msra.mxu0 0.0
    %6801 = vmatprep.subr.mxu0 0.0
    %6802 = vmatpush1.msra.mxu0 0.0
    %6803 = vmatprep.subr.mxu0 0.0
    %6804 = vmatpush1.msra.mxu0 0.0
    %6805 = vmatprep.subr.mxu0 0.0
    %6806 = vmatpush1.msra.mxu0 0.0
    %6807 = vmatprep.subr.mxu0 0.0
    %6808 = vmatpush1.msra.mxu0 0.0
    %6809 = vmatprep.subr.mxu0 0.0
    %6810 = vmatpush1.msra.mxu0 0.0
    %6811 = vmatprep.subr.mxu0 0.0
    %6812 = vmatpush1.msra.mxu0 0.0
    %6813 = vmatprep.subr.mxu0 0.0
    %6814 = vmatpush1.msra.mxu0 0.0
    %6815 = vmatprep.subr.mxu0 0.0
    %6816 = vmatpush1.msra.mxu0 0.0
    %6817 = vmatprep.subr.mxu0 0.0
    %6818 = vmatpush1.msra.mxu0 0.0
    %6819 = vmatprep.subr.mxu0 0.0
    %6820 = vmatpush1.msra.mxu0 0.0
    %6821 = vmatprep.subr.mxu0 0.0
    %6822 = vmatpush1.msra.mxu0 0.0
    %6823 = vmatprep.subr.mxu0 0.0
    %6824 = vmatpush1.msra.mxu0 0.0
    %6825 = vmatprep.subr.mxu0 0.0
    %6826 = vmatpush1.msra.mxu0 0.0
    %6827 = vmatprep.subr.mxu0 0.0
    %6828 = vmatpush1.msra.mxu0 0.0
    %6829 = vmatprep.subr.mxu0 0.0
    %6830 = vmatpush1.msra.mxu0 0.0
    %6831 = vmatprep.subr.mxu0 0.0
    %6832 = vmatpush1.msra.mxu0 0.0
    %6833 = vmatprep.subr.mxu0 0.0
    %6834 = vmatpush1.msra.mxu0 0.0
    %6835 = vmatprep.subr.mxu0 0.0
    %6836 = vmatpush1.msra.mxu0 0.0
    %6837 = vmatprep.subr.mxu0 0.0
    %6838 = vmatpush1.msra.mxu0 0.0
    %6839 = vmatprep.subr.mxu0 0.0
    %6840 = vmatpush1.msra.mxu0 0.0
    %6841 = vmatprep.subr.mxu0 0.0
    %6842 = vmatpush1.msra.mxu0 0.0
    %6843 = vmatprep.subr.mxu0 0.0
    %6844 = vmatpush1.msra.mxu0 0.0
    %6845 = vmatprep.subr.mxu0 0.0
    %6846 = vmatpush1.msra.mxu0 0.0
    %6847 = vmatprep.subr.mxu0 0.0
    %6848 = vmatpush1.msra.mxu0 0.0
    %6849 = vmatprep.subr.mxu0 0.0
    %6850 = vmatpush1.msra.mxu0 0.0
    %6851 = vmatprep.subr.mxu0 0.0
    %6852 = vmatpush1.msra.mxu0 0.0
    %6853 = vmatprep.subr.mxu0 0.0
    %6854 = vmatpush1.msra.mxu0 0.0
    %6855 = vmatprep.subr.mxu0 0.0
    %6856 = vmatpush1.msra.mxu0 0.0
    %6857 = vmatprep.subr.mxu0 0.0
    %6858 = vmatpush1.msra.mxu0 0.0
    %6859 = vmatprep.mubr.f32.mxu0 0.0
    %6860 = vmatmul.mubr.f32.gmra.mrb[0].mxu0 %v6793
    %v6861 = vpop.f32.mrb[0].mxu0
    %v6862 = vadd.f32 0.0, %v6861
    %v6863 = vpop.f32.mrb[0].mxu0
    %6864 = vdwg.mxu0
    %6866 = vrot.lane.b32.xlu0 %v6704, 8
    %v6867 = vpop.permute.xlu0 %6866
    %6870 = vrot.lane.b32.xlu0 %v6783, 16
    %v6871 = vpop.permute.xlu0 %6870
    %6874 = vrot.lane.b32.xlu0 %v6862, 24
    %v6875 = vpop.permute.xlu0 %6874
    %v6877 = vsel %vm294, %v6623, %v6867
    %v6878 = vsel %vm1318, %v6877, %v6871
    %v6879 = vsel %vm1320, %v6878, %v6875
    %v6881 = vsel %vm1318, %v6549, 0
    %6883 = vmatprep.subr.mxu0 0.0
    %6884 = vmatpush1.msra.mxu0 %v5801
    %6885 = vmatprep.subr.mxu0 0.0
    %6886 = vmatpush1.msra.mxu0 %v5806
    %6887 = vmatprep.subr.mxu0 0.0
    %6888 = vmatpush1.msra.mxu0 0.0
    %6889 = vmatprep.subr.mxu0 0.0
    %6890 = vmatpush1.msra.mxu0 0.0
    %6891 = vmatprep.subr.mxu0 0.0
    %6892 = vmatpush1.msra.mxu0 0.0
    %6893 = vmatprep.subr.mxu0 0.0
    %6894 = vmatpush1.msra.mxu0 0.0
    %6895 = vmatprep.subr.mxu0 0.0
    %6896 = vmatpush1.msra.mxu0 0.0
    %6897 = vmatprep.subr.mxu0 0.0
    %6898 = vmatpush1.msra.mxu0 0.0
    %6899 = vmatprep.subr.mxu0 0.0
    %6900 = vmatpush1.msra.mxu0 0.0
    %6901 = vmatprep.subr.mxu0 0.0
    %6902 = vmatpush1.msra.mxu0 0.0
    %6903 = vmatprep.subr.mxu0 0.0
    %6904 = vmatpush1.msra.mxu0 0.0
    %6905 = vmatprep.subr.mxu0 0.0
    %6906 = vmatpush1.msra.mxu0 0.0
    %6907 = vmatprep.subr.mxu0 0.0
    %6908 = vmatpush1.msra.mxu0 0.0
    %6909 = vmatprep.subr.mxu0 0.0
    %6910 = vmatpush1.msra.mxu0 0.0
    %6911 = vmatprep.subr.mxu0 0.0
    %6912 = vmatpush1.msra.mxu0 0.0
    %6913 = vmatprep.subr.mxu0 0.0
    %6914 = vmatpush1.msra.mxu0 0.0
    %6915 = vmatprep.subr.mxu0 0.0
    %6916 = vmatpush1.msra.mxu0 0.0
    %6917 = vmatprep.subr.mxu0 0.0
    %6918 = vmatpush1.msra.mxu0 0.0
    %6919 = vmatprep.subr.mxu0 0.0
    %6920 = vmatpush1.msra.mxu0 0.0
    %6921 = vmatprep.subr.mxu0 0.0
    %6922 = vmatpush1.msra.mxu0 0.0
    %6923 = vmatprep.subr.mxu0 0.0
    %6924 = vmatpush1.msra.mxu0 0.0
    %6925 = vmatprep.subr.mxu0 0.0
    %6926 = vmatpush1.msra.mxu0 0.0
    %6927 = vmatprep.subr.mxu0 0.0
    %6928 = vmatpush1.msra.mxu0 0.0
    %6929 = vmatprep.subr.mxu0 0.0
    %6930 = vmatpush1.msra.mxu0 0.0
    %6931 = vmatprep.subr.mxu0 0.0
    %6932 = vmatpush1.msra.mxu0 0.0
    %6933 = vmatprep.subr.mxu0 0.0
    %6934 = vmatpush1.msra.mxu0 0.0
    %6935 = vmatprep.subr.mxu0 0.0
    %6936 = vmatpush1.msra.mxu0 0.0
    %6937 = vmatprep.subr.mxu0 0.0
    %6938 = vmatpush1.msra.mxu0 0.0
    %6939 = vmatprep.subr.mxu0 0.0
    %6940 = vmatpush1.msra.mxu0 0.0
    %6941 = vmatprep.subr.mxu0 0.0
    %6942 = vmatpush1.msra.mxu0 0.0
    %6943 = vmatprep.subr.mxu0 0.0
    %6944 = vmatpush1.msra.mxu0 0.0
    %6945 = vmatprep.subr.mxu0 0.0
    %6946 = vmatpush1.msra.mxu0 0.0
    %6947 = vmatprep.mubr.f32.mxu0 0.0
    %6948 = vmatmul.mubr.f32.gmra.mrb[0].mxu0 %v6881
    %v6949 = vpop.f32.mrb[0].mxu0
    %v6950 = vadd.f32 0.0, %v6949
    %v6951 = vpop.f32.mrb[0].mxu0
    %6952 = vdwg.mxu0
    %6955 = vrot.lane.b32.xlu0 %v5801, 120
    %v6956 = vpop.permute.xlu0 %6955
    %6957 = vrot.lane.b32.xlu0 %v5806, 120
    %v6958 = vpop.permute.xlu0 %6957
    %v6962 = vsel %vm1318, %v6550, 0
    %6964 = vmatprep.subr.mxu0 0.0
    %6965 = vmatpush1.msra.mxu0 %v6956
    %6966 = vmatprep.subr.mxu0 0.0
    %6967 = vmatpush1.msra.mxu0 %v6958
    %6968 = vmatprep.subr.mxu0 0.0
    %6969 = vmatpush1.msra.mxu0 0.0
    %6970 = vmatprep.subr.mxu0 0.0
    %6971 = vmatpush1.msra.mxu0 0.0
    %6972 = vmatprep.subr.mxu0 0.0
    %6973 = vmatpush1.msra.mxu0 0.0
    %6974 = vmatprep.subr.mxu0 0.0
    %6975 = vmatpush1.msra.mxu0 0.0
    %6976 = vmatprep.subr.mxu0 0.0
    %6977 = vmatpush1.msra.mxu0 0.0
    %6978 = vmatprep.subr.mxu0 0.0
    %6979 = vmatpush1.msra.mxu0 0.0
    %6980 = vmatprep.subr.mxu0 0.0
    %6981 = vmatpush1.msra.mxu0 0.0
    %6982 = vmatprep.subr.mxu0 0.0
    %6983 = vmatpush1.msra.mxu0 0.0
    %6984 = vmatprep.subr.mxu0 0.0
    %6985 = vmatpush1.msra.mxu0 0.0
    %6986 = vmatprep.subr.mxu0 0.0
    %6987 = vmatpush1.msra.mxu0 0.0
    %6988 = vmatprep.subr.mxu0 0.0
    %6989 = vmatpush1.msra.mxu0 0.0
    %6990 = vmatprep.subr.mxu0 0.0
    %6991 = vmatpush1.msra.mxu0 0.0
    %6992 = vmatprep.subr.mxu0 0.0
    %6993 = vmatpush1.msra.mxu0 0.0
    %6994 = vmatprep.subr.mxu0 0.0
    %6995 = vmatpush1.msra.mxu0 0.0
    %6996 = vmatprep.subr.mxu0 0.0
    %6997 = vmatpush1.msra.mxu0 0.0
    %6998 = vmatprep.subr.mxu0 0.0
    %6999 = vmatpush1.msra.mxu0 0.0
    %7000 = vmatprep.subr.mxu0 0.0
    %7001 = vmatpush1.msra.mxu0 0.0
    %7002 = vmatprep.subr.mxu0 0.0
    %7003 = vmatpush1.msra.mxu0 0.0
    %7004 = vmatprep.subr.mxu0 0.0
    %7005 = vmatpush1.msra.mxu0 0.0
    %7006 = vmatprep.subr.mxu0 0.0
    %7007 = vmatpush1.msra.mxu0 0.0
    %7008 = vmatprep.subr.mxu0 0.0
    %7009 = vmatpush1.msra.mxu0 0.0
    %7010 = vmatprep.subr.mxu0 0.0
    %7011 = vmatpush1.msra.mxu0 0.0
    %7012 = vmatprep.subr.mxu0 0.0
    %7013 = vmatpush1.msra.mxu0 0.0
    %7014 = vmatprep.subr.mxu0 0.0
    %7015 = vmatpush1.msra.mxu0 0.0
    %7016 = vmatprep.subr.mxu0 0.0
    %7017 = vmatpush1.msra.mxu0 0.0
    %7018 = vmatprep.subr.mxu0 0.0
    %7019 = vmatpush1.msra.mxu0 0.0
    %7020 = vmatprep.subr.mxu0 0.0
    %7021 = vmatpush1.msra.mxu0 0.0
    %7022 = vmatprep.subr.mxu0 0.0
    %7023 = vmatpush1.msra.mxu0 0.0
    %7024 = vmatprep.subr.mxu0 0.0
    %7025 = vmatpush1.msra.mxu0 0.0
    %7026 = vmatprep.subr.mxu0 0.0
    %7027 = vmatpush1.msra.mxu0 0.0
    %7028 = vmatprep.mubr.f32.mxu0 0.0
    %7029 = vmatmul.mubr.f32.gmra.mrb[0].mxu0 %v6962
    %v7030 = vpop.f32.mrb[0].mxu0
    %v7031 = vadd.f32 0.0, %v7030
    %v7032 = vpop.f32.mrb[0].mxu0
    %7033 = vdwg.mxu0
    %7034 = vrot.lane.b32.xlu0 %v5801, 112
    %v7035 = vpop.permute.xlu0 %7034
    %7036 = vrot.lane.b32.xlu0 %v5806, 112
    %v7037 = vpop.permute.xlu0 %7036
    %v7041 = vsel %vm1318, %v6551, 0
    %7043 = vmatprep.subr.mxu0 0.0
    %7044 = vmatpush1.msra.mxu0 %v7035
    %7045 = vmatprep.subr.mxu0 0.0
    %7046 = vmatpush1.msra.mxu0 %v7037
    %7047 = vmatprep.subr.mxu0 0.0
    %7048 = vmatpush1.msra.mxu0 0.0
    %7049 = vmatprep.subr.mxu0 0.0
    %7050 = vmatpush1.msra.mxu0 0.0
    %7051 = vmatprep.subr.mxu0 0.0
    %7052 = vmatpush1.msra.mxu0 0.0
    %7053 = vmatprep.subr.mxu0 0.0
    %7054 = vmatpush1.msra.mxu0 0.0
    %7055 = vmatprep.subr.mxu0 0.0
    %7056 = vmatpush1.msra.mxu0 0.0
    %7057 = vmatprep.subr.mxu0 0.0
    %7058 = vmatpush1.msra.mxu0 0.0
    %7059 = vmatprep.subr.mxu0 0.0
    %7060 = vmatpush1.msra.mxu0 0.0
    %7061 = vmatprep.subr.mxu0 0.0
    %7062 = vmatpush1.msra.mxu0 0.0
    %7063 = vmatprep.subr.mxu0 0.0
    %7064 = vmatpush1.msra.mxu0 0.0
    %7065 = vmatprep.subr.mxu0 0.0
    %7066 = vmatpush1.msra.mxu0 0.0
    %7067 = vmatprep.subr.mxu0 0.0
    %7068 = vmatpush1.msra.mxu0 0.0
    %7069 = vmatprep.subr.mxu0 0.0
    %7070 = vmatpush1.msra.mxu0 0.0
    %7071 = vmatprep.subr.mxu0 0.0
    %7072 = vmatpush1.msra.mxu0 0.0
    %7073 = vmatprep.subr.mxu0 0.0
    %7074 = vmatpush1.msra.mxu0 0.0
    %7075 = vmatprep.subr.mxu0 0.0
    %7076 = vmatpush1.msra.mxu0 0.0
    %7077 = vmatprep.subr.mxu0 0.0
    %7078 = vmatpush1.msra.mxu0 0.0
    %7079 = vmatprep.subr.mxu0 0.0
    %7080 = vmatpush1.msra.mxu0 0.0
    %7081 = vmatprep.subr.mxu0 0.0
    %7082 = vmatpush1.msra.mxu0 0.0
    %7083 = vmatprep.subr.mxu0 0.0
    %7084 = vmatpush1.msra.mxu0 0.0
    %7085 = vmatprep.subr.mxu0 0.0
    %7086 = vmatpush1.msra.mxu0 0.0
    %7087 = vmatprep.subr.mxu0 0.0
    %7088 = vmatpush1.msra.mxu0 0.0
    %7089 = vmatprep.subr.mxu0 0.0
    %7090 = vmatpush1.msra.mxu0 0.0
    %7091 = vmatprep.subr.mxu0 0.0
    %7092 = vmatpush1.msra.mxu0 0.0
    %7093 = vmatprep.subr.mxu0 0.0
    %7094 = vmatpush1.msra.mxu0 0.0
    %7095 = vmatprep.subr.mxu0 0.0
    %7096 = vmatpush1.msra.mxu0 0.0
    %7097 = vmatprep.subr.mxu0 0.0
    %7098 = vmatpush1.msra.mxu0 0.0
    %7099 = vmatprep.subr.mxu0 0.0
    %7100 = vmatpush1.msra.mxu0 0.0
    %7101 = vmatprep.subr.mxu0 0.0
    %7102 = vmatpush1.msra.mxu0 0.0
    %7103 = vmatprep.subr.mxu0 0.0
    %7104 = vmatpush1.msra.mxu0 0.0
    %7105 = vmatprep.subr.mxu0 0.0
    %7106 = vmatpush1.msra.mxu0 0.0
    %7107 = vmatprep.mubr.f32.mxu0 0.0
    %7108 = vmatmul.mubr.f32.gmra.mrb[0].mxu0 %v7041
    %v7109 = vpop.f32.mrb[0].mxu0
    %v7110 = vadd.f32 0.0, %v7109
    %v7111 = vpop.f32.mrb[0].mxu0
    %7112 = vdwg.mxu0
    %7113 = vrot.lane.b32.xlu0 %v5801, 104
    %v7114 = vpop.permute.xlu0 %7113
    %7115 = vrot.lane.b32.xlu0 %v5806, 104
    %v7116 = vpop.permute.xlu0 %7115
    %v7120 = vsel %vm1318, %v6552, 0
    %7122 = vmatprep.subr.mxu0 0.0
    %7123 = vmatpush1.msra.mxu0 %v7114
    %7124 = vmatprep.subr.mxu0 0.0
    %7125 = vmatpush1.msra.mxu0 %v7116
    %7126 = vmatprep.subr.mxu0 0.0
    %7127 = vmatpush1.msra.mxu0 0.0
    %7128 = vmatprep.subr.mxu0 0.0
    %7129 = vmatpush1.msra.mxu0 0.0
    %7130 = vmatprep.subr.mxu0 0.0
    %7131 = vmatpush1.msra.mxu0 0.0
    %7132 = vmatprep.subr.mxu0 0.0
    %7133 = vmatpush1.msra.mxu0 0.0
    %7134 = vmatprep.subr.mxu0 0.0
    %7135 = vmatpush1.msra.mxu0 0.0
    %7136 = vmatprep.subr.mxu0 0.0
    %7137 = vmatpush1.msra.mxu0 0.0
    %7138 = vmatprep.subr.mxu0 0.0
    %7139 = vmatpush1.msra.mxu0 0.0
    %7140 = vmatprep.subr.mxu0 0.0
    %7141 = vmatpush1.msra.mxu0 0.0
    %7142 = vmatprep.subr.mxu0 0.0
    %7143 = vmatpush1.msra.mxu0 0.0
    %7144 = vmatprep.subr.mxu0 0.0
    %7145 = vmatpush1.msra.mxu0 0.0
    %7146 = vmatprep.subr.mxu0 0.0
    %7147 = vmatpush1.msra.mxu0 0.0
    %7148 = vmatprep.subr.mxu0 0.0
    %7149 = vmatpush1.msra.mxu0 0.0
    %7150 = vmatprep.subr.mxu0 0.0
    %7151 = vmatpush1.msra.mxu0 0.0
    %7152 = vmatprep.subr.mxu0 0.0
    %7153 = vmatpush1.msra.mxu0 0.0
    %7154 = vmatprep.subr.mxu0 0.0
    %7155 = vmatpush1.msra.mxu0 0.0
    %7156 = vmatprep.subr.mxu0 0.0
    %7157 = vmatpush1.msra.mxu0 0.0
    %7158 = vmatprep.subr.mxu0 0.0
    %7159 = vmatpush1.msra.mxu0 0.0
    %7160 = vmatprep.subr.mxu0 0.0
    %7161 = vmatpush1.msra.mxu0 0.0
    %7162 = vmatprep.subr.mxu0 0.0
    %7163 = vmatpush1.msra.mxu0 0.0
    %7164 = vmatprep.subr.mxu0 0.0
    %7165 = vmatpush1.msra.mxu0 0.0
    %7166 = vmatprep.subr.mxu0 0.0
    %7167 = vmatpush1.msra.mxu0 0.0
    %7168 = vmatprep.subr.mxu0 0.0
    %7169 = vmatpush1.msra.mxu0 0.0
    %7170 = vmatprep.subr.mxu0 0.0
    %7171 = vmatpush1.msra.mxu0 0.0
    %7172 = vmatprep.subr.mxu0 0.0
    %7173 = vmatpush1.msra.mxu0 0.0
    %7174 = vmatprep.subr.mxu0 0.0
    %7175 = vmatpush1.msra.mxu0 0.0
    %7176 = vmatprep.subr.mxu0 0.0
    %7177 = vmatpush1.msra.mxu0 0.0
    %7178 = vmatprep.subr.mxu0 0.0
    %7179 = vmatpush1.msra.mxu0 0.0
    %7180 = vmatprep.subr.mxu0 0.0
    %7181 = vmatpush1.msra.mxu0 0.0
    %7182 = vmatprep.subr.mxu0 0.0
    %7183 = vmatpush1.msra.mxu0 0.0
    %7184 = vmatprep.subr.mxu0 0.0
    %7185 = vmatpush1.msra.mxu0 0.0
    %7186 = vmatprep.mubr.f32.mxu0 0.0
    %7187 = vmatmul.mubr.f32.gmra.mrb[0].mxu0 %v7120
    %v7188 = vpop.f32.mrb[0].mxu0
    %v7189 = vadd.f32 0.0, %v7188
    %v7190 = vpop.f32.mrb[0].mxu0
    %7191 = vdwg.mxu0
    %7193 = vrot.lane.b32.xlu0 %v7031, 8
    %v7194 = vpop.permute.xlu0 %7193
    %7197 = vrot.lane.b32.xlu0 %v7110, 16
    %v7198 = vpop.permute.xlu0 %7197
    %7201 = vrot.lane.b32.xlu0 %v7189, 24
    %v7202 = vpop.permute.xlu0 %7201
    %v7204 = vsel %vm294, %v6950, %v7194
    %v7205 = vsel %vm1318, %v7204, %v7198
    %v7206 = vsel %vm1320, %v7205, %v7202
    %v7207 = vlaneseq
    %v7208 = vshrl.u32 %v7207, 7
    %v7209 = vsub.s32 7, %v7208
    %v7210 = vrot.slane %v3802, %v7209
    %v7212 = vsel %vm40, %v6879, 0
    %v7215 = vsel %vm40, %v7206, 0
    %7217 = vmatprep.subr.mxu0 0.0
    %7218 = vmatpush1.msra.mxu0 %v5809
    %7219 = vmatprep.subr.mxu0 0.0
    %7220 = vmatpush1.msra.mxu0 %v5810
    %7221 = vmatprep.subr.mxu0 0.0
    %7222 = vmatpush1.msra.mxu0 %v5811
    %7223 = vmatprep.subr.mxu0 0.0
    %7224 = vmatpush1.msra.mxu0 %v5812
    %7225 = vmatprep.subr.mxu0 0.0
    %7226 = vmatpush1.msra.mxu0 0.0
    %7227 = vmatprep.subr.mxu0 0.0
    %7228 = vmatpush1.msra.mxu0 0.0
    %7229 = vmatprep.subr.mxu0 0.0
    %7230 = vmatpush1.msra.mxu0 0.0
    %7231 = vmatprep.subr.mxu0 0.0
    %7232 = vmatpush1.msra.mxu0 0.0
    %7233 = vmatprep.subr.mxu0 0.0
    %7234 = vmatpush1.msra.mxu0 0.0
    %7235 = vmatprep.subr.mxu0 0.0
    %7236 = vmatpush1.msra.mxu0 0.0
    %7237 = vmatprep.subr.mxu0 0.0
    %7238 = vmatpush1.msra.mxu0 0.0
    %7239 = vmatprep.subr.mxu0 0.0
    %7240 = vmatpush1.msra.mxu0 0.0
    %7241 = vmatprep.subr.mxu0 0.0
    %7242 = vmatpush1.msra.mxu0 0.0
    %7243 = vmatprep.subr.mxu0 0.0
    %7244 = vmatpush1.msra.mxu0 0.0
    %7245 = vmatprep.subr.mxu0 0.0
    %7246 = vmatpush1.msra.mxu0 0.0
    %7247 = vmatprep.subr.mxu0 0.0
    %7248 = vmatpush1.msra.mxu0 0.0
    %7249 = vmatprep.subr.mxu0 0.0
    %7250 = vmatpush1.msra.mxu0 0.0
    %7251 = vmatprep.subr.mxu0 0.0
    %7252 = vmatpush1.msra.mxu0 0.0
    %7253 = vmatprep.subr.mxu0 0.0
    %7254 = vmatpush1.msra.mxu0 0.0
    %7255 = vmatprep.subr.mxu0 0.0
    %7256 = vmatpush1.msra.mxu0 0.0
    %7257 = vmatprep.subr.mxu0 0.0
    %7258 = vmatpush1.msra.mxu0 0.0
    %7259 = vmatprep.subr.mxu0 0.0
    %7260 = vmatpush1.msra.mxu0 0.0
    %7261 = vmatprep.subr.mxu0 0.0
    %7262 = vmatpush1.msra.mxu0 0.0
    %7263 = vmatprep.subr.mxu0 0.0
    %7264 = vmatpush1.msra.mxu0 0.0
    %7265 = vmatprep.subr.mxu0 0.0
    %7266 = vmatpush1.msra.mxu0 0.0
    %7267 = vmatprep.subr.mxu0 0.0
    %7268 = vmatpush1.msra.mxu0 0.0
    %7269 = vmatprep.subr.mxu0 0.0
    %7270 = vmatpush1.msra.mxu0 0.0
    %7271 = vmatprep.subr.mxu0 0.0
    %7272 = vmatpush1.msra.mxu0 0.0
    %7273 = vmatprep.subr.mxu0 0.0
    %7274 = vmatpush1.msra.mxu0 0.0
    %7275 = vmatprep.subr.mxu0 0.0
    %7276 = vmatpush1.msra.mxu0 0.0
    %7277 = vmatprep.subr.mxu0 0.0
    %7278 = vmatpush1.msra.mxu0 0.0
    %7279 = vmatprep.subr.mxu0 0.0
    %7280 = vmatpush1.msra.mxu0 0.0
    %7281 = vmatprep.mubr.f32.mxu0 0.0
    %7282 = vmatmul.mubr.f32.gmra.mrb[0].mxu0 %v7212
    %v7283 = vpop.f32.mrb[0].mxu0
    %v7284 = vadd.f32 %v7210, %v7283
    %v7285 = vpop.f32.mrb[0].mxu0
    %7286 = vmatprep.mubr.f32.mxu0 0.0
    %7287 = vmatmul.mubr.f32.gmra.mrb[0].mxu0 %v7215
    %v7288 = vpop.f32.mrb[0].mxu0
    %v7289 = vadd.f32 %v7210, %v7288
    %v7290 = vpop.f32.mrb[0].mxu0
    %7291 = vdwg.mxu0
    %v7292 = vadd.f32 %v5532, %v7284
    %v7293 = vadd.f32 %v5533, %v7289
    %v7294 = vsel %vm40, %v7292, 0.0
    %7295 = vadd.xlane.f32.xlu0 %v7294
    %v7296 = vpop.xlane.xlu0 %7295
    %v7297 = vsel %vm40, %v7293, 0.0
    %7298 = vadd.xlane.f32.xlu0 %v7297
    %v7299 = vpop.xlane.xlu0 %7298
    %v7300 = vmul.f32 %v7296, %v1732
    %v7301 = vmul.f32 %v7299, %v1732
    %v7302 = vsub.f32 %v7292, %v7300
    %v7303 = vsub.f32 %v7293, %v7301
    %v7304 = vmul.f32 %v7302, %v7302
    %v7305 = vmul.f32 %v7303, %v7303
    %v7306 = vsel %vm40, %v7304, 0.0
    %7307 = vadd.xlane.f32.xlu0 %v7306
    %v7308 = vpop.xlane.xlu0 %7307
    %v7309 = vsel %vm40, %v7305, 0.0
    %7310 = vadd.xlane.f32.xlu0 %v7309
    %v7311 = vpop.xlane.xlu0 %7310
    %v7312 = vmul.f32 %v7308, %v1732
    %v7313 = vmul.f32 %v7311, %v1732
    %v7314 = vadd.f32 %v7312, 1e-05
    %v7315 = vadd.f32 %v7313, 1e-05
    %v7316 = vrsqrt.pop %v7314
    %v7317 = vrsqrt.pop %v7315
    %v7318 = vmul.f32 %v7302, %v7316
    %v7319 = vmul.f32 %v7303, %v7317
    %v7320 = vlaneseq
    %v7321 = vshrl.u32 %v7320, 7
    %v7322 = vsub.s32 3, %v7321
    %v7323 = vrot.slane %v3803, %v7322
    %v7324 = vmul.f32 %v7318, %v7323
    %v7325 = vmul.f32 %v7319, %v7323
    %v7326 = vlaneseq
    %v7327 = vshrl.u32 %v7326, 7
    %v7328 = vsub.s32 4, %v7327
    %v7329 = vrot.slane %v3803, %v7328
    %v7330 = vadd.f32 %v7324, %v7329
    %v7331 = vadd.f32 %v7325, %v7329
    %s7332 = scalar_lea.vmem %s3, 40
    %v7333 = vld [vmem:[%s7332] sm:$0xff]
    %v7334 = vld [vmem:[%s7332 + $0x8] sm:$0xff]
    %v7335 = vld [vmem:[%s7332 + $0x10] sm:$0xff]
    %v7336 = vld [vmem:[%s7332 + $0x18] sm:$0xff]
    %v7337 = vld [vmem:[%s7332 + $0x20] sm:$0x1]
    %s7338 = scalar_lea.vmem %s4, 64
    %v7339 = vld [vmem:[%s7338] sm:$0xff]
    %v7340 = vld [vmem:[%s7338 + $0x8] sm:$0xff]
    %v7341 = vld [vmem:[%s7338 + $0x10] sm:$0xff]
    %v7342 = vld [vmem:[%s7338 + $0x18] sm:$0xff]
    %v7343 = vld [vmem:[%s7338 + $0x20] sm:$0xff]
    %v7344 = vld [vmem:[%s7338 + $0x28] sm:$0xff]
    %v7345 = vld [vmem:[%s7338 + $0x30] sm:$0xff]
    %v7346 = vld [vmem:[%s7338 + $0x38] sm:$0xff]
    %v7347 = vlaneseq
    %v7348 = vshrl.u32 %v7347, 7
    %v7349 = vsub.s32 0, %v7348
    %v7350 = vrot.slane %v7337, %v7349
    %v7352 = vsel %vm40, %v7330, 0
    %v7355 = vsel %vm40, %v7331, 0
    %7357 = vmatprep.subr.mxu0 0.0
    %7358 = vmatpush1.msra.mxu0 %v7333
    %7359 = vmatprep.subr.mxu0 0.0
    %7360 = vmatpush1.msra.mxu0 %v7334
    %7361 = vmatprep.subr.mxu0 0.0
    %7362 = vmatpush1.msra.mxu0 %v7335
    %7363 = vmatprep.subr.mxu0 0.0
    %7364 = vmatpush1.msra.mxu0 %v7336
    %7365 = vmatprep.subr.mxu0 0.0
    %7366 = vmatpush1.msra.mxu0 0.0
    %7367 = vmatprep.subr.mxu0 0.0
    %7368 = vmatpush1.msra.mxu0 0.0
    %7369 = vmatprep.subr.mxu0 0.0
    %7370 = vmatpush1.msra.mxu0 0.0
    %7371 = vmatprep.subr.mxu0 0.0
    %7372 = vmatpush1.msra.mxu0 0.0
    %7373 = vmatprep.subr.mxu0 0.0
    %7374 = vmatpush1.msra.mxu0 0.0
    %7375 = vmatprep.subr.mxu0 0.0
    %7376 = vmatpush1.msra.mxu0 0.0
    %7377 = vmatprep.subr.mxu0 0.0
    %7378 = vmatpush1.msra.mxu0 0.0
    %7379 = vmatprep.subr.mxu0 0.0
    %7380 = vmatpush1.msra.mxu0 0.0
    %7381 = vmatprep.subr.mxu0 0.0
    %7382 = vmatpush1.msra.mxu0 0.0
    %7383 = vmatprep.subr.mxu0 0.0
    %7384 = vmatpush1.msra.mxu0 0.0
    %7385 = vmatprep.subr.mxu0 0.0
    %7386 = vmatpush1.msra.mxu0 0.0
    %7387 = vmatprep.subr.mxu0 0.0
    %7388 = vmatpush1.msra.mxu0 0.0
    %7389 = vmatprep.subr.mxu0 0.0
    %7390 = vmatpush1.msra.mxu0 0.0
    %7391 = vmatprep.subr.mxu0 0.0
    %7392 = vmatpush1.msra.mxu0 0.0
    %7393 = vmatprep.subr.mxu0 0.0
    %7394 = vmatpush1.msra.mxu0 0.0
    %7395 = vmatprep.subr.mxu0 0.0
    %7396 = vmatpush1.msra.mxu0 0.0
    %7397 = vmatprep.subr.mxu0 0.0
    %7398 = vmatpush1.msra.mxu0 0.0
    %7399 = vmatprep.subr.mxu0 0.0
    %7400 = vmatpush1.msra.mxu0 0.0
    %7401 = vmatprep.subr.mxu0 0.0
    %7402 = vmatpush1.msra.mxu0 0.0
    %7403 = vmatprep.subr.mxu0 0.0
    %7404 = vmatpush1.msra.mxu0 0.0
    %7405 = vmatprep.subr.mxu0 0.0
    %7406 = vmatpush1.msra.mxu0 0.0
    %7407 = vmatprep.subr.mxu0 0.0
    %7408 = vmatpush1.msra.mxu0 0.0
    %7409 = vmatprep.subr.mxu0 0.0
    %7410 = vmatpush1.msra.mxu0 0.0
    %7411 = vmatprep.subr.mxu0 0.0
    %7412 = vmatpush1.msra.mxu0 0.0
    %7413 = vmatprep.subr.mxu0 0.0
    %7414 = vmatpush1.msra.mxu0 0.0
    %7415 = vmatprep.subr.mxu0 0.0
    %7416 = vmatpush1.msra.mxu0 0.0
    %7417 = vmatprep.subr.mxu0 0.0
    %7418 = vmatpush1.msra.mxu0 0.0
    %7419 = vmatprep.subr.mxu0 0.0
    %7420 = vmatpush1.msra.mxu0 0.0
    %7421 = vmatprep.mubr.f32.mxu0 0.0
    %7422 = vmatmul.mubr.f32.gmra.mrb[0].mxu0 %v7352
    %v7423 = vpop.f32.mrb[0].mxu0
    %v7424 = vadd.f32 %v7350, %v7423
    %v7425 = vpop.f32.mrb[0].mxu0
    %7426 = vmatprep.mubr.f32.mxu0 0.0
    %7427 = vmatmul.mubr.f32.gmra.mrb[0].mxu0 %v7355
    %v7428 = vpop.f32.mrb[0].mxu0
    %v7429 = vadd.f32 %v7350, %v7428
    %v7430 = vpop.f32.mrb[0].mxu0
    %7431 = vdwg.mxu0
    %v7432 = vmax.f32 %v7424, 0.0
    %v7433 = vmax.f32 %v7429, 0.0
    %v7434 = vlaneseq
    %v7435 = vshrl.u32 %v7434, 7
    %v7436 = vsub.s32 0, %v7435
    %v7437 = vrot.slane %v3803, %v7436
    %v7439 = vsel %vm3679, %v7432, 0
    %v7442 = vsel %vm3679, %v7433, 0
    %7444 = vmatprep.subr.mxu0 0.0
    %7445 = vmatpush1.msra.mxu0 %v7339
    %7446 = vmatprep.subr.mxu0 0.0
    %7447 = vmatpush1.msra.mxu0 %v7340
    %7448 = vmatprep.subr.mxu0 0.0
    %7449 = vmatpush1.msra.mxu0 %v7341
    %7450 = vmatprep.subr.mxu0 0.0
    %7451 = vmatpush1.msra.mxu0 %v7342
    %7452 = vmatprep.subr.mxu0 0.0
    %7453 = vmatpush1.msra.mxu0 %v7343
    %7454 = vmatprep.subr.mxu0 0.0
    %7455 = vmatpush1.msra.mxu0 %v7344
    %7456 = vmatprep.subr.mxu0 0.0
    %7457 = vmatpush1.msra.mxu0 %v7345
    %7458 = vmatprep.subr.mxu0 0.0
    %7459 = vmatpush1.msra.mxu0 %v7346
    %7460 = vmatprep.subr.mxu0 0.0
    %7461 = vmatpush1.msra.mxu0 0.0
    %7462 = vmatprep.subr.mxu0 0.0
    %7463 = vmatpush1.msra.mxu0 0.0
    %7464 = vmatprep.subr.mxu0 0.0
    %7465 = vmatpush1.msra.mxu0 0.0
    %7466 = vmatprep.subr.mxu0 0.0
    %7467 = vmatpush1.msra.mxu0 0.0
    %7468 = vmatprep.subr.mxu0 0.0
    %7469 = vmatpush1.msra.mxu0 0.0
    %7470 = vmatprep.subr.mxu0 0.0
    %7471 = vmatpush1.msra.mxu0 0.0
    %7472 = vmatprep.subr.mxu0 0.0
    %7473 = vmatpush1.msra.mxu0 0.0
    %7474 = vmatprep.subr.mxu0 0.0
    %7475 = vmatpush1.msra.mxu0 0.0
    %7476 = vmatprep.subr.mxu0 0.0
    %7477 = vmatpush1.msra.mxu0 0.0
    %7478 = vmatprep.subr.mxu0 0.0
    %7479 = vmatpush1.msra.mxu0 0.0
    %7480 = vmatprep.subr.mxu0 0.0
    %7481 = vmatpush1.msra.mxu0 0.0
    %7482 = vmatprep.subr.mxu0 0.0
    %7483 = vmatpush1.msra.mxu0 0.0
    %7484 = vmatprep.subr.mxu0 0.0
    %7485 = vmatpush1.msra.mxu0 0.0
    %7486 = vmatprep.subr.mxu0 0.0
    %7487 = vmatpush1.msra.mxu0 0.0
    %7488 = vmatprep.subr.mxu0 0.0
    %7489 = vmatpush1.msra.mxu0 0.0
    %7490 = vmatprep.subr.mxu0 0.0
    %7491 = vmatpush1.msra.mxu0 0.0
    %7492 = vmatprep.subr.mxu0 0.0
    %7493 = vmatpush1.msra.mxu0 0.0
    %7494 = vmatprep.subr.mxu0 0.0
    %7495 = vmatpush1.msra.mxu0 0.0
    %7496 = vmatprep.subr.mxu0 0.0
    %7497 = vmatpush1.msra.mxu0 0.0
    %7498 = vmatprep.subr.mxu0 0.0
    %7499 = vmatpush1.msra.mxu0 0.0
    %7500 = vmatprep.subr.mxu0 0.0
    %7501 = vmatpush1.msra.mxu0 0.0
    %7502 = vmatprep.subr.mxu0 0.0
    %7503 = vmatpush1.msra.mxu0 0.0
    %7504 = vmatprep.subr.mxu0 0.0
    %7505 = vmatpush1.msra.mxu0 0.0
    %7506 = vmatprep.subr.mxu0 0.0
    %7507 = vmatpush1.msra.mxu0 0.0
    %7508 = vmatprep.mubr.f32.mxu0 0.0
    %7509 = vmatmul.mubr.f32.gmra.mrb[0].mxu0 %v7439
    %v7510 = vpop.f32.mrb[0].mxu0
    %v7511 = vadd.f32 %v7437, %v7510
    %v7512 = vpop.f32.mrb[0].mxu0
    %7513 = vmatprep.mubr.f32.mxu0 0.0
    %7514 = vmatmul.mubr.f32.gmra.mrb[0].mxu0 %v7442
    %v7515 = vpop.f32.mrb[0].mxu0
    %v7516 = vadd.f32 %v7437, %v7515
    %v7517 = vpop.f32.mrb[0].mxu0
    %7518 = vdwg.mxu0
    %v7519 = vadd.f32 %v7330, %v7511
    %v7520 = vadd.f32 %v7331, %v7516
    %v7521 = vsel %vm40, %v7519, 0.0
    %7522 = vadd.xlane.f32.xlu0 %v7521
    %v7523 = vpop.xlane.xlu0 %7522
    %v7524 = vsel %vm40, %v7520, 0.0
    %7525 = vadd.xlane.f32.xlu0 %v7524
    %v7526 = vpop.xlane.xlu0 %7525
    %v7527 = vmul.f32 %v7523, %v1732
    %v7528 = vmul.f32 %v7526, %v1732
    %v7529 = vsub.f32 %v7519, %v7527
    %v7530 = vsub.f32 %v7520, %v7528
    %v7531 = vmul.f32 %v7529, %v7529
    %v7532 = vmul.f32 %v7530, %v7530
    %v7533 = vsel %vm40, %v7531, 0.0
    %7534 = vadd.xlane.f32.xlu0 %v7533
    %v7535 = vpop.xlane.xlu0 %7534
    %v7536 = vsel %vm40, %v7532, 0.0
    %7537 = vadd.xlane.f32.xlu0 %v7536
    %v7538 = vpop.xlane.xlu0 %7537
    %v7539 = vmul.f32 %v7535, %v1732
    %v7540 = vmul.f32 %v7538, %v1732
    %v7541 = vadd.f32 %v7539, 1e-05
    %v7542 = vadd.f32 %v7540, 1e-05
    %v7543 = vrsqrt.pop %v7541
    %v7544 = vrsqrt.pop %v7542
    %v7545 = vmul.f32 %v7529, %v7543
    %v7546 = vmul.f32 %v7530, %v7544
    %v7547 = vlaneseq
    %v7548 = vshrl.u32 %v7547, 7
    %v7549 = vsub.s32 5, %v7548
    %v7550 = vrot.slane %v3803, %v7549
    %v7551 = vmul.f32 %v7545, %v7550
    %v7552 = vmul.f32 %v7546, %v7550
    %v7553 = vlaneseq
    %v7554 = vshrl.u32 %v7553, 7
    %v7555 = vsub.s32 6, %v7554
    %v7556 = vrot.slane %v3803, %v7555
    %v7557 = vadd.f32 %v7551, %v7556
    %v7558 = vadd.f32 %v7552, %v7556
    %v7559 = vsel %vm40, %v7557, 0.0
    %7560 = vadd.xlane.f32.xlu0 %v7559
    %v7561 = vpop.xlane.xlu0 %7560
    %v7562 = vsel %vm40, %v7558, 0.0
    %7563 = vadd.xlane.f32.xlu0 %v7562
    %v7564 = vpop.xlane.xlu0 %7563
    %v7565 = vmul.f32 %v7561, %v1732
    %v7566 = vmul.f32 %v7564, %v1732
    %v7567 = vsub.f32 %v7557, %v7565
    %v7568 = vsub.f32 %v7558, %v7566
    %v7569 = vmul.f32 %v7567, %v7567
    %v7570 = vmul.f32 %v7568, %v7568
    %v7571 = vsel %vm40, %v7569, 0.0
    %7572 = vadd.xlane.f32.xlu0 %v7571
    %v7573 = vpop.xlane.xlu0 %7572
    %v7574 = vsel %vm40, %v7570, 0.0
    %7575 = vadd.xlane.f32.xlu0 %v7574
    %v7576 = vpop.xlane.xlu0 %7575
    %v7577 = vmul.f32 %v7573, %v1732
    %v7578 = vmul.f32 %v7576, %v1732
    %v7579 = vadd.f32 %v7577, 1e-05
    %v7580 = vadd.f32 %v7578, 1e-05
    %v7581 = vrsqrt.pop %v7579
    %v7582 = vrsqrt.pop %v7580
    %v7583 = vmul.f32 %v7567, %v7581
    %v7584 = vmul.f32 %v7568, %v7582
    %v7585 = vlaneseq
    %v7586 = vshrl.u32 %v7585, 7
    %v7587 = vsub.s32 7, %v7586
    %v7588 = vrot.slane %v3803, %v7587
    %v7589 = vmul.f32 %v7583, %v7588
    %v7590 = vmul.f32 %v7584, %v7588
    %v7591 = vlaneseq
    %v7592 = vshrl.u32 %v7591, 7
    %v7593 = vsub.s32 0, %v7592
    %v7594 = vrot.slane %v3804, %v7593
    %v7595 = vadd.f32 %v7589, %v7594
    %v7596 = vadd.f32 %v7590, %v7594
    %7597 = vst.msk [vmem:[#allocation2] sm:$0xff] %vm40, %v7595
    %7598 = vst.msk [vmem:[#allocation2 + $0x8] sm:$0xff] %vm40, %v7596
    // Predicated region
    $region26: #{decoder_forward.1} parent=1 // pred_check
      _
    $region27: #{decoder_forward.1} parent=1 // pred_check_branch
      %7600 = sbr.rel (0) target = $region29
    $region28: #{decoder_forward.1} parent=1 // pred_region
      %s7602 = ssub.s32 256, 256
      %7603 = vsyncadd [#allocation3], %s7602
      %s7604 = sshll.u32 [#allocation2], 4
      %s7605 = int_to_ptr.vmem [resolvable:$true] %s7604
      %7610 = dma.vmem_to_hbm [thread:$0]  %s7605, 256, %s6, [#allocation3], 128, 128, 8
    $region29: #{decoder_forward.1} parent=1 // pred_fallthru
      _
    // Predicated region
    $region30: #{decoder_forward.1} parent=1 // pred_check
      _
    $region31: #{decoder_forward.1} parent=1 // pred_check_branch
      %7612 = sbr.rel (0) target = $region33
    $region32: #{decoder_forward.1} parent=1 // pred_region
      %7613 = dma.done [#allocation3], 256
    $region33: #{decoder_forward.1} parent=1 // pred_fallthru
      _
    %7614 = vsyncpa [#allocation3], 1

</llo_original>
